<compile_context>
chip_gen: v7x
topology: tpu7x:2x2x1
jax: 0.10.0
libtpu: 0.0.40
codegen_flags: <defaults>
</compile_context>

<pallas_src>
import functools

import jax
import jax.numpy as jnp
from jax.experimental import pallas as pl
from jax.experimental.pallas import tpu as pltpu


# ---------------------------------------------------------------------------
# in-kernel helpers
# ---------------------------------------------------------------------------
def _im2col_3x3(cur, top, bot, TH, W):
    """3x3 im2col for one H-tile, built entirely in the input dtype (bf16).

    cur : (C, TH*W)  tile rows
    top : (C, W)     row above the tile (already zero at the image boundary)
    bot : (C, W)     row below the tile (already zero at the image boundary)
    Returns (9*C, TH*W), taps ordered (kh*3+kw)-major, channel-minor.
    The 1-px conv zero padding on the left/right columns is inserted here.
    """
    C = cur.shape[0]
    body = jnp.concatenate([top.reshape(C, 1, W),
                            cur.reshape(C, TH, W),
                            bot.reshape(C, 1, W)], axis=1)        # (C, TH+2, W)
    zcol = jnp.zeros((C, TH + 2, 1), cur.dtype)
    xpad = jnp.concatenate([zcol, body, zcol], axis=2)            # (C, TH+2, W+2)
    # TODO(synk): the pad->slice->reshape taps below could be rebuilt with
    # pltpu.roll shifts + column masks on the flat (C, TH*W) layout to move the
    # tap construction onto the (idle) XLU slot; kept as slices for robustness.
    taps = [xpad[:, kh:kh + TH, kw:kw + W].reshape(C, TH * W)
            for kh in range(3) for kw in range(3)]
    return jnp.concatenate(taps, axis=0)                          # (9*C, TH*W)


def _partial_stats(acc):
    # Lane-dense per-tile per-channel one-pass stats: (2, C) f32,
    # row 0 = sum, row 1 = sum of squares (var = E[x^2] - mean^2).
    s = jnp.sum(acc, axis=1, keepdims=True)
    sq = jnp.sum(acc * acc, axis=1, keepdims=True)
    return jnp.concatenate([s, sq], axis=1).T                     # (2, C)


# ---------------------------------------------------------------------------
# kernels
# ---------------------------------------------------------------------------
def _conv1_kernel(x2c_ref, x2t_ref, x2b_ref, x1c_ref, x1t_ref, x1b_ref,
                  w_ref, y_ref, st_ref, *, TH, W):
    # conv1 over concat([x2, x1], dim=1); the concat is folded into the weight
    # columns, so p is just the two im2col blocks stacked.
    p = jnp.concatenate(
        [_im2col_3x3(x2c_ref[...], x2t_ref[...], x2b_ref[...], TH, W),
         _im2col_3x3(x1c_ref[...], x1t_ref[...], x1b_ref[...], TH, W)], axis=0)
    # Conv bias intentionally omitted: a per-channel constant is cancelled
    # exactly by the batch-statistic BatchNorm mean subtraction that follows.
    acc = jnp.dot(w_ref[...], p, preferred_element_type=jnp.float32)  # (Cmid, TH*W)
    y_ref[...] = acc.astype(y_ref.dtype)
    st_ref[...] = _partial_stats(acc)


def _bn_relu_conv2_kernel(yc_ref, yt_ref, yb_ref, w_ref, sc_ref, sh_ref,
                          y2_ref, st_ref, *, TH, W):
    # BN1(scale/shift)+ReLU on the tile (halo rows arrive already activated and
    # boundary-zeroed from the wrapper), then conv2 as one MXU matmul.
    sc = sc_ref[...]                                   # (Cmid, 1) f32
    sh = sh_ref[...]
    cur = jnp.maximum(yc_ref[...].astype(jnp.float32) * sc + sh,
                      0.0).astype(jnp.bfloat16)
    p = _im2col_3x3(cur, yt_ref[...], yb_ref[...], TH, W)
    acc = jnp.dot(w_ref[...], p, preferred_element_type=jnp.float32)  # (Cout, TH*W)
    y2_ref[...] = acc.astype(y2_ref.dtype)
    st_ref[...] = _partial_stats(acc)


def _bn_relu_kernel(y_ref, sc_ref, sh_ref, o_ref):
    v = y_ref[...].astype(jnp.float32)
    o_ref[...] = jnp.maximum(v * sc_ref[...] + sh_ref[...], 0.0).astype(o_ref.dtype)


# ---------------------------------------------------------------------------
# wrapper helpers
# ---------------------------------------------------------------------------
def _flatten_oihw(w):
    # (O, I, 3, 3) -> (O, 9*I), column index = (kh*3+kw)*I + i  (tap-major)
    o, i = w.shape[0], w.shape[1]
    return jnp.transpose(w, (0, 2, 3, 1)).reshape(o, 9 * i).astype(jnp.bfloat16)


def _interp_matrix(size_in, size_out):
    if size_in == 1:
        return jnp.ones((size_out, 1), jnp.float32)
    src = jnp.arange(size_out, dtype=jnp.float32) * (size_in - 1) / (size_out - 1)
    i0 = jnp.clip(jnp.floor(src).astype(jnp.int32), 0, size_in - 1)
    i1 = jnp.clip(i0 + 1, 0, size_in - 1)
    f = (src - i0.astype(jnp.float32))[:, None]
    return (jax.nn.one_hot(i0, size_in, dtype=jnp.float32) * (1.0 - f)
            + jax.nn.one_hot(i1, size_in, dtype=jnp.float32) * f)


def bilinear_upsample_x2_align_corners(x):
    # TODO(synk): the bilinear upsample stays in plain JAX (not fused into
    # pass 1); gathers are replaced by a dense interpolation-matrix einsum.
    N, C, H, W = x.shape
    Ah = _interp_matrix(H, 2 * H)          # (2H, H)
    Aw = _interp_matrix(W, 2 * W)          # (2W, W)
    return jnp.einsum('oh,nchw,pw->ncop', Ah, x, Aw)


def _halo_rows(xf, N, C, TH, nT, W):
    """Boundary rows for each H-tile of xf (N, C, H*W).

    Returns top/bot of shape (N, nT, C, W): the single row just above / below
    each tile, zero-filled at the image top/bottom (= the conv zero padding).
    Only two C x W rows per tile are ever DMA'd into the kernel.
    """
    if nT == 1:
        z = jnp.zeros((N, 1, C, W), xf.dtype)
        return z, z
    xr = xf.reshape(N, C, nT, TH, W)
    last = jnp.transpose(xr[:, :, :, TH - 1, :], (0, 2, 1, 3))    # (N, nT, C, W)
    first = jnp.transpose(xr[:, :, :, 0, :], (0, 2, 1, 3))
    z = jnp.zeros((N, 1, C, W), xf.dtype)
    top = jnp.concatenate([z, last[:, :-1]], axis=1)
    bot = jnp.concatenate([first[:, 1:], z], axis=1)
    return top, bot


def _vmem_limit_bytes():
    # Per-generation VMEM request: v7x has 64 MiB/TC, v5e/v6e have 128 MiB.
    try:
        kind = jax.devices()[0].device_kind.lower()
    except Exception:
        kind = ""
    phys = 128 * 2**20 if ("v5" in kind or "v6" in kind) else 64 * 2**20
    return min((phys * 3) // 4, 100 * 2**20)   # leave compiler/pipeline headroom


def _working_set_bytes(TH, W, cin_tot, cmid, cout):
    M = TH * W
    w_bytes = 2 * cmid * 9 * cin_tot + 2 * cout * 9 * cmid       # bf16, 1-buffered
    p1 = (2 * 2 * cin_tot * M      # double-buffered bf16 activation blocks
          + 2 * 2 * cmid * M       # double-buffered bf16 conv1 output block
          + 2 * 9 * cin_tot * M    # bf16 im2col scratch
          + 4 * cmid * M)          # f32 accumulator
    p2 = (2 * 2 * cmid * M + 2 * 2 * cout * M + 2 * 9 * cmid * M + 4 * cout * M)
    return w_bytes + max(p1, p2)


def _pick_tile_h(H, W, cin_tot, cmid, cout, vmem_limit):
    # Largest H-tile (divisor of H) whose working set fits the VMEM budget and
    # whose flattened width TH*W is lane-aligned (multiple of 128) or full-H.
    budget = (vmem_limit * 3) // 5
    for th in range(H, 0, -1):
        if H % th:
            continue
        if (th * W) % 128 != 0 and th != H:
            continue
        if _working_set_bytes(th, W, cin_tot, cmid, cout) <= budget:
            return th
    for th in range(1, H + 1):
        if H % th == 0 and ((th * W) % 128 == 0 or th == H):
            return th
    return H


def _const_block_spec(shape):
    # Grid-invariant operand: single-buffered (its block index never changes).
    index_map = lambda n, t: (0,) * len(shape)
    try:
        return pl.BlockSpec(shape, index_map, pipeline_mode=pl.Buffered(1))
    except TypeError:
        return pl.BlockSpec(shape, index_map)


# ---------------------------------------------------------------------------
# wrapper
# ---------------------------------------------------------------------------
def up_forward(x1, x2, params, *, out_dtype=jnp.float32):
    """Forward of `up(in_ch, out_ch, bilinear=True)` with training-mode BN."""
    w1, b1, g1, be1, w2, b2, g2, be2 = params
    del b1, b2   # exactly cancelled by batch-stat BN mean subtraction (train mode)
    N, C2, H, W = x2.shape
    C1 = x1.shape[1]
    Cmid = w1.shape[0]
    Cout = w2.shape[0]
    eps = 1e-5

    # ---- upsample x1 and align it to x2 (F.pad equivalent), plain JAX -------
    x1u = bilinear_upsample_x2_align_corners(x1)
    dY = H - x1u.shape[2]
    dX = W - x1u.shape[3]
    x1a = jnp.pad(x1u, ((0, 0), (0, 0),
                        (dY // 2, dY - dY // 2), (dX // 2, dX - dX // 2)))

    # ---- planning: lane-dense NC(HW) layout, per-generation VMEM sizing -----
    vmem_limit = _vmem_limit_bytes()
    TH = _pick_tile_h(H, W, C1 + C2, Cmid, Cout, vmem_limit)
    nT = H // TH
    M = TH * W

    x2f = x2.reshape(N, C2, H * W).astype(jnp.bfloat16)
    x1f = x1a.reshape(N, C1, H * W).astype(jnp.bfloat16)
    # channel concat folded into conv1 weight columns (x2 block, then x1 block)
    w1f = jnp.concatenate([_flatten_oihw(w1[:, :C2]), _flatten_oihw(w1[:, C2:])],
                          axis=1)                     # (Cmid, 9*(C2+C1))
    w2f = _flatten_oihw(w2)                           # (Cout, 9*Cmid)

    # one C x W halo row per tile edge (NOT full neighbour tiles)
    x2_top, x2_bot = _halo_rows(x2f, N, C2, TH, nT, W)
    x1_top, x1_bot = _halo_rows(x1f, N, C1, TH, nT, W)

    cparams = pltpu.CompilerParams(
        dimension_semantics=("parallel", "parallel"),   # megacore / 2-TC friendly
        vmem_limit_bytes=int(vmem_limit))

    idx_cur = lambda n, t: (n, 0, t)
    idx_tile = lambda n, t: (n, t, 0, 0)

    def cur_spec(C):
        return pl.BlockSpec((None, C, M), idx_cur)

    def halo_spec(C):
        return pl.BlockSpec((None, None, C, W), idx_tile)

    # ---- pass 1: conv1 + per-tile BN1 partial stats --------------------------
    y1_raw, st1 = pl.pallas_call(
        functools.partial(_conv1_kernel, TH=TH, W=W),
        grid=(N, nT),
        in_specs=[cur_spec(C2), halo_spec(C2), halo_spec(C2),
                  cur_spec(C1), halo_spec(C1), halo_spec(C1),
                  _const_block_spec(w1f.shape)],
        out_specs=(pl.BlockSpec((None, Cmid, M), idx_cur),
                   pl.BlockSpec((None, None, 2, Cmid), idx_tile)),
        out_shape=(jax.ShapeDtypeStruct((N, Cmid, H * W), jnp.bfloat16),
                   jax.ShapeDtypeStruct((N, nT, 2, Cmid), jnp.float32)),
        compiler_params=cparams,
    )(x2f, x2_top, x2_bot, x1f, x1_top, x1_bot, w1f)

    # ---- tiny per-channel reduction -> BN affine (scale, shift) --------------
    cnt = float(N * H * W)

    def bn_affine(st, gamma, beta):
        red = jnp.sum(st, axis=(0, 1))                 # (2, C)
        mean = red[0] / cnt
        # NOTE: one-pass E[x^2]-mean^2 variance (f32), clamped at 0; adequate at
        # these magnitudes (a Welford-style merge would be sturdier if mean>>std).
        var = jnp.maximum(red[1] / cnt - mean * mean, 0.0)
        scale = gamma * jax.lax.rsqrt(var + eps)
        shift = beta - mean * scale
        return (scale.reshape(-1, 1).astype(jnp.float32),
                shift.reshape(-1, 1).astype(jnp.float32))

    sc1, sh1 = bn_affine(st1, g1, be1)

    # halo rows of the conv1 output, BN1+ReLU'd in the wrapper (tiny), then
    # re-zeroed at the image border (conv2's zero padding is post-activation).
    y1_top, y1_bot = _halo_rows(y1_raw, N, Cmid, TH, nT, W)
    scb = sc1.reshape(1, 1, Cmid, 1)
    shb = sh1.reshape(1, 1, Cmid, 1)
    y1_top = jnp.maximum(y1_top.astype(jnp.float32) * scb + shb,
                         0.0).astype(jnp.bfloat16).at[:, 0].set(0)
    y1_bot = jnp.maximum(y1_bot.astype(jnp.float32) * scb + shb,
                         0.0).astype(jnp.bfloat16).at[:, -1].set(0)

    # ---- pass 2: BN1+ReLU (fused) + conv2 + per-tile BN2 partial stats -------
    y2_raw, st2 = pl.pallas_call(
        functools.partial(_bn_relu_conv2_kernel, TH=TH, W=W),
        grid=(N, nT),
        in_specs=[cur_spec(Cmid), halo_spec(Cmid), halo_spec(Cmid),
                  _const_block_spec(w2f.shape),
                  _const_block_spec((Cmid, 1)), _const_block_spec((Cmid, 1))],
        out_specs=(pl.BlockSpec((None, Cout, M), idx_cur),
                   pl.BlockSpec((None, None, 2, Cout), idx_tile)),
        out_shape=(jax.ShapeDtypeStruct((N, Cout, H * W), jnp.bfloat16),
                   jax.ShapeDtypeStruct((N, nT, 2, Cout), jnp.float32)),
        compiler_params=cparams,
    )(y1_raw, y1_top, y1_bot, w2f, sc1, sh1)

    sc2, sh2 = bn_affine(st2, g2, be2)

    # ---- pass 3: BN2 + ReLU (output dtype caller-selectable) -----------------
    out = pl.pallas_call(
        _bn_relu_kernel,
        grid=(N, nT),
        in_specs=[cur_spec(Cout),
                  _const_block_spec((Cout, 1)), _const_block_spec((Cout, 1))],
        out_specs=pl.BlockSpec((None, Cout, M), idx_cur),
        out_shape=jax.ShapeDtypeStruct((N, Cout, H * W), out_dtype),
        compiler_params=cparams,
    )(y2_raw, sc2, sh2)

    return out.reshape(N, Cout, H, W)      # free metadata reshape back to NCHW


# ---------------------------------------------------------------------------
# parameters (PyTorch OIHW convention) and pure-JAX reference
# ---------------------------------------------------------------------------
def init_params(key, in_channels, out_channels):
    ks = jax.random.split(key, 8)
    w1 = jax.random.normal(ks[0], (out_channels, in_channels, 3, 3), jnp.float32) * 0.1
    b1 = jax.random.normal(ks[1], (out_channels,), jnp.float32) * 0.1
    g1 = 1.0 + 0.1 * jax.random.normal(ks[2], (out_channels,), jnp.float32)
    be1 = 0.1 * jax.random.normal(ks[3], (out_channels,), jnp.float32)
    w2 = jax.random.normal(ks[4], (out_channels, out_channels, 3, 3), jnp.float32) * 0.1
    b2 = jax.random.normal(ks[5], (out_channels,), jnp.float32) * 0.1
    g2 = 1.0 + 0.1 * jax.random.normal(ks[6], (out_channels,), jnp.float32)
    be2 = 0.1 * jax.random.normal(ks[7], (out_channels,), jnp.float32)
    return (w1, b1, g1, be1, w2, b2, g2, be2)


def _interp_idx(size_in, size_out):
    if size_in == 1:
        z = jnp.zeros(size_out, jnp.int32)
        return z, z, jnp.zeros(size_out, jnp.float32)
    src = jnp.arange(size_out, dtype=jnp.float32) * (size_in - 1) / (size_out - 1)
    i0 = jnp.clip(jnp.floor(src).astype(jnp.int32), 0, size_in - 1)
    i1 = jnp.clip(i0 + 1, 0, size_in - 1)
    return i0, i1, src - i0.astype(jnp.float32)


def _bilinear_upsample_ref(x):
    # independent gather/lerp formulation, used only by the pure-JAX reference
    h0, h1, wh = _interp_idx(x.shape[2], 2 * x.shape[2])
    w0, w1, ww = _interp_idx(x.shape[3], 2 * x.shape[3])
    xh = (x[:, :, h0, :] * (1.0 - wh)[None, None, :, None]
          + x[:, :, h1, :] * wh[None, None, :, None])
    return (xh[:, :, :, w0] * (1.0 - ww)[None, None, None, :]
            + xh[:, :, :, w1] * ww[None, None, None, :])


def _reference_up_forward(x1, x2, params):
    w1, b1, g1, be1, w2, b2, g2, be2 = params
    x1u = _bilinear_upsample_ref(x1)
    dY = x2.shape[2] - x1u.shape[2]
    dX = x2.shape[3] - x1u.shape[3]
    x1a = jnp.pad(x1u, ((0, 0), (0, 0),
                        (dY // 2, dY - dY // 2), (dX // 2, dX - dX // 2)))
    x = jnp.concatenate([x2, x1a], axis=1)

    def conv_bn_relu(h, w, b, g, be):
        y = jax.lax.conv_general_dilated(
            h, w, (1, 1), ((1, 1), (1, 1)),
            dimension_numbers=("NCHW", "OIHW", "NCHW")) + b[None, :, None, None]
        m = jnp.mean(y, axis=(0, 2, 3), keepdims=True)
        v = jnp.var(y, axis=(0, 2, 3), keepdims=True)
        yn = ((y - m) * jax.lax.rsqrt(v + 1e-5) * g[None, :, None, None]
              + be[None, :, None, None])
        return jnp.maximum(yn, 0.0)

    return conv_bn_relu(conv_bn_relu(x, w1, b1, g1, be1), w2, b2, g2, be2)


if __name__ == "__main__":
    key = jax.random.PRNGKey(0)
    k_x1, k_x2, k_p = jax.random.split(key, 3)

    in_channels, out_channels = 8, 4          # up(8, 4, bilinear=True)
    N, H, W = 2, 16, 16
    # x1: deeper layer (half spatial, in_channels//2 ch); x2: skip connection
    x1 = jax.random.normal(k_x1, (N, in_channels // 2, H // 2, W // 2), jnp.float32)
    x2 = jax.random.normal(k_x2, (N, in_channels // 2, H, W), jnp.float32)
    params = init_params(k_p, in_channels, out_channels)

    out = jax.jit(up_forward)(x1, x2, params)
    jax.block_until_ready(out)
    assert out.shape == (N, out_channels, H, W)

    # loose f32-reference check (kernel uses bf16 MXU operands / intermediates)
    ref = _reference_up_forward(x1, x2, params)
    max_err = float(jnp.max(jnp.abs(out - ref)))
    assert max_err < 0.3, f"max abs error vs reference: {max_err}"
    print("KERNEL_OK")
</pallas_src>

<mosaic_0001>
module attributes {stable_mosaic.version = 11 : i64} {
  func.func @_conv1_kernel(%arg0: i32, %arg1: i32, %arg2: memref<1x4x256xbf16, #tpu.memory_space<vmem>>, %arg3: memref<1x1x4x16xbf16, #tpu.memory_space<vmem>>, %arg4: memref<1x1x4x16xbf16, #tpu.memory_space<vmem>>, %arg5: memref<1x4x256xbf16, #tpu.memory_space<vmem>>, %arg6: memref<1x1x4x16xbf16, #tpu.memory_space<vmem>>, %arg7: memref<1x1x4x16xbf16, #tpu.memory_space<vmem>>, %arg8: memref<4x72xbf16, #tpu.memory_space<vmem>>, %arg9: memref<1x4x256xbf16, #tpu.memory_space<vmem>>, %arg10: memref<1x1x2x4xf32, #tpu.memory_space<vmem>>) attributes {dimension_semantics = [#tpu.dimension_semantics<parallel>, #tpu.dimension_semantics<parallel>], iteration_bounds = array<i64: 2, 1>, scalar_prefetch = 0 : i64, scratch_operands = 0 : i64, tpu.core_type = #tpu.core_type<tc>, window_params = [{transform_indices = @transform_0, window_bounds = array<i64: 1, 4, 256>}, {transform_indices = @transform_1, window_bounds = array<i64: 1, 1, 4, 16>}, {transform_indices = @transform_2, window_bounds = array<i64: 1, 1, 4, 16>}, {transform_indices = @transform_3, window_bounds = array<i64: 1, 4, 256>}, {transform_indices = @transform_4, window_bounds = array<i64: 1, 1, 4, 16>}, {transform_indices = @transform_5, window_bounds = array<i64: 1, 1, 4, 16>}, {pipeline_mode = #tpu.pipeline_mode<synchronous>, transform_indices = @transform_6, window_bounds = array<i64: 4, 72>}, {transform_indices = @transform_7, window_bounds = array<i64: 1, 4, 256>}, {transform_indices = @transform_8, window_bounds = array<i64: 1, 1, 2, 4>}]} {
    %c0 = arith.constant 0 : index
    %c0_0 = arith.constant 0 : index
    %c0_1 = arith.constant 0 : index
    %0 = vector.load %arg2[%c0, %c0_0, %c0_1] : memref<1x4x256xbf16, #tpu.memory_space<vmem>>, vector<1x4x256xbf16>
    %1 = vector.shape_cast %0 : vector<1x4x256xbf16> to vector<4x256xbf16>
    %c0_2 = arith.constant 0 : index
    %c0_3 = arith.constant 0 : index
    %c0_4 = arith.constant 0 : index
    %c0_5 = arith.constant 0 : index
    %2 = vector.load %arg3[%c0_2, %c0_3, %c0_4, %c0_5] : memref<1x1x4x16xbf16, #tpu.memory_space<vmem>>, vector<1x1x4x16xbf16>
    %3 = vector.shape_cast %2 : vector<1x1x4x16xbf16> to vector<4x16xbf16>
    %c0_6 = arith.constant 0 : index
    %c0_7 = arith.constant 0 : index
    %c0_8 = arith.constant 0 : index
    %c0_9 = arith.constant 0 : index
    %4 = vector.load %arg4[%c0_6, %c0_7, %c0_8, %c0_9] : memref<1x1x4x16xbf16, #tpu.memory_space<vmem>>, vector<1x1x4x16xbf16>
    %5 = vector.shape_cast %4 : vector<1x1x4x16xbf16> to vector<4x16xbf16>
    %6 = vector.shape_cast %3 : vector<4x16xbf16> to vector<4x1x16xbf16>
    %7 = vector.shape_cast %1 : vector<4x256xbf16> to vector<4x16x16xbf16>
    %8 = vector.shape_cast %5 : vector<4x16xbf16> to vector<4x1x16xbf16>
    %9 = tpu.concatenate %6, %7, %8 in 1 : vector<4x1x16xbf16>, vector<4x16x16xbf16>, vector<4x1x16xbf16> -> vector<4x18x16xbf16>
    %cst = arith.constant 0.000000e+00 : bf16
    %10 = vector.broadcast %cst : bf16 to vector<4x18x1xbf16>
    %11 = tpu.concatenate %10, %9, %10 in 2 : vector<4x18x1xbf16>, vector<4x18x16xbf16>, vector<4x18x1xbf16> -> vector<4x18x18xbf16>
    %12 = vector.extract_strided_slice %11 {offsets = [0, 0, 0], sizes = [4, 16, 16], strides = [1, 1, 1]} : vector<4x18x18xbf16> to vector<4x16x16xbf16>
    %13 = vector.shape_cast %12 : vector<4x16x16xbf16> to vector<4x256xbf16>
    %14 = vector.extract_strided_slice %11 {offsets = [0, 0, 1], sizes = [4, 16, 16], strides = [1, 1, 1]} : vector<4x18x18xbf16> to vector<4x16x16xbf16>
    %15 = vector.shape_cast %14 : vector<4x16x16xbf16> to vector<4x256xbf16>
    %16 = vector.extract_strided_slice %11 {offsets = [0, 0, 2], sizes = [4, 16, 16], strides = [1, 1, 1]} : vector<4x18x18xbf16> to vector<4x16x16xbf16>
    %17 = vector.shape_cast %16 : vector<4x16x16xbf16> to vector<4x256xbf16>
    %18 = vector.extract_strided_slice %11 {offsets = [0, 1, 0], sizes = [4, 16, 16], strides = [1, 1, 1]} : vector<4x18x18xbf16> to vector<4x16x16xbf16>
    %19 = vector.shape_cast %18 : vector<4x16x16xbf16> to vector<4x256xbf16>
    %20 = vector.extract_strided_slice %11 {offsets = [0, 1, 1], sizes = [4, 16, 16], strides = [1, 1, 1]} : vector<4x18x18xbf16> to vector<4x16x16xbf16>
    %21 = vector.shape_cast %20 : vector<4x16x16xbf16> to vector<4x256xbf16>
    %22 = vector.extract_strided_slice %11 {offsets = [0, 1, 2], sizes = [4, 16, 16], strides = [1, 1, 1]} : vector<4x18x18xbf16> to vector<4x16x16xbf16>
    %23 = vector.shape_cast %22 : vector<4x16x16xbf16> to vector<4x256xbf16>
    %24 = vector.extract_strided_slice %11 {offsets = [0, 2, 0], sizes = [4, 16, 16], strides = [1, 1, 1]} : vector<4x18x18xbf16> to vector<4x16x16xbf16>
    %25 = vector.shape_cast %24 : vector<4x16x16xbf16> to vector<4x256xbf16>
    %26 = vector.extract_strided_slice %11 {offsets = [0, 2, 1], sizes = [4, 16, 16], strides = [1, 1, 1]} : vector<4x18x18xbf16> to vector<4x16x16xbf16>
    %27 = vector.shape_cast %26 : vector<4x16x16xbf16> to vector<4x256xbf16>
    %28 = vector.extract_strided_slice %11 {offsets = [0, 2, 2], sizes = [4, 16, 16], strides = [1, 1, 1]} : vector<4x18x18xbf16> to vector<4x16x16xbf16>
    %29 = vector.shape_cast %28 : vector<4x16x16xbf16> to vector<4x256xbf16>
    %30 = tpu.concatenate %13, %15, %17, %19, %21, %23, %25, %27, %29 in 0 : vector<4x256xbf16>, vector<4x256xbf16>, vector<4x256xbf16>, vector<4x256xbf16>, vector<4x256xbf16>, vector<4x256xbf16>, vector<4x256xbf16>, vector<4x256xbf16>, vector<4x256xbf16> -> vector<36x256xbf16>
    %c0_10 = arith.constant 0 : index
    %c0_11 = arith.constant 0 : index
    %c0_12 = arith.constant 0 : index
    %31 = vector.load %arg5[%c0_10, %c0_11, %c0_12] : memref<1x4x256xbf16, #tpu.memory_space<vmem>>, vector<1x4x256xbf16>
    %32 = vector.shape_cast %31 : vector<1x4x256xbf16> to vector<4x256xbf16>
    %c0_13 = arith.constant 0 : index
    %c0_14 = arith.constant 0 : index
    %c0_15 = arith.constant 0 : index
    %c0_16 = arith.constant 0 : index
    %33 = vector.load %arg6[%c0_13, %c0_14, %c0_15, %c0_16] : memref<1x1x4x16xbf16, #tpu.memory_space<vmem>>, vector<1x1x4x16xbf16>
    %34 = vector.shape_cast %33 : vector<1x1x4x16xbf16> to vector<4x16xbf16>
    %c0_17 = arith.constant 0 : index
    %c0_18 = arith.constant 0 : index
    %c0_19 = arith.constant 0 : index
    %c0_20 = arith.constant 0 : index
    %35 = vector.load %arg7[%c0_17, %c0_18, %c0_19, %c0_20] : memref<1x1x4x16xbf16, #tpu.memory_space<vmem>>, vector<1x1x4x16xbf16>
    %36 = vector.shape_cast %35 : vector<1x1x4x16xbf16> to vector<4x16xbf16>
    %37 = vector.shape_cast %34 : vector<4x16xbf16> to vector<4x1x16xbf16>
    %38 = vector.shape_cast %32 : vector<4x256xbf16> to vector<4x16x16xbf16>
    %39 = vector.shape_cast %36 : vector<4x16xbf16> to vector<4x1x16xbf16>
    %40 = tpu.concatenate %37, %38, %39 in 1 : vector<4x1x16xbf16>, vector<4x16x16xbf16>, vector<4x1x16xbf16> -> vector<4x18x16xbf16>
    %cst_21 = arith.constant 0.000000e+00 : bf16
    %41 = vector.broadcast %cst_21 : bf16 to vector<4x18x1xbf16>
    %42 = tpu.concatenate %41, %40, %41 in 2 : vector<4x18x1xbf16>, vector<4x18x16xbf16>, vector<4x18x1xbf16> -> vector<4x18x18xbf16>
    %43 = vector.extract_strided_slice %42 {offsets = [0, 0, 0], sizes = [4, 16, 16], strides = [1, 1, 1]} : vector<4x18x18xbf16> to vector<4x16x16xbf16>
    %44 = vector.shape_cast %43 : vector<4x16x16xbf16> to vector<4x256xbf16>
    %45 = vector.extract_strided_slice %42 {offsets = [0, 0, 1], sizes = [4, 16, 16], strides = [1, 1, 1]} : vector<4x18x18xbf16> to vector<4x16x16xbf16>
    %46 = vector.shape_cast %45 : vector<4x16x16xbf16> to vector<4x256xbf16>
    %47 = vector.extract_strided_slice %42 {offsets = [0, 0, 2], sizes = [4, 16, 16], strides = [1, 1, 1]} : vector<4x18x18xbf16> to vector<4x16x16xbf16>
    %48 = vector.shape_cast %47 : vector<4x16x16xbf16> to vector<4x256xbf16>
    %49 = vector.extract_strided_slice %42 {offsets = [0, 1, 0], sizes = [4, 16, 16], strides = [1, 1, 1]} : vector<4x18x18xbf16> to vector<4x16x16xbf16>
    %50 = vector.shape_cast %49 : vector<4x16x16xbf16> to vector<4x256xbf16>
    %51 = vector.extract_strided_slice %42 {offsets = [0, 1, 1], sizes = [4, 16, 16], strides = [1, 1, 1]} : vector<4x18x18xbf16> to vector<4x16x16xbf16>
    %52 = vector.shape_cast %51 : vector<4x16x16xbf16> to vector<4x256xbf16>
    %53 = vector.extract_strided_slice %42 {offsets = [0, 1, 2], sizes = [4, 16, 16], strides = [1, 1, 1]} : vector<4x18x18xbf16> to vector<4x16x16xbf16>
    %54 = vector.shape_cast %53 : vector<4x16x16xbf16> to vector<4x256xbf16>
    %55 = vector.extract_strided_slice %42 {offsets = [0, 2, 0], sizes = [4, 16, 16], strides = [1, 1, 1]} : vector<4x18x18xbf16> to vector<4x16x16xbf16>
    %56 = vector.shape_cast %55 : vector<4x16x16xbf16> to vector<4x256xbf16>
    %57 = vector.extract_strided_slice %42 {offsets = [0, 2, 1], sizes = [4, 16, 16], strides = [1, 1, 1]} : vector<4x18x18xbf16> to vector<4x16x16xbf16>
    %58 = vector.shape_cast %57 : vector<4x16x16xbf16> to vector<4x256xbf16>
    %59 = vector.extract_strided_slice %42 {offsets = [0, 2, 2], sizes = [4, 16, 16], strides = [1, 1, 1]} : vector<4x18x18xbf16> to vector<4x16x16xbf16>
    %60 = vector.shape_cast %59 : vector<4x16x16xbf16> to vector<4x256xbf16>
    %61 = tpu.concatenate %44, %46, %48, %50, %52, %54, %56, %58, %60 in 0 : vector<4x256xbf16>, vector<4x256xbf16>, vector<4x256xbf16>, vector<4x256xbf16>, vector<4x256xbf16>, vector<4x256xbf16>, vector<4x256xbf16>, vector<4x256xbf16>, vector<4x256xbf16> -> vector<36x256xbf16>
    %62 = tpu.concatenate %30, %61 in 0 : vector<36x256xbf16>, vector<36x256xbf16> -> vector<72x256xbf16>
    %c0_22 = arith.constant 0 : index
    %c0_23 = arith.constant 0 : index
    %63 = vector.load %arg8[%c0_22, %c0_23] : memref<4x72xbf16, #tpu.memory_space<vmem>>, vector<4x72xbf16>
    %cst_24 = arith.constant dense<0.000000e+00> : vector<4x256xf32>
    %64 = tpu.matmul %63, %62, %cst_24 {dimension_numbers = #tpu.dot_dimension_numbers<[1], [0], [0], [1], [0, 0, 1, 1], [], []>} : vector<4x72xbf16>, vector<72x256xbf16>, vector<4x256xf32> -> vector<4x256xf32>
    %65 = arith.truncf %64 : vector<4x256xf32> to vector<4x256xbf16>
    %c0_25 = arith.constant 0 : index
    %c0_26 = arith.constant 0 : index
    %c0_27 = arith.constant 0 : index
    %66 = vector.load %arg9[%c0_25, %c0_26, %c0_27] : memref<1x4x256xbf16, #tpu.memory_space<vmem>>, vector<1x4x256xbf16>
    %67 = vector.shape_cast %66 : vector<1x4x256xbf16> to vector<4x256xbf16>
    %68 = vector.shape_cast %65 : vector<4x256xbf16> to vector<1x4x256xbf16>
    tpu.vector_store %arg9[%c0_25, %c0_26, %c0_27], %68 {strides = array<i32>} : memref<1x4x256xbf16, #tpu.memory_space<vmem>>, vector<1x4x256xbf16>,
    %cst_28 = arith.constant dense<0.000000e+00> : vector<4xf32>
    %69 = vector.multi_reduction <add>, %64, %cst_28 [1] : vector<4x256xf32> to vector<4xf32>
    %70 = vector.shape_cast %69 : vector<4xf32> to vector<4x1xf32>
    %71 = arith.mulf %64, %64 : vector<4x256xf32>
    %cst_29 = arith.constant dense<0.000000e+00> : vector<4xf32>
    %72 = vector.multi_reduction <add>, %71, %cst_29 [1] : vector<4x256xf32> to vector<4xf32>
    %73 = vector.shape_cast %72 : vector<4xf32> to vector<4x1xf32>
    %74 = tpu.concatenate %70, %73 in 1 : vector<4x1xf32>, vector<4x1xf32> -> vector<4x2xf32>
    %75 = tpu.transpose %74, [1, 0] : vector<4x2xf32> -> vector<2x4xf32>
    %c0_30 = arith.constant 0 : index
    %c0_31 = arith.constant 0 : index
    %c0_32 = arith.constant 0 : index
    %c0_33 = arith.constant 0 : index
    %76 = vector.load %arg10[%c0_30, %c0_31, %c0_32, %c0_33] : memref<1x1x2x4xf32, #tpu.memory_space<vmem>>, vector<1x1x2x4xf32>
    %77 = vector.shape_cast %76 : vector<1x1x2x4xf32> to vector<2x4xf32>
    %78 = vector.shape_cast %75 : vector<2x4xf32> to vector<1x1x2x4xf32>
    tpu.vector_store %arg10[%c0_30, %c0_31, %c0_32, %c0_33], %78 {strides = array<i32>} : memref<1x1x2x4xf32, #tpu.memory_space<vmem>>, vector<1x1x2x4xf32>,
    return
  }
  func.func @transform_0(%arg0: i32, %arg1: i32) -> (i32, i32, i32) {
    %c0_i32 = arith.constant 0 : i32
    %c0_i32_0 = arith.constant 0 : i32
    return %arg0, %c0_i32, %arg1 : i32, i32, i32
  }
  func.func @transform_1(%arg0: i32, %arg1: i32) -> (i32, i32, i32, i32) {
    %c0_i32 = arith.constant 0 : i32
    %c0_i32_0 = arith.constant 0 : i32
    %c0_i32_1 = arith.constant 0 : i32
    return %arg0, %arg1, %c0_i32, %c0_i32_0 : i32, i32, i32, i32
  }
  func.func @transform_2(%arg0: i32, %arg1: i32) -> (i32, i32, i32, i32) {
    %c0_i32 = arith.constant 0 : i32
    %c0_i32_0 = arith.constant 0 : i32
    %c0_i32_1 = arith.constant 0 : i32
    return %arg0, %arg1, %c0_i32, %c0_i32_0 : i32, i32, i32, i32
  }
  func.func @transform_3(%arg0: i32, %arg1: i32) -> (i32, i32, i32) {
    %c0_i32 = arith.constant 0 : i32
    %c0_i32_0 = arith.constant 0 : i32
    return %arg0, %c0_i32, %arg1 : i32, i32, i32
  }
  func.func @transform_4(%arg0: i32, %arg1: i32) -> (i32, i32, i32, i32) {
    %c0_i32 = arith.constant 0 : i32
    %c0_i32_0 = arith.constant 0 : i32
    %c0_i32_1 = arith.constant 0 : i32
    return %arg0, %arg1, %c0_i32, %c0_i32_0 : i32, i32, i32, i32
  }
  func.func @transform_5(%arg0: i32, %arg1: i32) -> (i32, i32, i32, i32) {
    %c0_i32 = arith.constant 0 : i32
    %c0_i32_0 = arith.constant 0 : i32
    %c0_i32_1 = arith.constant 0 : i32
    return %arg0, %arg1, %c0_i32, %c0_i32_0 : i32, i32, i32, i32
  }
  func.func @transform_6(%arg0: i32, %arg1: i32) -> (i32, i32) {
    %c0_i32 = arith.constant 0 : i32
    %c0_i32_0 = arith.constant 0 : i32
    %c0_i32_1 = arith.constant 0 : i32
    return %c0_i32, %c0_i32_0 : i32, i32
  }
  func.func @transform_7(%arg0: i32, %arg1: i32) -> (i32, i32, i32) {
    %c0_i32 = arith.constant 0 : i32
    %c0_i32_0 = arith.constant 0 : i32
    return %arg0, %c0_i32, %arg1 : i32, i32, i32
  }
  func.func @transform_8(%arg0: i32, %arg1: i32) -> (i32, i32, i32, i32) {
    %c0_i32 = arith.constant 0 : i32
    %c0_i32_0 = arith.constant 0 : i32
    %c0_i32_1 = arith.constant 0 : i32
    return %arg0, %arg1, %c0_i32, %c0_i32_0 : i32, i32, i32, i32
  }
}

module attributes {stable_mosaic.version = 11 : i64} {
  func.func @_bn_relu_kernel(%arg0: i32, %arg1: i32, %arg2: memref<1x4x256xbf16, #tpu.memory_space<vmem>>, %arg3: memref<4x1xf32, #tpu.memory_space<vmem>>, %arg4: memref<4x1xf32, #tpu.memory_space<vmem>>, %arg5: memref<1x4x256xf32, #tpu.memory_space<vmem>>) attributes {dimension_semantics = [#tpu.dimension_semantics<parallel>, #tpu.dimension_semantics<parallel>], iteration_bounds = array<i64: 2, 1>, scalar_prefetch = 0 : i64, scratch_operands = 0 : i64, tpu.core_type = #tpu.core_type<tc>, window_params = [{transform_indices = @transform_0, window_bounds = array<i64: 1, 4, 256>}, {pipeline_mode = #tpu.pipeline_mode<synchronous>, transform_indices = @transform_1, window_bounds = array<i64: 4, 1>}, {pipeline_mode = #tpu.pipeline_mode<synchronous>, transform_indices = @transform_2, window_bounds = array<i64: 4, 1>}, {transform_indices = @transform_3, window_bounds = array<i64: 1, 4, 256>}]} {
    %c0 = arith.constant 0 : index
    %c0_0 = arith.constant 0 : index
    %c0_1 = arith.constant 0 : index
    %0 = vector.load %arg2[%c0, %c0_0, %c0_1] : memref<1x4x256xbf16, #tpu.memory_space<vmem>>, vector<1x4x256xbf16>
    %1 = vector.shape_cast %0 : vector<1x4x256xbf16> to vector<4x256xbf16>
    %2 = arith.extf %1 : vector<4x256xbf16> to vector<4x256xf32>
    %c0_2 = arith.constant 0 : index
    %c0_3 = arith.constant 0 : index
    %3 = vector.load %arg3[%c0_2, %c0_3] : memref<4x1xf32, #tpu.memory_space<vmem>>, vector<4x1xf32>
    %4 = vector.broadcast %3 : vector<4x1xf32> to vector<4x256xf32>
    %5 = arith.mulf %2, %4 : vector<4x256xf32>
    %c0_4 = arith.constant 0 : index
    %c0_5 = arith.constant 0 : index
    %6 = vector.load %arg4[%c0_4, %c0_5] : memref<4x1xf32, #tpu.memory_space<vmem>>, vector<4x1xf32>
    %7 = vector.broadcast %6 : vector<4x1xf32> to vector<4x256xf32>
    %8 = arith.addf %5, %7 : vector<4x256xf32>
    %cst = arith.constant 0.000000e+00 : f32
    %9 = vector.broadcast %cst : f32 to vector<4x256xf32>
    %10 = arith.maximumf %8, %9 : vector<4x256xf32>
    %c0_6 = arith.constant 0 : index
    %c0_7 = arith.constant 0 : index
    %c0_8 = arith.constant 0 : index
    %11 = vector.load %arg5[%c0_6, %c0_7, %c0_8] : memref<1x4x256xf32, #tpu.memory_space<vmem>>, vector<1x4x256xf32>
    %12 = vector.shape_cast %11 : vector<1x4x256xf32> to vector<4x256xf32>
    %13 = vector.shape_cast %10 : vector<4x256xf32> to vector<1x4x256xf32>
    tpu.vector_store %arg5[%c0_6, %c0_7, %c0_8], %13 {strides = array<i32>} : memref<1x4x256xf32, #tpu.memory_space<vmem>>, vector<1x4x256xf32>,
    return
  }
  func.func @transform_0(%arg0: i32, %arg1: i32) -> (i32, i32, i32) {
    %c0_i32 = arith.constant 0 : i32
    %c0_i32_0 = arith.constant 0 : i32
    return %arg0, %c0_i32, %arg1 : i32, i32, i32
  }
  func.func @transform_1(%arg0: i32, %arg1: i32) -> (i32, i32) {
    %c0_i32 = arith.constant 0 : i32
    %c0_i32_0 = arith.constant 0 : i32
    %c0_i32_1 = arith.constant 0 : i32
    return %c0_i32, %c0_i32_0 : i32, i32
  }
  func.func @transform_2(%arg0: i32, %arg1: i32) -> (i32, i32) {
    %c0_i32 = arith.constant 0 : i32
    %c0_i32_0 = arith.constant 0 : i32
    %c0_i32_1 = arith.constant 0 : i32
    return %c0_i32, %c0_i32_0 : i32, i32
  }
  func.func @transform_3(%arg0: i32, %arg1: i32) -> (i32, i32, i32) {
    %c0_i32 = arith.constant 0 : i32
    %c0_i32_0 = arith.constant 0 : i32
    return %arg0, %c0_i32, %arg1 : i32, i32, i32
  }
}

module attributes {stable_mosaic.version = 11 : i64} {
  func.func @_bn_relu_conv2_kernel(%arg0: i32, %arg1: i32, %arg2: memref<1x4x256xbf16, #tpu.memory_space<vmem>>, %arg3: memref<1x1x4x16xbf16, #tpu.memory_space<vmem>>, %arg4: memref<1x1x4x16xbf16, #tpu.memory_space<vmem>>, %arg5: memref<4x36xbf16, #tpu.memory_space<vmem>>, %arg6: memref<4x1xf32, #tpu.memory_space<vmem>>, %arg7: memref<4x1xf32, #tpu.memory_space<vmem>>, %arg8: memref<1x4x256xbf16, #tpu.memory_space<vmem>>, %arg9: memref<1x1x2x4xf32, #tpu.memory_space<vmem>>) attributes {dimension_semantics = [#tpu.dimension_semantics<parallel>, #tpu.dimension_semantics<parallel>], iteration_bounds = array<i64: 2, 1>, scalar_prefetch = 0 : i64, scratch_operands = 0 : i64, tpu.core_type = #tpu.core_type<tc>, window_params = [{transform_indices = @transform_0, window_bounds = array<i64: 1, 4, 256>}, {transform_indices = @transform_1, window_bounds = array<i64: 1, 1, 4, 16>}, {transform_indices = @transform_2, window_bounds = array<i64: 1, 1, 4, 16>}, {pipeline_mode = #tpu.pipeline_mode<synchronous>, transform_indices = @transform_3, window_bounds = array<i64: 4, 36>}, {pipeline_mode = #tpu.pipeline_mode<synchronous>, transform_indices = @transform_4, window_bounds = array<i64: 4, 1>}, {pipeline_mode = #tpu.pipeline_mode<synchronous>, transform_indices = @transform_5, window_bounds = array<i64: 4, 1>}, {transform_indices = @transform_6, window_bounds = array<i64: 1, 4, 256>}, {transform_indices = @transform_7, window_bounds = array<i64: 1, 1, 2, 4>}]} {
    %c0 = arith.constant 0 : index
    %c0_0 = arith.constant 0 : index
    %0 = vector.load %arg6[%c0, %c0_0] : memref<4x1xf32, #tpu.memory_space<vmem>>, vector<4x1xf32>
    %c0_1 = arith.constant 0 : index
    %c0_2 = arith.constant 0 : index
    %1 = vector.load %arg7[%c0_1, %c0_2] : memref<4x1xf32, #tpu.memory_space<vmem>>, vector<4x1xf32>
    %c0_3 = arith.constant 0 : index
    %c0_4 = arith.constant 0 : index
    %c0_5 = arith.constant 0 : index
    %2 = vector.load %arg2[%c0_3, %c0_4, %c0_5] : memref<1x4x256xbf16, #tpu.memory_space<vmem>>, vector<1x4x256xbf16>
    %3 = vector.shape_cast %2 : vector<1x4x256xbf16> to vector<4x256xbf16>
    %4 = arith.extf %3 : vector<4x256xbf16> to vector<4x256xf32>
    %5 = vector.broadcast %0 : vector<4x1xf32> to vector<4x256xf32>
    %6 = arith.mulf %4, %5 : vector<4x256xf32>
    %7 = vector.broadcast %1 : vector<4x1xf32> to vector<4x256xf32>
    %8 = arith.addf %6, %7 : vector<4x256xf32>
    %cst = arith.constant 0.000000e+00 : f32
    %9 = vector.broadcast %cst : f32 to vector<4x256xf32>
    %10 = arith.maximumf %8, %9 : vector<4x256xf32>
    %11 = arith.truncf %10 : vector<4x256xf32> to vector<4x256xbf16>
    %c0_6 = arith.constant 0 : index
    %c0_7 = arith.constant 0 : index
    %c0_8 = arith.constant 0 : index
    %c0_9 = arith.constant 0 : index
    %12 = vector.load %arg3[%c0_6, %c0_7, %c0_8, %c0_9] : memref<1x1x4x16xbf16, #tpu.memory_space<vmem>>, vector<1x1x4x16xbf16>
    %13 = vector.shape_cast %12 : vector<1x1x4x16xbf16> to vector<4x16xbf16>
    %c0_10 = arith.constant 0 : index
    %c0_11 = arith.constant 0 : index
    %c0_12 = arith.constant 0 : index
    %c0_13 = arith.constant 0 : index
    %14 = vector.load %arg4[%c0_10, %c0_11, %c0_12, %c0_13] : memref<1x1x4x16xbf16, #tpu.memory_space<vmem>>, vector<1x1x4x16xbf16>
    %15 = vector.shape_cast %14 : vector<1x1x4x16xbf16> to vector<4x16xbf16>
    %16 = vector.shape_cast %13 : vector<4x16xbf16> to vector<4x1x16xbf16>
    %17 = vector.shape_cast %11 : vector<4x256xbf16> to vector<4x16x16xbf16>
    %18 = vector.shape_cast %15 : vector<4x16xbf16> to vector<4x1x16xbf16>
    %19 = tpu.concatenate %16, %17, %18 in 1 : vector<4x1x16xbf16>, vector<4x16x16xbf16>, vector<4x1x16xbf16> -> vector<4x18x16xbf16>
    %cst_14 = arith.constant 0.000000e+00 : bf16
    %20 = vector.broadcast %cst_14 : bf16 to vector<4x18x1xbf16>
    %21 = tpu.concatenate %20, %19, %20 in 2 : vector<4x18x1xbf16>, vector<4x18x16xbf16>, vector<4x18x1xbf16> -> vector<4x18x18xbf16>
    %22 = vector.extract_strided_slice %21 {offsets = [0, 0, 0], sizes = [4, 16, 16], strides = [1, 1, 1]} : vector<4x18x18xbf16> to vector<4x16x16xbf16>
    %23 = vector.shape_cast %22 : vector<4x16x16xbf16> to vector<4x256xbf16>
    %24 = vector.extract_strided_slice %21 {offsets = [0, 0, 1], sizes = [4, 16, 16], strides = [1, 1, 1]} : vector<4x18x18xbf16> to vector<4x16x16xbf16>
    %25 = vector.shape_cast %24 : vector<4x16x16xbf16> to vector<4x256xbf16>
    %26 = vector.extract_strided_slice %21 {offsets = [0, 0, 2], sizes = [4, 16, 16], strides = [1, 1, 1]} : vector<4x18x18xbf16> to vector<4x16x16xbf16>
    %27 = vector.shape_cast %26 : vector<4x16x16xbf16> to vector<4x256xbf16>
    %28 = vector.extract_strided_slice %21 {offsets = [0, 1, 0], sizes = [4, 16, 16], strides = [1, 1, 1]} : vector<4x18x18xbf16> to vector<4x16x16xbf16>
    %29 = vector.shape_cast %28 : vector<4x16x16xbf16> to vector<4x256xbf16>
    %30 = vector.extract_strided_slice %21 {offsets = [0, 1, 1], sizes = [4, 16, 16], strides = [1, 1, 1]} : vector<4x18x18xbf16> to vector<4x16x16xbf16>
    %31 = vector.shape_cast %30 : vector<4x16x16xbf16> to vector<4x256xbf16>
    %32 = vector.extract_strided_slice %21 {offsets = [0, 1, 2], sizes = [4, 16, 16], strides = [1, 1, 1]} : vector<4x18x18xbf16> to vector<4x16x16xbf16>
    %33 = vector.shape_cast %32 : vector<4x16x16xbf16> to vector<4x256xbf16>
    %34 = vector.extract_strided_slice %21 {offsets = [0, 2, 0], sizes = [4, 16, 16], strides = [1, 1, 1]} : vector<4x18x18xbf16> to vector<4x16x16xbf16>
    %35 = vector.shape_cast %34 : vector<4x16x16xbf16> to vector<4x256xbf16>
    %36 = vector.extract_strided_slice %21 {offsets = [0, 2, 1], sizes = [4, 16, 16], strides = [1, 1, 1]} : vector<4x18x18xbf16> to vector<4x16x16xbf16>
    %37 = vector.shape_cast %36 : vector<4x16x16xbf16> to vector<4x256xbf16>
    %38 = vector.extract_strided_slice %21 {offsets = [0, 2, 2], sizes = [4, 16, 16], strides = [1, 1, 1]} : vector<4x18x18xbf16> to vector<4x16x16xbf16>
    %39 = vector.shape_cast %38 : vector<4x16x16xbf16> to vector<4x256xbf16>
    %40 = tpu.concatenate %23, %25, %27, %29, %31, %33, %35, %37, %39 in 0 : vector<4x256xbf16>, vector<4x256xbf16>, vector<4x256xbf16>, vector<4x256xbf16>, vector<4x256xbf16>, vector<4x256xbf16>, vector<4x256xbf16>, vector<4x256xbf16>, vector<4x256xbf16> -> vector<36x256xbf16>
    %c0_15 = arith.constant 0 : index
    %c0_16 = arith.constant 0 : index
    %41 = vector.load %arg5[%c0_15, %c0_16] : memref<4x36xbf16, #tpu.memory_space<vmem>>, vector<4x36xbf16>
    %cst_17 = arith.constant dense<0.000000e+00> : vector<4x256xf32>
    %42 = tpu.matmul %41, %40, %cst_17 {dimension_numbers = #tpu.dot_dimension_numbers<[1], [0], [0], [1], [0, 0, 1, 1], [], []>} : vector<4x36xbf16>, vector<36x256xbf16>, vector<4x256xf32> -> vector<4x256xf32>
    %43 = arith.truncf %42 : vector<4x256xf32> to vector<4x256xbf16>
    %c0_18 = arith.constant 0 : index
    %c0_19 = arith.constant 0 : index
    %c0_20 = arith.constant 0 : index
    %44 = vector.load %arg8[%c0_18, %c0_19, %c0_20] : memref<1x4x256xbf16, #tpu.memory_space<vmem>>, vector<1x4x256xbf16>
    %45 = vector.shape_cast %44 : vector<1x4x256xbf16> to vector<4x256xbf16>
    %46 = vector.shape_cast %43 : vector<4x256xbf16> to vector<1x4x256xbf16>
    tpu.vector_store %arg8[%c0_18, %c0_19, %c0_20], %46 {strides = array<i32>} : memref<1x4x256xbf16, #tpu.memory_space<vmem>>, vector<1x4x256xbf16>,
    %cst_21 = arith.constant dense<0.000000e+00> : vector<4xf32>
    %47 = vector.multi_reduction <add>, %42, %cst_21 [1] : vector<4x256xf32> to vector<4xf32>
    %48 = vector.shape_cast %47 : vector<4xf32> to vector<4x1xf32>
    %49 = arith.mulf %42, %42 : vector<4x256xf32>
    %cst_22 = arith.constant dense<0.000000e+00> : vector<4xf32>
    %50 = vector.multi_reduction <add>, %49, %cst_22 [1] : vector<4x256xf32> to vector<4xf32>
    %51 = vector.shape_cast %50 : vector<4xf32> to vector<4x1xf32>
    %52 = tpu.concatenate %48, %51 in 1 : vector<4x1xf32>, vector<4x1xf32> -> vector<4x2xf32>
    %53 = tpu.transpose %52, [1, 0] : vector<4x2xf32> -> vector<2x4xf32>
    %c0_23 = arith.constant 0 : index
    %c0_24 = arith.constant 0 : index
    %c0_25 = arith.constant 0 : index
    %c0_26 = arith.constant 0 : index
    %54 = vector.load %arg9[%c0_23, %c0_24, %c0_25, %c0_26] : memref<1x1x2x4xf32, #tpu.memory_space<vmem>>, vector<1x1x2x4xf32>
    %55 = vector.shape_cast %54 : vector<1x1x2x4xf32> to vector<2x4xf32>
    %56 = vector.shape_cast %53 : vector<2x4xf32> to vector<1x1x2x4xf32>
    tpu.vector_store %arg9[%c0_23, %c0_24, %c0_25, %c0_26], %56 {strides = array<i32>} : memref<1x1x2x4xf32, #tpu.memory_space<vmem>>, vector<1x1x2x4xf32>,
    return
  }
  func.func @transform_0(%arg0: i32, %arg1: i32) -> (i32, i32, i32) {
    %c0_i32 = arith.constant 0 : i32
    %c0_i32_0 = arith.constant 0 : i32
    return %arg0, %c0_i32, %arg1 : i32, i32, i32
  }
  func.func @transform_1(%arg0: i32, %arg1: i32) -> (i32, i32, i32, i32) {
    %c0_i32 = arith.constant 0 : i32
    %c0_i32_0 = arith.constant 0 : i32
    %c0_i32_1 = arith.constant 0 : i32
    return %arg0, %arg1, %c0_i32, %c0_i32_0 : i32, i32, i32, i32
  }
  func.func @transform_2(%arg0: i32, %arg1: i32) -> (i32, i32, i32, i32) {
    %c0_i32 = arith.constant 0 : i32
    %c0_i32_0 = arith.constant 0 : i32
    %c0_i32_1 = arith.constant 0 : i32
    return %arg0, %arg1, %c0_i32, %c0_i32_0 : i32, i32, i32, i32
  }
  func.func @transform_3(%arg0: i32, %arg1: i32) -> (i32, i32) {
    %c0_i32 = arith.constant 0 : i32
    %c0_i32_0 = arith.constant 0 : i32
    %c0_i32_1 = arith.constant 0 : i32
    return %c0_i32, %c0_i32_0 : i32, i32
  }
  func.func @transform_4(%arg0: i32, %arg1: i32) -> (i32, i32) {
    %c0_i32 = arith.constant 0 : i32
    %c0_i32_0 = arith.constant 0 : i32
    %c0_i32_1 = arith.constant 0 : i32
    return %c0_i32, %c0_i32_0 : i32, i32
  }
  func.func @transform_5(%arg0: i32, %arg1: i32) -> (i32, i32) {
    %c0_i32 = arith.constant 0 : i32
    %c0_i32_0 = arith.constant 0 : i32
    %c0_i32_1 = arith.constant 0 : i32
    return %c0_i32, %c0_i32_0 : i32, i32
  }
  func.func @transform_6(%arg0: i32, %arg1: i32) -> (i32, i32, i32) {
    %c0_i32 = arith.constant 0 : i32
    %c0_i32_0 = arith.constant 0 : i32
    return %arg0, %c0_i32, %arg1 : i32, i32, i32
  }
  func.func @transform_7(%arg0: i32, %arg1: i32) -> (i32, i32, i32, i32) {
    %c0_i32 = arith.constant 0 : i32
    %c0_i32_0 = arith.constant 0 : i32
    %c0_i32_1 = arith.constant 0 : i32
    return %arg0, %arg1, %c0_i32, %c0_i32_0 : i32, i32, i32, i32
  }
}

</mosaic_0001>

<llo_original>
// kernel: up_forward.5
$region0: #{up_forward.5}
  #allocation0 [shape = 'u32[]', space=smem, size = 0x4, offset = 0x4, fixed_abs, tag = 'smem constant byte address 0x4 - core index']
  #allocation1 [shape = 'u32[144,128]{1,0:T(1,128)}', space=vmem, size = 0x12000, scoped, tag = 'internal scratch']
  %s0 = inlined_call_operand.vmem [shape: bf16[2,4,256], index: 0, kind: input, shape index: {}]
  %s1 = inlined_call_operand.vmem [shape: f32[4,1], index: 1, kind: input, shape index: {}]
  %s2 = inlined_call_operand.vmem [shape: f32[4,1], index: 2, kind: input, shape index: {}]
  %s3 = inlined_call_operand.vmem [shape: f32[2,4,256], index: 3, kind: output, shape index: {}]
  %s4 = sld [smem:[#allocation0]]
  $region45: #{up_forward.5} parent=0
    _
  %s6 = ssub.s32 1, %s4
  %s7 = scalar_select 0, %s6, %s4
  loop: start=0, step=1, limit=4
  $region2: #{up_forward.5} parent=0 // loop_pre_header
    _
  $region3: #{up_forward.5} parent=0 // loop_header
    %s9 = sphi 0, %s13
    %p10 = scmp.ge.s32.totalorder %s9, 4
    %s16 = sphi 0, %s28
    %s17 = sphi 0, %s24
    %s18 = sphi 0, %s16
    %s19 = sphi 0, %s17
    %s20 = sphi 0, %s18
    %s21 = sphi 0, %s19
    %s33 = sphi 0, %s35
    %s36 = sphi 0, %s33
    %s37 = sphi 0, %s36
    %s53 = sphi 0, %s37
    %s57 = sphi 0, %s57
    %s59 = sphi 0, %s57
    %s60 = sphi 0, %s59
    %s74 = sphi 0, %s60
    %s78 = sphi 0, %s78
    %s80 = sphi 0, %s78
    %s81 = sphi 0, %s80
    %s95 = sphi 0, %s81
    %s103 = sphi 0, %s105
    %s106 = sphi 0, %s103
    %s107 = sphi 0, %s106
    %s123 = sphi 0, %s107
  $region4: #{up_forward.5} parent=0 // loop_header_branch
    %12 = sbr.rel (%p10) target = $region8
  $region5: #{up_forward.5} parent=0 // loop_body
    %s14 = ssub.s32 %s9, 1
    %s15 = ssub.s32 %s9, 2
    %s22 = sadd.s32 1, %s17
    %p23 = scmp.ge.s32.totalorder %s22, 1
    %s24 = scalar_select %p23, 0, %s22
    %s25 = sadd.s32 1, %s16
    %s26 = scalar_select %p23, %s25, %s16
    %p27 = scmp.ge.s32.totalorder %s26, 2
    %s28 = scalar_select %p27, 0, %s26
    %s29 = ssub.s32 %s16, %s28
    %s30 = ssub.s32 %s17, %s24
    %s31 = sor.u32 %s29, %s30
    %p32 = scmp.eq.s32.totalorder %s31, 0
    %s34 = sadd.s32 %s33, 1
    %s35 = scalar_select %p32, %s33, %s34
    %p38 = pneg %p32
    %p39 = scmp.eq.s32.totalorder %s9, 1
    %p40 = por %p38, %p39
    %p41 = scmp.ne.s32.totalorder %s33, %s36
    %p42 = scmp.eq.s32.totalorder %s9, 0
    %p43 = por %p41, %p42
    %p44 = scmp.ne.s32.totalorder %s33, %s36
    %p45 = scmp.eq.s32.totalorder %s14, 1
    %p46 = por %p44, %p45
    %p47 = scmp.ne.s32.totalorder %s36, %s37
    %p48 = scmp.eq.s32.totalorder %s14, 0
    %p49 = por %p47, %p48
    %p50 = scmp.ne.s32.totalorder %s36, %s37
    %p51 = scmp.eq.s32.totalorder %s15, 1
    %p52 = por %p50, %p51
    %p54 = scmp.ne.s32.totalorder %s37, %s53
    %p55 = scmp.eq.s32.totalorder %s15, 0
    %p56 = por %p54, %p55
    %s58 = sadd.s32 %s57, 1
    %p61 = scmp.eq.s32.totalorder %s9, 1
    %p62 = scmp.ne.s32.totalorder %s57, %s59
    %p63 = scmp.eq.s32.totalorder %s9, 0
    %p64 = por %p62, %p63
    %p65 = scmp.ne.s32.totalorder %s57, %s59
    %p66 = scmp.eq.s32.totalorder %s14, 1
    %p67 = por %p65, %p66
    %p68 = scmp.ne.s32.totalorder %s59, %s60
    %p69 = scmp.eq.s32.totalorder %s14, 0
    %p70 = por %p68, %p69
    %p71 = scmp.ne.s32.totalorder %s59, %s60
    %p72 = scmp.eq.s32.totalorder %s15, 1
    %p73 = por %p71, %p72
    %p75 = scmp.ne.s32.totalorder %s60, %s74
    %p76 = scmp.eq.s32.totalorder %s15, 0
    %p77 = por %p75, %p76
    %s79 = sadd.s32 %s78, 1
    %p82 = scmp.eq.s32.totalorder %s9, 1
    %p83 = scmp.ne.s32.totalorder %s78, %s80
    %p84 = scmp.eq.s32.totalorder %s9, 0
    %p85 = por %p83, %p84
    %p86 = scmp.ne.s32.totalorder %s78, %s80
    %p87 = scmp.eq.s32.totalorder %s14, 1
    %p88 = por %p86, %p87
    %p89 = scmp.ne.s32.totalorder %s80, %s81
    %p90 = scmp.eq.s32.totalorder %s14, 0
    %p91 = por %p89, %p90
    %p92 = scmp.ne.s32.totalorder %s80, %s81
    %p93 = scmp.eq.s32.totalorder %s15, 1
    %p94 = por %p92, %p93
    %p96 = scmp.ne.s32.totalorder %s81, %s95
    %p97 = scmp.eq.s32.totalorder %s15, 0
    %p98 = por %p96, %p97
    %s99 = ssub.s32 %s16, %s28
    %s100 = ssub.s32 %s17, %s24
    %s101 = sor.u32 %s99, %s100
    %p102 = scmp.eq.s32.totalorder %s101, 0
    %s104 = sadd.s32 %s103, 1
    %s105 = scalar_select %p102, %s103, %s104
    %p108 = pneg %p102
    %p109 = scmp.eq.s32.totalorder %s9, 1
    %p110 = por %p108, %p109
    %p111 = scmp.ne.s32.totalorder %s103, %s106
    %p112 = scmp.eq.s32.totalorder %s9, 0
    %p113 = por %p111, %p112
    %p114 = scmp.ne.s32.totalorder %s103, %s106
    %p115 = scmp.eq.s32.totalorder %s14, 1
    %p116 = por %p114, %p115
    %p117 = scmp.ne.s32.totalorder %s106, %s107
    %p118 = scmp.eq.s32.totalorder %s14, 0
    %p119 = por %p117, %p118
    %p120 = scmp.ne.s32.totalorder %s106, %s107
    %p121 = scmp.eq.s32.totalorder %s15, 1
    %p122 = por %p120, %p121
    %p124 = scmp.ne.s32.totalorder %s107, %s123
    %p125 = scmp.eq.s32.totalorder %s15, 0
    %p126 = por %p124, %p125
    %p127 = scmp.le.s32.totalorder 1, %s9
    %p128 = scmp.lt.s32.totalorder %s9, 3
    %p129 = pnand %p127, %p128
    %p130 = pneg %p129
    // Predicated region
    $region9: #{up_forward.5} parent=5 // pred_check
      _
    $region10: #{up_forward.5} parent=5 // pred_check_branch
      %132 = sbr.rel (%p129) target = $region12
    $region11: #{up_forward.5} parent=5 // pred_region
      %s133 = ssub.s32 %s9, 1
      // Predicated region
      $region13: #{up_forward.5} parent=11 // pred_check
        %p134 = pneg %p70
      $region14: #{up_forward.5} parent=11 // pred_check_branch
        %136 = sbr.rel (%p134) target = $region16
      $region15: #{up_forward.5} parent=11 // pred_region
        _
      $region16: #{up_forward.5} parent=11 // pred_fallthru
        _
      // Predicated region
      $region17: #{up_forward.5} parent=11 // pred_check
        %p137 = pneg %p91
      $region18: #{up_forward.5} parent=11 // pred_check_branch
        %139 = sbr.rel (%p137) target = $region20
      $region19: #{up_forward.5} parent=11 // pred_region
        _
      $region20: #{up_forward.5} parent=11 // pred_fallthru
        _
    $region12: #{up_forward.5} parent=5 // pred_fallthru
      _
    %p140 = scmp.lt.s32.totalorder %s9, 2
    // Predicated region
    $region21: #{up_forward.5} parent=5 // pred_check
      %p141 = pneg %p140
    $region22: #{up_forward.5} parent=5 // pred_check_branch
      %143 = sbr.rel (%p141) target = $region24
    $region23: #{up_forward.5} parent=5 // pred_region
      // Predicated region
      $region25: #{up_forward.5} parent=23 // pred_check
        %p144 = pneg %p43
      $region26: #{up_forward.5} parent=23 // pred_check_branch
        %146 = sbr.rel (%p144) target = $region28
      $region27: #{up_forward.5} parent=23 // pred_region
        %s147 = smul.u32 2, %s17
        %p148 = scmp.lt.s32.totalorder %s16, 1
        %s149 = scalar_select %p148, %s16, 1
        %p150 = scmp.lt.s32.totalorder %s147, 1
        %s151 = scalar_select %p150, %s147, 1
        %s152 = smul.addr %s149, 2
        %s153 = sadd.s32 %s151, %s152
        %s154 = smul.addr %s153, 2
        %s155 = scalar_lea.vmem %s0, %s154
        %s156 = smul.u32 2, %s17
      $region28: #{up_forward.5} parent=23 // pred_fallthru
        _
    $region24: #{up_forward.5} parent=5 // pred_fallthru
      _
    %p157 = scmp.le.s32.totalorder 1, %s9
    %p158 = scmp.lt.s32.totalorder %s9, 3
    %p159 = pnand %p157, %p158
    %p160 = pneg %p159
    // Predicated region
    $region29: #{up_forward.5} parent=5 // pred_check
      _
    $region30: #{up_forward.5} parent=5 // pred_check_branch
      %162 = sbr.rel (%p159) target = $region32
    $region31: #{up_forward.5} parent=5 // pred_region
      %s163 = ssub.s32 %s9, 1
      %s164 = smul.u32 2, %s19
      %p165 = scmp.lt.s32.totalorder %s18, 1
      %s166 = scalar_select %p165, %s18, 1
      %p167 = scmp.lt.s32.totalorder %s164, 1
      %s168 = scalar_select %p167, %s164, 1
      %s169 = smul.addr %s166, 2
      %s170 = sadd.s32 %s168, %s169
      %s171 = smul.addr %s170, 2
      %s172 = scalar_lea.vmem %s0, %s171
      %p173 = pneg %p49
      %p174 = pneg %p46
      %p175 = pneg %p70
      %p176 = pneg %p67
      %p177 = pneg %p91
      %p178 = pneg %p88
      %p179 = pneg %p119
      %p180 = pneg %p116
      %s181 = smul.u32 2, %s19
      %p182 = scmp.lt.s32.totalorder %s18, 1
      %s183 = scalar_select %p182, %s18, 1
      %p184 = scmp.lt.s32.totalorder %s181, 1
      %s185 = scalar_select %p184, %s181, 1
      %s186 = smul.addr %s183, 2
      %s187 = sadd.s32 %s185, %s186
      %s188 = smul.addr %s187, 4
      %s189 = scalar_lea.vmem %s3, %s188
      %s190 = smul.u32 2, %s19
      %p191 = scmp.lt.s32.totalorder %s18, 1
      %s192 = scalar_select %p191, %s18, 1
      %p193 = scmp.lt.s32.totalorder %s190, 1
      %s194 = scalar_select %p193, %s190, 1
      %s195 = smul.addr %s192, 2
      %s196 = sadd.s32 %s194, %s195
      %s197 = smul.addr %s196, 2
      %s198 = scalar_lea.vmem %s0, %s197
      %s199 = smul.u32 2, %s19
      %s200 = smul.u32 2, %s19
      %p201 = scmp.lt.s32.totalorder %s18, 1
      %s202 = scalar_select %p201, %s18, 1
      %p203 = scmp.lt.s32.totalorder %s200, 1
      %s204 = scalar_select %p203, %s200, 1
      %s205 = smul.addr %s202, 2
      %s206 = sadd.s32 %s204, %s205
      %s207 = smul.addr %s206, 4
      %s208 = scalar_lea.vmem %s3, %s207
      %s209 = smul.u32 2, %s19
      %v210 = vld [vmem:[%s198] sm:$0xf]
      %v211 = vunpack.c.l.bf16 %v210
      %v212 = vld [vmem:[%s1] sm:$0xf]
      %214 = vset.pattern.permute.xlu0 0
      %215 = vperm.xlu0 %214, %v212
      %v216 = vpop.permute.xlu0 %215
      %v218 = vunpack.c.l.s4 839922192
      %v219 = vunpack.c.0.s8 %v218
      %v220 = vlaneseq
      %v221 = vshrl.u32 %v220, 7
      %v222 = vsub.s32 %v219, %v221
      %v223 = vrot.slane %v216, %v222
      %v225 = vmul.f32 %v211, %v223
      %v226 = vld [vmem:[%s2] sm:$0xf]
      %228 = vset.pattern.permute.xlu0 0
      %229 = vperm.xlu0 %228, %v226
      %v230 = vpop.permute.xlu0 %229
      %v232 = vunpack.c.l.s4 839922192
      %v233 = vunpack.c.0.s8 %v232
      %v234 = vlaneseq
      %v235 = vshrl.u32 %v234, 7
      %v236 = vsub.s32 %v233, %v235
      %v237 = vrot.slane %v230, %v236
      %v239 = vadd.f32 %v225, %v237
      %v240 = vmax.f32 %v239, 0.0
      %241 = vst [vmem:[%s208] sm:$0xff] %v240
      %s242 = smul.u32 2, %s19
      %p243 = scmp.lt.s32.totalorder %s18, 1
      %s244 = scalar_select %p243, %s18, 1
      %p245 = scmp.lt.s32.totalorder %s242, 1
      %s246 = scalar_select %p245, %s242, 1
      %s247 = smul.addr %s244, 2
      %s248 = sadd.s32 %s246, %s247
      %s249 = smul.addr %s248, 4
      %s250 = scalar_lea.vmem %s3, %s249
      // Predicated region
      $region33: #{up_forward.5} parent=31 // pred_check
        %p251 = pneg %p116
      $region34: #{up_forward.5} parent=31 // pred_check_branch
        %253 = sbr.rel (%p251) target = $region36
      $region35: #{up_forward.5} parent=31 // pred_region
        %s254 = smul.u32 2, %s19
      $region36: #{up_forward.5} parent=31 // pred_fallthru
        _
    $region32: #{up_forward.5} parent=5 // pred_fallthru
      _
    %p255 = scmp.le.s32.totalorder 2, %s9
    // Predicated region
    $region37: #{up_forward.5} parent=5 // pred_check
      %p256 = pneg %p255
    $region38: #{up_forward.5} parent=5 // pred_check_branch
      %258 = sbr.rel (%p256) target = $region40
    $region39: #{up_forward.5} parent=5 // pred_region
      %s259 = ssub.s32 %s9, 2
      // Predicated region
      $region41: #{up_forward.5} parent=39 // pred_check
        %p260 = pneg %p122
      $region42: #{up_forward.5} parent=39 // pred_check_branch
        %262 = sbr.rel (%p260) target = $region44
      $region43: #{up_forward.5} parent=39 // pred_region
        %s263 = smul.u32 2, %s21
        %p264 = scmp.lt.s32.totalorder %s20, 1
        %s265 = scalar_select %p264, %s20, 1
        %p266 = scmp.lt.s32.totalorder %s263, 1
        %s267 = scalar_select %p266, %s263, 1
        %s268 = smul.addr %s265, 2
        %s269 = sadd.s32 %s267, %s268
        %s270 = smul.addr %s269, 4
        %s271 = scalar_lea.vmem %s3, %s270
      $region44: #{up_forward.5} parent=39 // pred_fallthru
        _
    $region40: #{up_forward.5} parent=5 // pred_fallthru
      _
  $region6: #{up_forward.5} parent=0 // loop_footer
    %s13 = sadd.s32 1, %s9
  $region7: #{up_forward.5} parent=0 // loop_footer_branch
    %8 = sbr.rel target = $region3
  $region8: #{up_forward.5} parent=0 // loop_exit
    _

// kernel: up_forward.4
$region0: #{up_forward.4}
  #allocation0 [shape = 'u32[]', space=smem, size = 0x4, offset = 0x4, fixed_abs, tag = 'smem constant byte address 0x4 - core index']
  #allocation1 [shape = 'u32[144,128]{1,0:T(1,128)}', space=vmem, size = 0x12000, scoped, tag = 'internal scratch']
  %s0 = inlined_call_operand.vmem [shape: bf16[2,4,256], index: 0, kind: input, shape index: {}]
  %s1 = inlined_call_operand.vmem [shape: bf16[2,1,4,16], index: 1, kind: input, shape index: {}, may-alias: {1,2}]
  %s2 = inlined_call_operand.vmem [shape: bf16[2,1,4,16], index: 2, kind: input, shape index: {}, may-alias: {1,2}]
  %s3 = inlined_call_operand.vmem [shape: bf16[4,36], index: 3, kind: input, shape index: {}]
  %s4 = inlined_call_operand.vmem [shape: f32[4,1], index: 4, kind: input, shape index: {}]
  %s5 = inlined_call_operand.vmem [shape: f32[4,1], index: 5, kind: input, shape index: {}]
  %s6 = inlined_call_operand.vmem [shape: bf16[2,4,256], index: 6, kind: output, shape index: {0}]
  %s7 = inlined_call_operand.vmem [shape: f32[2,1,2,4], index: 7, kind: output, shape index: {1}]
  %8 = xla_tuple %s6, %s7
  %s9 = sld [smem:[#allocation0]]
  $region65: #{up_forward.4} parent=0
    _
  %s11 = ssub.s32 1, %s9
  %s12 = scalar_select 0, %s11, %s9
  loop: start=0, step=1, limit=4
  $region2: #{up_forward.4} parent=0 // loop_pre_header
    _
  $region3: #{up_forward.4} parent=0 // loop_header
    %s14 = sphi 0, %s18
    %p15 = scmp.ge.s32.totalorder %s14, 4
    %s21 = sphi 0, %s33
    %s22 = sphi 0, %s29
    %s23 = sphi 0, %s21
    %s24 = sphi 0, %s22
    %s25 = sphi 0, %s23
    %s26 = sphi 0, %s24
    %s38 = sphi 0, %s40
    %s41 = sphi 0, %s38
    %s42 = sphi 0, %s41
    %s58 = sphi 0, %s42
    %s66 = sphi 0, %s68
    %s69 = sphi 0, %s66
    %s70 = sphi 0, %s69
    %s86 = sphi 0, %s70
    %s94 = sphi 0, %s96
    %s97 = sphi 0, %s94
    %s98 = sphi 0, %s97
    %s114 = sphi 0, %s98
    %s118 = sphi 0, %s118
    %s120 = sphi 0, %s118
    %s121 = sphi 0, %s120
    %s135 = sphi 0, %s121
    %s139 = sphi 0, %s139
    %s141 = sphi 0, %s139
    %s142 = sphi 0, %s141
    %s156 = sphi 0, %s142
    %s160 = sphi 0, %s160
    %s162 = sphi 0, %s160
    %s163 = sphi 0, %s162
    %s177 = sphi 0, %s163
    %s185 = sphi 0, %s187
    %s188 = sphi 0, %s185
    %s189 = sphi 0, %s188
    %s205 = sphi 0, %s189
    %s213 = sphi 0, %s215
    %s216 = sphi 0, %s213
    %s217 = sphi 0, %s216
    %s233 = sphi 0, %s217
  $region4: #{up_forward.4} parent=0 // loop_header_branch
    %17 = sbr.rel (%p15) target = $region8
  $region5: #{up_forward.4} parent=0 // loop_body
    %s19 = ssub.s32 %s14, 1
    %s20 = ssub.s32 %s14, 2
    %s27 = sadd.s32 1, %s22
    %p28 = scmp.ge.s32.totalorder %s27, 1
    %s29 = scalar_select %p28, 0, %s27
    %s30 = sadd.s32 1, %s21
    %s31 = scalar_select %p28, %s30, %s21
    %p32 = scmp.ge.s32.totalorder %s31, 2
    %s33 = scalar_select %p32, 0, %s31
    %s34 = ssub.s32 %s21, %s33
    %s35 = ssub.s32 %s22, %s29
    %s36 = sor.u32 %s34, %s35
    %p37 = scmp.eq.s32.totalorder %s36, 0
    %s39 = sadd.s32 %s38, 1
    %s40 = scalar_select %p37, %s38, %s39
    %p43 = pneg %p37
    %p44 = scmp.eq.s32.totalorder %s14, 1
    %p45 = por %p43, %p44
    %p46 = scmp.ne.s32.totalorder %s38, %s41
    %p47 = scmp.eq.s32.totalorder %s14, 0
    %p48 = por %p46, %p47
    %p49 = scmp.ne.s32.totalorder %s38, %s41
    %p50 = scmp.eq.s32.totalorder %s19, 1
    %p51 = por %p49, %p50
    %p52 = scmp.ne.s32.totalorder %s41, %s42
    %p53 = scmp.eq.s32.totalorder %s19, 0
    %p54 = por %p52, %p53
    %p55 = scmp.ne.s32.totalorder %s41, %s42
    %p56 = scmp.eq.s32.totalorder %s20, 1
    %p57 = por %p55, %p56
    %p59 = scmp.ne.s32.totalorder %s42, %s58
    %p60 = scmp.eq.s32.totalorder %s20, 0
    %p61 = por %p59, %p60
    %s62 = ssub.s32 %s21, %s33
    %s63 = ssub.s32 %s22, %s29
    %s64 = sor.u32 %s62, %s63
    %p65 = scmp.eq.s32.totalorder %s64, 0
    %s67 = sadd.s32 %s66, 1
    %s68 = scalar_select %p65, %s66, %s67
    %p71 = pneg %p65
    %p72 = scmp.eq.s32.totalorder %s14, 1
    %p73 = por %p71, %p72
    %p74 = scmp.ne.s32.totalorder %s66, %s69
    %p75 = scmp.eq.s32.totalorder %s14, 0
    %p76 = por %p74, %p75
    %p77 = scmp.ne.s32.totalorder %s66, %s69
    %p78 = scmp.eq.s32.totalorder %s19, 1
    %p79 = por %p77, %p78
    %p80 = scmp.ne.s32.totalorder %s69, %s70
    %p81 = scmp.eq.s32.totalorder %s19, 0
    %p82 = por %p80, %p81
    %p83 = scmp.ne.s32.totalorder %s69, %s70
    %p84 = scmp.eq.s32.totalorder %s20, 1
    %p85 = por %p83, %p84
    %p87 = scmp.ne.s32.totalorder %s70, %s86
    %p88 = scmp.eq.s32.totalorder %s20, 0
    %p89 = por %p87, %p88
    %s90 = ssub.s32 %s21, %s33
    %s91 = ssub.s32 %s22, %s29
    %s92 = sor.u32 %s90, %s91
    %p93 = scmp.eq.s32.totalorder %s92, 0
    %s95 = sadd.s32 %s94, 1
    %s96 = scalar_select %p93, %s94, %s95
    %p99 = pneg %p93
    %p100 = scmp.eq.s32.totalorder %s14, 1
    %p101 = por %p99, %p100
    %p102 = scmp.ne.s32.totalorder %s94, %s97
    %p103 = scmp.eq.s32.totalorder %s14, 0
    %p104 = por %p102, %p103
    %p105 = scmp.ne.s32.totalorder %s94, %s97
    %p106 = scmp.eq.s32.totalorder %s19, 1
    %p107 = por %p105, %p106
    %p108 = scmp.ne.s32.totalorder %s97, %s98
    %p109 = scmp.eq.s32.totalorder %s19, 0
    %p110 = por %p108, %p109
    %p111 = scmp.ne.s32.totalorder %s97, %s98
    %p112 = scmp.eq.s32.totalorder %s20, 1
    %p113 = por %p111, %p112
    %p115 = scmp.ne.s32.totalorder %s98, %s114
    %p116 = scmp.eq.s32.totalorder %s20, 0
    %p117 = por %p115, %p116
    %s119 = sadd.s32 %s118, 1
    %p122 = scmp.eq.s32.totalorder %s14, 1
    %p123 = scmp.ne.s32.totalorder %s118, %s120
    %p124 = scmp.eq.s32.totalorder %s14, 0
    %p125 = por %p123, %p124
    %p126 = scmp.ne.s32.totalorder %s118, %s120
    %p127 = scmp.eq.s32.totalorder %s19, 1
    %p128 = por %p126, %p127
    %p129 = scmp.ne.s32.totalorder %s120, %s121
    %p130 = scmp.eq.s32.totalorder %s19, 0
    %p131 = por %p129, %p130
    %p132 = scmp.ne.s32.totalorder %s120, %s121
    %p133 = scmp.eq.s32.totalorder %s20, 1
    %p134 = por %p132, %p133
    %p136 = scmp.ne.s32.totalorder %s121, %s135
    %p137 = scmp.eq.s32.totalorder %s20, 0
    %p138 = por %p136, %p137
    %s140 = sadd.s32 %s139, 1
    %p143 = scmp.eq.s32.totalorder %s14, 1
    %p144 = scmp.ne.s32.totalorder %s139, %s141
    %p145 = scmp.eq.s32.totalorder %s14, 0
    %p146 = por %p144, %p145
    %p147 = scmp.ne.s32.totalorder %s139, %s141
    %p148 = scmp.eq.s32.totalorder %s19, 1
    %p149 = por %p147, %p148
    %p150 = scmp.ne.s32.totalorder %s141, %s142
    %p151 = scmp.eq.s32.totalorder %s19, 0
    %p152 = por %p150, %p151
    %p153 = scmp.ne.s32.totalorder %s141, %s142
    %p154 = scmp.eq.s32.totalorder %s20, 1
    %p155 = por %p153, %p154
    %p157 = scmp.ne.s32.totalorder %s142, %s156
    %p158 = scmp.eq.s32.totalorder %s20, 0
    %p159 = por %p157, %p158
    %s161 = sadd.s32 %s160, 1
    %p164 = scmp.eq.s32.totalorder %s14, 1
    %p165 = scmp.ne.s32.totalorder %s160, %s162
    %p166 = scmp.eq.s32.totalorder %s14, 0
    %p167 = por %p165, %p166
    %p168 = scmp.ne.s32.totalorder %s160, %s162
    %p169 = scmp.eq.s32.totalorder %s19, 1
    %p170 = por %p168, %p169
    %p171 = scmp.ne.s32.totalorder %s162, %s163
    %p172 = scmp.eq.s32.totalorder %s19, 0
    %p173 = por %p171, %p172
    %p174 = scmp.ne.s32.totalorder %s162, %s163
    %p175 = scmp.eq.s32.totalorder %s20, 1
    %p176 = por %p174, %p175
    %p178 = scmp.ne.s32.totalorder %s163, %s177
    %p179 = scmp.eq.s32.totalorder %s20, 0
    %p180 = por %p178, %p179
    %s181 = ssub.s32 %s21, %s33
    %s182 = ssub.s32 %s22, %s29
    %s183 = sor.u32 %s181, %s182
    %p184 = scmp.eq.s32.totalorder %s183, 0
    %s186 = sadd.s32 %s185, 1
    %s187 = scalar_select %p184, %s185, %s186
    %p190 = pneg %p184
    %p191 = scmp.eq.s32.totalorder %s14, 1
    %p192 = por %p190, %p191
    %p193 = scmp.ne.s32.totalorder %s185, %s188
    %p194 = scmp.eq.s32.totalorder %s14, 0
    %p195 = por %p193, %p194
    %p196 = scmp.ne.s32.totalorder %s185, %s188
    %p197 = scmp.eq.s32.totalorder %s19, 1
    %p198 = por %p196, %p197
    %p199 = scmp.ne.s32.totalorder %s188, %s189
    %p200 = scmp.eq.s32.totalorder %s19, 0
    %p201 = por %p199, %p200
    %p202 = scmp.ne.s32.totalorder %s188, %s189
    %p203 = scmp.eq.s32.totalorder %s20, 1
    %p204 = por %p202, %p203
    %p206 = scmp.ne.s32.totalorder %s189, %s205
    %p207 = scmp.eq.s32.totalorder %s20, 0
    %p208 = por %p206, %p207
    %s209 = ssub.s32 %s21, %s33
    %s210 = ssub.s32 %s22, %s29
    %s211 = sor.u32 %s209, %s210
    %p212 = scmp.eq.s32.totalorder %s211, 0
    %s214 = sadd.s32 %s213, 1
    %s215 = scalar_select %p212, %s213, %s214
    %p218 = pneg %p212
    %p219 = scmp.eq.s32.totalorder %s14, 1
    %p220 = por %p218, %p219
    %p221 = scmp.ne.s32.totalorder %s213, %s216
    %p222 = scmp.eq.s32.totalorder %s14, 0
    %p223 = por %p221, %p222
    %p224 = scmp.ne.s32.totalorder %s213, %s216
    %p225 = scmp.eq.s32.totalorder %s19, 1
    %p226 = por %p224, %p225
    %p227 = scmp.ne.s32.totalorder %s216, %s217
    %p228 = scmp.eq.s32.totalorder %s19, 0
    %p229 = por %p227, %p228
    %p230 = scmp.ne.s32.totalorder %s216, %s217
    %p231 = scmp.eq.s32.totalorder %s20, 1
    %p232 = por %p230, %p231
    %p234 = scmp.ne.s32.totalorder %s217, %s233
    %p235 = scmp.eq.s32.totalorder %s20, 0
    %p236 = por %p234, %p235
    %p237 = scmp.le.s32.totalorder 1, %s14
    %p238 = scmp.lt.s32.totalorder %s14, 3
    %p239 = pnand %p237, %p238
    %p240 = pneg %p239
    // Predicated region
    $region9: #{up_forward.4} parent=5 // pred_check
      _
    $region10: #{up_forward.4} parent=5 // pred_check_branch
      %242 = sbr.rel (%p239) target = $region12
    $region11: #{up_forward.4} parent=5 // pred_region
      %s243 = ssub.s32 %s14, 1
      // Predicated region
      $region13: #{up_forward.4} parent=11 // pred_check
        %p244 = pneg %p131
      $region14: #{up_forward.4} parent=11 // pred_check_branch
        %246 = sbr.rel (%p244) target = $region16
      $region15: #{up_forward.4} parent=11 // pred_region
        _
      $region16: #{up_forward.4} parent=11 // pred_fallthru
        _
      // Predicated region
      $region17: #{up_forward.4} parent=11 // pred_check
        %p247 = pneg %p152
      $region18: #{up_forward.4} parent=11 // pred_check_branch
        %249 = sbr.rel (%p247) target = $region20
      $region19: #{up_forward.4} parent=11 // pred_region
        _
      $region20: #{up_forward.4} parent=11 // pred_fallthru
        _
      // Predicated region
      $region21: #{up_forward.4} parent=11 // pred_check
        %p250 = pneg %p173
      $region22: #{up_forward.4} parent=11 // pred_check_branch
        %252 = sbr.rel (%p250) target = $region24
      $region23: #{up_forward.4} parent=11 // pred_region
        _
      $region24: #{up_forward.4} parent=11 // pred_fallthru
        _
    $region12: #{up_forward.4} parent=5 // pred_fallthru
      _
    %p253 = scmp.lt.s32.totalorder %s14, 2
    // Predicated region
    $region25: #{up_forward.4} parent=5 // pred_check
      %p254 = pneg %p253
    $region26: #{up_forward.4} parent=5 // pred_check_branch
      %256 = sbr.rel (%p254) target = $region28
    $region27: #{up_forward.4} parent=5 // pred_region
      // Predicated region
      $region29: #{up_forward.4} parent=27 // pred_check
        %p257 = pneg %p48
      $region30: #{up_forward.4} parent=27 // pred_check_branch
        %259 = sbr.rel (%p257) target = $region32
      $region31: #{up_forward.4} parent=27 // pred_region
        %s260 = smul.u32 2, %s22
        %p261 = scmp.lt.s32.totalorder %s21, 1
        %s262 = scalar_select %p261, %s21, 1
        %p263 = scmp.lt.s32.totalorder %s260, 1
        %s264 = scalar_select %p263, %s260, 1
        %s265 = smul.addr %s262, 2
        %s266 = sadd.s32 %s264, %s265
        %s267 = smul.addr %s266, 2
        %s268 = scalar_lea.vmem %s0, %s267
        %s269 = smul.u32 2, %s22
      $region32: #{up_forward.4} parent=27 // pred_fallthru
        _
      // Predicated region
      $region33: #{up_forward.4} parent=27 // pred_check
        %p270 = pneg %p76
      $region34: #{up_forward.4} parent=27 // pred_check_branch
        %272 = sbr.rel (%p270) target = $region36
      $region35: #{up_forward.4} parent=27 // pred_region
        %p273 = scmp.lt.s32.totalorder %s21, 1
        %s274 = scalar_select %p273, %s21, 1
        %p275 = scmp.lt.s32.totalorder %s22, 0
        %s276 = scalar_select %p275, %s22, 0
        %s277 = sadd.s32 %s276, %s274
        %s278 = smul.addr %s277, 2
        %s279 = scalar_lea.vmem %s1, %s278
      $region36: #{up_forward.4} parent=27 // pred_fallthru
        _
      // Predicated region
      $region37: #{up_forward.4} parent=27 // pred_check
        %p280 = pneg %p104
      $region38: #{up_forward.4} parent=27 // pred_check_branch
        %282 = sbr.rel (%p280) target = $region40
      $region39: #{up_forward.4} parent=27 // pred_region
        %p283 = scmp.lt.s32.totalorder %s21, 1
        %s284 = scalar_select %p283, %s21, 1
        %p285 = scmp.lt.s32.totalorder %s22, 0
        %s286 = scalar_select %p285, %s22, 0
        %s287 = sadd.s32 %s286, %s284
        %s288 = smul.addr %s287, 2
        %s289 = scalar_lea.vmem %s2, %s288
      $region40: #{up_forward.4} parent=27 // pred_fallthru
        _
    $region28: #{up_forward.4} parent=5 // pred_fallthru
      _
    %p290 = scmp.le.s32.totalorder 1, %s14
    %p291 = scmp.lt.s32.totalorder %s14, 3
    %p292 = pnand %p290, %p291
    %p293 = pneg %p292
    // Predicated region
    $region41: #{up_forward.4} parent=5 // pred_check
      _
    $region42: #{up_forward.4} parent=5 // pred_check_branch
      %295 = sbr.rel (%p292) target = $region44
    $region43: #{up_forward.4} parent=5 // pred_region
      %s296 = ssub.s32 %s14, 1
      %s297 = smul.u32 2, %s24
      %p298 = scmp.lt.s32.totalorder %s23, 1
      %s299 = scalar_select %p298, %s23, 1
      %p300 = scmp.lt.s32.totalorder %s297, 1
      %s301 = scalar_select %p300, %s297, 1
      %s302 = smul.addr %s299, 2
      %s303 = sadd.s32 %s301, %s302
      %s304 = smul.addr %s303, 2
      %s305 = scalar_lea.vmem %s0, %s304
      %p306 = pneg %p54
      %p307 = pneg %p51
      %p308 = scmp.lt.s32.totalorder %s23, 1
      %s309 = scalar_select %p308, %s23, 1
      %p310 = scmp.lt.s32.totalorder %s24, 0
      %s311 = scalar_select %p310, %s24, 0
      %s312 = sadd.s32 %s311, %s309
      %s313 = smul.addr %s312, 2
      %s314 = scalar_lea.vmem %s1, %s313
      %p315 = pneg %p82
      %p316 = pneg %p79
      %p317 = scmp.lt.s32.totalorder %s23, 1
      %s318 = scalar_select %p317, %s23, 1
      %p319 = scmp.lt.s32.totalorder %s24, 0
      %s320 = scalar_select %p319, %s24, 0
      %s321 = sadd.s32 %s320, %s318
      %s322 = smul.addr %s321, 2
      %s323 = scalar_lea.vmem %s2, %s322
      %p324 = pneg %p110
      %p325 = pneg %p107
      %p326 = pneg %p131
      %p327 = pneg %p128
      %p328 = pneg %p152
      %p329 = pneg %p149
      %p330 = pneg %p173
      %p331 = pneg %p170
      %p332 = pneg %p201
      %p333 = pneg %p198
      %s334 = smul.u32 2, %s24
      %p335 = scmp.lt.s32.totalorder %s23, 1
      %s336 = scalar_select %p335, %s23, 1
      %p337 = scmp.lt.s32.totalorder %s334, 1
      %s338 = scalar_select %p337, %s334, 1
      %s339 = smul.addr %s336, 2
      %s340 = sadd.s32 %s338, %s339
      %s341 = smul.addr %s340, 2
      %s342 = scalar_lea.vmem %s6, %s341
      %p343 = pneg %p229
      %p344 = pneg %p226
      %p345 = scmp.lt.s32.totalorder %s23, 1
      %s346 = scalar_select %p345, %s23, 1
      %p347 = scmp.lt.s32.totalorder %s24, 0
      %s348 = scalar_select %p347, %s24, 0
      %s349 = sadd.s32 %s348, %s346
      %s350 = smul.addr %s349, 2
      %s351 = scalar_lea.vmem %s7, %s350
      %s352 = smul.u32 2, %s24
      %p353 = scmp.lt.s32.totalorder %s23, 1
      %s354 = scalar_select %p353, %s23, 1
      %p355 = scmp.lt.s32.totalorder %s352, 1
      %s356 = scalar_select %p355, %s352, 1
      %s357 = smul.addr %s354, 2
      %s358 = sadd.s32 %s356, %s357
      %s359 = smul.addr %s358, 2
      %s360 = scalar_lea.vmem %s0, %s359
      %s361 = smul.u32 2, %s24
      %p362 = scmp.lt.s32.totalorder %s23, 1
      %s363 = scalar_select %p362, %s23, 1
      %p364 = scmp.lt.s32.totalorder %s24, 0
      %s365 = scalar_select %p364, %s24, 0
      %s366 = sadd.s32 %s365, %s363
      %s367 = smul.addr %s366, 2
      %s368 = scalar_lea.vmem %s1, %s367
      %p369 = scmp.lt.s32.totalorder %s23, 1
      %s370 = scalar_select %p369, %s23, 1
      %p371 = scmp.lt.s32.totalorder %s24, 0
      %s372 = scalar_select %p371, %s24, 0
      %s373 = sadd.s32 %s372, %s370
      %s374 = smul.addr %s373, 2
      %s375 = scalar_lea.vmem %s2, %s374
      %s376 = smul.u32 2, %s24
      %p377 = scmp.lt.s32.totalorder %s23, 1
      %s378 = scalar_select %p377, %s23, 1
      %p379 = scmp.lt.s32.totalorder %s376, 1
      %s380 = scalar_select %p379, %s376, 1
      %s381 = smul.addr %s378, 2
      %s382 = sadd.s32 %s380, %s381
      %s383 = smul.addr %s382, 2
      %s384 = scalar_lea.vmem %s6, %s383
      %s385 = smul.u32 2, %s24
      %p386 = scmp.lt.s32.totalorder %s23, 1
      %s387 = scalar_select %p386, %s23, 1
      %p388 = scmp.lt.s32.totalorder %s24, 0
      %s389 = scalar_select %p388, %s24, 0
      %s390 = sadd.s32 %s389, %s387
      %s391 = smul.addr %s390, 2
      %s392 = scalar_lea.vmem %s7, %s391
      %v394 = vld [vmem:[%s4] sm:$0xf]
      %v395 = vld [vmem:[%s5] sm:$0xf]
      %v396 = vld [vmem:[%s360] sm:$0xf]
      %v397 = vunpack.c.l.bf16 %v396
      %399 = vset.pattern.permute.xlu0 0
      %400 = vperm.xlu0 %399, %v394
      %v401 = vpop.permute.xlu0 %400
      %v403 = vunpack.c.l.s4 839922192
      %v404 = vunpack.c.0.s8 %v403
      %v405 = vlaneseq
      %v406 = vshrl.u32 %v405, 7
      %v407 = vsub.s32 %v404, %v406
      %v408 = vrot.slane %v401, %v407
      %v410 = vmul.f32 %v397, %v408
      %412 = vset.pattern.permute.xlu0 0
      %413 = vperm.xlu0 %412, %v395
      %v414 = vpop.permute.xlu0 %413
      %v416 = vunpack.c.l.s4 839922192
      %v417 = vunpack.c.0.s8 %v416
      %v418 = vlaneseq
      %v419 = vshrl.u32 %v418, 7
      %v420 = vsub.s32 %v417, %v419
      %v421 = vrot.slane %v414, %v420
      %v423 = vadd.f32 %v410, %v421
      %v424 = vmax.f32 %v423, 0.0
      %v426 = vcombine.high %v424, %v424
      %v428 = vpack.c.bf16 %v424, %v424
      %v429 = vpack.c.bf16 %v426, %v426
      %v430 = vld [vmem:[%s368] sm:$0x3]
      %v431 = vld [vmem:[%s375] sm:$0x3]
      %v434 = vunpack.c.l.s4 1966171168
      %v435 = vunpack.c.0.s8 %v434
      %v436 = vlaneseq
      %v437 = vshrl.u32 %v436, 7
      %v438 = vsub.s32 %v435, %v437
      %v439 = vrot.slane %v430, %v438
      %v440 = vcombine.high %v439, %v439
      %v441 = vunpack.i.l.s16 %v439
      %v442 = vunpack.i.h.s16 %v439
      %v443 = vunpack.i.l.s16 %v440
      %v444 = vunpack.i.h.s16 %v440
      %446 = vrot.lane.b32.xlu0 %v428, 112
      %v447 = vpop.permute.xlu0 %446
      %449 = vrot.lane.b32.xlu0 %v428, 96
      %v450 = vpop.permute.xlu0 %449
      %452 = vrot.lane.b32.xlu0 %v428, 80
      %v453 = vpop.permute.xlu0 %452
      %455 = vrot.lane.b32.xlu0 %v428, 64
      %v456 = vpop.permute.xlu0 %455
      %458 = vrot.lane.b32.xlu0 %v428, 48
      %v459 = vpop.permute.xlu0 %458
      %461 = vrot.lane.b32.xlu0 %v428, 32
      %v462 = vpop.permute.xlu0 %461
      %464 = vrot.lane.b32.xlu0 %v428, 16
      %v465 = vpop.permute.xlu0 %464
      %468 = vrot.lane.b32.xlu0 %v429, 112
      %v469 = vpop.permute.xlu0 %468
      %471 = vrot.lane.b32.xlu0 %v429, 96
      %v472 = vpop.permute.xlu0 %471
      %474 = vrot.lane.b32.xlu0 %v429, 80
      %v475 = vpop.permute.xlu0 %474
      %477 = vrot.lane.b32.xlu0 %v429, 64
      %v478 = vpop.permute.xlu0 %477
      %480 = vrot.lane.b32.xlu0 %v429, 48
      %v481 = vpop.permute.xlu0 %480
      %483 = vrot.lane.b32.xlu0 %v429, 32
      %v484 = vpop.permute.xlu0 %483
      %486 = vrot.lane.b32.xlu0 %v429, 16
      %v487 = vpop.permute.xlu0 %486
      %v489 = vcombine.low %v428, %v456
      %v491 = vunpack.c.l.s4 1983009808
      %v492 = vunpack.c.0.s8 %v491
      %v493 = vlaneseq
      %v494 = vshrl.u32 %v493, 7
      %v495 = vsub.s32 %v492, %v494
      %v496 = vrot.slane %v489, %v495
      %v497 = vcombine.low %v450, %v462
      %v499 = vunpack.c.l.s4 1983009808
      %v500 = vunpack.c.0.s8 %v499
      %v501 = vlaneseq
      %v502 = vshrl.u32 %v501, 7
      %v503 = vsub.s32 %v500, %v502
      %v504 = vrot.slane %v497, %v503
      %v505 = vcombine.low %v429, %v478
      %v507 = vunpack.c.l.s4 1983009808
      %v508 = vunpack.c.0.s8 %v507
      %v509 = vlaneseq
      %v510 = vshrl.u32 %v509, 7
      %v511 = vsub.s32 %v508, %v510
      %v512 = vrot.slane %v505, %v511
      %v513 = vcombine.low %v472, %v484
      %v515 = vunpack.c.l.s4 1983009808
      %v516 = vunpack.c.0.s8 %v515
      %v517 = vlaneseq
      %v518 = vshrl.u32 %v517, 7
      %v519 = vsub.s32 %v516, %v518
      %v520 = vrot.slane %v513, %v519
      %v521 = vcombine.low %v496, %v504
      %v523 = vunpack.c.l.s4 1934713408
      %v524 = vunpack.c.0.s8 %v523
      %v525 = vlaneseq
      %v526 = vshrl.u32 %v525, 7
      %v527 = vsub.s32 %v524, %v526
      %v528 = vrot.slane %v521, %v527
      %v529 = vcombine.low %v512, %v520
      %v531 = vunpack.c.l.s4 1934713408
      %v532 = vunpack.c.0.s8 %v531
      %v533 = vlaneseq
      %v534 = vshrl.u32 %v533, 7
      %v535 = vsub.s32 %v532, %v534
      %v536 = vrot.slane %v529, %v535
      %v537 = vcombine.low %v528, %v536
      %v538 = vcombine.high %v528, %v536
      %v539 = vcombine.low %v447, %v459
      %v541 = vunpack.c.l.s4 1983009808
      %v542 = vunpack.c.0.s8 %v541
      %v543 = vlaneseq
      %v544 = vshrl.u32 %v543, 7
      %v545 = vsub.s32 %v542, %v544
      %v546 = vrot.slane %v539, %v545
      %v547 = vcombine.low %v453, %v465
      %v549 = vunpack.c.l.s4 1983009808
      %v550 = vunpack.c.0.s8 %v549
      %v551 = vlaneseq
      %v552 = vshrl.u32 %v551, 7
      %v553 = vsub.s32 %v550, %v552
      %v554 = vrot.slane %v547, %v553
      %v555 = vcombine.low %v469, %v481
      %v557 = vunpack.c.l.s4 1983009808
      %v558 = vunpack.c.0.s8 %v557
      %v559 = vlaneseq
      %v560 = vshrl.u32 %v559, 7
      %v561 = vsub.s32 %v558, %v560
      %v562 = vrot.slane %v555, %v561
      %v563 = vcombine.low %v475, %v487
      %v565 = vunpack.c.l.s4 1983009808
      %v566 = vunpack.c.0.s8 %v565
      %v567 = vlaneseq
      %v568 = vshrl.u32 %v567, 7
      %v569 = vsub.s32 %v566, %v568
      %v570 = vrot.slane %v563, %v569
      %v571 = vcombine.low %v546, %v554
      %v573 = vunpack.c.l.s4 1934713408
      %v574 = vunpack.c.0.s8 %v573
      %v575 = vlaneseq
      %v576 = vshrl.u32 %v575, 7
      %v577 = vsub.s32 %v574, %v576
      %v578 = vrot.slane %v571, %v577
      %v579 = vcombine.low %v562, %v570
      %v581 = vunpack.c.l.s4 1934713408
      %v582 = vunpack.c.0.s8 %v581
      %v583 = vlaneseq
      %v584 = vshrl.u32 %v583, 7
      %v585 = vsub.s32 %v582, %v584
      %v586 = vrot.slane %v579, %v585
      %v587 = vcombine.low %v578, %v586
      %v588 = vcombine.high %v578, %v586
      %v591 = vpack.i.b16 %v587, %v537
      %v592 = vshrl.u32 %v537, 16
      %v593 = vshrl.u32 %v587, 16
      %v594 = vpack.i.b16 %v593, %v592
      %v597 = vpack.i.b16 %v588, %v538
      %v598 = vshrl.u32 %v538, 16
      %v599 = vshrl.u32 %v588, 16
      %v600 = vpack.i.b16 %v599, %v598
      %v603 = vunpack.c.l.s4 1966171168
      %v604 = vunpack.c.0.s8 %v603
      %v605 = vlaneseq
      %v606 = vshrl.u32 %v605, 7
      %v607 = vsub.s32 %v604, %v606
      %v608 = vrot.slane %v431, %v607
      %v609 = vcombine.high %v608, %v608
      %v610 = vunpack.i.l.s16 %v608
      %v611 = vunpack.i.h.s16 %v608
      %v612 = vunpack.i.l.s16 %v609
      %v613 = vunpack.i.h.s16 %v609
      %v614 = vpack.i.b16 %v441, %v441
      %v615 = vpack.i.b16 %v442, %v442
      %v616 = vpack.i.b16 %v443, %v443
      %v617 = vpack.i.b16 %v444, %v444
      %v618 = vlaneseq
      %v619 = vshrl.u32 %v618, 7
      %v620 = vsub.s32 0, %v619
      %v621 = vrot.slane %v614, %v620
      %v622 = vlaneseq
      %v623 = vshrl.u32 %v622, 7
      %v624 = vsub.s32 0, %v623
      %v625 = vrot.slane %v615, %v624
      %v626 = vlaneseq
      %v627 = vshrl.u32 %v626, 7
      %v628 = vsub.s32 0, %v627
      %v629 = vrot.slane %v616, %v628
      %v630 = vlaneseq
      %v631 = vshrl.u32 %v630, 7
      %v632 = vsub.s32 0, %v631
      %v633 = vrot.slane %v617, %v632
      %v639 = vshrl.u32 %v591, 16
      %v641 = vrot.slane %v639, 7
      %v642 = vshll.u32 %v591, 16
      %v644 = vor.u32 %v641, %v642
      %v646 = vshrl.u32 %v594, 16
      %v648 = vrot.slane %v646, 7
      %v649 = vshll.u32 %v594, 16
      %v651 = vor.u32 %v648, %v649
      %v653 = vshrl.u32 %v597, 16
      %v655 = vrot.slane %v653, 7
      %v656 = vshll.u32 %v597, 16
      %v658 = vor.u32 %v655, %v656
      %v660 = vshrl.u32 %v600, 16
      %v662 = vrot.slane %v660, 7
      %v663 = vshll.u32 %v600, 16
      %v665 = vor.u32 %v662, %v663
      %v674 = vpack.i.b16 %v610, %v610
      %v675 = vpack.i.b16 %v611, %v611
      %v676 = vpack.i.b16 %v612, %v612
      %v677 = vpack.i.b16 %v613, %v613
      %v678 = vlaneseq
      %v679 = vshrl.u32 %v678, 7
      %v680 = vsub.s32 0, %v679
      %v681 = vrot.slane %v674, %v680
      %v682 = vlaneseq
      %v683 = vshrl.u32 %v682, 7
      %v684 = vsub.s32 0, %v683
      %v685 = vrot.slane %v675, %v684
      %v686 = vlaneseq
      %v687 = vshrl.u32 %v686, 7
      %v688 = vsub.s32 0, %v687
      %v689 = vrot.slane %v676, %v688
      %v690 = vlaneseq
      %v691 = vshrl.u32 %v690, 7
      %v692 = vsub.s32 0, %v691
      %v693 = vrot.slane %v677, %v692
      %vm698 = vcmask 1040384
      %vm699 = vsmask.f32 256
      %vm700 = vmand %vm698, %vm699
      %v701 = vsel %vm700, %v621, %v644
      %v702 = vsel %vm700, %v625, %v651
      %v703 = vsel %vm700, %v629, %v658
      %v704 = vsel %vm700, %v633, %v665
      %v705 = vsel %vm700, %v641, %v681
      %v706 = vsel %vm700, %v648, %v685
      %v707 = vsel %vm700, %v655, %v689
      %v708 = vsel %vm700, %v662, %v693
      %717 = vrot.lane.b32.xlu0 %v701, 1
      %v718 = vpop.permute.xlu0 %717
      %719 = vrot.lane.b32.xlu0 %v705, 1
      %v720 = vpop.permute.xlu0 %719
      %721 = vrot.lane.b32.xlu0 %v702, 1
      %v722 = vpop.permute.xlu0 %721
      %723 = vrot.lane.b32.xlu0 %v706, 1
      %v724 = vpop.permute.xlu0 %723
      %725 = vrot.lane.b32.xlu0 %v703, 1
      %v726 = vpop.permute.xlu0 %725
      %727 = vrot.lane.b32.xlu0 %v707, 1
      %v728 = vpop.permute.xlu0 %727
      %729 = vrot.lane.b32.xlu0 %v704, 1
      %v730 = vpop.permute.xlu0 %729
      %731 = vrot.lane.b32.xlu0 %v708, 1
      %v732 = vpop.permute.xlu0 %731
      %vm733 = vcmask 7168
      %v736 = vsel %vm733, 0, %v718
      %v738 = vsel %vm733, 0, %v720
      %v740 = vsel %vm733, 0, %v722
      %v742 = vsel %vm733, 0, %v724
      %v744 = vsel %vm733, 0, %v726
      %v746 = vsel %vm733, 0, %v728
      %v748 = vsel %vm733, 0, %v730
      %v750 = vsel %vm733, 0, %v732
      %vm751 = vcmask 138240
      %v752 = vsel %vm751, %v736, 0
      %v753 = vsel %vm751, %v738, 0
      %v754 = vsel %vm751, %v740, 0
      %v755 = vsel %vm751, %v742, 0
      %v756 = vsel %vm751, %v744, 0
      %v757 = vsel %vm751, %v746, 0
      %v758 = vsel %vm751, %v748, 0
      %v759 = vsel %vm751, %v750, 0
      %v760 = vpack.i.b16 %v754, %v752
      %v762 = vshrl.u32 %v752, 16
      %v763 = vshrl.u32 %v754, 16
      %v764 = vpack.i.b16 %v763, %v762
      %v766 = vpack.i.b16 %v758, %v756
      %v768 = vshrl.u32 %v756, 16
      %v769 = vshrl.u32 %v758, 16
      %v770 = vpack.i.b16 %v769, %v768
      %v772 = vpack.i.b16 0, 0
      %v774 = vshrl.u32 0, 16
      %v775 = vpack.i.b16 %v774, %v774
      %v777 = vcombine.high %v760, %v772
      %v779 = vunpack.c.l.s4 1983009808
      %v780 = vunpack.c.0.s8 %v779
      %v781 = vlaneseq
      %v782 = vshrl.u32 %v781, 7
      %v783 = vsub.s32 %v780, %v782
      %v784 = vrot.slane %v760, %v783
      %v786 = vunpack.c.l.s4 1983009808
      %v787 = vunpack.c.0.s8 %v786
      %v788 = vlaneseq
      %v789 = vshrl.u32 %v788, 7
      %v790 = vsub.s32 %v787, %v789
      %v791 = vrot.slane %v777, %v790
      %v792 = vcombine.high %v766, %v772
      %v794 = vunpack.c.l.s4 1983009808
      %v795 = vunpack.c.0.s8 %v794
      %v796 = vlaneseq
      %v797 = vshrl.u32 %v796, 7
      %v798 = vsub.s32 %v795, %v797
      %v799 = vrot.slane %v766, %v798
      %v801 = vunpack.c.l.s4 1983009808
      %v802 = vunpack.c.0.s8 %v801
      %v803 = vlaneseq
      %v804 = vshrl.u32 %v803, 7
      %v805 = vsub.s32 %v802, %v804
      %v806 = vrot.slane %v792, %v805
      %v807 = vcombine.low %v784, %v799
      %v808 = vcombine.high %v784, %v799
      %v810 = vunpack.c.l.s4 1934713408
      %v811 = vunpack.c.0.s8 %v810
      %v812 = vlaneseq
      %v813 = vshrl.u32 %v812, 7
      %v814 = vsub.s32 %v811, %v813
      %v815 = vrot.slane %v807, %v814
      %v817 = vunpack.c.l.s4 1934713408
      %v818 = vunpack.c.0.s8 %v817
      %v819 = vlaneseq
      %v820 = vshrl.u32 %v819, 7
      %v821 = vsub.s32 %v818, %v820
      %v822 = vrot.slane %v808, %v821
      %v823 = vcombine.low %v791, %v806
      %v824 = vcombine.high %v791, %v806
      %v826 = vunpack.c.l.s4 1934713408
      %v827 = vunpack.c.0.s8 %v826
      %v828 = vlaneseq
      %v829 = vshrl.u32 %v828, 7
      %v830 = vsub.s32 %v827, %v829
      %v831 = vrot.slane %v823, %v830
      %v833 = vunpack.c.l.s4 1934713408
      %v834 = vunpack.c.0.s8 %v833
      %v835 = vlaneseq
      %v836 = vshrl.u32 %v835, 7
      %v837 = vsub.s32 %v834, %v836
      %v838 = vrot.slane %v824, %v837
      %v839 = vcombine.high %v815, 0
      %v840 = vcombine.high %v822, 0
      %v841 = vcombine.high %v831, 0
      %v842 = vcombine.high %v838, 0
      %v843 = vcombine.high %v764, %v775
      %v845 = vunpack.c.l.s4 1983009808
      %v846 = vunpack.c.0.s8 %v845
      %v847 = vlaneseq
      %v848 = vshrl.u32 %v847, 7
      %v849 = vsub.s32 %v846, %v848
      %v850 = vrot.slane %v764, %v849
      %v852 = vunpack.c.l.s4 1983009808
      %v853 = vunpack.c.0.s8 %v852
      %v854 = vlaneseq
      %v855 = vshrl.u32 %v854, 7
      %v856 = vsub.s32 %v853, %v855
      %v857 = vrot.slane %v843, %v856
      %v858 = vcombine.high %v770, %v775
      %v860 = vunpack.c.l.s4 1983009808
      %v861 = vunpack.c.0.s8 %v860
      %v862 = vlaneseq
      %v863 = vshrl.u32 %v862, 7
      %v864 = vsub.s32 %v861, %v863
      %v865 = vrot.slane %v770, %v864
      %v867 = vunpack.c.l.s4 1983009808
      %v868 = vunpack.c.0.s8 %v867
      %v869 = vlaneseq
      %v870 = vshrl.u32 %v869, 7
      %v871 = vsub.s32 %v868, %v870
      %v872 = vrot.slane %v858, %v871
      %v873 = vcombine.low %v850, %v865
      %v874 = vcombine.high %v850, %v865
      %v876 = vunpack.c.l.s4 1934713408
      %v877 = vunpack.c.0.s8 %v876
      %v878 = vlaneseq
      %v879 = vshrl.u32 %v878, 7
      %v880 = vsub.s32 %v877, %v879
      %v881 = vrot.slane %v873, %v880
      %v883 = vunpack.c.l.s4 1934713408
      %v884 = vunpack.c.0.s8 %v883
      %v885 = vlaneseq
      %v886 = vshrl.u32 %v885, 7
      %v887 = vsub.s32 %v884, %v886
      %v888 = vrot.slane %v874, %v887
      %v889 = vcombine.low %v857, %v872
      %v890 = vcombine.high %v857, %v872
      %v892 = vunpack.c.l.s4 1934713408
      %v893 = vunpack.c.0.s8 %v892
      %v894 = vlaneseq
      %v895 = vshrl.u32 %v894, 7
      %v896 = vsub.s32 %v893, %v895
      %v897 = vrot.slane %v889, %v896
      %v899 = vunpack.c.l.s4 1934713408
      %v900 = vunpack.c.0.s8 %v899
      %v901 = vlaneseq
      %v902 = vshrl.u32 %v901, 7
      %v903 = vsub.s32 %v900, %v902
      %v904 = vrot.slane %v890, %v903
      %v905 = vcombine.high %v881, 0
      %v906 = vcombine.high %v888, 0
      %v907 = vcombine.high %v897, 0
      %v908 = vcombine.high %v904, 0
      %910 = vrot.lane.b32.xlu0 %v881, 16
      %v911 = vpop.permute.xlu0 %910
      %913 = vrot.lane.b32.xlu0 %v839, 32
      %v914 = vpop.permute.xlu0 %913
      %916 = vrot.lane.b32.xlu0 %v905, 48
      %v917 = vpop.permute.xlu0 %916
      %919 = vrot.lane.b32.xlu0 %v822, 64
      %v920 = vpop.permute.xlu0 %919
      %922 = vrot.lane.b32.xlu0 %v888, 80
      %v923 = vpop.permute.xlu0 %922
      %925 = vrot.lane.b32.xlu0 %v840, 96
      %v926 = vpop.permute.xlu0 %925
      %928 = vrot.lane.b32.xlu0 %v906, 112
      %v929 = vpop.permute.xlu0 %928
      %931 = vrot.lane.b32.xlu0 %v897, 16
      %v932 = vpop.permute.xlu0 %931
      %934 = vrot.lane.b32.xlu0 %v841, 32
      %v935 = vpop.permute.xlu0 %934
      %937 = vrot.lane.b32.xlu0 %v907, 48
      %v938 = vpop.permute.xlu0 %937
      %940 = vrot.lane.b32.xlu0 %v838, 64
      %v941 = vpop.permute.xlu0 %940
      %943 = vrot.lane.b32.xlu0 %v904, 80
      %v944 = vpop.permute.xlu0 %943
      %946 = vrot.lane.b32.xlu0 %v842, 96
      %v947 = vpop.permute.xlu0 %946
      %949 = vrot.lane.b32.xlu0 %v908, 112
      %v950 = vpop.permute.xlu0 %949
      %vm951 = vcmask 130048
      %v954 = vsel %vm951, %v815, %v911
      %vm955 = vcmask 261120
      %v957 = vsel %vm955, %v954, %v914
      %vm958 = vcmask 392192
      %v960 = vsel %vm958, %v957, %v917
      %vm961 = vcmask 523264
      %v963 = vsel %vm961, %v960, %v920
      %vm964 = vcmask 654336
      %v966 = vsel %vm964, %v963, %v923
      %vm967 = vcmask 785408
      %v969 = vsel %vm967, %v966, %v926
      %vm970 = vcmask 916480
      %v972 = vsel %vm970, %v969, %v929
      %v975 = vsel %vm951, %v831, %v932
      %v977 = vsel %vm955, %v975, %v935
      %v979 = vsel %vm958, %v977, %v938
      %v981 = vsel %vm961, %v979, %v941
      %v983 = vsel %vm964, %v981, %v944
      %v985 = vsel %vm967, %v983, %v947
      %v987 = vsel %vm970, %v985, %v950
      %992 = vrot.lane.b32.xlu0 %v752, 127
      %v993 = vpop.permute.xlu0 %992
      %994 = vrot.lane.b32.xlu0 %v754, 127
      %v995 = vpop.permute.xlu0 %994
      %996 = vrot.lane.b32.xlu0 %v756, 127
      %v997 = vpop.permute.xlu0 %996
      %998 = vrot.lane.b32.xlu0 %v758, 127
      %v999 = vpop.permute.xlu0 %998
      %v1002 = vpack.i.b16 %v995, %v993
      %v1004 = vshrl.u32 %v993, 16
      %v1005 = vshrl.u32 %v995, 16
      %v1006 = vpack.i.b16 %v1005, %v1004
      %v1010 = vpack.i.b16 %v999, %v997
      %v1012 = vshrl.u32 %v997, 16
      %v1013 = vshrl.u32 %v999, 16
      %v1014 = vpack.i.b16 %v1013, %v1012
      %v1016 = vcombine.high %v1002, %v772
      %v1018 = vunpack.c.l.s4 1983009808
      %v1019 = vunpack.c.0.s8 %v1018
      %v1020 = vlaneseq
      %v1021 = vshrl.u32 %v1020, 7
      %v1022 = vsub.s32 %v1019, %v1021
      %v1023 = vrot.slane %v1002, %v1022
      %v1025 = vunpack.c.l.s4 1983009808
      %v1026 = vunpack.c.0.s8 %v1025
      %v1027 = vlaneseq
      %v1028 = vshrl.u32 %v1027, 7
      %v1029 = vsub.s32 %v1026, %v1028
      %v1030 = vrot.slane %v1016, %v1029
      %v1031 = vcombine.high %v1010, %v772
      %v1033 = vunpack.c.l.s4 1983009808
      %v1034 = vunpack.c.0.s8 %v1033
      %v1035 = vlaneseq
      %v1036 = vshrl.u32 %v1035, 7
      %v1037 = vsub.s32 %v1034, %v1036
      %v1038 = vrot.slane %v1010, %v1037
      %v1040 = vunpack.c.l.s4 1983009808
      %v1041 = vunpack.c.0.s8 %v1040
      %v1042 = vlaneseq
      %v1043 = vshrl.u32 %v1042, 7
      %v1044 = vsub.s32 %v1041, %v1043
      %v1045 = vrot.slane %v1031, %v1044
      %v1046 = vcombine.low %v1023, %v1038
      %v1047 = vcombine.high %v1023, %v1038
      %v1049 = vunpack.c.l.s4 1934713408
      %v1050 = vunpack.c.0.s8 %v1049
      %v1051 = vlaneseq
      %v1052 = vshrl.u32 %v1051, 7
      %v1053 = vsub.s32 %v1050, %v1052
      %v1054 = vrot.slane %v1046, %v1053
      %v1056 = vunpack.c.l.s4 1934713408
      %v1057 = vunpack.c.0.s8 %v1056
      %v1058 = vlaneseq
      %v1059 = vshrl.u32 %v1058, 7
      %v1060 = vsub.s32 %v1057, %v1059
      %v1061 = vrot.slane %v1047, %v1060
      %v1062 = vcombine.low %v1030, %v1045
      %v1063 = vcombine.high %v1030, %v1045
      %v1065 = vunpack.c.l.s4 1934713408
      %v1066 = vunpack.c.0.s8 %v1065
      %v1067 = vlaneseq
      %v1068 = vshrl.u32 %v1067, 7
      %v1069 = vsub.s32 %v1066, %v1068
      %v1070 = vrot.slane %v1062, %v1069
      %v1072 = vunpack.c.l.s4 1934713408
      %v1073 = vunpack.c.0.s8 %v1072
      %v1074 = vlaneseq
      %v1075 = vshrl.u32 %v1074, 7
      %v1076 = vsub.s32 %v1073, %v1075
      %v1077 = vrot.slane %v1063, %v1076
      %v1078 = vcombine.high %v1054, 0
      %v1079 = vcombine.high %v1061, 0
      %v1080 = vcombine.high %v1070, 0
      %v1081 = vcombine.high %v1077, 0
      %v1082 = vcombine.high %v1006, %v775
      %v1084 = vunpack.c.l.s4 1983009808
      %v1085 = vunpack.c.0.s8 %v1084
      %v1086 = vlaneseq
      %v1087 = vshrl.u32 %v1086, 7
      %v1088 = vsub.s32 %v1085, %v1087
      %v1089 = vrot.slane %v1006, %v1088
      %v1091 = vunpack.c.l.s4 1983009808
      %v1092 = vunpack.c.0.s8 %v1091
      %v1093 = vlaneseq
      %v1094 = vshrl.u32 %v1093, 7
      %v1095 = vsub.s32 %v1092, %v1094
      %v1096 = vrot.slane %v1082, %v1095
      %v1097 = vcombine.high %v1014, %v775
      %v1099 = vunpack.c.l.s4 1983009808
      %v1100 = vunpack.c.0.s8 %v1099
      %v1101 = vlaneseq
      %v1102 = vshrl.u32 %v1101, 7
      %v1103 = vsub.s32 %v1100, %v1102
      %v1104 = vrot.slane %v1014, %v1103
      %v1106 = vunpack.c.l.s4 1983009808
      %v1107 = vunpack.c.0.s8 %v1106
      %v1108 = vlaneseq
      %v1109 = vshrl.u32 %v1108, 7
      %v1110 = vsub.s32 %v1107, %v1109
      %v1111 = vrot.slane %v1097, %v1110
      %v1112 = vcombine.low %v1089, %v1104
      %v1113 = vcombine.high %v1089, %v1104
      %v1115 = vunpack.c.l.s4 1934713408
      %v1116 = vunpack.c.0.s8 %v1115
      %v1117 = vlaneseq
      %v1118 = vshrl.u32 %v1117, 7
      %v1119 = vsub.s32 %v1116, %v1118
      %v1120 = vrot.slane %v1112, %v1119
      %v1122 = vunpack.c.l.s4 1934713408
      %v1123 = vunpack.c.0.s8 %v1122
      %v1124 = vlaneseq
      %v1125 = vshrl.u32 %v1124, 7
      %v1126 = vsub.s32 %v1123, %v1125
      %v1127 = vrot.slane %v1113, %v1126
      %v1128 = vcombine.low %v1096, %v1111
      %v1129 = vcombine.high %v1096, %v1111
      %v1131 = vunpack.c.l.s4 1934713408
      %v1132 = vunpack.c.0.s8 %v1131
      %v1133 = vlaneseq
      %v1134 = vshrl.u32 %v1133, 7
      %v1135 = vsub.s32 %v1132, %v1134
      %v1136 = vrot.slane %v1128, %v1135
      %v1138 = vunpack.c.l.s4 1934713408
      %v1139 = vunpack.c.0.s8 %v1138
      %v1140 = vlaneseq
      %v1141 = vshrl.u32 %v1140, 7
      %v1142 = vsub.s32 %v1139, %v1141
      %v1143 = vrot.slane %v1129, %v1142
      %v1144 = vcombine.high %v1120, 0
      %v1145 = vcombine.high %v1127, 0
      %v1146 = vcombine.high %v1136, 0
      %v1147 = vcombine.high %v1143, 0
      %1149 = vrot.lane.b32.xlu0 %v1120, 16
      %v1150 = vpop.permute.xlu0 %1149
      %1152 = vrot.lane.b32.xlu0 %v1078, 32
      %v1153 = vpop.permute.xlu0 %1152
      %1155 = vrot.lane.b32.xlu0 %v1144, 48
      %v1156 = vpop.permute.xlu0 %1155
      %1158 = vrot.lane.b32.xlu0 %v1061, 64
      %v1159 = vpop.permute.xlu0 %1158
      %1161 = vrot.lane.b32.xlu0 %v1127, 80
      %v1162 = vpop.permute.xlu0 %1161
      %1164 = vrot.lane.b32.xlu0 %v1079, 96
      %v1165 = vpop.permute.xlu0 %1164
      %1167 = vrot.lane.b32.xlu0 %v1145, 112
      %v1168 = vpop.permute.xlu0 %1167
      %1170 = vrot.lane.b32.xlu0 %v1136, 16
      %v1171 = vpop.permute.xlu0 %1170
      %1173 = vrot.lane.b32.xlu0 %v1080, 32
      %v1174 = vpop.permute.xlu0 %1173
      %1176 = vrot.lane.b32.xlu0 %v1146, 48
      %v1177 = vpop.permute.xlu0 %1176
      %1179 = vrot.lane.b32.xlu0 %v1077, 64
      %v1180 = vpop.permute.xlu0 %1179
      %1182 = vrot.lane.b32.xlu0 %v1143, 80
      %v1183 = vpop.permute.xlu0 %1182
      %1185 = vrot.lane.b32.xlu0 %v1081, 96
      %v1186 = vpop.permute.xlu0 %1185
      %1188 = vrot.lane.b32.xlu0 %v1147, 112
      %v1189 = vpop.permute.xlu0 %1188
      %v1192 = vsel %vm951, %v1054, %v1150
      %v1194 = vsel %vm955, %v1192, %v1153
      %v1196 = vsel %vm958, %v1194, %v1156
      %v1198 = vsel %vm961, %v1196, %v1159
      %v1200 = vsel %vm964, %v1198, %v1162
      %v1202 = vsel %vm967, %v1200, %v1165
      %v1204 = vsel %vm970, %v1202, %v1168
      %v1207 = vsel %vm951, %v1070, %v1171
      %v1209 = vsel %vm955, %v1207, %v1174
      %v1211 = vsel %vm958, %v1209, %v1177
      %v1213 = vsel %vm961, %v1211, %v1180
      %v1215 = vsel %vm964, %v1213, %v1183
      %v1217 = vsel %vm967, %v1215, %v1186
      %v1219 = vsel %vm970, %v1217, %v1189
      %1220 = vrot.lane.b32.xlu0 %v752, 126
      %v1221 = vpop.permute.xlu0 %1220
      %1222 = vrot.lane.b32.xlu0 %v754, 126
      %v1223 = vpop.permute.xlu0 %1222
      %1224 = vrot.lane.b32.xlu0 %v756, 126
      %v1225 = vpop.permute.xlu0 %1224
      %1226 = vrot.lane.b32.xlu0 %v758, 126
      %v1227 = vpop.permute.xlu0 %1226
      %v1230 = vpack.i.b16 %v1223, %v1221
      %v1232 = vshrl.u32 %v1221, 16
      %v1233 = vshrl.u32 %v1223, 16
      %v1234 = vpack.i.b16 %v1233, %v1232
      %v1238 = vpack.i.b16 %v1227, %v1225
      %v1240 = vshrl.u32 %v1225, 16
      %v1241 = vshrl.u32 %v1227, 16
      %v1242 = vpack.i.b16 %v1241, %v1240
      %v1244 = vcombine.high %v1230, %v772
      %v1246 = vunpack.c.l.s4 1983009808
      %v1247 = vunpack.c.0.s8 %v1246
      %v1248 = vlaneseq
      %v1249 = vshrl.u32 %v1248, 7
      %v1250 = vsub.s32 %v1247, %v1249
      %v1251 = vrot.slane %v1230, %v1250
      %v1253 = vunpack.c.l.s4 1983009808
      %v1254 = vunpack.c.0.s8 %v1253
      %v1255 = vlaneseq
      %v1256 = vshrl.u32 %v1255, 7
      %v1257 = vsub.s32 %v1254, %v1256
      %v1258 = vrot.slane %v1244, %v1257
      %v1259 = vcombine.high %v1238, %v772
      %v1261 = vunpack.c.l.s4 1983009808
      %v1262 = vunpack.c.0.s8 %v1261
      %v1263 = vlaneseq
      %v1264 = vshrl.u32 %v1263, 7
      %v1265 = vsub.s32 %v1262, %v1264
      %v1266 = vrot.slane %v1238, %v1265
      %v1268 = vunpack.c.l.s4 1983009808
      %v1269 = vunpack.c.0.s8 %v1268
      %v1270 = vlaneseq
      %v1271 = vshrl.u32 %v1270, 7
      %v1272 = vsub.s32 %v1269, %v1271
      %v1273 = vrot.slane %v1259, %v1272
      %v1274 = vcombine.low %v1251, %v1266
      %v1275 = vcombine.high %v1251, %v1266
      %v1277 = vunpack.c.l.s4 1934713408
      %v1278 = vunpack.c.0.s8 %v1277
      %v1279 = vlaneseq
      %v1280 = vshrl.u32 %v1279, 7
      %v1281 = vsub.s32 %v1278, %v1280
      %v1282 = vrot.slane %v1274, %v1281
      %v1284 = vunpack.c.l.s4 1934713408
      %v1285 = vunpack.c.0.s8 %v1284
      %v1286 = vlaneseq
      %v1287 = vshrl.u32 %v1286, 7
      %v1288 = vsub.s32 %v1285, %v1287
      %v1289 = vrot.slane %v1275, %v1288
      %v1290 = vcombine.low %v1258, %v1273
      %v1291 = vcombine.high %v1258, %v1273
      %v1293 = vunpack.c.l.s4 1934713408
      %v1294 = vunpack.c.0.s8 %v1293
      %v1295 = vlaneseq
      %v1296 = vshrl.u32 %v1295, 7
      %v1297 = vsub.s32 %v1294, %v1296
      %v1298 = vrot.slane %v1290, %v1297
      %v1300 = vunpack.c.l.s4 1934713408
      %v1301 = vunpack.c.0.s8 %v1300
      %v1302 = vlaneseq
      %v1303 = vshrl.u32 %v1302, 7
      %v1304 = vsub.s32 %v1301, %v1303
      %v1305 = vrot.slane %v1291, %v1304
      %v1306 = vcombine.high %v1282, 0
      %v1307 = vcombine.high %v1289, 0
      %v1308 = vcombine.high %v1298, 0
      %v1309 = vcombine.high %v1305, 0
      %v1310 = vcombine.high %v1234, %v775
      %v1312 = vunpack.c.l.s4 1983009808
      %v1313 = vunpack.c.0.s8 %v1312
      %v1314 = vlaneseq
      %v1315 = vshrl.u32 %v1314, 7
      %v1316 = vsub.s32 %v1313, %v1315
      %v1317 = vrot.slane %v1234, %v1316
      %v1319 = vunpack.c.l.s4 1983009808
      %v1320 = vunpack.c.0.s8 %v1319
      %v1321 = vlaneseq
      %v1322 = vshrl.u32 %v1321, 7
      %v1323 = vsub.s32 %v1320, %v1322
      %v1324 = vrot.slane %v1310, %v1323
      %v1325 = vcombine.high %v1242, %v775
      %v1327 = vunpack.c.l.s4 1983009808
      %v1328 = vunpack.c.0.s8 %v1327
      %v1329 = vlaneseq
      %v1330 = vshrl.u32 %v1329, 7
      %v1331 = vsub.s32 %v1328, %v1330
      %v1332 = vrot.slane %v1242, %v1331
      %v1334 = vunpack.c.l.s4 1983009808
      %v1335 = vunpack.c.0.s8 %v1334
      %v1336 = vlaneseq
      %v1337 = vshrl.u32 %v1336, 7
      %v1338 = vsub.s32 %v1335, %v1337
      %v1339 = vrot.slane %v1325, %v1338
      %v1340 = vcombine.low %v1317, %v1332
      %v1341 = vcombine.high %v1317, %v1332
      %v1343 = vunpack.c.l.s4 1934713408
      %v1344 = vunpack.c.0.s8 %v1343
      %v1345 = vlaneseq
      %v1346 = vshrl.u32 %v1345, 7
      %v1347 = vsub.s32 %v1344, %v1346
      %v1348 = vrot.slane %v1340, %v1347
      %v1350 = vunpack.c.l.s4 1934713408
      %v1351 = vunpack.c.0.s8 %v1350
      %v1352 = vlaneseq
      %v1353 = vshrl.u32 %v1352, 7
      %v1354 = vsub.s32 %v1351, %v1353
      %v1355 = vrot.slane %v1341, %v1354
      %v1356 = vcombine.low %v1324, %v1339
      %v1357 = vcombine.high %v1324, %v1339
      %v1359 = vunpack.c.l.s4 1934713408
      %v1360 = vunpack.c.0.s8 %v1359
      %v1361 = vlaneseq
      %v1362 = vshrl.u32 %v1361, 7
      %v1363 = vsub.s32 %v1360, %v1362
      %v1364 = vrot.slane %v1356, %v1363
      %v1366 = vunpack.c.l.s4 1934713408
      %v1367 = vunpack.c.0.s8 %v1366
      %v1368 = vlaneseq
      %v1369 = vshrl.u32 %v1368, 7
      %v1370 = vsub.s32 %v1367, %v1369
      %v1371 = vrot.slane %v1357, %v1370
      %v1372 = vcombine.high %v1348, 0
      %v1373 = vcombine.high %v1355, 0
      %v1374 = vcombine.high %v1364, 0
      %v1375 = vcombine.high %v1371, 0
      %1377 = vrot.lane.b32.xlu0 %v1348, 16
      %v1378 = vpop.permute.xlu0 %1377
      %1380 = vrot.lane.b32.xlu0 %v1306, 32
      %v1381 = vpop.permute.xlu0 %1380
      %1383 = vrot.lane.b32.xlu0 %v1372, 48
      %v1384 = vpop.permute.xlu0 %1383
      %1386 = vrot.lane.b32.xlu0 %v1289, 64
      %v1387 = vpop.permute.xlu0 %1386
      %1389 = vrot.lane.b32.xlu0 %v1355, 80
      %v1390 = vpop.permute.xlu0 %1389
      %1392 = vrot.lane.b32.xlu0 %v1307, 96
      %v1393 = vpop.permute.xlu0 %1392
      %1395 = vrot.lane.b32.xlu0 %v1373, 112
      %v1396 = vpop.permute.xlu0 %1395
      %1398 = vrot.lane.b32.xlu0 %v1364, 16
      %v1399 = vpop.permute.xlu0 %1398
      %1401 = vrot.lane.b32.xlu0 %v1308, 32
      %v1402 = vpop.permute.xlu0 %1401
      %1404 = vrot.lane.b32.xlu0 %v1374, 48
      %v1405 = vpop.permute.xlu0 %1404
      %1407 = vrot.lane.b32.xlu0 %v1305, 64
      %v1408 = vpop.permute.xlu0 %1407
      %1410 = vrot.lane.b32.xlu0 %v1371, 80
      %v1411 = vpop.permute.xlu0 %1410
      %1413 = vrot.lane.b32.xlu0 %v1309, 96
      %v1414 = vpop.permute.xlu0 %1413
      %1416 = vrot.lane.b32.xlu0 %v1375, 112
      %v1417 = vpop.permute.xlu0 %1416
      %v1420 = vsel %vm951, %v1282, %v1378
      %v1422 = vsel %vm955, %v1420, %v1381
      %v1424 = vsel %vm958, %v1422, %v1384
      %v1426 = vsel %vm961, %v1424, %v1387
      %v1428 = vsel %vm964, %v1426, %v1390
      %v1430 = vsel %vm967, %v1428, %v1393
      %v1432 = vsel %vm970, %v1430, %v1396
      %v1435 = vsel %vm951, %v1298, %v1399
      %v1437 = vsel %vm955, %v1435, %v1402
      %v1439 = vsel %vm958, %v1437, %v1405
      %v1441 = vsel %vm961, %v1439, %v1408
      %v1443 = vsel %vm964, %v1441, %v1411
      %v1445 = vsel %vm967, %v1443, %v1414
      %v1447 = vsel %vm970, %v1445, %v1417
      %vm1448 = vsmask.f32 7424
      %v1450 = vshll.u32 %v752, 16
      %v1452 = vrot.slane %v1450, 1
      %v1453 = vor.u32 %v762, %v1452
      %v1454 = vshll.u32 %v753, 16
      %v1456 = vrot.slane %v1454, 1
      %v1457 = vsel %vm1448, %v1453, %v1456
      %v1459 = vshll.u32 %v754, 16
      %v1461 = vrot.slane %v1459, 1
      %v1462 = vor.u32 %v763, %v1461
      %v1463 = vshll.u32 %v755, 16
      %v1465 = vrot.slane %v1463, 1
      %v1466 = vsel %vm1448, %v1462, %v1465
      %v1468 = vshll.u32 %v756, 16
      %v1470 = vrot.slane %v1468, 1
      %v1471 = vor.u32 %v768, %v1470
      %v1472 = vshll.u32 %v757, 16
      %v1474 = vrot.slane %v1472, 1
      %v1475 = vsel %vm1448, %v1471, %v1474
      %v1477 = vshll.u32 %v758, 16
      %v1479 = vrot.slane %v1477, 1
      %v1480 = vor.u32 %v769, %v1479
      %v1481 = vshll.u32 %v759, 16
      %v1483 = vrot.slane %v1481, 1
      %v1484 = vsel %vm1448, %v1480, %v1483
      %v1487 = vpack.i.b16 %v1466, %v1457
      %v1489 = vshrl.u32 %v1457, 16
      %v1490 = vshrl.u32 %v1466, 16
      %v1491 = vpack.i.b16 %v1490, %v1489
      %v1495 = vpack.i.b16 %v1484, %v1475
      %v1497 = vshrl.u32 %v1475, 16
      %v1498 = vshrl.u32 %v1484, 16
      %v1499 = vpack.i.b16 %v1498, %v1497
      %v1501 = vcombine.high %v1487, %v772
      %v1503 = vunpack.c.l.s4 1983009808
      %v1504 = vunpack.c.0.s8 %v1503
      %v1505 = vlaneseq
      %v1506 = vshrl.u32 %v1505, 7
      %v1507 = vsub.s32 %v1504, %v1506
      %v1508 = vrot.slane %v1487, %v1507
      %v1510 = vunpack.c.l.s4 1983009808
      %v1511 = vunpack.c.0.s8 %v1510
      %v1512 = vlaneseq
      %v1513 = vshrl.u32 %v1512, 7
      %v1514 = vsub.s32 %v1511, %v1513
      %v1515 = vrot.slane %v1501, %v1514
      %v1516 = vcombine.high %v1495, %v772
      %v1518 = vunpack.c.l.s4 1983009808
      %v1519 = vunpack.c.0.s8 %v1518
      %v1520 = vlaneseq
      %v1521 = vshrl.u32 %v1520, 7
      %v1522 = vsub.s32 %v1519, %v1521
      %v1523 = vrot.slane %v1495, %v1522
      %v1525 = vunpack.c.l.s4 1983009808
      %v1526 = vunpack.c.0.s8 %v1525
      %v1527 = vlaneseq
      %v1528 = vshrl.u32 %v1527, 7
      %v1529 = vsub.s32 %v1526, %v1528
      %v1530 = vrot.slane %v1516, %v1529
      %v1531 = vcombine.low %v1508, %v1523
      %v1532 = vcombine.high %v1508, %v1523
      %v1534 = vunpack.c.l.s4 1934713408
      %v1535 = vunpack.c.0.s8 %v1534
      %v1536 = vlaneseq
      %v1537 = vshrl.u32 %v1536, 7
      %v1538 = vsub.s32 %v1535, %v1537
      %v1539 = vrot.slane %v1531, %v1538
      %v1541 = vunpack.c.l.s4 1934713408
      %v1542 = vunpack.c.0.s8 %v1541
      %v1543 = vlaneseq
      %v1544 = vshrl.u32 %v1543, 7
      %v1545 = vsub.s32 %v1542, %v1544
      %v1546 = vrot.slane %v1532, %v1545
      %v1547 = vcombine.low %v1515, %v1530
      %v1548 = vcombine.high %v1515, %v1530
      %v1550 = vunpack.c.l.s4 1934713408
      %v1551 = vunpack.c.0.s8 %v1550
      %v1552 = vlaneseq
      %v1553 = vshrl.u32 %v1552, 7
      %v1554 = vsub.s32 %v1551, %v1553
      %v1555 = vrot.slane %v1547, %v1554
      %v1557 = vunpack.c.l.s4 1934713408
      %v1558 = vunpack.c.0.s8 %v1557
      %v1559 = vlaneseq
      %v1560 = vshrl.u32 %v1559, 7
      %v1561 = vsub.s32 %v1558, %v1560
      %v1562 = vrot.slane %v1548, %v1561
      %v1563 = vcombine.high %v1539, 0
      %v1564 = vcombine.high %v1546, 0
      %v1565 = vcombine.high %v1555, 0
      %v1566 = vcombine.high %v1562, 0
      %v1567 = vcombine.high %v1491, %v775
      %v1569 = vunpack.c.l.s4 1983009808
      %v1570 = vunpack.c.0.s8 %v1569
      %v1571 = vlaneseq
      %v1572 = vshrl.u32 %v1571, 7
      %v1573 = vsub.s32 %v1570, %v1572
      %v1574 = vrot.slane %v1491, %v1573
      %v1576 = vunpack.c.l.s4 1983009808
      %v1577 = vunpack.c.0.s8 %v1576
      %v1578 = vlaneseq
      %v1579 = vshrl.u32 %v1578, 7
      %v1580 = vsub.s32 %v1577, %v1579
      %v1581 = vrot.slane %v1567, %v1580
      %v1582 = vcombine.high %v1499, %v775
      %v1584 = vunpack.c.l.s4 1983009808
      %v1585 = vunpack.c.0.s8 %v1584
      %v1586 = vlaneseq
      %v1587 = vshrl.u32 %v1586, 7
      %v1588 = vsub.s32 %v1585, %v1587
      %v1589 = vrot.slane %v1499, %v1588
      %v1591 = vunpack.c.l.s4 1983009808
      %v1592 = vunpack.c.0.s8 %v1591
      %v1593 = vlaneseq
      %v1594 = vshrl.u32 %v1593, 7
      %v1595 = vsub.s32 %v1592, %v1594
      %v1596 = vrot.slane %v1582, %v1595
      %v1597 = vcombine.low %v1574, %v1589
      %v1598 = vcombine.high %v1574, %v1589
      %v1600 = vunpack.c.l.s4 1934713408
      %v1601 = vunpack.c.0.s8 %v1600
      %v1602 = vlaneseq
      %v1603 = vshrl.u32 %v1602, 7
      %v1604 = vsub.s32 %v1601, %v1603
      %v1605 = vrot.slane %v1597, %v1604
      %v1607 = vunpack.c.l.s4 1934713408
      %v1608 = vunpack.c.0.s8 %v1607
      %v1609 = vlaneseq
      %v1610 = vshrl.u32 %v1609, 7
      %v1611 = vsub.s32 %v1608, %v1610
      %v1612 = vrot.slane %v1598, %v1611
      %v1613 = vcombine.low %v1581, %v1596
      %v1614 = vcombine.high %v1581, %v1596
      %v1616 = vunpack.c.l.s4 1934713408
      %v1617 = vunpack.c.0.s8 %v1616
      %v1618 = vlaneseq
      %v1619 = vshrl.u32 %v1618, 7
      %v1620 = vsub.s32 %v1617, %v1619
      %v1621 = vrot.slane %v1613, %v1620
      %v1623 = vunpack.c.l.s4 1934713408
      %v1624 = vunpack.c.0.s8 %v1623
      %v1625 = vlaneseq
      %v1626 = vshrl.u32 %v1625, 7
      %v1627 = vsub.s32 %v1624, %v1626
      %v1628 = vrot.slane %v1614, %v1627
      %v1629 = vcombine.high %v1605, 0
      %v1630 = vcombine.high %v1612, 0
      %v1631 = vcombine.high %v1621, 0
      %v1632 = vcombine.high %v1628, 0
      %1634 = vrot.lane.b32.xlu0 %v1605, 16
      %v1635 = vpop.permute.xlu0 %1634
      %1637 = vrot.lane.b32.xlu0 %v1563, 32
      %v1638 = vpop.permute.xlu0 %1637
      %1640 = vrot.lane.b32.xlu0 %v1629, 48
      %v1641 = vpop.permute.xlu0 %1640
      %1643 = vrot.lane.b32.xlu0 %v1546, 64
      %v1644 = vpop.permute.xlu0 %1643
      %1646 = vrot.lane.b32.xlu0 %v1612, 80
      %v1647 = vpop.permute.xlu0 %1646
      %1649 = vrot.lane.b32.xlu0 %v1564, 96
      %v1650 = vpop.permute.xlu0 %1649
      %1652 = vrot.lane.b32.xlu0 %v1630, 112
      %v1653 = vpop.permute.xlu0 %1652
      %1655 = vrot.lane.b32.xlu0 %v1621, 16
      %v1656 = vpop.permute.xlu0 %1655
      %1658 = vrot.lane.b32.xlu0 %v1565, 32
      %v1659 = vpop.permute.xlu0 %1658
      %1661 = vrot.lane.b32.xlu0 %v1631, 48
      %v1662 = vpop.permute.xlu0 %1661
      %1664 = vrot.lane.b32.xlu0 %v1562, 64
      %v1665 = vpop.permute.xlu0 %1664
      %1667 = vrot.lane.b32.xlu0 %v1628, 80
      %v1668 = vpop.permute.xlu0 %1667
      %1670 = vrot.lane.b32.xlu0 %v1566, 96
      %v1671 = vpop.permute.xlu0 %1670
      %1673 = vrot.lane.b32.xlu0 %v1632, 112
      %v1674 = vpop.permute.xlu0 %1673
      %v1677 = vsel %vm951, %v1539, %v1635
      %v1679 = vsel %vm955, %v1677, %v1638
      %v1681 = vsel %vm958, %v1679, %v1641
      %v1683 = vsel %vm961, %v1681, %v1644
      %v1685 = vsel %vm964, %v1683, %v1647
      %v1687 = vsel %vm967, %v1685, %v1650
      %v1689 = vsel %vm970, %v1687, %v1653
      %v1692 = vsel %vm951, %v1555, %v1656
      %v1694 = vsel %vm955, %v1692, %v1659
      %v1696 = vsel %vm958, %v1694, %v1662
      %v1698 = vsel %vm961, %v1696, %v1665
      %v1700 = vsel %vm964, %v1698, %v1668
      %v1702 = vsel %vm967, %v1700, %v1671
      %v1704 = vsel %vm970, %v1702, %v1674
      %1705 = vrot.lane.b32.xlu0 %v1457, 127
      %v1706 = vpop.permute.xlu0 %1705
      %1707 = vrot.lane.b32.xlu0 %v1466, 127
      %v1708 = vpop.permute.xlu0 %1707
      %1709 = vrot.lane.b32.xlu0 %v1475, 127
      %v1710 = vpop.permute.xlu0 %1709
      %1711 = vrot.lane.b32.xlu0 %v1484, 127
      %v1712 = vpop.permute.xlu0 %1711
      %v1715 = vpack.i.b16 %v1708, %v1706
      %v1717 = vshrl.u32 %v1706, 16
      %v1718 = vshrl.u32 %v1708, 16
      %v1719 = vpack.i.b16 %v1718, %v1717
      %v1723 = vpack.i.b16 %v1712, %v1710
      %v1725 = vshrl.u32 %v1710, 16
      %v1726 = vshrl.u32 %v1712, 16
      %v1727 = vpack.i.b16 %v1726, %v1725
      %v1729 = vcombine.high %v1715, %v772
      %v1731 = vunpack.c.l.s4 1983009808
      %v1732 = vunpack.c.0.s8 %v1731
      %v1733 = vlaneseq
      %v1734 = vshrl.u32 %v1733, 7
      %v1735 = vsub.s32 %v1732, %v1734
      %v1736 = vrot.slane %v1715, %v1735
      %v1738 = vunpack.c.l.s4 1983009808
      %v1739 = vunpack.c.0.s8 %v1738
      %v1740 = vlaneseq
      %v1741 = vshrl.u32 %v1740, 7
      %v1742 = vsub.s32 %v1739, %v1741
      %v1743 = vrot.slane %v1729, %v1742
      %v1744 = vcombine.high %v1723, %v772
      %v1746 = vunpack.c.l.s4 1983009808
      %v1747 = vunpack.c.0.s8 %v1746
      %v1748 = vlaneseq
      %v1749 = vshrl.u32 %v1748, 7
      %v1750 = vsub.s32 %v1747, %v1749
      %v1751 = vrot.slane %v1723, %v1750
      %v1753 = vunpack.c.l.s4 1983009808
      %v1754 = vunpack.c.0.s8 %v1753
      %v1755 = vlaneseq
      %v1756 = vshrl.u32 %v1755, 7
      %v1757 = vsub.s32 %v1754, %v1756
      %v1758 = vrot.slane %v1744, %v1757
      %v1759 = vcombine.low %v1736, %v1751
      %v1760 = vcombine.high %v1736, %v1751
      %v1762 = vunpack.c.l.s4 1934713408
      %v1763 = vunpack.c.0.s8 %v1762
      %v1764 = vlaneseq
      %v1765 = vshrl.u32 %v1764, 7
      %v1766 = vsub.s32 %v1763, %v1765
      %v1767 = vrot.slane %v1759, %v1766
      %v1769 = vunpack.c.l.s4 1934713408
      %v1770 = vunpack.c.0.s8 %v1769
      %v1771 = vlaneseq
      %v1772 = vshrl.u32 %v1771, 7
      %v1773 = vsub.s32 %v1770, %v1772
      %v1774 = vrot.slane %v1760, %v1773
      %v1775 = vcombine.low %v1743, %v1758
      %v1776 = vcombine.high %v1743, %v1758
      %v1778 = vunpack.c.l.s4 1934713408
      %v1779 = vunpack.c.0.s8 %v1778
      %v1780 = vlaneseq
      %v1781 = vshrl.u32 %v1780, 7
      %v1782 = vsub.s32 %v1779, %v1781
      %v1783 = vrot.slane %v1775, %v1782
      %v1785 = vunpack.c.l.s4 1934713408
      %v1786 = vunpack.c.0.s8 %v1785
      %v1787 = vlaneseq
      %v1788 = vshrl.u32 %v1787, 7
      %v1789 = vsub.s32 %v1786, %v1788
      %v1790 = vrot.slane %v1776, %v1789
      %v1791 = vcombine.high %v1767, 0
      %v1792 = vcombine.high %v1774, 0
      %v1793 = vcombine.high %v1783, 0
      %v1794 = vcombine.high %v1790, 0
      %v1795 = vcombine.high %v1719, %v775
      %v1797 = vunpack.c.l.s4 1983009808
      %v1798 = vunpack.c.0.s8 %v1797
      %v1799 = vlaneseq
      %v1800 = vshrl.u32 %v1799, 7
      %v1801 = vsub.s32 %v1798, %v1800
      %v1802 = vrot.slane %v1719, %v1801
      %v1804 = vunpack.c.l.s4 1983009808
      %v1805 = vunpack.c.0.s8 %v1804
      %v1806 = vlaneseq
      %v1807 = vshrl.u32 %v1806, 7
      %v1808 = vsub.s32 %v1805, %v1807
      %v1809 = vrot.slane %v1795, %v1808
      %v1810 = vcombine.high %v1727, %v775
      %v1812 = vunpack.c.l.s4 1983009808
      %v1813 = vunpack.c.0.s8 %v1812
      %v1814 = vlaneseq
      %v1815 = vshrl.u32 %v1814, 7
      %v1816 = vsub.s32 %v1813, %v1815
      %v1817 = vrot.slane %v1727, %v1816
      %v1819 = vunpack.c.l.s4 1983009808
      %v1820 = vunpack.c.0.s8 %v1819
      %v1821 = vlaneseq
      %v1822 = vshrl.u32 %v1821, 7
      %v1823 = vsub.s32 %v1820, %v1822
      %v1824 = vrot.slane %v1810, %v1823
      %v1825 = vcombine.low %v1802, %v1817
      %v1826 = vcombine.high %v1802, %v1817
      %v1828 = vunpack.c.l.s4 1934713408
      %v1829 = vunpack.c.0.s8 %v1828
      %v1830 = vlaneseq
      %v1831 = vshrl.u32 %v1830, 7
      %v1832 = vsub.s32 %v1829, %v1831
      %v1833 = vrot.slane %v1825, %v1832
      %v1835 = vunpack.c.l.s4 1934713408
      %v1836 = vunpack.c.0.s8 %v1835
      %v1837 = vlaneseq
      %v1838 = vshrl.u32 %v1837, 7
      %v1839 = vsub.s32 %v1836, %v1838
      %v1840 = vrot.slane %v1826, %v1839
      %v1841 = vcombine.low %v1809, %v1824
      %v1842 = vcombine.high %v1809, %v1824
      %v1844 = vunpack.c.l.s4 1934713408
      %v1845 = vunpack.c.0.s8 %v1844
      %v1846 = vlaneseq
      %v1847 = vshrl.u32 %v1846, 7
      %v1848 = vsub.s32 %v1845, %v1847
      %v1849 = vrot.slane %v1841, %v1848
      %v1851 = vunpack.c.l.s4 1934713408
      %v1852 = vunpack.c.0.s8 %v1851
      %v1853 = vlaneseq
      %v1854 = vshrl.u32 %v1853, 7
      %v1855 = vsub.s32 %v1852, %v1854
      %v1856 = vrot.slane %v1842, %v1855
      %v1857 = vcombine.high %v1833, 0
      %v1858 = vcombine.high %v1840, 0
      %v1859 = vcombine.high %v1849, 0
      %v1860 = vcombine.high %v1856, 0
      %1862 = vrot.lane.b32.xlu0 %v1833, 16
      %v1863 = vpop.permute.xlu0 %1862
      %1865 = vrot.lane.b32.xlu0 %v1791, 32
      %v1866 = vpop.permute.xlu0 %1865
      %1868 = vrot.lane.b32.xlu0 %v1857, 48
      %v1869 = vpop.permute.xlu0 %1868
      %1871 = vrot.lane.b32.xlu0 %v1774, 64
      %v1872 = vpop.permute.xlu0 %1871
      %1874 = vrot.lane.b32.xlu0 %v1840, 80
      %v1875 = vpop.permute.xlu0 %1874
      %1877 = vrot.lane.b32.xlu0 %v1792, 96
      %v1878 = vpop.permute.xlu0 %1877
      %1880 = vrot.lane.b32.xlu0 %v1858, 112
      %v1881 = vpop.permute.xlu0 %1880
      %1883 = vrot.lane.b32.xlu0 %v1849, 16
      %v1884 = vpop.permute.xlu0 %1883
      %1886 = vrot.lane.b32.xlu0 %v1793, 32
      %v1887 = vpop.permute.xlu0 %1886
      %1889 = vrot.lane.b32.xlu0 %v1859, 48
      %v1890 = vpop.permute.xlu0 %1889
      %1892 = vrot.lane.b32.xlu0 %v1790, 64
      %v1893 = vpop.permute.xlu0 %1892
      %1895 = vrot.lane.b32.xlu0 %v1856, 80
      %v1896 = vpop.permute.xlu0 %1895
      %1898 = vrot.lane.b32.xlu0 %v1794, 96
      %v1899 = vpop.permute.xlu0 %1898
      %1901 = vrot.lane.b32.xlu0 %v1860, 112
      %v1902 = vpop.permute.xlu0 %1901
      %v1905 = vsel %vm951, %v1767, %v1863
      %v1907 = vsel %vm955, %v1905, %v1866
      %v1909 = vsel %vm958, %v1907, %v1869
      %v1911 = vsel %vm961, %v1909, %v1872
      %v1913 = vsel %vm964, %v1911, %v1875
      %v1915 = vsel %vm967, %v1913, %v1878
      %v1917 = vsel %vm970, %v1915, %v1881
      %v1920 = vsel %vm951, %v1783, %v1884
      %v1922 = vsel %vm955, %v1920, %v1887
      %v1924 = vsel %vm958, %v1922, %v1890
      %v1926 = vsel %vm961, %v1924, %v1893
      %v1928 = vsel %vm964, %v1926, %v1896
      %v1930 = vsel %vm967, %v1928, %v1899
      %v1932 = vsel %vm970, %v1930, %v1902
      %1933 = vrot.lane.b32.xlu0 %v1457, 126
      %v1934 = vpop.permute.xlu0 %1933
      %1935 = vrot.lane.b32.xlu0 %v1466, 126
      %v1936 = vpop.permute.xlu0 %1935
      %1937 = vrot.lane.b32.xlu0 %v1475, 126
      %v1938 = vpop.permute.xlu0 %1937
      %1939 = vrot.lane.b32.xlu0 %v1484, 126
      %v1940 = vpop.permute.xlu0 %1939
      %v1943 = vpack.i.b16 %v1936, %v1934
      %v1945 = vshrl.u32 %v1934, 16
      %v1946 = vshrl.u32 %v1936, 16
      %v1947 = vpack.i.b16 %v1946, %v1945
      %v1951 = vpack.i.b16 %v1940, %v1938
      %v1953 = vshrl.u32 %v1938, 16
      %v1954 = vshrl.u32 %v1940, 16
      %v1955 = vpack.i.b16 %v1954, %v1953
      %v1957 = vcombine.high %v1943, %v772
      %v1959 = vunpack.c.l.s4 1983009808
      %v1960 = vunpack.c.0.s8 %v1959
      %v1961 = vlaneseq
      %v1962 = vshrl.u32 %v1961, 7
      %v1963 = vsub.s32 %v1960, %v1962
      %v1964 = vrot.slane %v1943, %v1963
      %v1966 = vunpack.c.l.s4 1983009808
      %v1967 = vunpack.c.0.s8 %v1966
      %v1968 = vlaneseq
      %v1969 = vshrl.u32 %v1968, 7
      %v1970 = vsub.s32 %v1967, %v1969
      %v1971 = vrot.slane %v1957, %v1970
      %v1972 = vcombine.high %v1951, %v772
      %v1974 = vunpack.c.l.s4 1983009808
      %v1975 = vunpack.c.0.s8 %v1974
      %v1976 = vlaneseq
      %v1977 = vshrl.u32 %v1976, 7
      %v1978 = vsub.s32 %v1975, %v1977
      %v1979 = vrot.slane %v1951, %v1978
      %v1981 = vunpack.c.l.s4 1983009808
      %v1982 = vunpack.c.0.s8 %v1981
      %v1983 = vlaneseq
      %v1984 = vshrl.u32 %v1983, 7
      %v1985 = vsub.s32 %v1982, %v1984
      %v1986 = vrot.slane %v1972, %v1985
      %v1987 = vcombine.low %v1964, %v1979
      %v1988 = vcombine.high %v1964, %v1979
      %v1990 = vunpack.c.l.s4 1934713408
      %v1991 = vunpack.c.0.s8 %v1990
      %v1992 = vlaneseq
      %v1993 = vshrl.u32 %v1992, 7
      %v1994 = vsub.s32 %v1991, %v1993
      %v1995 = vrot.slane %v1987, %v1994
      %v1997 = vunpack.c.l.s4 1934713408
      %v1998 = vunpack.c.0.s8 %v1997
      %v1999 = vlaneseq
      %v2000 = vshrl.u32 %v1999, 7
      %v2001 = vsub.s32 %v1998, %v2000
      %v2002 = vrot.slane %v1988, %v2001
      %v2003 = vcombine.low %v1971, %v1986
      %v2004 = vcombine.high %v1971, %v1986
      %v2006 = vunpack.c.l.s4 1934713408
      %v2007 = vunpack.c.0.s8 %v2006
      %v2008 = vlaneseq
      %v2009 = vshrl.u32 %v2008, 7
      %v2010 = vsub.s32 %v2007, %v2009
      %v2011 = vrot.slane %v2003, %v2010
      %v2013 = vunpack.c.l.s4 1934713408
      %v2014 = vunpack.c.0.s8 %v2013
      %v2015 = vlaneseq
      %v2016 = vshrl.u32 %v2015, 7
      %v2017 = vsub.s32 %v2014, %v2016
      %v2018 = vrot.slane %v2004, %v2017
      %v2019 = vcombine.high %v1995, 0
      %v2020 = vcombine.high %v2002, 0
      %v2021 = vcombine.high %v2011, 0
      %v2022 = vcombine.high %v2018, 0
      %v2023 = vcombine.high %v1947, %v775
      %v2025 = vunpack.c.l.s4 1983009808
      %v2026 = vunpack.c.0.s8 %v2025
      %v2027 = vlaneseq
      %v2028 = vshrl.u32 %v2027, 7
      %v2029 = vsub.s32 %v2026, %v2028
      %v2030 = vrot.slane %v1947, %v2029
      %v2032 = vunpack.c.l.s4 1983009808
      %v2033 = vunpack.c.0.s8 %v2032
      %v2034 = vlaneseq
      %v2035 = vshrl.u32 %v2034, 7
      %v2036 = vsub.s32 %v2033, %v2035
      %v2037 = vrot.slane %v2023, %v2036
      %v2038 = vcombine.high %v1955, %v775
      %v2040 = vunpack.c.l.s4 1983009808
      %v2041 = vunpack.c.0.s8 %v2040
      %v2042 = vlaneseq
      %v2043 = vshrl.u32 %v2042, 7
      %v2044 = vsub.s32 %v2041, %v2043
      %v2045 = vrot.slane %v1955, %v2044
      %v2047 = vunpack.c.l.s4 1983009808
      %v2048 = vunpack.c.0.s8 %v2047
      %v2049 = vlaneseq
      %v2050 = vshrl.u32 %v2049, 7
      %v2051 = vsub.s32 %v2048, %v2050
      %v2052 = vrot.slane %v2038, %v2051
      %v2053 = vcombine.low %v2030, %v2045
      %v2054 = vcombine.high %v2030, %v2045
      %v2056 = vunpack.c.l.s4 1934713408
      %v2057 = vunpack.c.0.s8 %v2056
      %v2058 = vlaneseq
      %v2059 = vshrl.u32 %v2058, 7
      %v2060 = vsub.s32 %v2057, %v2059
      %v2061 = vrot.slane %v2053, %v2060
      %v2063 = vunpack.c.l.s4 1934713408
      %v2064 = vunpack.c.0.s8 %v2063
      %v2065 = vlaneseq
      %v2066 = vshrl.u32 %v2065, 7
      %v2067 = vsub.s32 %v2064, %v2066
      %v2068 = vrot.slane %v2054, %v2067
      %v2069 = vcombine.low %v2037, %v2052
      %v2070 = vcombine.high %v2037, %v2052
      %v2072 = vunpack.c.l.s4 1934713408
      %v2073 = vunpack.c.0.s8 %v2072
      %v2074 = vlaneseq
      %v2075 = vshrl.u32 %v2074, 7
      %v2076 = vsub.s32 %v2073, %v2075
      %v2077 = vrot.slane %v2069, %v2076
      %v2079 = vunpack.c.l.s4 1934713408
      %v2080 = vunpack.c.0.s8 %v2079
      %v2081 = vlaneseq
      %v2082 = vshrl.u32 %v2081, 7
      %v2083 = vsub.s32 %v2080, %v2082
      %v2084 = vrot.slane %v2070, %v2083
      %v2085 = vcombine.high %v2061, 0
      %v2086 = vcombine.high %v2068, 0
      %v2087 = vcombine.high %v2077, 0
      %v2088 = vcombine.high %v2084, 0
      %2090 = vrot.lane.b32.xlu0 %v2061, 16
      %v2091 = vpop.permute.xlu0 %2090
      %2093 = vrot.lane.b32.xlu0 %v2019, 32
      %v2094 = vpop.permute.xlu0 %2093
      %2096 = vrot.lane.b32.xlu0 %v2085, 48
      %v2097 = vpop.permute.xlu0 %2096
      %2099 = vrot.lane.b32.xlu0 %v2002, 64
      %v2100 = vpop.permute.xlu0 %2099
      %2102 = vrot.lane.b32.xlu0 %v2068, 80
      %v2103 = vpop.permute.xlu0 %2102
      %2105 = vrot.lane.b32.xlu0 %v2020, 96
      %v2106 = vpop.permute.xlu0 %2105
      %2108 = vrot.lane.b32.xlu0 %v2086, 112
      %v2109 = vpop.permute.xlu0 %2108
      %2111 = vrot.lane.b32.xlu0 %v2077, 16
      %v2112 = vpop.permute.xlu0 %2111
      %2114 = vrot.lane.b32.xlu0 %v2021, 32
      %v2115 = vpop.permute.xlu0 %2114
      %2117 = vrot.lane.b32.xlu0 %v2087, 48
      %v2118 = vpop.permute.xlu0 %2117
      %2120 = vrot.lane.b32.xlu0 %v2018, 64
      %v2121 = vpop.permute.xlu0 %2120
      %2123 = vrot.lane.b32.xlu0 %v2084, 80
      %v2124 = vpop.permute.xlu0 %2123
      %2126 = vrot.lane.b32.xlu0 %v2022, 96
      %v2127 = vpop.permute.xlu0 %2126
      %2129 = vrot.lane.b32.xlu0 %v2088, 112
      %v2130 = vpop.permute.xlu0 %2129
      %v2133 = vsel %vm951, %v1995, %v2091
      %v2135 = vsel %vm955, %v2133, %v2094
      %v2137 = vsel %vm958, %v2135, %v2097
      %v2139 = vsel %vm961, %v2137, %v2100
      %v2141 = vsel %vm964, %v2139, %v2103
      %v2143 = vsel %vm967, %v2141, %v2106
      %v2145 = vsel %vm970, %v2143, %v2109
      %v2148 = vsel %vm951, %v2011, %v2112
      %v2150 = vsel %vm955, %v2148, %v2115
      %v2152 = vsel %vm958, %v2150, %v2118
      %v2154 = vsel %vm961, %v2152, %v2121
      %v2156 = vsel %vm964, %v2154, %v2124
      %v2158 = vsel %vm967, %v2156, %v2127
      %v2160 = vsel %vm970, %v2158, %v2130
      %vm2165 = vcmask 1046528
      %v2166 = vrot.slane %v752, 1
      %v2167 = vrot.slane %v753, 1
      %v2168 = vsel %vm2165, %v2166, %v2167
      %v2169 = vrot.slane %v754, 1
      %v2170 = vrot.slane %v755, 1
      %v2171 = vsel %vm2165, %v2169, %v2170
      %v2172 = vrot.slane %v756, 1
      %v2173 = vrot.slane %v757, 1
      %v2174 = vsel %vm2165, %v2172, %v2173
      %v2175 = vrot.slane %v758, 1
      %v2176 = vrot.slane %v759, 1
      %v2177 = vsel %vm2165, %v2175, %v2176
      %v2180 = vpack.i.b16 %v2171, %v2168
      %v2182 = vshrl.u32 %v2168, 16
      %v2183 = vshrl.u32 %v2171, 16
      %v2184 = vpack.i.b16 %v2183, %v2182
      %v2188 = vpack.i.b16 %v2177, %v2174
      %v2190 = vshrl.u32 %v2174, 16
      %v2191 = vshrl.u32 %v2177, 16
      %v2192 = vpack.i.b16 %v2191, %v2190
      %v2194 = vcombine.high %v2180, %v772
      %v2196 = vunpack.c.l.s4 1983009808
      %v2197 = vunpack.c.0.s8 %v2196
      %v2198 = vlaneseq
      %v2199 = vshrl.u32 %v2198, 7
      %v2200 = vsub.s32 %v2197, %v2199
      %v2201 = vrot.slane %v2180, %v2200
      %v2203 = vunpack.c.l.s4 1983009808
      %v2204 = vunpack.c.0.s8 %v2203
      %v2205 = vlaneseq
      %v2206 = vshrl.u32 %v2205, 7
      %v2207 = vsub.s32 %v2204, %v2206
      %v2208 = vrot.slane %v2194, %v2207
      %v2209 = vcombine.high %v2188, %v772
      %v2211 = vunpack.c.l.s4 1983009808
      %v2212 = vunpack.c.0.s8 %v2211
      %v2213 = vlaneseq
      %v2214 = vshrl.u32 %v2213, 7
      %v2215 = vsub.s32 %v2212, %v2214
      %v2216 = vrot.slane %v2188, %v2215
      %v2218 = vunpack.c.l.s4 1983009808
      %v2219 = vunpack.c.0.s8 %v2218
      %v2220 = vlaneseq
      %v2221 = vshrl.u32 %v2220, 7
      %v2222 = vsub.s32 %v2219, %v2221
      %v2223 = vrot.slane %v2209, %v2222
      %v2224 = vcombine.low %v2201, %v2216
      %v2225 = vcombine.high %v2201, %v2216
      %v2227 = vunpack.c.l.s4 1934713408
      %v2228 = vunpack.c.0.s8 %v2227
      %v2229 = vlaneseq
      %v2230 = vshrl.u32 %v2229, 7
      %v2231 = vsub.s32 %v2228, %v2230
      %v2232 = vrot.slane %v2224, %v2231
      %v2234 = vunpack.c.l.s4 1934713408
      %v2235 = vunpack.c.0.s8 %v2234
      %v2236 = vlaneseq
      %v2237 = vshrl.u32 %v2236, 7
      %v2238 = vsub.s32 %v2235, %v2237
      %v2239 = vrot.slane %v2225, %v2238
      %v2240 = vcombine.low %v2208, %v2223
      %v2241 = vcombine.high %v2208, %v2223
      %v2243 = vunpack.c.l.s4 1934713408
      %v2244 = vunpack.c.0.s8 %v2243
      %v2245 = vlaneseq
      %v2246 = vshrl.u32 %v2245, 7
      %v2247 = vsub.s32 %v2244, %v2246
      %v2248 = vrot.slane %v2240, %v2247
      %v2250 = vunpack.c.l.s4 1934713408
      %v2251 = vunpack.c.0.s8 %v2250
      %v2252 = vlaneseq
      %v2253 = vshrl.u32 %v2252, 7
      %v2254 = vsub.s32 %v2251, %v2253
      %v2255 = vrot.slane %v2241, %v2254
      %v2256 = vcombine.high %v2232, 0
      %v2257 = vcombine.high %v2239, 0
      %v2258 = vcombine.high %v2248, 0
      %v2259 = vcombine.high %v2255, 0
      %v2260 = vcombine.high %v2184, %v775
      %v2262 = vunpack.c.l.s4 1983009808
      %v2263 = vunpack.c.0.s8 %v2262
      %v2264 = vlaneseq
      %v2265 = vshrl.u32 %v2264, 7
      %v2266 = vsub.s32 %v2263, %v2265
      %v2267 = vrot.slane %v2184, %v2266
      %v2269 = vunpack.c.l.s4 1983009808
      %v2270 = vunpack.c.0.s8 %v2269
      %v2271 = vlaneseq
      %v2272 = vshrl.u32 %v2271, 7
      %v2273 = vsub.s32 %v2270, %v2272
      %v2274 = vrot.slane %v2260, %v2273
      %v2275 = vcombine.high %v2192, %v775
      %v2277 = vunpack.c.l.s4 1983009808
      %v2278 = vunpack.c.0.s8 %v2277
      %v2279 = vlaneseq
      %v2280 = vshrl.u32 %v2279, 7
      %v2281 = vsub.s32 %v2278, %v2280
      %v2282 = vrot.slane %v2192, %v2281
      %v2284 = vunpack.c.l.s4 1983009808
      %v2285 = vunpack.c.0.s8 %v2284
      %v2286 = vlaneseq
      %v2287 = vshrl.u32 %v2286, 7
      %v2288 = vsub.s32 %v2285, %v2287
      %v2289 = vrot.slane %v2275, %v2288
      %v2290 = vcombine.low %v2267, %v2282
      %v2291 = vcombine.high %v2267, %v2282
      %v2293 = vunpack.c.l.s4 1934713408
      %v2294 = vunpack.c.0.s8 %v2293
      %v2295 = vlaneseq
      %v2296 = vshrl.u32 %v2295, 7
      %v2297 = vsub.s32 %v2294, %v2296
      %v2298 = vrot.slane %v2290, %v2297
      %v2300 = vunpack.c.l.s4 1934713408
      %v2301 = vunpack.c.0.s8 %v2300
      %v2302 = vlaneseq
      %v2303 = vshrl.u32 %v2302, 7
      %v2304 = vsub.s32 %v2301, %v2303
      %v2305 = vrot.slane %v2291, %v2304
      %v2306 = vcombine.low %v2274, %v2289
      %v2307 = vcombine.high %v2274, %v2289
      %v2309 = vunpack.c.l.s4 1934713408
      %v2310 = vunpack.c.0.s8 %v2309
      %v2311 = vlaneseq
      %v2312 = vshrl.u32 %v2311, 7
      %v2313 = vsub.s32 %v2310, %v2312
      %v2314 = vrot.slane %v2306, %v2313
      %v2316 = vunpack.c.l.s4 1934713408
      %v2317 = vunpack.c.0.s8 %v2316
      %v2318 = vlaneseq
      %v2319 = vshrl.u32 %v2318, 7
      %v2320 = vsub.s32 %v2317, %v2319
      %v2321 = vrot.slane %v2307, %v2320
      %v2322 = vcombine.high %v2298, 0
      %v2323 = vcombine.high %v2305, 0
      %v2324 = vcombine.high %v2314, 0
      %v2325 = vcombine.high %v2321, 0
      %2327 = vrot.lane.b32.xlu0 %v2298, 16
      %v2328 = vpop.permute.xlu0 %2327
      %2330 = vrot.lane.b32.xlu0 %v2256, 32
      %v2331 = vpop.permute.xlu0 %2330
      %2333 = vrot.lane.b32.xlu0 %v2322, 48
      %v2334 = vpop.permute.xlu0 %2333
      %2336 = vrot.lane.b32.xlu0 %v2239, 64
      %v2337 = vpop.permute.xlu0 %2336
      %2339 = vrot.lane.b32.xlu0 %v2305, 80
      %v2340 = vpop.permute.xlu0 %2339
      %2342 = vrot.lane.b32.xlu0 %v2257, 96
      %v2343 = vpop.permute.xlu0 %2342
      %2345 = vrot.lane.b32.xlu0 %v2323, 112
      %v2346 = vpop.permute.xlu0 %2345
      %2348 = vrot.lane.b32.xlu0 %v2314, 16
      %v2349 = vpop.permute.xlu0 %2348
      %2351 = vrot.lane.b32.xlu0 %v2258, 32
      %v2352 = vpop.permute.xlu0 %2351
      %2354 = vrot.lane.b32.xlu0 %v2324, 48
      %v2355 = vpop.permute.xlu0 %2354
      %2357 = vrot.lane.b32.xlu0 %v2255, 64
      %v2358 = vpop.permute.xlu0 %2357
      %2360 = vrot.lane.b32.xlu0 %v2321, 80
      %v2361 = vpop.permute.xlu0 %2360
      %2363 = vrot.lane.b32.xlu0 %v2259, 96
      %v2364 = vpop.permute.xlu0 %2363
      %2366 = vrot.lane.b32.xlu0 %v2325, 112
      %v2367 = vpop.permute.xlu0 %2366
      %v2370 = vsel %vm951, %v2232, %v2328
      %v2372 = vsel %vm955, %v2370, %v2331
      %v2374 = vsel %vm958, %v2372, %v2334
      %v2376 = vsel %vm961, %v2374, %v2337
      %v2378 = vsel %vm964, %v2376, %v2340
      %v2380 = vsel %vm967, %v2378, %v2343
      %v2382 = vsel %vm970, %v2380, %v2346
      %v2385 = vsel %vm951, %v2248, %v2349
      %v2387 = vsel %vm955, %v2385, %v2352
      %v2389 = vsel %vm958, %v2387, %v2355
      %v2391 = vsel %vm961, %v2389, %v2358
      %v2393 = vsel %vm964, %v2391, %v2361
      %v2395 = vsel %vm967, %v2393, %v2364
      %v2397 = vsel %vm970, %v2395, %v2367
      %2398 = vrot.lane.b32.xlu0 %v2168, 127
      %v2399 = vpop.permute.xlu0 %2398
      %2400 = vrot.lane.b32.xlu0 %v2171, 127
      %v2401 = vpop.permute.xlu0 %2400
      %2402 = vrot.lane.b32.xlu0 %v2174, 127
      %v2403 = vpop.permute.xlu0 %2402
      %2404 = vrot.lane.b32.xlu0 %v2177, 127
      %v2405 = vpop.permute.xlu0 %2404
      %v2408 = vpack.i.b16 %v2401, %v2399
      %v2410 = vshrl.u32 %v2399, 16
      %v2411 = vshrl.u32 %v2401, 16
      %v2412 = vpack.i.b16 %v2411, %v2410
      %v2416 = vpack.i.b16 %v2405, %v2403
      %v2418 = vshrl.u32 %v2403, 16
      %v2419 = vshrl.u32 %v2405, 16
      %v2420 = vpack.i.b16 %v2419, %v2418
      %v2422 = vcombine.high %v2408, %v772
      %v2424 = vunpack.c.l.s4 1983009808
      %v2425 = vunpack.c.0.s8 %v2424
      %v2426 = vlaneseq
      %v2427 = vshrl.u32 %v2426, 7
      %v2428 = vsub.s32 %v2425, %v2427
      %v2429 = vrot.slane %v2408, %v2428
      %v2431 = vunpack.c.l.s4 1983009808
      %v2432 = vunpack.c.0.s8 %v2431
      %v2433 = vlaneseq
      %v2434 = vshrl.u32 %v2433, 7
      %v2435 = vsub.s32 %v2432, %v2434
      %v2436 = vrot.slane %v2422, %v2435
      %v2437 = vcombine.high %v2416, %v772
      %v2439 = vunpack.c.l.s4 1983009808
      %v2440 = vunpack.c.0.s8 %v2439
      %v2441 = vlaneseq
      %v2442 = vshrl.u32 %v2441, 7
      %v2443 = vsub.s32 %v2440, %v2442
      %v2444 = vrot.slane %v2416, %v2443
      %v2446 = vunpack.c.l.s4 1983009808
      %v2447 = vunpack.c.0.s8 %v2446
      %v2448 = vlaneseq
      %v2449 = vshrl.u32 %v2448, 7
      %v2450 = vsub.s32 %v2447, %v2449
      %v2451 = vrot.slane %v2437, %v2450
      %v2452 = vcombine.low %v2429, %v2444
      %v2453 = vcombine.high %v2429, %v2444
      %v2455 = vunpack.c.l.s4 1934713408
      %v2456 = vunpack.c.0.s8 %v2455
      %v2457 = vlaneseq
      %v2458 = vshrl.u32 %v2457, 7
      %v2459 = vsub.s32 %v2456, %v2458
      %v2460 = vrot.slane %v2452, %v2459
      %v2462 = vunpack.c.l.s4 1934713408
      %v2463 = vunpack.c.0.s8 %v2462
      %v2464 = vlaneseq
      %v2465 = vshrl.u32 %v2464, 7
      %v2466 = vsub.s32 %v2463, %v2465
      %v2467 = vrot.slane %v2453, %v2466
      %v2468 = vcombine.low %v2436, %v2451
      %v2469 = vcombine.high %v2436, %v2451
      %v2471 = vunpack.c.l.s4 1934713408
      %v2472 = vunpack.c.0.s8 %v2471
      %v2473 = vlaneseq
      %v2474 = vshrl.u32 %v2473, 7
      %v2475 = vsub.s32 %v2472, %v2474
      %v2476 = vrot.slane %v2468, %v2475
      %v2478 = vunpack.c.l.s4 1934713408
      %v2479 = vunpack.c.0.s8 %v2478
      %v2480 = vlaneseq
      %v2481 = vshrl.u32 %v2480, 7
      %v2482 = vsub.s32 %v2479, %v2481
      %v2483 = vrot.slane %v2469, %v2482
      %v2484 = vcombine.high %v2460, 0
      %v2485 = vcombine.high %v2467, 0
      %v2486 = vcombine.high %v2476, 0
      %v2487 = vcombine.high %v2483, 0
      %v2488 = vcombine.high %v2412, %v775
      %v2490 = vunpack.c.l.s4 1983009808
      %v2491 = vunpack.c.0.s8 %v2490
      %v2492 = vlaneseq
      %v2493 = vshrl.u32 %v2492, 7
      %v2494 = vsub.s32 %v2491, %v2493
      %v2495 = vrot.slane %v2412, %v2494
      %v2497 = vunpack.c.l.s4 1983009808
      %v2498 = vunpack.c.0.s8 %v2497
      %v2499 = vlaneseq
      %v2500 = vshrl.u32 %v2499, 7
      %v2501 = vsub.s32 %v2498, %v2500
      %v2502 = vrot.slane %v2488, %v2501
      %v2503 = vcombine.high %v2420, %v775
      %v2505 = vunpack.c.l.s4 1983009808
      %v2506 = vunpack.c.0.s8 %v2505
      %v2507 = vlaneseq
      %v2508 = vshrl.u32 %v2507, 7
      %v2509 = vsub.s32 %v2506, %v2508
      %v2510 = vrot.slane %v2420, %v2509
      %v2512 = vunpack.c.l.s4 1983009808
      %v2513 = vunpack.c.0.s8 %v2512
      %v2514 = vlaneseq
      %v2515 = vshrl.u32 %v2514, 7
      %v2516 = vsub.s32 %v2513, %v2515
      %v2517 = vrot.slane %v2503, %v2516
      %v2518 = vcombine.low %v2495, %v2510
      %v2519 = vcombine.high %v2495, %v2510
      %v2521 = vunpack.c.l.s4 1934713408
      %v2522 = vunpack.c.0.s8 %v2521
      %v2523 = vlaneseq
      %v2524 = vshrl.u32 %v2523, 7
      %v2525 = vsub.s32 %v2522, %v2524
      %v2526 = vrot.slane %v2518, %v2525
      %v2528 = vunpack.c.l.s4 1934713408
      %v2529 = vunpack.c.0.s8 %v2528
      %v2530 = vlaneseq
      %v2531 = vshrl.u32 %v2530, 7
      %v2532 = vsub.s32 %v2529, %v2531
      %v2533 = vrot.slane %v2519, %v2532
      %v2534 = vcombine.low %v2502, %v2517
      %v2535 = vcombine.high %v2502, %v2517
      %v2537 = vunpack.c.l.s4 1934713408
      %v2538 = vunpack.c.0.s8 %v2537
      %v2539 = vlaneseq
      %v2540 = vshrl.u32 %v2539, 7
      %v2541 = vsub.s32 %v2538, %v2540
      %v2542 = vrot.slane %v2534, %v2541
      %v2544 = vunpack.c.l.s4 1934713408
      %v2545 = vunpack.c.0.s8 %v2544
      %v2546 = vlaneseq
      %v2547 = vshrl.u32 %v2546, 7
      %v2548 = vsub.s32 %v2545, %v2547
      %v2549 = vrot.slane %v2535, %v2548
      %v2550 = vcombine.high %v2526, 0
      %v2551 = vcombine.high %v2533, 0
      %v2552 = vcombine.high %v2542, 0
      %v2553 = vcombine.high %v2549, 0
      %2555 = vrot.lane.b32.xlu0 %v2526, 16
      %v2556 = vpop.permute.xlu0 %2555
      %2558 = vrot.lane.b32.xlu0 %v2484, 32
      %v2559 = vpop.permute.xlu0 %2558
      %2561 = vrot.lane.b32.xlu0 %v2550, 48
      %v2562 = vpop.permute.xlu0 %2561
      %2564 = vrot.lane.b32.xlu0 %v2467, 64
      %v2565 = vpop.permute.xlu0 %2564
      %2567 = vrot.lane.b32.xlu0 %v2533, 80
      %v2568 = vpop.permute.xlu0 %2567
      %2570 = vrot.lane.b32.xlu0 %v2485, 96
      %v2571 = vpop.permute.xlu0 %2570
      %2573 = vrot.lane.b32.xlu0 %v2551, 112
      %v2574 = vpop.permute.xlu0 %2573
      %2576 = vrot.lane.b32.xlu0 %v2542, 16
      %v2577 = vpop.permute.xlu0 %2576
      %2579 = vrot.lane.b32.xlu0 %v2486, 32
      %v2580 = vpop.permute.xlu0 %2579
      %2582 = vrot.lane.b32.xlu0 %v2552, 48
      %v2583 = vpop.permute.xlu0 %2582
      %2585 = vrot.lane.b32.xlu0 %v2483, 64
      %v2586 = vpop.permute.xlu0 %2585
      %2588 = vrot.lane.b32.xlu0 %v2549, 80
      %v2589 = vpop.permute.xlu0 %2588
      %2591 = vrot.lane.b32.xlu0 %v2487, 96
      %v2592 = vpop.permute.xlu0 %2591
      %2594 = vrot.lane.b32.xlu0 %v2553, 112
      %v2595 = vpop.permute.xlu0 %2594
      %v2598 = vsel %vm951, %v2460, %v2556
      %v2600 = vsel %vm955, %v2598, %v2559
      %v2602 = vsel %vm958, %v2600, %v2562
      %v2604 = vsel %vm961, %v2602, %v2565
      %v2606 = vsel %vm964, %v2604, %v2568
      %v2608 = vsel %vm967, %v2606, %v2571
      %v2610 = vsel %vm970, %v2608, %v2574
      %v2613 = vsel %vm951, %v2476, %v2577
      %v2615 = vsel %vm955, %v2613, %v2580
      %v2617 = vsel %vm958, %v2615, %v2583
      %v2619 = vsel %vm961, %v2617, %v2586
      %v2621 = vsel %vm964, %v2619, %v2589
      %v2623 = vsel %vm967, %v2621, %v2592
      %v2625 = vsel %vm970, %v2623, %v2595
      %2626 = vrot.lane.b32.xlu0 %v2168, 126
      %v2627 = vpop.permute.xlu0 %2626
      %2628 = vrot.lane.b32.xlu0 %v2171, 126
      %v2629 = vpop.permute.xlu0 %2628
      %2630 = vrot.lane.b32.xlu0 %v2174, 126
      %v2631 = vpop.permute.xlu0 %2630
      %2632 = vrot.lane.b32.xlu0 %v2177, 126
      %v2633 = vpop.permute.xlu0 %2632
      %v2636 = vpack.i.b16 %v2629, %v2627
      %v2638 = vshrl.u32 %v2627, 16
      %v2639 = vshrl.u32 %v2629, 16
      %v2640 = vpack.i.b16 %v2639, %v2638
      %v2644 = vpack.i.b16 %v2633, %v2631
      %v2646 = vshrl.u32 %v2631, 16
      %v2647 = vshrl.u32 %v2633, 16
      %v2648 = vpack.i.b16 %v2647, %v2646
      %v2650 = vcombine.high %v2636, %v772
      %v2652 = vunpack.c.l.s4 1983009808
      %v2653 = vunpack.c.0.s8 %v2652
      %v2654 = vlaneseq
      %v2655 = vshrl.u32 %v2654, 7
      %v2656 = vsub.s32 %v2653, %v2655
      %v2657 = vrot.slane %v2636, %v2656
      %v2659 = vunpack.c.l.s4 1983009808
      %v2660 = vunpack.c.0.s8 %v2659
      %v2661 = vlaneseq
      %v2662 = vshrl.u32 %v2661, 7
      %v2663 = vsub.s32 %v2660, %v2662
      %v2664 = vrot.slane %v2650, %v2663
      %v2665 = vcombine.high %v2644, %v772
      %v2667 = vunpack.c.l.s4 1983009808
      %v2668 = vunpack.c.0.s8 %v2667
      %v2669 = vlaneseq
      %v2670 = vshrl.u32 %v2669, 7
      %v2671 = vsub.s32 %v2668, %v2670
      %v2672 = vrot.slane %v2644, %v2671
      %v2674 = vunpack.c.l.s4 1983009808
      %v2675 = vunpack.c.0.s8 %v2674
      %v2676 = vlaneseq
      %v2677 = vshrl.u32 %v2676, 7
      %v2678 = vsub.s32 %v2675, %v2677
      %v2679 = vrot.slane %v2665, %v2678
      %v2680 = vcombine.low %v2657, %v2672
      %v2681 = vcombine.high %v2657, %v2672
      %v2683 = vunpack.c.l.s4 1934713408
      %v2684 = vunpack.c.0.s8 %v2683
      %v2685 = vlaneseq
      %v2686 = vshrl.u32 %v2685, 7
      %v2687 = vsub.s32 %v2684, %v2686
      %v2688 = vrot.slane %v2680, %v2687
      %v2690 = vunpack.c.l.s4 1934713408
      %v2691 = vunpack.c.0.s8 %v2690
      %v2692 = vlaneseq
      %v2693 = vshrl.u32 %v2692, 7
      %v2694 = vsub.s32 %v2691, %v2693
      %v2695 = vrot.slane %v2681, %v2694
      %v2696 = vcombine.low %v2664, %v2679
      %v2697 = vcombine.high %v2664, %v2679
      %v2699 = vunpack.c.l.s4 1934713408
      %v2700 = vunpack.c.0.s8 %v2699
      %v2701 = vlaneseq
      %v2702 = vshrl.u32 %v2701, 7
      %v2703 = vsub.s32 %v2700, %v2702
      %v2704 = vrot.slane %v2696, %v2703
      %v2706 = vunpack.c.l.s4 1934713408
      %v2707 = vunpack.c.0.s8 %v2706
      %v2708 = vlaneseq
      %v2709 = vshrl.u32 %v2708, 7
      %v2710 = vsub.s32 %v2707, %v2709
      %v2711 = vrot.slane %v2697, %v2710
      %v2712 = vcombine.high %v2688, 0
      %v2713 = vcombine.high %v2695, 0
      %v2714 = vcombine.high %v2704, 0
      %v2715 = vcombine.high %v2711, 0
      %v2716 = vcombine.high %v2640, %v775
      %v2718 = vunpack.c.l.s4 1983009808
      %v2719 = vunpack.c.0.s8 %v2718
      %v2720 = vlaneseq
      %v2721 = vshrl.u32 %v2720, 7
      %v2722 = vsub.s32 %v2719, %v2721
      %v2723 = vrot.slane %v2640, %v2722
      %v2725 = vunpack.c.l.s4 1983009808
      %v2726 = vunpack.c.0.s8 %v2725
      %v2727 = vlaneseq
      %v2728 = vshrl.u32 %v2727, 7
      %v2729 = vsub.s32 %v2726, %v2728
      %v2730 = vrot.slane %v2716, %v2729
      %v2731 = vcombine.high %v2648, %v775
      %v2733 = vunpack.c.l.s4 1983009808
      %v2734 = vunpack.c.0.s8 %v2733
      %v2735 = vlaneseq
      %v2736 = vshrl.u32 %v2735, 7
      %v2737 = vsub.s32 %v2734, %v2736
      %v2738 = vrot.slane %v2648, %v2737
      %v2740 = vunpack.c.l.s4 1983009808
      %v2741 = vunpack.c.0.s8 %v2740
      %v2742 = vlaneseq
      %v2743 = vshrl.u32 %v2742, 7
      %v2744 = vsub.s32 %v2741, %v2743
      %v2745 = vrot.slane %v2731, %v2744
      %v2746 = vcombine.low %v2723, %v2738
      %v2747 = vcombine.high %v2723, %v2738
      %v2749 = vunpack.c.l.s4 1934713408
      %v2750 = vunpack.c.0.s8 %v2749
      %v2751 = vlaneseq
      %v2752 = vshrl.u32 %v2751, 7
      %v2753 = vsub.s32 %v2750, %v2752
      %v2754 = vrot.slane %v2746, %v2753
      %v2756 = vunpack.c.l.s4 1934713408
      %v2757 = vunpack.c.0.s8 %v2756
      %v2758 = vlaneseq
      %v2759 = vshrl.u32 %v2758, 7
      %v2760 = vsub.s32 %v2757, %v2759
      %v2761 = vrot.slane %v2747, %v2760
      %v2762 = vcombine.low %v2730, %v2745
      %v2763 = vcombine.high %v2730, %v2745
      %v2765 = vunpack.c.l.s4 1934713408
      %v2766 = vunpack.c.0.s8 %v2765
      %v2767 = vlaneseq
      %v2768 = vshrl.u32 %v2767, 7
      %v2769 = vsub.s32 %v2766, %v2768
      %v2770 = vrot.slane %v2762, %v2769
      %v2772 = vunpack.c.l.s4 1934713408
      %v2773 = vunpack.c.0.s8 %v2772
      %v2774 = vlaneseq
      %v2775 = vshrl.u32 %v2774, 7
      %v2776 = vsub.s32 %v2773, %v2775
      %v2777 = vrot.slane %v2763, %v2776
      %v2778 = vcombine.high %v2754, 0
      %v2779 = vcombine.high %v2761, 0
      %v2780 = vcombine.high %v2770, 0
      %v2781 = vcombine.high %v2777, 0
      %2783 = vrot.lane.b32.xlu0 %v2754, 16
      %v2784 = vpop.permute.xlu0 %2783
      %2786 = vrot.lane.b32.xlu0 %v2712, 32
      %v2787 = vpop.permute.xlu0 %2786
      %2789 = vrot.lane.b32.xlu0 %v2778, 48
      %v2790 = vpop.permute.xlu0 %2789
      %2792 = vrot.lane.b32.xlu0 %v2695, 64
      %v2793 = vpop.permute.xlu0 %2792
      %2795 = vrot.lane.b32.xlu0 %v2761, 80
      %v2796 = vpop.permute.xlu0 %2795
      %2798 = vrot.lane.b32.xlu0 %v2713, 96
      %v2799 = vpop.permute.xlu0 %2798
      %2801 = vrot.lane.b32.xlu0 %v2779, 112
      %v2802 = vpop.permute.xlu0 %2801
      %2804 = vrot.lane.b32.xlu0 %v2770, 16
      %v2805 = vpop.permute.xlu0 %2804
      %2807 = vrot.lane.b32.xlu0 %v2714, 32
      %v2808 = vpop.permute.xlu0 %2807
      %2810 = vrot.lane.b32.xlu0 %v2780, 48
      %v2811 = vpop.permute.xlu0 %2810
      %2813 = vrot.lane.b32.xlu0 %v2711, 64
      %v2814 = vpop.permute.xlu0 %2813
      %2816 = vrot.lane.b32.xlu0 %v2777, 80
      %v2817 = vpop.permute.xlu0 %2816
      %2819 = vrot.lane.b32.xlu0 %v2715, 96
      %v2820 = vpop.permute.xlu0 %2819
      %2822 = vrot.lane.b32.xlu0 %v2781, 112
      %v2823 = vpop.permute.xlu0 %2822
      %v2826 = vsel %vm951, %v2688, %v2784
      %v2828 = vsel %vm955, %v2826, %v2787
      %v2830 = vsel %vm958, %v2828, %v2790
      %v2832 = vsel %vm961, %v2830, %v2793
      %v2834 = vsel %vm964, %v2832, %v2796
      %v2836 = vsel %vm967, %v2834, %v2799
      %v2838 = vsel %vm970, %v2836, %v2802
      %v2841 = vsel %vm951, %v2704, %v2805
      %v2843 = vsel %vm955, %v2841, %v2808
      %v2845 = vsel %vm958, %v2843, %v2811
      %v2847 = vsel %vm961, %v2845, %v2814
      %v2849 = vsel %vm964, %v2847, %v2817
      %v2851 = vsel %vm967, %v2849, %v2820
      %v2853 = vsel %vm970, %v2851, %v2823
      %v2856 = vrot.slane %v1204, 6
      %v2857 = vrot.slane %v1219, 6
      %v2860 = vrot.slane %v1432, 4
      %v2861 = vrot.slane %v1447, 4
      %v2864 = vrot.slane %v1689, 2
      %v2865 = vrot.slane %v1704, 2
      %v2868 = vrot.slane %v2145, 6
      %v2869 = vrot.slane %v2160, 6
      %v2872 = vrot.slane %v2382, 4
      %v2873 = vrot.slane %v2397, 4
      %v2876 = vrot.slane %v2610, 2
      %v2877 = vrot.slane %v2625, 2
      %vm2878 = vcmask 1041408
      %v2880 = vsel %vm2878, %v972, %v2856
      %v2882 = vsel %vm2878, %v987, %v2857
      %vm2883 = vcmask 1043456
      %v2885 = vsel %vm2883, %v2880, %v2860
      %v2887 = vsel %vm2883, %v2882, %v2861
      %vm2888 = vcmask 1045504
      %v2890 = vsel %vm2888, %v2885, %v2864
      %v2893 = vsel %vm2888, %v2887, %v2865
      %v2896 = vsel %vm2878, %v1917, %v2868
      %v2898 = vsel %vm2878, %v1932, %v2869
      %v2900 = vsel %vm2883, %v2896, %v2872
      %v2902 = vsel %vm2883, %v2898, %v2873
      %v2904 = vsel %vm2888, %v2900, %v2876
      %v2907 = vsel %vm2888, %v2902, %v2877
      %v2909 = vld [vmem:[%s3] sm:$0x3]
      %vm2910 = vcmask 293888
      %v2912 = vsel %vm2910, %v2909, 0
      %v2914 = vsel %vm2878, %v2838, 0
      %v2916 = vsel %vm2878, %v2853, 0
      %2918 = vmatprep.subr.bf16.mxu0 %v2893
      %2919 = vmatpush1.bf16.msra.mxu0 %v2890
      %2920 = vmatprep.subr.bf16.mxu0 %v2907
      %2921 = vmatpush1.bf16.msra.mxu0 %v2904
      %2922 = vmatprep.subr.bf16.mxu0 %v2916
      %2923 = vmatpush1.bf16.msra.mxu0 %v2914
      %2924 = vmatprep.subr.bf16.mxu0 0
      %2925 = vmatpush1.bf16.msra.mxu0 0
      %2926 = vmatprep.subr.bf16.mxu0 0
      %2927 = vmatpush1.bf16.msra.mxu0 0
      %2928 = vmatprep.subr.bf16.mxu0 0
      %2929 = vmatpush1.bf16.msra.mxu0 0
      %2930 = vmatprep.subr.bf16.mxu0 0
      %2931 = vmatpush1.bf16.msra.mxu0 0
      %2932 = vmatprep.subr.bf16.mxu0 0
      %2933 = vmatpush1.bf16.msra.mxu0 0
      %2934 = vmatprep.subr.bf16.mxu0 0
      %2935 = vmatpush1.bf16.msra.mxu0 0
      %2936 = vmatprep.subr.bf16.mxu0 0
      %2937 = vmatpush1.bf16.msra.mxu0 0
      %2938 = vmatprep.subr.bf16.mxu0 0
      %2939 = vmatpush1.bf16.msra.mxu0 0
      %2940 = vmatprep.subr.bf16.mxu0 0
      %2941 = vmatpush1.bf16.msra.mxu0 0
      %2942 = vmatprep.subr.bf16.mxu0 0
      %2943 = vmatpush1.bf16.msra.mxu0 0
      %2944 = vmatprep.subr.bf16.mxu0 0
      %2945 = vmatpush1.bf16.msra.mxu0 0
      %2946 = vmatprep.subr.bf16.mxu0 0
      %2947 = vmatpush1.bf16.msra.mxu0 0
      %2948 = vmatprep.subr.bf16.mxu0 0
      %2949 = vmatpush1.bf16.msra.mxu0 0
      %2950 = vmatprep.mubr.bf16.mxu0 0
      %2951 = vmatmul.mubr.bf16.gmra.mrb[0].mxu0 %v2912
      %v2952 = vpop.f32.mrb[0].mxu0
      %v2953 = vadd.f32 0.0, %v2952
      %v2954 = vpop.f32.mrb[0].mxu0
      %v2955 = vadd.f32 0.0, %v2954
      %v2956 = vpop.f32.mrb[0].mxu0
      %v2957 = vpop.f32.mrb[0].mxu0
      %2958 = vdwg.mxu0
      %v2959 = vpack.c.bf16 %v2953, %v2953
      %v2960 = vpack.c.bf16 %v2955, %v2955
      %v2963 = vcombine.low %v2959, %v2960
      %v2965 = vunpack.c.l.s4 1983009808
      %v2966 = vunpack.c.0.s8 %v2965
      %v2967 = vlaneseq
      %v2968 = vshrl.u32 %v2967, 7
      %v2969 = vsub.s32 %v2966, %v2968
      %v2970 = vrot.slane %v2963, %v2969
      %2972 = vst [vmem:[%s384] sm:$0xf] %v2970
      %v2973 = vsel %vm2883, %v2953, 0.0
      %v2974 = vsel %vm2883, %v2955, 0.0
      %v2975 = vadd.f32 %v2973, %v2974
      %2976 = vadd.xlane.f32.xlu0 %v2975
      %v2977 = vpop.xlane.xlu0 %2976
      %v2978 = vmul.f32 %v2953, %v2953
      %v2979 = vmul.f32 %v2955, %v2955
      %v2980 = vsel %vm2883, %v2978, 0.0
      %v2981 = vsel %vm2883, %v2979, 0.0
      %v2982 = vadd.f32 %v2980, %v2981
      %2983 = vadd.xlane.f32.xlu0 %v2982
      %v2984 = vpop.xlane.xlu0 %2983
      %v2985 = vsel %vm733, %v2977, %v2984
      %2986 = vxpose.xlu0.b32.start [1/16] %v2985, 128
      %2987 = vxpose.xlu0.b32.cont [2/16] 0.0, 128
      %2988 = vxpose.xlu0.b32.cont [3/16] 0.0, 128
      %2989 = vxpose.xlu0.b32.cont [4/16] 0.0, 128
      %2990 = vxpose.xlu0.b32.cont [5/16] 0.0, 128
      %2991 = vxpose.xlu0.b32.cont [6/16] 0.0, 128
      %2992 = vxpose.xlu0.b32.cont [7/16] 0.0, 128
      %2993 = vxpose.xlu0.b32.cont [8/16] 0.0, 128
      %2994 = vxpose.xlu0.b32.cont [9/16] 0.0, 128
      %2995 = vxpose.xlu0.b32.cont [10/16] 0.0, 128
      %2996 = vxpose.xlu0.b32.cont [11/16] 0.0, 128
      %2997 = vxpose.xlu0.b32.cont [12/16] 0.0, 128
      %2998 = vxpose.xlu0.b32.cont [13/16] 0.0, 128
      %2999 = vxpose.xlu0.b32.cont [14/16] 0.0, 128
      %3000 = vxpose.xlu0.b32.cont [15/16] 0.0, 128
      %3001 = vxpose.xlu0.b32.end [16/16] 0.0, 128
      %v3002 = vpop.trf.xlu0
      %v3003 = vpop.trf.xlu0
      %v3004 = vpop.trf.xlu0
      %v3005 = vpop.trf.xlu0
      %v3006 = vpop.trf.xlu0
      %v3007 = vpop.trf.xlu0
      %v3008 = vpop.trf.xlu0
      %v3009 = vpop.trf.xlu0
      %v3010 = vpop.trf.xlu0
      %v3011 = vpop.trf.xlu0
      %v3012 = vpop.trf.xlu0
      %v3013 = vpop.trf.xlu0
      %v3014 = vpop.trf.xlu0
      %v3015 = vpop.trf.xlu0
      %v3016 = vpop.trf.xlu0
      %v3017 = vpop.trf.xlu0
      %vm3018 = vcmask 25600
      %3019 = vst.msk [vmem:[%s392] sm:$0x3] %vm3018, %v3002
      %s3020 = smul.u32 2, %s24
      %p3021 = scmp.lt.s32.totalorder %s23, 1
      %s3022 = scalar_select %p3021, %s23, 1
      %p3023 = scmp.lt.s32.totalorder %s3020, 1
      %s3024 = scalar_select %p3023, %s3020, 1
      %s3025 = smul.addr %s3022, 2
      %s3026 = sadd.s32 %s3024, %s3025
      %s3027 = smul.addr %s3026, 2
      %s3028 = scalar_lea.vmem %s6, %s3027
      %p3029 = scmp.lt.s32.totalorder %s23, 1
      %s3030 = scalar_select %p3029, %s23, 1
      %p3031 = scmp.lt.s32.totalorder %s24, 0
      %s3032 = scalar_select %p3031, %s24, 0
      %s3033 = sadd.s32 %s3032, %s3030
      %s3034 = smul.addr %s3033, 2
      %s3035 = scalar_lea.vmem %s7, %s3034
      // Predicated region
      $region45: #{up_forward.4} parent=43 // pred_check
        %p3036 = pneg %p198
      $region46: #{up_forward.4} parent=43 // pred_check_branch
        %3038 = sbr.rel (%p3036) target = $region48
      $region47: #{up_forward.4} parent=43 // pred_region
        %s3039 = smul.u32 2, %s24
      $region48: #{up_forward.4} parent=43 // pred_fallthru
        _
      // Predicated region
      $region49: #{up_forward.4} parent=43 // pred_check
        %p3040 = pneg %p226
      $region50: #{up_forward.4} parent=43 // pred_check_branch
        %3042 = sbr.rel (%p3040) target = $region52
      $region51: #{up_forward.4} parent=43 // pred_region
        _
      $region52: #{up_forward.4} parent=43 // pred_fallthru
        _
    $region44: #{up_forward.4} parent=5 // pred_fallthru
      _
    %p3043 = scmp.le.s32.totalorder 2, %s14
    // Predicated region
    $region53: #{up_forward.4} parent=5 // pred_check
      %p3044 = pneg %p3043
    $region54: #{up_forward.4} parent=5 // pred_check_branch
      %3046 = sbr.rel (%p3044) target = $region56
    $region55: #{up_forward.4} parent=5 // pred_region
      %s3047 = ssub.s32 %s14, 2
      // Predicated region
      $region57: #{up_forward.4} parent=55 // pred_check
        %p3048 = pneg %p204
      $region58: #{up_forward.4} parent=55 // pred_check_branch
        %3050 = sbr.rel (%p3048) target = $region60
      $region59: #{up_forward.4} parent=55 // pred_region
        %s3051 = smul.u32 2, %s26
        %p3052 = scmp.lt.s32.totalorder %s25, 1
        %s3053 = scalar_select %p3052, %s25, 1
        %p3054 = scmp.lt.s32.totalorder %s3051, 1
        %s3055 = scalar_select %p3054, %s3051, 1
        %s3056 = smul.addr %s3053, 2
        %s3057 = sadd.s32 %s3055, %s3056
        %s3058 = smul.addr %s3057, 2
        %s3059 = scalar_lea.vmem %s6, %s3058
      $region60: #{up_forward.4} parent=55 // pred_fallthru
        _
      // Predicated region
      $region61: #{up_forward.4} parent=55 // pred_check
        %p3060 = pneg %p232
      $region62: #{up_forward.4} parent=55 // pred_check_branch
        %3062 = sbr.rel (%p3060) target = $region64
      $region63: #{up_forward.4} parent=55 // pred_region
        %p3063 = scmp.lt.s32.totalorder %s25, 1
        %s3064 = scalar_select %p3063, %s25, 1
        %p3065 = scmp.lt.s32.totalorder %s26, 0
        %s3066 = scalar_select %p3065, %s26, 0
        %s3067 = sadd.s32 %s3066, %s3064
        %s3068 = smul.addr %s3067, 2
        %s3069 = scalar_lea.vmem %s7, %s3068
      $region64: #{up_forward.4} parent=55 // pred_fallthru
        _
    $region56: #{up_forward.4} parent=5 // pred_fallthru
      _
  $region6: #{up_forward.4} parent=0 // loop_footer
    %s18 = sadd.s32 1, %s14
  $region7: #{up_forward.4} parent=0 // loop_footer_branch
    %13 = sbr.rel target = $region3
  $region8: #{up_forward.4} parent=0 // loop_exit
    _

// kernel: up_forward.3
$region0: #{up_forward.3}
  #allocation0 [shape = 'u32[]', space=smem, size = 0x4, offset = 0x4, fixed_abs, tag = 'smem constant byte address 0x4 - core index']
  #allocation1 [shape = 'u32[144,128]{1,0:T(1,128)}', space=vmem, size = 0x12000, scoped, tag = 'internal scratch']
  %s0 = inlined_call_operand.vmem [shape: bf16[2,4,256], index: 0, kind: input, shape index: {}]
  %s1 = inlined_call_operand.vmem [shape: bf16[2,1,4,16], index: 1, kind: input, shape index: {}, may-alias: {1,2,4,5}]
  %s2 = inlined_call_operand.vmem [shape: bf16[2,1,4,16], index: 2, kind: input, shape index: {}, may-alias: {1,2,4,5}]
  %s3 = inlined_call_operand.vmem [shape: bf16[2,4,256], index: 3, kind: input, shape index: {}]
  %s4 = inlined_call_operand.vmem [shape: bf16[2,1,4,16], index: 4, kind: input, shape index: {}, may-alias: {1,2,4,5}]
  %s5 = inlined_call_operand.vmem [shape: bf16[2,1,4,16], index: 5, kind: input, shape index: {}, may-alias: {1,2,4,5}]
  %s6 = inlined_call_operand.vmem [shape: bf16[4,72], index: 6, kind: input, shape index: {}]
  %s7 = inlined_call_operand.vmem [shape: bf16[2,4,256], index: 7, kind: output, shape index: {0}]
  %s8 = inlined_call_operand.vmem [shape: f32[2,1,2,4], index: 8, kind: output, shape index: {1}]
  %9 = xla_tuple %s7, %s8
  %s10 = sld [smem:[#allocation0]]
  $region69: #{up_forward.3} parent=0
    _
  %s12 = ssub.s32 1, %s10
  %s13 = scalar_select 0, %s12, %s10
  loop: start=0, step=1, limit=4
  $region2: #{up_forward.3} parent=0 // loop_pre_header
    _
  $region3: #{up_forward.3} parent=0 // loop_header
    %s15 = sphi 0, %s19
    %p16 = scmp.ge.s32.totalorder %s15, 4
    %s22 = sphi 0, %s34
    %s23 = sphi 0, %s30
    %s24 = sphi 0, %s22
    %s25 = sphi 0, %s23
    %s26 = sphi 0, %s24
    %s27 = sphi 0, %s25
    %s39 = sphi 0, %s41
    %s42 = sphi 0, %s39
    %s43 = sphi 0, %s42
    %s59 = sphi 0, %s43
    %s67 = sphi 0, %s69
    %s70 = sphi 0, %s67
    %s71 = sphi 0, %s70
    %s87 = sphi 0, %s71
    %s95 = sphi 0, %s97
    %s98 = sphi 0, %s95
    %s99 = sphi 0, %s98
    %s115 = sphi 0, %s99
    %s123 = sphi 0, %s125
    %s126 = sphi 0, %s123
    %s127 = sphi 0, %s126
    %s143 = sphi 0, %s127
    %s151 = sphi 0, %s153
    %s154 = sphi 0, %s151
    %s155 = sphi 0, %s154
    %s171 = sphi 0, %s155
    %s179 = sphi 0, %s181
    %s182 = sphi 0, %s179
    %s183 = sphi 0, %s182
    %s199 = sphi 0, %s183
    %s203 = sphi 0, %s203
    %s205 = sphi 0, %s203
    %s206 = sphi 0, %s205
    %s220 = sphi 0, %s206
    %s228 = sphi 0, %s230
    %s231 = sphi 0, %s228
    %s232 = sphi 0, %s231
    %s248 = sphi 0, %s232
    %s256 = sphi 0, %s258
    %s259 = sphi 0, %s256
    %s260 = sphi 0, %s259
    %s276 = sphi 0, %s260
  $region4: #{up_forward.3} parent=0 // loop_header_branch
    %18 = sbr.rel (%p16) target = $region8
  $region5: #{up_forward.3} parent=0 // loop_body
    %s20 = ssub.s32 %s15, 1
    %s21 = ssub.s32 %s15, 2
    %s28 = sadd.s32 1, %s23
    %p29 = scmp.ge.s32.totalorder %s28, 1
    %s30 = scalar_select %p29, 0, %s28
    %s31 = sadd.s32 1, %s22
    %s32 = scalar_select %p29, %s31, %s22
    %p33 = scmp.ge.s32.totalorder %s32, 2
    %s34 = scalar_select %p33, 0, %s32
    %s35 = ssub.s32 %s22, %s34
    %s36 = ssub.s32 %s23, %s30
    %s37 = sor.u32 %s35, %s36
    %p38 = scmp.eq.s32.totalorder %s37, 0
    %s40 = sadd.s32 %s39, 1
    %s41 = scalar_select %p38, %s39, %s40
    %p44 = pneg %p38
    %p45 = scmp.eq.s32.totalorder %s15, 1
    %p46 = por %p44, %p45
    %p47 = scmp.ne.s32.totalorder %s39, %s42
    %p48 = scmp.eq.s32.totalorder %s15, 0
    %p49 = por %p47, %p48
    %p50 = scmp.ne.s32.totalorder %s39, %s42
    %p51 = scmp.eq.s32.totalorder %s20, 1
    %p52 = por %p50, %p51
    %p53 = scmp.ne.s32.totalorder %s42, %s43
    %p54 = scmp.eq.s32.totalorder %s20, 0
    %p55 = por %p53, %p54
    %p56 = scmp.ne.s32.totalorder %s42, %s43
    %p57 = scmp.eq.s32.totalorder %s21, 1
    %p58 = por %p56, %p57
    %p60 = scmp.ne.s32.totalorder %s43, %s59
    %p61 = scmp.eq.s32.totalorder %s21, 0
    %p62 = por %p60, %p61
    %s63 = ssub.s32 %s22, %s34
    %s64 = ssub.s32 %s23, %s30
    %s65 = sor.u32 %s63, %s64
    %p66 = scmp.eq.s32.totalorder %s65, 0
    %s68 = sadd.s32 %s67, 1
    %s69 = scalar_select %p66, %s67, %s68
    %p72 = pneg %p66
    %p73 = scmp.eq.s32.totalorder %s15, 1
    %p74 = por %p72, %p73
    %p75 = scmp.ne.s32.totalorder %s67, %s70
    %p76 = scmp.eq.s32.totalorder %s15, 0
    %p77 = por %p75, %p76
    %p78 = scmp.ne.s32.totalorder %s67, %s70
    %p79 = scmp.eq.s32.totalorder %s20, 1
    %p80 = por %p78, %p79
    %p81 = scmp.ne.s32.totalorder %s70, %s71
    %p82 = scmp.eq.s32.totalorder %s20, 0
    %p83 = por %p81, %p82
    %p84 = scmp.ne.s32.totalorder %s70, %s71
    %p85 = scmp.eq.s32.totalorder %s21, 1
    %p86 = por %p84, %p85
    %p88 = scmp.ne.s32.totalorder %s71, %s87
    %p89 = scmp.eq.s32.totalorder %s21, 0
    %p90 = por %p88, %p89
    %s91 = ssub.s32 %s22, %s34
    %s92 = ssub.s32 %s23, %s30
    %s93 = sor.u32 %s91, %s92
    %p94 = scmp.eq.s32.totalorder %s93, 0
    %s96 = sadd.s32 %s95, 1
    %s97 = scalar_select %p94, %s95, %s96
    %p100 = pneg %p94
    %p101 = scmp.eq.s32.totalorder %s15, 1
    %p102 = por %p100, %p101
    %p103 = scmp.ne.s32.totalorder %s95, %s98
    %p104 = scmp.eq.s32.totalorder %s15, 0
    %p105 = por %p103, %p104
    %p106 = scmp.ne.s32.totalorder %s95, %s98
    %p107 = scmp.eq.s32.totalorder %s20, 1
    %p108 = por %p106, %p107
    %p109 = scmp.ne.s32.totalorder %s98, %s99
    %p110 = scmp.eq.s32.totalorder %s20, 0
    %p111 = por %p109, %p110
    %p112 = scmp.ne.s32.totalorder %s98, %s99
    %p113 = scmp.eq.s32.totalorder %s21, 1
    %p114 = por %p112, %p113
    %p116 = scmp.ne.s32.totalorder %s99, %s115
    %p117 = scmp.eq.s32.totalorder %s21, 0
    %p118 = por %p116, %p117
    %s119 = ssub.s32 %s22, %s34
    %s120 = ssub.s32 %s23, %s30
    %s121 = sor.u32 %s119, %s120
    %p122 = scmp.eq.s32.totalorder %s121, 0
    %s124 = sadd.s32 %s123, 1
    %s125 = scalar_select %p122, %s123, %s124
    %p128 = pneg %p122
    %p129 = scmp.eq.s32.totalorder %s15, 1
    %p130 = por %p128, %p129
    %p131 = scmp.ne.s32.totalorder %s123, %s126
    %p132 = scmp.eq.s32.totalorder %s15, 0
    %p133 = por %p131, %p132
    %p134 = scmp.ne.s32.totalorder %s123, %s126
    %p135 = scmp.eq.s32.totalorder %s20, 1
    %p136 = por %p134, %p135
    %p137 = scmp.ne.s32.totalorder %s126, %s127
    %p138 = scmp.eq.s32.totalorder %s20, 0
    %p139 = por %p137, %p138
    %p140 = scmp.ne.s32.totalorder %s126, %s127
    %p141 = scmp.eq.s32.totalorder %s21, 1
    %p142 = por %p140, %p141
    %p144 = scmp.ne.s32.totalorder %s127, %s143
    %p145 = scmp.eq.s32.totalorder %s21, 0
    %p146 = por %p144, %p145
    %s147 = ssub.s32 %s22, %s34
    %s148 = ssub.s32 %s23, %s30
    %s149 = sor.u32 %s147, %s148
    %p150 = scmp.eq.s32.totalorder %s149, 0
    %s152 = sadd.s32 %s151, 1
    %s153 = scalar_select %p150, %s151, %s152
    %p156 = pneg %p150
    %p157 = scmp.eq.s32.totalorder %s15, 1
    %p158 = por %p156, %p157
    %p159 = scmp.ne.s32.totalorder %s151, %s154
    %p160 = scmp.eq.s32.totalorder %s15, 0
    %p161 = por %p159, %p160
    %p162 = scmp.ne.s32.totalorder %s151, %s154
    %p163 = scmp.eq.s32.totalorder %s20, 1
    %p164 = por %p162, %p163
    %p165 = scmp.ne.s32.totalorder %s154, %s155
    %p166 = scmp.eq.s32.totalorder %s20, 0
    %p167 = por %p165, %p166
    %p168 = scmp.ne.s32.totalorder %s154, %s155
    %p169 = scmp.eq.s32.totalorder %s21, 1
    %p170 = por %p168, %p169
    %p172 = scmp.ne.s32.totalorder %s155, %s171
    %p173 = scmp.eq.s32.totalorder %s21, 0
    %p174 = por %p172, %p173
    %s175 = ssub.s32 %s22, %s34
    %s176 = ssub.s32 %s23, %s30
    %s177 = sor.u32 %s175, %s176
    %p178 = scmp.eq.s32.totalorder %s177, 0
    %s180 = sadd.s32 %s179, 1
    %s181 = scalar_select %p178, %s179, %s180
    %p184 = pneg %p178
    %p185 = scmp.eq.s32.totalorder %s15, 1
    %p186 = por %p184, %p185
    %p187 = scmp.ne.s32.totalorder %s179, %s182
    %p188 = scmp.eq.s32.totalorder %s15, 0
    %p189 = por %p187, %p188
    %p190 = scmp.ne.s32.totalorder %s179, %s182
    %p191 = scmp.eq.s32.totalorder %s20, 1
    %p192 = por %p190, %p191
    %p193 = scmp.ne.s32.totalorder %s182, %s183
    %p194 = scmp.eq.s32.totalorder %s20, 0
    %p195 = por %p193, %p194
    %p196 = scmp.ne.s32.totalorder %s182, %s183
    %p197 = scmp.eq.s32.totalorder %s21, 1
    %p198 = por %p196, %p197
    %p200 = scmp.ne.s32.totalorder %s183, %s199
    %p201 = scmp.eq.s32.totalorder %s21, 0
    %p202 = por %p200, %p201
    %s204 = sadd.s32 %s203, 1
    %p207 = scmp.eq.s32.totalorder %s15, 1
    %p208 = scmp.ne.s32.totalorder %s203, %s205
    %p209 = scmp.eq.s32.totalorder %s15, 0
    %p210 = por %p208, %p209
    %p211 = scmp.ne.s32.totalorder %s203, %s205
    %p212 = scmp.eq.s32.totalorder %s20, 1
    %p213 = por %p211, %p212
    %p214 = scmp.ne.s32.totalorder %s205, %s206
    %p215 = scmp.eq.s32.totalorder %s20, 0
    %p216 = por %p214, %p215
    %p217 = scmp.ne.s32.totalorder %s205, %s206
    %p218 = scmp.eq.s32.totalorder %s21, 1
    %p219 = por %p217, %p218
    %p221 = scmp.ne.s32.totalorder %s206, %s220
    %p222 = scmp.eq.s32.totalorder %s21, 0
    %p223 = por %p221, %p222
    %s224 = ssub.s32 %s22, %s34
    %s225 = ssub.s32 %s23, %s30
    %s226 = sor.u32 %s224, %s225
    %p227 = scmp.eq.s32.totalorder %s226, 0
    %s229 = sadd.s32 %s228, 1
    %s230 = scalar_select %p227, %s228, %s229
    %p233 = pneg %p227
    %p234 = scmp.eq.s32.totalorder %s15, 1
    %p235 = por %p233, %p234
    %p236 = scmp.ne.s32.totalorder %s228, %s231
    %p237 = scmp.eq.s32.totalorder %s15, 0
    %p238 = por %p236, %p237
    %p239 = scmp.ne.s32.totalorder %s228, %s231
    %p240 = scmp.eq.s32.totalorder %s20, 1
    %p241 = por %p239, %p240
    %p242 = scmp.ne.s32.totalorder %s231, %s232
    %p243 = scmp.eq.s32.totalorder %s20, 0
    %p244 = por %p242, %p243
    %p245 = scmp.ne.s32.totalorder %s231, %s232
    %p246 = scmp.eq.s32.totalorder %s21, 1
    %p247 = por %p245, %p246
    %p249 = scmp.ne.s32.totalorder %s232, %s248
    %p250 = scmp.eq.s32.totalorder %s21, 0
    %p251 = por %p249, %p250
    %s252 = ssub.s32 %s22, %s34
    %s253 = ssub.s32 %s23, %s30
    %s254 = sor.u32 %s252, %s253
    %p255 = scmp.eq.s32.totalorder %s254, 0
    %s257 = sadd.s32 %s256, 1
    %s258 = scalar_select %p255, %s256, %s257
    %p261 = pneg %p255
    %p262 = scmp.eq.s32.totalorder %s15, 1
    %p263 = por %p261, %p262
    %p264 = scmp.ne.s32.totalorder %s256, %s259
    %p265 = scmp.eq.s32.totalorder %s15, 0
    %p266 = por %p264, %p265
    %p267 = scmp.ne.s32.totalorder %s256, %s259
    %p268 = scmp.eq.s32.totalorder %s20, 1
    %p269 = por %p267, %p268
    %p270 = scmp.ne.s32.totalorder %s259, %s260
    %p271 = scmp.eq.s32.totalorder %s20, 0
    %p272 = por %p270, %p271
    %p273 = scmp.ne.s32.totalorder %s259, %s260
    %p274 = scmp.eq.s32.totalorder %s21, 1
    %p275 = por %p273, %p274
    %p277 = scmp.ne.s32.totalorder %s260, %s276
    %p278 = scmp.eq.s32.totalorder %s21, 0
    %p279 = por %p277, %p278
    %p280 = scmp.le.s32.totalorder 1, %s15
    %p281 = scmp.lt.s32.totalorder %s15, 3
    %p282 = pnand %p280, %p281
    %p283 = pneg %p282
    // Predicated region
    $region9: #{up_forward.3} parent=5 // pred_check
      _
    $region10: #{up_forward.3} parent=5 // pred_check_branch
      %285 = sbr.rel (%p282) target = $region12
    $region11: #{up_forward.3} parent=5 // pred_region
      %s286 = ssub.s32 %s15, 1
      // Predicated region
      $region13: #{up_forward.3} parent=11 // pred_check
        %p287 = pneg %p216
      $region14: #{up_forward.3} parent=11 // pred_check_branch
        %289 = sbr.rel (%p287) target = $region16
      $region15: #{up_forward.3} parent=11 // pred_region
        _
      $region16: #{up_forward.3} parent=11 // pred_fallthru
        _
    $region12: #{up_forward.3} parent=5 // pred_fallthru
      _
    %p290 = scmp.lt.s32.totalorder %s15, 2
    // Predicated region
    $region17: #{up_forward.3} parent=5 // pred_check
      %p291 = pneg %p290
    $region18: #{up_forward.3} parent=5 // pred_check_branch
      %293 = sbr.rel (%p291) target = $region20
    $region19: #{up_forward.3} parent=5 // pred_region
      // Predicated region
      $region21: #{up_forward.3} parent=19 // pred_check
        %p294 = pneg %p49
      $region22: #{up_forward.3} parent=19 // pred_check_branch
        %296 = sbr.rel (%p294) target = $region24
      $region23: #{up_forward.3} parent=19 // pred_region
        %s297 = smul.u32 2, %s23
        %p298 = scmp.lt.s32.totalorder %s22, 1
        %s299 = scalar_select %p298, %s22, 1
        %p300 = scmp.lt.s32.totalorder %s297, 1
        %s301 = scalar_select %p300, %s297, 1
        %s302 = smul.addr %s299, 2
        %s303 = sadd.s32 %s301, %s302
        %s304 = smul.addr %s303, 2
        %s305 = scalar_lea.vmem %s0, %s304
        %s306 = smul.u32 2, %s23
      $region24: #{up_forward.3} parent=19 // pred_fallthru
        _
      // Predicated region
      $region25: #{up_forward.3} parent=19 // pred_check
        %p307 = pneg %p77
      $region26: #{up_forward.3} parent=19 // pred_check_branch
        %309 = sbr.rel (%p307) target = $region28
      $region27: #{up_forward.3} parent=19 // pred_region
        %p310 = scmp.lt.s32.totalorder %s22, 1
        %s311 = scalar_select %p310, %s22, 1
        %p312 = scmp.lt.s32.totalorder %s23, 0
        %s313 = scalar_select %p312, %s23, 0
        %s314 = sadd.s32 %s313, %s311
        %s315 = smul.addr %s314, 2
        %s316 = scalar_lea.vmem %s1, %s315
      $region28: #{up_forward.3} parent=19 // pred_fallthru
        _
      // Predicated region
      $region29: #{up_forward.3} parent=19 // pred_check
        %p317 = pneg %p105
      $region30: #{up_forward.3} parent=19 // pred_check_branch
        %319 = sbr.rel (%p317) target = $region32
      $region31: #{up_forward.3} parent=19 // pred_region
        %p320 = scmp.lt.s32.totalorder %s22, 1
        %s321 = scalar_select %p320, %s22, 1
        %p322 = scmp.lt.s32.totalorder %s23, 0
        %s323 = scalar_select %p322, %s23, 0
        %s324 = sadd.s32 %s323, %s321
        %s325 = smul.addr %s324, 2
        %s326 = scalar_lea.vmem %s2, %s325
      $region32: #{up_forward.3} parent=19 // pred_fallthru
        _
      // Predicated region
      $region33: #{up_forward.3} parent=19 // pred_check
        %p327 = pneg %p133
      $region34: #{up_forward.3} parent=19 // pred_check_branch
        %329 = sbr.rel (%p327) target = $region36
      $region35: #{up_forward.3} parent=19 // pred_region
        %s330 = smul.u32 2, %s23
        %p331 = scmp.lt.s32.totalorder %s22, 1
        %s332 = scalar_select %p331, %s22, 1
        %p333 = scmp.lt.s32.totalorder %s330, 1
        %s334 = scalar_select %p333, %s330, 1
        %s335 = smul.addr %s332, 2
        %s336 = sadd.s32 %s334, %s335
        %s337 = smul.addr %s336, 2
        %s338 = scalar_lea.vmem %s3, %s337
        %s339 = smul.u32 2, %s23
      $region36: #{up_forward.3} parent=19 // pred_fallthru
        _
      // Predicated region
      $region37: #{up_forward.3} parent=19 // pred_check
        %p340 = pneg %p161
      $region38: #{up_forward.3} parent=19 // pred_check_branch
        %342 = sbr.rel (%p340) target = $region40
      $region39: #{up_forward.3} parent=19 // pred_region
        %p343 = scmp.lt.s32.totalorder %s22, 1
        %s344 = scalar_select %p343, %s22, 1
        %p345 = scmp.lt.s32.totalorder %s23, 0
        %s346 = scalar_select %p345, %s23, 0
        %s347 = sadd.s32 %s346, %s344
        %s348 = smul.addr %s347, 2
        %s349 = scalar_lea.vmem %s4, %s348
      $region40: #{up_forward.3} parent=19 // pred_fallthru
        _
      // Predicated region
      $region41: #{up_forward.3} parent=19 // pred_check
        %p350 = pneg %p189
      $region42: #{up_forward.3} parent=19 // pred_check_branch
        %352 = sbr.rel (%p350) target = $region44
      $region43: #{up_forward.3} parent=19 // pred_region
        %p353 = scmp.lt.s32.totalorder %s22, 1
        %s354 = scalar_select %p353, %s22, 1
        %p355 = scmp.lt.s32.totalorder %s23, 0
        %s356 = scalar_select %p355, %s23, 0
        %s357 = sadd.s32 %s356, %s354
        %s358 = smul.addr %s357, 2
        %s359 = scalar_lea.vmem %s5, %s358
      $region44: #{up_forward.3} parent=19 // pred_fallthru
        _
    $region20: #{up_forward.3} parent=5 // pred_fallthru
      _
    %p360 = scmp.le.s32.totalorder 1, %s15
    %p361 = scmp.lt.s32.totalorder %s15, 3
    %p362 = pnand %p360, %p361
    %p363 = pneg %p362
    // Predicated region
    $region45: #{up_forward.3} parent=5 // pred_check
      _
    $region46: #{up_forward.3} parent=5 // pred_check_branch
      %365 = sbr.rel (%p362) target = $region48
    $region47: #{up_forward.3} parent=5 // pred_region
      %s366 = ssub.s32 %s15, 1
      %s367 = smul.u32 2, %s25
      %p368 = scmp.lt.s32.totalorder %s24, 1
      %s369 = scalar_select %p368, %s24, 1
      %p370 = scmp.lt.s32.totalorder %s367, 1
      %s371 = scalar_select %p370, %s367, 1
      %s372 = smul.addr %s369, 2
      %s373 = sadd.s32 %s371, %s372
      %s374 = smul.addr %s373, 2
      %s375 = scalar_lea.vmem %s0, %s374
      %p376 = pneg %p55
      %p377 = pneg %p52
      %p378 = scmp.lt.s32.totalorder %s24, 1
      %s379 = scalar_select %p378, %s24, 1
      %p380 = scmp.lt.s32.totalorder %s25, 0
      %s381 = scalar_select %p380, %s25, 0
      %s382 = sadd.s32 %s381, %s379
      %s383 = smul.addr %s382, 2
      %s384 = scalar_lea.vmem %s1, %s383
      %p385 = pneg %p83
      %p386 = pneg %p80
      %p387 = scmp.lt.s32.totalorder %s24, 1
      %s388 = scalar_select %p387, %s24, 1
      %p389 = scmp.lt.s32.totalorder %s25, 0
      %s390 = scalar_select %p389, %s25, 0
      %s391 = sadd.s32 %s390, %s388
      %s392 = smul.addr %s391, 2
      %s393 = scalar_lea.vmem %s2, %s392
      %p394 = pneg %p111
      %p395 = pneg %p108
      %s396 = smul.u32 2, %s25
      %p397 = scmp.lt.s32.totalorder %s24, 1
      %s398 = scalar_select %p397, %s24, 1
      %p399 = scmp.lt.s32.totalorder %s396, 1
      %s400 = scalar_select %p399, %s396, 1
      %s401 = smul.addr %s398, 2
      %s402 = sadd.s32 %s400, %s401
      %s403 = smul.addr %s402, 2
      %s404 = scalar_lea.vmem %s3, %s403
      %p405 = pneg %p139
      %p406 = pneg %p136
      %p407 = scmp.lt.s32.totalorder %s24, 1
      %s408 = scalar_select %p407, %s24, 1
      %p409 = scmp.lt.s32.totalorder %s25, 0
      %s410 = scalar_select %p409, %s25, 0
      %s411 = sadd.s32 %s410, %s408
      %s412 = smul.addr %s411, 2
      %s413 = scalar_lea.vmem %s4, %s412
      %p414 = pneg %p167
      %p415 = pneg %p164
      %p416 = scmp.lt.s32.totalorder %s24, 1
      %s417 = scalar_select %p416, %s24, 1
      %p418 = scmp.lt.s32.totalorder %s25, 0
      %s419 = scalar_select %p418, %s25, 0
      %s420 = sadd.s32 %s419, %s417
      %s421 = smul.addr %s420, 2
      %s422 = scalar_lea.vmem %s5, %s421
      %p423 = pneg %p195
      %p424 = pneg %p192
      %p425 = pneg %p216
      %p426 = pneg %p213
      %p427 = pneg %p244
      %p428 = pneg %p241
      %s429 = smul.u32 2, %s25
      %p430 = scmp.lt.s32.totalorder %s24, 1
      %s431 = scalar_select %p430, %s24, 1
      %p432 = scmp.lt.s32.totalorder %s429, 1
      %s433 = scalar_select %p432, %s429, 1
      %s434 = smul.addr %s431, 2
      %s435 = sadd.s32 %s433, %s434
      %s436 = smul.addr %s435, 2
      %s437 = scalar_lea.vmem %s7, %s436
      %p438 = pneg %p272
      %p439 = pneg %p269
      %p440 = scmp.lt.s32.totalorder %s24, 1
      %s441 = scalar_select %p440, %s24, 1
      %p442 = scmp.lt.s32.totalorder %s25, 0
      %s443 = scalar_select %p442, %s25, 0
      %s444 = sadd.s32 %s443, %s441
      %s445 = smul.addr %s444, 2
      %s446 = scalar_lea.vmem %s8, %s445
      %s447 = smul.u32 2, %s25
      %p448 = scmp.lt.s32.totalorder %s24, 1
      %s449 = scalar_select %p448, %s24, 1
      %p450 = scmp.lt.s32.totalorder %s447, 1
      %s451 = scalar_select %p450, %s447, 1
      %s452 = smul.addr %s449, 2
      %s453 = sadd.s32 %s451, %s452
      %s454 = smul.addr %s453, 2
      %s455 = scalar_lea.vmem %s0, %s454
      %s456 = smul.u32 2, %s25
      %p457 = scmp.lt.s32.totalorder %s24, 1
      %s458 = scalar_select %p457, %s24, 1
      %p459 = scmp.lt.s32.totalorder %s25, 0
      %s460 = scalar_select %p459, %s25, 0
      %s461 = sadd.s32 %s460, %s458
      %s462 = smul.addr %s461, 2
      %s463 = scalar_lea.vmem %s1, %s462
      %p464 = scmp.lt.s32.totalorder %s24, 1
      %s465 = scalar_select %p464, %s24, 1
      %p466 = scmp.lt.s32.totalorder %s25, 0
      %s467 = scalar_select %p466, %s25, 0
      %s468 = sadd.s32 %s467, %s465
      %s469 = smul.addr %s468, 2
      %s470 = scalar_lea.vmem %s2, %s469
      %s471 = smul.u32 2, %s25
      %p472 = scmp.lt.s32.totalorder %s24, 1
      %s473 = scalar_select %p472, %s24, 1
      %p474 = scmp.lt.s32.totalorder %s471, 1
      %s475 = scalar_select %p474, %s471, 1
      %s476 = smul.addr %s473, 2
      %s477 = sadd.s32 %s475, %s476
      %s478 = smul.addr %s477, 2
      %s479 = scalar_lea.vmem %s3, %s478
      %s480 = smul.u32 2, %s25
      %p481 = scmp.lt.s32.totalorder %s24, 1
      %s482 = scalar_select %p481, %s24, 1
      %p483 = scmp.lt.s32.totalorder %s25, 0
      %s484 = scalar_select %p483, %s25, 0
      %s485 = sadd.s32 %s484, %s482
      %s486 = smul.addr %s485, 2
      %s487 = scalar_lea.vmem %s4, %s486
      %p488 = scmp.lt.s32.totalorder %s24, 1
      %s489 = scalar_select %p488, %s24, 1
      %p490 = scmp.lt.s32.totalorder %s25, 0
      %s491 = scalar_select %p490, %s25, 0
      %s492 = sadd.s32 %s491, %s489
      %s493 = smul.addr %s492, 2
      %s494 = scalar_lea.vmem %s5, %s493
      %s495 = smul.u32 2, %s25
      %p496 = scmp.lt.s32.totalorder %s24, 1
      %s497 = scalar_select %p496, %s24, 1
      %p498 = scmp.lt.s32.totalorder %s495, 1
      %s499 = scalar_select %p498, %s495, 1
      %s500 = smul.addr %s497, 2
      %s501 = sadd.s32 %s499, %s500
      %s502 = smul.addr %s501, 2
      %s503 = scalar_lea.vmem %s7, %s502
      %s504 = smul.u32 2, %s25
      %p505 = scmp.lt.s32.totalorder %s24, 1
      %s506 = scalar_select %p505, %s24, 1
      %p507 = scmp.lt.s32.totalorder %s25, 0
      %s508 = scalar_select %p507, %s25, 0
      %s509 = sadd.s32 %s508, %s506
      %s510 = smul.addr %s509, 2
      %s511 = scalar_lea.vmem %s8, %s510
      %v513 = vld [vmem:[%s455] sm:$0xf]
      %v514 = vld [vmem:[%s463] sm:$0x3]
      %v515 = vld [vmem:[%s470] sm:$0x3]
      %v518 = vunpack.c.l.s4 1966171168
      %v519 = vunpack.c.0.s8 %v518
      %v520 = vlaneseq
      %v521 = vshrl.u32 %v520, 7
      %v522 = vsub.s32 %v519, %v521
      %v523 = vrot.slane %v514, %v522
      %v524 = vcombine.high %v523, %v523
      %v525 = vunpack.i.l.s16 %v523
      %v526 = vunpack.i.h.s16 %v523
      %v527 = vunpack.i.l.s16 %v524
      %v528 = vunpack.i.h.s16 %v524
      %v530 = vrot.slane %v513, 2
      %532 = vrot.lane.b32.xlu0 %v513, 112
      %v533 = vpop.permute.xlu0 %532
      %v534 = vrot.slane %v533, 2
      %536 = vrot.lane.b32.xlu0 %v513, 96
      %v537 = vpop.permute.xlu0 %536
      %v538 = vrot.slane %v537, 2
      %540 = vrot.lane.b32.xlu0 %v513, 80
      %v541 = vpop.permute.xlu0 %540
      %v542 = vrot.slane %v541, 2
      %544 = vrot.lane.b32.xlu0 %v513, 64
      %v545 = vpop.permute.xlu0 %544
      %v546 = vrot.slane %v545, 2
      %548 = vrot.lane.b32.xlu0 %v513, 48
      %v549 = vpop.permute.xlu0 %548
      %v550 = vrot.slane %v549, 2
      %552 = vrot.lane.b32.xlu0 %v513, 32
      %v553 = vpop.permute.xlu0 %552
      %v554 = vrot.slane %v553, 2
      %556 = vrot.lane.b32.xlu0 %v513, 16
      %v557 = vpop.permute.xlu0 %556
      %v558 = vrot.slane %v557, 2
      %v567 = vcombine.low %v513, %v537
      %v569 = vunpack.c.l.s4 1934713408
      %v570 = vunpack.c.0.s8 %v569
      %v571 = vlaneseq
      %v572 = vshrl.u32 %v571, 7
      %v573 = vsub.s32 %v570, %v572
      %v574 = vrot.slane %v567, %v573
      %v575 = vcombine.high %v574, 0
      %v576 = vcombine.low %v533, %v541
      %v578 = vunpack.c.l.s4 1934713408
      %v579 = vunpack.c.0.s8 %v578
      %v580 = vlaneseq
      %v581 = vshrl.u32 %v580, 7
      %v582 = vsub.s32 %v579, %v581
      %v583 = vrot.slane %v576, %v582
      %v584 = vcombine.high %v583, 0
      %v585 = vcombine.low %v545, %v553
      %v587 = vunpack.c.l.s4 1934713408
      %v588 = vunpack.c.0.s8 %v587
      %v589 = vlaneseq
      %v590 = vshrl.u32 %v589, 7
      %v591 = vsub.s32 %v588, %v590
      %v592 = vrot.slane %v585, %v591
      %v593 = vcombine.high %v592, 0
      %v594 = vcombine.low %v549, %v557
      %v596 = vunpack.c.l.s4 1934713408
      %v597 = vunpack.c.0.s8 %v596
      %v598 = vlaneseq
      %v599 = vshrl.u32 %v598, 7
      %v600 = vsub.s32 %v597, %v599
      %v601 = vrot.slane %v594, %v600
      %v602 = vcombine.high %v601, 0
      %v603 = vcombine.low %v530, %v538
      %v605 = vunpack.c.l.s4 1934713408
      %v606 = vunpack.c.0.s8 %v605
      %v607 = vlaneseq
      %v608 = vshrl.u32 %v607, 7
      %v609 = vsub.s32 %v606, %v608
      %v610 = vrot.slane %v603, %v609
      %v611 = vcombine.high %v610, 0
      %v612 = vcombine.low %v534, %v542
      %v614 = vunpack.c.l.s4 1934713408
      %v615 = vunpack.c.0.s8 %v614
      %v616 = vlaneseq
      %v617 = vshrl.u32 %v616, 7
      %v618 = vsub.s32 %v615, %v617
      %v619 = vrot.slane %v612, %v618
      %v620 = vcombine.high %v619, 0
      %v621 = vcombine.low %v546, %v554
      %v623 = vunpack.c.l.s4 1934713408
      %v624 = vunpack.c.0.s8 %v623
      %v625 = vlaneseq
      %v626 = vshrl.u32 %v625, 7
      %v627 = vsub.s32 %v624, %v626
      %v628 = vrot.slane %v621, %v627
      %v629 = vcombine.high %v628, 0
      %v630 = vcombine.low %v550, %v558
      %v632 = vunpack.c.l.s4 1934713408
      %v633 = vunpack.c.0.s8 %v632
      %v634 = vlaneseq
      %v635 = vshrl.u32 %v634, 7
      %v636 = vsub.s32 %v633, %v635
      %v637 = vrot.slane %v630, %v636
      %v638 = vcombine.high %v637, 0
      %v641 = vpack.i.b16 %v583, %v574
      %v642 = vshrl.u32 %v574, 16
      %v643 = vshrl.u32 %v583, 16
      %v644 = vpack.i.b16 %v643, %v642
      %v647 = vpack.i.b16 %v584, %v575
      %v648 = vshrl.u32 %v575, 16
      %v649 = vshrl.u32 %v584, 16
      %v650 = vpack.i.b16 %v649, %v648
      %v653 = vpack.i.b16 %v601, %v592
      %v654 = vshrl.u32 %v592, 16
      %v655 = vshrl.u32 %v601, 16
      %v656 = vpack.i.b16 %v655, %v654
      %v659 = vpack.i.b16 %v602, %v593
      %v660 = vshrl.u32 %v593, 16
      %v661 = vshrl.u32 %v602, 16
      %v662 = vpack.i.b16 %v661, %v660
      %v665 = vpack.i.b16 %v619, %v610
      %v666 = vshrl.u32 %v610, 16
      %v667 = vshrl.u32 %v619, 16
      %v668 = vpack.i.b16 %v667, %v666
      %v671 = vpack.i.b16 %v620, %v611
      %v672 = vshrl.u32 %v611, 16
      %v673 = vshrl.u32 %v620, 16
      %v674 = vpack.i.b16 %v673, %v672
      %v677 = vpack.i.b16 %v637, %v628
      %v678 = vshrl.u32 %v628, 16
      %v679 = vshrl.u32 %v637, 16
      %v680 = vpack.i.b16 %v679, %v678
      %v683 = vpack.i.b16 %v638, %v629
      %v684 = vshrl.u32 %v629, 16
      %v685 = vshrl.u32 %v638, 16
      %v686 = vpack.i.b16 %v685, %v684
      %v689 = vunpack.c.l.s4 1966171168
      %v690 = vunpack.c.0.s8 %v689
      %v691 = vlaneseq
      %v692 = vshrl.u32 %v691, 7
      %v693 = vsub.s32 %v690, %v692
      %v694 = vrot.slane %v515, %v693
      %v695 = vcombine.high %v694, %v694
      %v696 = vunpack.i.l.s16 %v694
      %v697 = vunpack.i.h.s16 %v694
      %v698 = vunpack.i.l.s16 %v695
      %v699 = vunpack.i.h.s16 %v695
      %v700 = vpack.i.b16 %v525, %v525
      %v701 = vpack.i.b16 %v526, %v526
      %v702 = vpack.i.b16 %v527, %v527
      %v703 = vpack.i.b16 %v528, %v528
      %v704 = vlaneseq
      %v705 = vshrl.u32 %v704, 7
      %v706 = vsub.s32 0, %v705
      %v707 = vrot.slane %v700, %v706
      %v708 = vlaneseq
      %v709 = vshrl.u32 %v708, 7
      %v710 = vsub.s32 0, %v709
      %v711 = vrot.slane %v701, %v710
      %v712 = vlaneseq
      %v713 = vshrl.u32 %v712, 7
      %v714 = vsub.s32 0, %v713
      %v715 = vrot.slane %v702, %v714
      %v716 = vlaneseq
      %v717 = vshrl.u32 %v716, 7
      %v718 = vsub.s32 0, %v717
      %v719 = vrot.slane %v703, %v718
      %v724 = vcombine.low %v641, %v653
      %v725 = vcombine.low %v665, %v677
      %v727 = vunpack.c.l.s4 1983009808
      %v728 = vunpack.c.0.s8 %v727
      %v729 = vlaneseq
      %v730 = vshrl.u32 %v729, 7
      %v731 = vsub.s32 %v728, %v730
      %v732 = vrot.slane %v724, %v731
      %v734 = vunpack.c.l.s4 1983009808
      %v735 = vunpack.c.0.s8 %v734
      %v736 = vlaneseq
      %v737 = vshrl.u32 %v736, 7
      %v738 = vsub.s32 %v735, %v737
      %v739 = vrot.slane %v725, %v738
      %v740 = vcombine.low %v732, %v739
      %v741 = vcombine.low %v644, %v656
      %v742 = vcombine.low %v668, %v680
      %v744 = vunpack.c.l.s4 1983009808
      %v745 = vunpack.c.0.s8 %v744
      %v746 = vlaneseq
      %v747 = vshrl.u32 %v746, 7
      %v748 = vsub.s32 %v745, %v747
      %v749 = vrot.slane %v741, %v748
      %v751 = vunpack.c.l.s4 1983009808
      %v752 = vunpack.c.0.s8 %v751
      %v753 = vlaneseq
      %v754 = vshrl.u32 %v753, 7
      %v755 = vsub.s32 %v752, %v754
      %v756 = vrot.slane %v742, %v755
      %v757 = vcombine.low %v749, %v756
      %v758 = vcombine.low %v647, %v659
      %v759 = vcombine.low %v671, %v683
      %v761 = vunpack.c.l.s4 1983009808
      %v762 = vunpack.c.0.s8 %v761
      %v763 = vlaneseq
      %v764 = vshrl.u32 %v763, 7
      %v765 = vsub.s32 %v762, %v764
      %v766 = vrot.slane %v758, %v765
      %v768 = vunpack.c.l.s4 1983009808
      %v769 = vunpack.c.0.s8 %v768
      %v770 = vlaneseq
      %v771 = vshrl.u32 %v770, 7
      %v772 = vsub.s32 %v769, %v771
      %v773 = vrot.slane %v759, %v772
      %v774 = vcombine.low %v766, %v773
      %v775 = vcombine.low %v650, %v662
      %v776 = vcombine.low %v674, %v686
      %v778 = vunpack.c.l.s4 1983009808
      %v779 = vunpack.c.0.s8 %v778
      %v780 = vlaneseq
      %v781 = vshrl.u32 %v780, 7
      %v782 = vsub.s32 %v779, %v781
      %v783 = vrot.slane %v775, %v782
      %v785 = vunpack.c.l.s4 1983009808
      %v786 = vunpack.c.0.s8 %v785
      %v787 = vlaneseq
      %v788 = vshrl.u32 %v787, 7
      %v789 = vsub.s32 %v786, %v788
      %v790 = vrot.slane %v776, %v789
      %v791 = vcombine.low %v783, %v790
      %v793 = vshrl.u32 %v740, 16
      %v795 = vrot.slane %v793, 7
      %v796 = vshll.u32 %v740, 16
      %v798 = vor.u32 %v795, %v796
      %v800 = vshrl.u32 %v757, 16
      %v802 = vrot.slane %v800, 7
      %v803 = vshll.u32 %v757, 16
      %v805 = vor.u32 %v802, %v803
      %v807 = vshrl.u32 %v774, 16
      %v809 = vrot.slane %v807, 7
      %v810 = vshll.u32 %v774, 16
      %v812 = vor.u32 %v809, %v810
      %v814 = vshrl.u32 %v791, 16
      %v816 = vrot.slane %v814, 7
      %v817 = vshll.u32 %v791, 16
      %v819 = vor.u32 %v816, %v817
      %v828 = vpack.i.b16 %v696, %v696
      %v829 = vpack.i.b16 %v697, %v697
      %v830 = vpack.i.b16 %v698, %v698
      %v831 = vpack.i.b16 %v699, %v699
      %v832 = vlaneseq
      %v833 = vshrl.u32 %v832, 7
      %v834 = vsub.s32 0, %v833
      %v835 = vrot.slane %v828, %v834
      %v836 = vlaneseq
      %v837 = vshrl.u32 %v836, 7
      %v838 = vsub.s32 0, %v837
      %v839 = vrot.slane %v829, %v838
      %v840 = vlaneseq
      %v841 = vshrl.u32 %v840, 7
      %v842 = vsub.s32 0, %v841
      %v843 = vrot.slane %v830, %v842
      %v844 = vlaneseq
      %v845 = vshrl.u32 %v844, 7
      %v846 = vsub.s32 0, %v845
      %v847 = vrot.slane %v831, %v846
      %vm852 = vcmask 1040384
      %vm853 = vsmask.f32 256
      %vm854 = vmand %vm852, %vm853
      %v855 = vsel %vm854, %v707, %v798
      %v856 = vsel %vm854, %v711, %v805
      %v857 = vsel %vm854, %v715, %v812
      %v858 = vsel %vm854, %v719, %v819
      %v859 = vsel %vm854, %v795, %v835
      %v860 = vsel %vm854, %v802, %v839
      %v861 = vsel %vm854, %v809, %v843
      %v862 = vsel %vm854, %v816, %v847
      %871 = vrot.lane.b32.xlu0 %v855, 1
      %v872 = vpop.permute.xlu0 %871
      %873 = vrot.lane.b32.xlu0 %v859, 1
      %v874 = vpop.permute.xlu0 %873
      %875 = vrot.lane.b32.xlu0 %v856, 1
      %v876 = vpop.permute.xlu0 %875
      %877 = vrot.lane.b32.xlu0 %v860, 1
      %v878 = vpop.permute.xlu0 %877
      %879 = vrot.lane.b32.xlu0 %v857, 1
      %v880 = vpop.permute.xlu0 %879
      %881 = vrot.lane.b32.xlu0 %v861, 1
      %v882 = vpop.permute.xlu0 %881
      %883 = vrot.lane.b32.xlu0 %v858, 1
      %v884 = vpop.permute.xlu0 %883
      %885 = vrot.lane.b32.xlu0 %v862, 1
      %v886 = vpop.permute.xlu0 %885
      %vm887 = vcmask 7168
      %v890 = vsel %vm887, 0, %v872
      %v892 = vsel %vm887, 0, %v874
      %v894 = vsel %vm887, 0, %v876
      %v896 = vsel %vm887, 0, %v878
      %v898 = vsel %vm887, 0, %v880
      %v900 = vsel %vm887, 0, %v882
      %v902 = vsel %vm887, 0, %v884
      %v904 = vsel %vm887, 0, %v886
      %vm905 = vcmask 138240
      %v906 = vsel %vm905, %v890, 0
      %v907 = vsel %vm905, %v892, 0
      %v908 = vsel %vm905, %v894, 0
      %v909 = vsel %vm905, %v896, 0
      %v910 = vsel %vm905, %v898, 0
      %v911 = vsel %vm905, %v900, 0
      %v912 = vsel %vm905, %v902, 0
      %v913 = vsel %vm905, %v904, 0
      %v914 = vpack.i.b16 %v908, %v906
      %v916 = vshrl.u32 %v906, 16
      %v917 = vshrl.u32 %v908, 16
      %v918 = vpack.i.b16 %v917, %v916
      %v920 = vpack.i.b16 %v912, %v910
      %v922 = vshrl.u32 %v910, 16
      %v923 = vshrl.u32 %v912, 16
      %v924 = vpack.i.b16 %v923, %v922
      %v926 = vpack.i.b16 0, 0
      %v928 = vshrl.u32 0, 16
      %v929 = vpack.i.b16 %v928, %v928
      %v931 = vcombine.high %v914, %v926
      %v933 = vunpack.c.l.s4 1983009808
      %v934 = vunpack.c.0.s8 %v933
      %v935 = vlaneseq
      %v936 = vshrl.u32 %v935, 7
      %v937 = vsub.s32 %v934, %v936
      %v938 = vrot.slane %v914, %v937
      %v940 = vunpack.c.l.s4 1983009808
      %v941 = vunpack.c.0.s8 %v940
      %v942 = vlaneseq
      %v943 = vshrl.u32 %v942, 7
      %v944 = vsub.s32 %v941, %v943
      %v945 = vrot.slane %v931, %v944
      %v946 = vcombine.high %v920, %v926
      %v948 = vunpack.c.l.s4 1983009808
      %v949 = vunpack.c.0.s8 %v948
      %v950 = vlaneseq
      %v951 = vshrl.u32 %v950, 7
      %v952 = vsub.s32 %v949, %v951
      %v953 = vrot.slane %v920, %v952
      %v955 = vunpack.c.l.s4 1983009808
      %v956 = vunpack.c.0.s8 %v955
      %v957 = vlaneseq
      %v958 = vshrl.u32 %v957, 7
      %v959 = vsub.s32 %v956, %v958
      %v960 = vrot.slane %v946, %v959
      %v961 = vcombine.low %v938, %v953
      %v962 = vcombine.high %v938, %v953
      %v964 = vunpack.c.l.s4 1934713408
      %v965 = vunpack.c.0.s8 %v964
      %v966 = vlaneseq
      %v967 = vshrl.u32 %v966, 7
      %v968 = vsub.s32 %v965, %v967
      %v969 = vrot.slane %v961, %v968
      %v971 = vunpack.c.l.s4 1934713408
      %v972 = vunpack.c.0.s8 %v971
      %v973 = vlaneseq
      %v974 = vshrl.u32 %v973, 7
      %v975 = vsub.s32 %v972, %v974
      %v976 = vrot.slane %v962, %v975
      %v977 = vcombine.low %v945, %v960
      %v978 = vcombine.high %v945, %v960
      %v980 = vunpack.c.l.s4 1934713408
      %v981 = vunpack.c.0.s8 %v980
      %v982 = vlaneseq
      %v983 = vshrl.u32 %v982, 7
      %v984 = vsub.s32 %v981, %v983
      %v985 = vrot.slane %v977, %v984
      %v987 = vunpack.c.l.s4 1934713408
      %v988 = vunpack.c.0.s8 %v987
      %v989 = vlaneseq
      %v990 = vshrl.u32 %v989, 7
      %v991 = vsub.s32 %v988, %v990
      %v992 = vrot.slane %v978, %v991
      %v993 = vcombine.high %v969, 0
      %v994 = vcombine.high %v976, 0
      %v995 = vcombine.high %v985, 0
      %v996 = vcombine.high %v992, 0
      %v997 = vcombine.high %v918, %v929
      %v999 = vunpack.c.l.s4 1983009808
      %v1000 = vunpack.c.0.s8 %v999
      %v1001 = vlaneseq
      %v1002 = vshrl.u32 %v1001, 7
      %v1003 = vsub.s32 %v1000, %v1002
      %v1004 = vrot.slane %v918, %v1003
      %v1006 = vunpack.c.l.s4 1983009808
      %v1007 = vunpack.c.0.s8 %v1006
      %v1008 = vlaneseq
      %v1009 = vshrl.u32 %v1008, 7
      %v1010 = vsub.s32 %v1007, %v1009
      %v1011 = vrot.slane %v997, %v1010
      %v1012 = vcombine.high %v924, %v929
      %v1014 = vunpack.c.l.s4 1983009808
      %v1015 = vunpack.c.0.s8 %v1014
      %v1016 = vlaneseq
      %v1017 = vshrl.u32 %v1016, 7
      %v1018 = vsub.s32 %v1015, %v1017
      %v1019 = vrot.slane %v924, %v1018
      %v1021 = vunpack.c.l.s4 1983009808
      %v1022 = vunpack.c.0.s8 %v1021
      %v1023 = vlaneseq
      %v1024 = vshrl.u32 %v1023, 7
      %v1025 = vsub.s32 %v1022, %v1024
      %v1026 = vrot.slane %v1012, %v1025
      %v1027 = vcombine.low %v1004, %v1019
      %v1028 = vcombine.high %v1004, %v1019
      %v1030 = vunpack.c.l.s4 1934713408
      %v1031 = vunpack.c.0.s8 %v1030
      %v1032 = vlaneseq
      %v1033 = vshrl.u32 %v1032, 7
      %v1034 = vsub.s32 %v1031, %v1033
      %v1035 = vrot.slane %v1027, %v1034
      %v1037 = vunpack.c.l.s4 1934713408
      %v1038 = vunpack.c.0.s8 %v1037
      %v1039 = vlaneseq
      %v1040 = vshrl.u32 %v1039, 7
      %v1041 = vsub.s32 %v1038, %v1040
      %v1042 = vrot.slane %v1028, %v1041
      %v1043 = vcombine.low %v1011, %v1026
      %v1044 = vcombine.high %v1011, %v1026
      %v1046 = vunpack.c.l.s4 1934713408
      %v1047 = vunpack.c.0.s8 %v1046
      %v1048 = vlaneseq
      %v1049 = vshrl.u32 %v1048, 7
      %v1050 = vsub.s32 %v1047, %v1049
      %v1051 = vrot.slane %v1043, %v1050
      %v1053 = vunpack.c.l.s4 1934713408
      %v1054 = vunpack.c.0.s8 %v1053
      %v1055 = vlaneseq
      %v1056 = vshrl.u32 %v1055, 7
      %v1057 = vsub.s32 %v1054, %v1056
      %v1058 = vrot.slane %v1044, %v1057
      %v1059 = vcombine.high %v1035, 0
      %v1060 = vcombine.high %v1042, 0
      %v1061 = vcombine.high %v1051, 0
      %v1062 = vcombine.high %v1058, 0
      %1064 = vrot.lane.b32.xlu0 %v1035, 16
      %v1065 = vpop.permute.xlu0 %1064
      %1067 = vrot.lane.b32.xlu0 %v993, 32
      %v1068 = vpop.permute.xlu0 %1067
      %1070 = vrot.lane.b32.xlu0 %v1059, 48
      %v1071 = vpop.permute.xlu0 %1070
      %1073 = vrot.lane.b32.xlu0 %v976, 64
      %v1074 = vpop.permute.xlu0 %1073
      %1076 = vrot.lane.b32.xlu0 %v1042, 80
      %v1077 = vpop.permute.xlu0 %1076
      %1079 = vrot.lane.b32.xlu0 %v994, 96
      %v1080 = vpop.permute.xlu0 %1079
      %1082 = vrot.lane.b32.xlu0 %v1060, 112
      %v1083 = vpop.permute.xlu0 %1082
      %1085 = vrot.lane.b32.xlu0 %v1051, 16
      %v1086 = vpop.permute.xlu0 %1085
      %1088 = vrot.lane.b32.xlu0 %v995, 32
      %v1089 = vpop.permute.xlu0 %1088
      %1091 = vrot.lane.b32.xlu0 %v1061, 48
      %v1092 = vpop.permute.xlu0 %1091
      %1094 = vrot.lane.b32.xlu0 %v992, 64
      %v1095 = vpop.permute.xlu0 %1094
      %1097 = vrot.lane.b32.xlu0 %v1058, 80
      %v1098 = vpop.permute.xlu0 %1097
      %1100 = vrot.lane.b32.xlu0 %v996, 96
      %v1101 = vpop.permute.xlu0 %1100
      %1103 = vrot.lane.b32.xlu0 %v1062, 112
      %v1104 = vpop.permute.xlu0 %1103
      %vm1105 = vcmask 130048
      %v1108 = vsel %vm1105, %v969, %v1065
      %vm1109 = vcmask 261120
      %v1111 = vsel %vm1109, %v1108, %v1068
      %vm1112 = vcmask 392192
      %v1114 = vsel %vm1112, %v1111, %v1071
      %vm1115 = vcmask 523264
      %v1117 = vsel %vm1115, %v1114, %v1074
      %vm1118 = vcmask 654336
      %v1120 = vsel %vm1118, %v1117, %v1077
      %vm1121 = vcmask 785408
      %v1123 = vsel %vm1121, %v1120, %v1080
      %vm1124 = vcmask 916480
      %v1126 = vsel %vm1124, %v1123, %v1083
      %v1129 = vsel %vm1105, %v985, %v1086
      %v1131 = vsel %vm1109, %v1129, %v1089
      %v1133 = vsel %vm1112, %v1131, %v1092
      %v1135 = vsel %vm1115, %v1133, %v1095
      %v1137 = vsel %vm1118, %v1135, %v1098
      %v1139 = vsel %vm1121, %v1137, %v1101
      %v1141 = vsel %vm1124, %v1139, %v1104
      %1146 = vrot.lane.b32.xlu0 %v906, 127
      %v1147 = vpop.permute.xlu0 %1146
      %1148 = vrot.lane.b32.xlu0 %v908, 127
      %v1149 = vpop.permute.xlu0 %1148
      %1150 = vrot.lane.b32.xlu0 %v910, 127
      %v1151 = vpop.permute.xlu0 %1150
      %1152 = vrot.lane.b32.xlu0 %v912, 127
      %v1153 = vpop.permute.xlu0 %1152
      %v1156 = vpack.i.b16 %v1149, %v1147
      %v1158 = vshrl.u32 %v1147, 16
      %v1159 = vshrl.u32 %v1149, 16
      %v1160 = vpack.i.b16 %v1159, %v1158
      %v1164 = vpack.i.b16 %v1153, %v1151
      %v1166 = vshrl.u32 %v1151, 16
      %v1167 = vshrl.u32 %v1153, 16
      %v1168 = vpack.i.b16 %v1167, %v1166
      %v1170 = vcombine.high %v1156, %v926
      %v1172 = vunpack.c.l.s4 1983009808
      %v1173 = vunpack.c.0.s8 %v1172
      %v1174 = vlaneseq
      %v1175 = vshrl.u32 %v1174, 7
      %v1176 = vsub.s32 %v1173, %v1175
      %v1177 = vrot.slane %v1156, %v1176
      %v1179 = vunpack.c.l.s4 1983009808
      %v1180 = vunpack.c.0.s8 %v1179
      %v1181 = vlaneseq
      %v1182 = vshrl.u32 %v1181, 7
      %v1183 = vsub.s32 %v1180, %v1182
      %v1184 = vrot.slane %v1170, %v1183
      %v1185 = vcombine.high %v1164, %v926
      %v1187 = vunpack.c.l.s4 1983009808
      %v1188 = vunpack.c.0.s8 %v1187
      %v1189 = vlaneseq
      %v1190 = vshrl.u32 %v1189, 7
      %v1191 = vsub.s32 %v1188, %v1190
      %v1192 = vrot.slane %v1164, %v1191
      %v1194 = vunpack.c.l.s4 1983009808
      %v1195 = vunpack.c.0.s8 %v1194
      %v1196 = vlaneseq
      %v1197 = vshrl.u32 %v1196, 7
      %v1198 = vsub.s32 %v1195, %v1197
      %v1199 = vrot.slane %v1185, %v1198
      %v1200 = vcombine.low %v1177, %v1192
      %v1201 = vcombine.high %v1177, %v1192
      %v1203 = vunpack.c.l.s4 1934713408
      %v1204 = vunpack.c.0.s8 %v1203
      %v1205 = vlaneseq
      %v1206 = vshrl.u32 %v1205, 7
      %v1207 = vsub.s32 %v1204, %v1206
      %v1208 = vrot.slane %v1200, %v1207
      %v1210 = vunpack.c.l.s4 1934713408
      %v1211 = vunpack.c.0.s8 %v1210
      %v1212 = vlaneseq
      %v1213 = vshrl.u32 %v1212, 7
      %v1214 = vsub.s32 %v1211, %v1213
      %v1215 = vrot.slane %v1201, %v1214
      %v1216 = vcombine.low %v1184, %v1199
      %v1217 = vcombine.high %v1184, %v1199
      %v1219 = vunpack.c.l.s4 1934713408
      %v1220 = vunpack.c.0.s8 %v1219
      %v1221 = vlaneseq
      %v1222 = vshrl.u32 %v1221, 7
      %v1223 = vsub.s32 %v1220, %v1222
      %v1224 = vrot.slane %v1216, %v1223
      %v1226 = vunpack.c.l.s4 1934713408
      %v1227 = vunpack.c.0.s8 %v1226
      %v1228 = vlaneseq
      %v1229 = vshrl.u32 %v1228, 7
      %v1230 = vsub.s32 %v1227, %v1229
      %v1231 = vrot.slane %v1217, %v1230
      %v1232 = vcombine.high %v1208, 0
      %v1233 = vcombine.high %v1215, 0
      %v1234 = vcombine.high %v1224, 0
      %v1235 = vcombine.high %v1231, 0
      %v1236 = vcombine.high %v1160, %v929
      %v1238 = vunpack.c.l.s4 1983009808
      %v1239 = vunpack.c.0.s8 %v1238
      %v1240 = vlaneseq
      %v1241 = vshrl.u32 %v1240, 7
      %v1242 = vsub.s32 %v1239, %v1241
      %v1243 = vrot.slane %v1160, %v1242
      %v1245 = vunpack.c.l.s4 1983009808
      %v1246 = vunpack.c.0.s8 %v1245
      %v1247 = vlaneseq
      %v1248 = vshrl.u32 %v1247, 7
      %v1249 = vsub.s32 %v1246, %v1248
      %v1250 = vrot.slane %v1236, %v1249
      %v1251 = vcombine.high %v1168, %v929
      %v1253 = vunpack.c.l.s4 1983009808
      %v1254 = vunpack.c.0.s8 %v1253
      %v1255 = vlaneseq
      %v1256 = vshrl.u32 %v1255, 7
      %v1257 = vsub.s32 %v1254, %v1256
      %v1258 = vrot.slane %v1168, %v1257
      %v1260 = vunpack.c.l.s4 1983009808
      %v1261 = vunpack.c.0.s8 %v1260
      %v1262 = vlaneseq
      %v1263 = vshrl.u32 %v1262, 7
      %v1264 = vsub.s32 %v1261, %v1263
      %v1265 = vrot.slane %v1251, %v1264
      %v1266 = vcombine.low %v1243, %v1258
      %v1267 = vcombine.high %v1243, %v1258
      %v1269 = vunpack.c.l.s4 1934713408
      %v1270 = vunpack.c.0.s8 %v1269
      %v1271 = vlaneseq
      %v1272 = vshrl.u32 %v1271, 7
      %v1273 = vsub.s32 %v1270, %v1272
      %v1274 = vrot.slane %v1266, %v1273
      %v1276 = vunpack.c.l.s4 1934713408
      %v1277 = vunpack.c.0.s8 %v1276
      %v1278 = vlaneseq
      %v1279 = vshrl.u32 %v1278, 7
      %v1280 = vsub.s32 %v1277, %v1279
      %v1281 = vrot.slane %v1267, %v1280
      %v1282 = vcombine.low %v1250, %v1265
      %v1283 = vcombine.high %v1250, %v1265
      %v1285 = vunpack.c.l.s4 1934713408
      %v1286 = vunpack.c.0.s8 %v1285
      %v1287 = vlaneseq
      %v1288 = vshrl.u32 %v1287, 7
      %v1289 = vsub.s32 %v1286, %v1288
      %v1290 = vrot.slane %v1282, %v1289
      %v1292 = vunpack.c.l.s4 1934713408
      %v1293 = vunpack.c.0.s8 %v1292
      %v1294 = vlaneseq
      %v1295 = vshrl.u32 %v1294, 7
      %v1296 = vsub.s32 %v1293, %v1295
      %v1297 = vrot.slane %v1283, %v1296
      %v1298 = vcombine.high %v1274, 0
      %v1299 = vcombine.high %v1281, 0
      %v1300 = vcombine.high %v1290, 0
      %v1301 = vcombine.high %v1297, 0
      %1303 = vrot.lane.b32.xlu0 %v1274, 16
      %v1304 = vpop.permute.xlu0 %1303
      %1306 = vrot.lane.b32.xlu0 %v1232, 32
      %v1307 = vpop.permute.xlu0 %1306
      %1309 = vrot.lane.b32.xlu0 %v1298, 48
      %v1310 = vpop.permute.xlu0 %1309
      %1312 = vrot.lane.b32.xlu0 %v1215, 64
      %v1313 = vpop.permute.xlu0 %1312
      %1315 = vrot.lane.b32.xlu0 %v1281, 80
      %v1316 = vpop.permute.xlu0 %1315
      %1318 = vrot.lane.b32.xlu0 %v1233, 96
      %v1319 = vpop.permute.xlu0 %1318
      %1321 = vrot.lane.b32.xlu0 %v1299, 112
      %v1322 = vpop.permute.xlu0 %1321
      %1324 = vrot.lane.b32.xlu0 %v1290, 16
      %v1325 = vpop.permute.xlu0 %1324
      %1327 = vrot.lane.b32.xlu0 %v1234, 32
      %v1328 = vpop.permute.xlu0 %1327
      %1330 = vrot.lane.b32.xlu0 %v1300, 48
      %v1331 = vpop.permute.xlu0 %1330
      %1333 = vrot.lane.b32.xlu0 %v1231, 64
      %v1334 = vpop.permute.xlu0 %1333
      %1336 = vrot.lane.b32.xlu0 %v1297, 80
      %v1337 = vpop.permute.xlu0 %1336
      %1339 = vrot.lane.b32.xlu0 %v1235, 96
      %v1340 = vpop.permute.xlu0 %1339
      %1342 = vrot.lane.b32.xlu0 %v1301, 112
      %v1343 = vpop.permute.xlu0 %1342
      %v1346 = vsel %vm1105, %v1208, %v1304
      %v1348 = vsel %vm1109, %v1346, %v1307
      %v1350 = vsel %vm1112, %v1348, %v1310
      %v1352 = vsel %vm1115, %v1350, %v1313
      %v1354 = vsel %vm1118, %v1352, %v1316
      %v1356 = vsel %vm1121, %v1354, %v1319
      %v1358 = vsel %vm1124, %v1356, %v1322
      %v1361 = vsel %vm1105, %v1224, %v1325
      %v1363 = vsel %vm1109, %v1361, %v1328
      %v1365 = vsel %vm1112, %v1363, %v1331
      %v1367 = vsel %vm1115, %v1365, %v1334
      %v1369 = vsel %vm1118, %v1367, %v1337
      %v1371 = vsel %vm1121, %v1369, %v1340
      %v1373 = vsel %vm1124, %v1371, %v1343
      %1374 = vrot.lane.b32.xlu0 %v906, 126
      %v1375 = vpop.permute.xlu0 %1374
      %1376 = vrot.lane.b32.xlu0 %v908, 126
      %v1377 = vpop.permute.xlu0 %1376
      %1378 = vrot.lane.b32.xlu0 %v910, 126
      %v1379 = vpop.permute.xlu0 %1378
      %1380 = vrot.lane.b32.xlu0 %v912, 126
      %v1381 = vpop.permute.xlu0 %1380
      %v1384 = vpack.i.b16 %v1377, %v1375
      %v1386 = vshrl.u32 %v1375, 16
      %v1387 = vshrl.u32 %v1377, 16
      %v1388 = vpack.i.b16 %v1387, %v1386
      %v1392 = vpack.i.b16 %v1381, %v1379
      %v1394 = vshrl.u32 %v1379, 16
      %v1395 = vshrl.u32 %v1381, 16
      %v1396 = vpack.i.b16 %v1395, %v1394
      %v1398 = vcombine.high %v1384, %v926
      %v1400 = vunpack.c.l.s4 1983009808
      %v1401 = vunpack.c.0.s8 %v1400
      %v1402 = vlaneseq
      %v1403 = vshrl.u32 %v1402, 7
      %v1404 = vsub.s32 %v1401, %v1403
      %v1405 = vrot.slane %v1384, %v1404
      %v1407 = vunpack.c.l.s4 1983009808
      %v1408 = vunpack.c.0.s8 %v1407
      %v1409 = vlaneseq
      %v1410 = vshrl.u32 %v1409, 7
      %v1411 = vsub.s32 %v1408, %v1410
      %v1412 = vrot.slane %v1398, %v1411
      %v1413 = vcombine.high %v1392, %v926
      %v1415 = vunpack.c.l.s4 1983009808
      %v1416 = vunpack.c.0.s8 %v1415
      %v1417 = vlaneseq
      %v1418 = vshrl.u32 %v1417, 7
      %v1419 = vsub.s32 %v1416, %v1418
      %v1420 = vrot.slane %v1392, %v1419
      %v1422 = vunpack.c.l.s4 1983009808
      %v1423 = vunpack.c.0.s8 %v1422
      %v1424 = vlaneseq
      %v1425 = vshrl.u32 %v1424, 7
      %v1426 = vsub.s32 %v1423, %v1425
      %v1427 = vrot.slane %v1413, %v1426
      %v1428 = vcombine.low %v1405, %v1420
      %v1429 = vcombine.high %v1405, %v1420
      %v1431 = vunpack.c.l.s4 1934713408
      %v1432 = vunpack.c.0.s8 %v1431
      %v1433 = vlaneseq
      %v1434 = vshrl.u32 %v1433, 7
      %v1435 = vsub.s32 %v1432, %v1434
      %v1436 = vrot.slane %v1428, %v1435
      %v1438 = vunpack.c.l.s4 1934713408
      %v1439 = vunpack.c.0.s8 %v1438
      %v1440 = vlaneseq
      %v1441 = vshrl.u32 %v1440, 7
      %v1442 = vsub.s32 %v1439, %v1441
      %v1443 = vrot.slane %v1429, %v1442
      %v1444 = vcombine.low %v1412, %v1427
      %v1445 = vcombine.high %v1412, %v1427
      %v1447 = vunpack.c.l.s4 1934713408
      %v1448 = vunpack.c.0.s8 %v1447
      %v1449 = vlaneseq
      %v1450 = vshrl.u32 %v1449, 7
      %v1451 = vsub.s32 %v1448, %v1450
      %v1452 = vrot.slane %v1444, %v1451
      %v1454 = vunpack.c.l.s4 1934713408
      %v1455 = vunpack.c.0.s8 %v1454
      %v1456 = vlaneseq
      %v1457 = vshrl.u32 %v1456, 7
      %v1458 = vsub.s32 %v1455, %v1457
      %v1459 = vrot.slane %v1445, %v1458
      %v1460 = vcombine.high %v1436, 0
      %v1461 = vcombine.high %v1443, 0
      %v1462 = vcombine.high %v1452, 0
      %v1463 = vcombine.high %v1459, 0
      %v1464 = vcombine.high %v1388, %v929
      %v1466 = vunpack.c.l.s4 1983009808
      %v1467 = vunpack.c.0.s8 %v1466
      %v1468 = vlaneseq
      %v1469 = vshrl.u32 %v1468, 7
      %v1470 = vsub.s32 %v1467, %v1469
      %v1471 = vrot.slane %v1388, %v1470
      %v1473 = vunpack.c.l.s4 1983009808
      %v1474 = vunpack.c.0.s8 %v1473
      %v1475 = vlaneseq
      %v1476 = vshrl.u32 %v1475, 7
      %v1477 = vsub.s32 %v1474, %v1476
      %v1478 = vrot.slane %v1464, %v1477
      %v1479 = vcombine.high %v1396, %v929
      %v1481 = vunpack.c.l.s4 1983009808
      %v1482 = vunpack.c.0.s8 %v1481
      %v1483 = vlaneseq
      %v1484 = vshrl.u32 %v1483, 7
      %v1485 = vsub.s32 %v1482, %v1484
      %v1486 = vrot.slane %v1396, %v1485
      %v1488 = vunpack.c.l.s4 1983009808
      %v1489 = vunpack.c.0.s8 %v1488
      %v1490 = vlaneseq
      %v1491 = vshrl.u32 %v1490, 7
      %v1492 = vsub.s32 %v1489, %v1491
      %v1493 = vrot.slane %v1479, %v1492
      %v1494 = vcombine.low %v1471, %v1486
      %v1495 = vcombine.high %v1471, %v1486
      %v1497 = vunpack.c.l.s4 1934713408
      %v1498 = vunpack.c.0.s8 %v1497
      %v1499 = vlaneseq
      %v1500 = vshrl.u32 %v1499, 7
      %v1501 = vsub.s32 %v1498, %v1500
      %v1502 = vrot.slane %v1494, %v1501
      %v1504 = vunpack.c.l.s4 1934713408
      %v1505 = vunpack.c.0.s8 %v1504
      %v1506 = vlaneseq
      %v1507 = vshrl.u32 %v1506, 7
      %v1508 = vsub.s32 %v1505, %v1507
      %v1509 = vrot.slane %v1495, %v1508
      %v1510 = vcombine.low %v1478, %v1493
      %v1511 = vcombine.high %v1478, %v1493
      %v1513 = vunpack.c.l.s4 1934713408
      %v1514 = vunpack.c.0.s8 %v1513
      %v1515 = vlaneseq
      %v1516 = vshrl.u32 %v1515, 7
      %v1517 = vsub.s32 %v1514, %v1516
      %v1518 = vrot.slane %v1510, %v1517
      %v1520 = vunpack.c.l.s4 1934713408
      %v1521 = vunpack.c.0.s8 %v1520
      %v1522 = vlaneseq
      %v1523 = vshrl.u32 %v1522, 7
      %v1524 = vsub.s32 %v1521, %v1523
      %v1525 = vrot.slane %v1511, %v1524
      %v1526 = vcombine.high %v1502, 0
      %v1527 = vcombine.high %v1509, 0
      %v1528 = vcombine.high %v1518, 0
      %v1529 = vcombine.high %v1525, 0
      %1531 = vrot.lane.b32.xlu0 %v1502, 16
      %v1532 = vpop.permute.xlu0 %1531
      %1534 = vrot.lane.b32.xlu0 %v1460, 32
      %v1535 = vpop.permute.xlu0 %1534
      %1537 = vrot.lane.b32.xlu0 %v1526, 48
      %v1538 = vpop.permute.xlu0 %1537
      %1540 = vrot.lane.b32.xlu0 %v1443, 64
      %v1541 = vpop.permute.xlu0 %1540
      %1543 = vrot.lane.b32.xlu0 %v1509, 80
      %v1544 = vpop.permute.xlu0 %1543
      %1546 = vrot.lane.b32.xlu0 %v1461, 96
      %v1547 = vpop.permute.xlu0 %1546
      %1549 = vrot.lane.b32.xlu0 %v1527, 112
      %v1550 = vpop.permute.xlu0 %1549
      %1552 = vrot.lane.b32.xlu0 %v1518, 16
      %v1553 = vpop.permute.xlu0 %1552
      %1555 = vrot.lane.b32.xlu0 %v1462, 32
      %v1556 = vpop.permute.xlu0 %1555
      %1558 = vrot.lane.b32.xlu0 %v1528, 48
      %v1559 = vpop.permute.xlu0 %1558
      %1561 = vrot.lane.b32.xlu0 %v1459, 64
      %v1562 = vpop.permute.xlu0 %1561
      %1564 = vrot.lane.b32.xlu0 %v1525, 80
      %v1565 = vpop.permute.xlu0 %1564
      %1567 = vrot.lane.b32.xlu0 %v1463, 96
      %v1568 = vpop.permute.xlu0 %1567
      %1570 = vrot.lane.b32.xlu0 %v1529, 112
      %v1571 = vpop.permute.xlu0 %1570
      %v1574 = vsel %vm1105, %v1436, %v1532
      %v1576 = vsel %vm1109, %v1574, %v1535
      %v1578 = vsel %vm1112, %v1576, %v1538
      %v1580 = vsel %vm1115, %v1578, %v1541
      %v1582 = vsel %vm1118, %v1580, %v1544
      %v1584 = vsel %vm1121, %v1582, %v1547
      %v1586 = vsel %vm1124, %v1584, %v1550
      %v1589 = vsel %vm1105, %v1452, %v1553
      %v1591 = vsel %vm1109, %v1589, %v1556
      %v1593 = vsel %vm1112, %v1591, %v1559
      %v1595 = vsel %vm1115, %v1593, %v1562
      %v1597 = vsel %vm1118, %v1595, %v1565
      %v1599 = vsel %vm1121, %v1597, %v1568
      %v1601 = vsel %vm1124, %v1599, %v1571
      %vm1602 = vsmask.f32 7424
      %v1604 = vshll.u32 %v906, 16
      %v1606 = vrot.slane %v1604, 1
      %v1607 = vor.u32 %v916, %v1606
      %v1608 = vshll.u32 %v907, 16
      %v1610 = vrot.slane %v1608, 1
      %v1611 = vsel %vm1602, %v1607, %v1610
      %v1613 = vshll.u32 %v908, 16
      %v1615 = vrot.slane %v1613, 1
      %v1616 = vor.u32 %v917, %v1615
      %v1617 = vshll.u32 %v909, 16
      %v1619 = vrot.slane %v1617, 1
      %v1620 = vsel %vm1602, %v1616, %v1619
      %v1622 = vshll.u32 %v910, 16
      %v1624 = vrot.slane %v1622, 1
      %v1625 = vor.u32 %v922, %v1624
      %v1626 = vshll.u32 %v911, 16
      %v1628 = vrot.slane %v1626, 1
      %v1629 = vsel %vm1602, %v1625, %v1628
      %v1631 = vshll.u32 %v912, 16
      %v1633 = vrot.slane %v1631, 1
      %v1634 = vor.u32 %v923, %v1633
      %v1635 = vshll.u32 %v913, 16
      %v1637 = vrot.slane %v1635, 1
      %v1638 = vsel %vm1602, %v1634, %v1637
      %v1641 = vpack.i.b16 %v1620, %v1611
      %v1643 = vshrl.u32 %v1611, 16
      %v1644 = vshrl.u32 %v1620, 16
      %v1645 = vpack.i.b16 %v1644, %v1643
      %v1649 = vpack.i.b16 %v1638, %v1629
      %v1651 = vshrl.u32 %v1629, 16
      %v1652 = vshrl.u32 %v1638, 16
      %v1653 = vpack.i.b16 %v1652, %v1651
      %v1655 = vcombine.high %v1641, %v926
      %v1657 = vunpack.c.l.s4 1983009808
      %v1658 = vunpack.c.0.s8 %v1657
      %v1659 = vlaneseq
      %v1660 = vshrl.u32 %v1659, 7
      %v1661 = vsub.s32 %v1658, %v1660
      %v1662 = vrot.slane %v1641, %v1661
      %v1664 = vunpack.c.l.s4 1983009808
      %v1665 = vunpack.c.0.s8 %v1664
      %v1666 = vlaneseq
      %v1667 = vshrl.u32 %v1666, 7
      %v1668 = vsub.s32 %v1665, %v1667
      %v1669 = vrot.slane %v1655, %v1668
      %v1670 = vcombine.high %v1649, %v926
      %v1672 = vunpack.c.l.s4 1983009808
      %v1673 = vunpack.c.0.s8 %v1672
      %v1674 = vlaneseq
      %v1675 = vshrl.u32 %v1674, 7
      %v1676 = vsub.s32 %v1673, %v1675
      %v1677 = vrot.slane %v1649, %v1676
      %v1679 = vunpack.c.l.s4 1983009808
      %v1680 = vunpack.c.0.s8 %v1679
      %v1681 = vlaneseq
      %v1682 = vshrl.u32 %v1681, 7
      %v1683 = vsub.s32 %v1680, %v1682
      %v1684 = vrot.slane %v1670, %v1683
      %v1685 = vcombine.low %v1662, %v1677
      %v1686 = vcombine.high %v1662, %v1677
      %v1688 = vunpack.c.l.s4 1934713408
      %v1689 = vunpack.c.0.s8 %v1688
      %v1690 = vlaneseq
      %v1691 = vshrl.u32 %v1690, 7
      %v1692 = vsub.s32 %v1689, %v1691
      %v1693 = vrot.slane %v1685, %v1692
      %v1695 = vunpack.c.l.s4 1934713408
      %v1696 = vunpack.c.0.s8 %v1695
      %v1697 = vlaneseq
      %v1698 = vshrl.u32 %v1697, 7
      %v1699 = vsub.s32 %v1696, %v1698
      %v1700 = vrot.slane %v1686, %v1699
      %v1701 = vcombine.low %v1669, %v1684
      %v1702 = vcombine.high %v1669, %v1684
      %v1704 = vunpack.c.l.s4 1934713408
      %v1705 = vunpack.c.0.s8 %v1704
      %v1706 = vlaneseq
      %v1707 = vshrl.u32 %v1706, 7
      %v1708 = vsub.s32 %v1705, %v1707
      %v1709 = vrot.slane %v1701, %v1708
      %v1711 = vunpack.c.l.s4 1934713408
      %v1712 = vunpack.c.0.s8 %v1711
      %v1713 = vlaneseq
      %v1714 = vshrl.u32 %v1713, 7
      %v1715 = vsub.s32 %v1712, %v1714
      %v1716 = vrot.slane %v1702, %v1715
      %v1717 = vcombine.high %v1693, 0
      %v1718 = vcombine.high %v1700, 0
      %v1719 = vcombine.high %v1709, 0
      %v1720 = vcombine.high %v1716, 0
      %v1721 = vcombine.high %v1645, %v929
      %v1723 = vunpack.c.l.s4 1983009808
      %v1724 = vunpack.c.0.s8 %v1723
      %v1725 = vlaneseq
      %v1726 = vshrl.u32 %v1725, 7
      %v1727 = vsub.s32 %v1724, %v1726
      %v1728 = vrot.slane %v1645, %v1727
      %v1730 = vunpack.c.l.s4 1983009808
      %v1731 = vunpack.c.0.s8 %v1730
      %v1732 = vlaneseq
      %v1733 = vshrl.u32 %v1732, 7
      %v1734 = vsub.s32 %v1731, %v1733
      %v1735 = vrot.slane %v1721, %v1734
      %v1736 = vcombine.high %v1653, %v929
      %v1738 = vunpack.c.l.s4 1983009808
      %v1739 = vunpack.c.0.s8 %v1738
      %v1740 = vlaneseq
      %v1741 = vshrl.u32 %v1740, 7
      %v1742 = vsub.s32 %v1739, %v1741
      %v1743 = vrot.slane %v1653, %v1742
      %v1745 = vunpack.c.l.s4 1983009808
      %v1746 = vunpack.c.0.s8 %v1745
      %v1747 = vlaneseq
      %v1748 = vshrl.u32 %v1747, 7
      %v1749 = vsub.s32 %v1746, %v1748
      %v1750 = vrot.slane %v1736, %v1749
      %v1751 = vcombine.low %v1728, %v1743
      %v1752 = vcombine.high %v1728, %v1743
      %v1754 = vunpack.c.l.s4 1934713408
      %v1755 = vunpack.c.0.s8 %v1754
      %v1756 = vlaneseq
      %v1757 = vshrl.u32 %v1756, 7
      %v1758 = vsub.s32 %v1755, %v1757
      %v1759 = vrot.slane %v1751, %v1758
      %v1761 = vunpack.c.l.s4 1934713408
      %v1762 = vunpack.c.0.s8 %v1761
      %v1763 = vlaneseq
      %v1764 = vshrl.u32 %v1763, 7
      %v1765 = vsub.s32 %v1762, %v1764
      %v1766 = vrot.slane %v1752, %v1765
      %v1767 = vcombine.low %v1735, %v1750
      %v1768 = vcombine.high %v1735, %v1750
      %v1770 = vunpack.c.l.s4 1934713408
      %v1771 = vunpack.c.0.s8 %v1770
      %v1772 = vlaneseq
      %v1773 = vshrl.u32 %v1772, 7
      %v1774 = vsub.s32 %v1771, %v1773
      %v1775 = vrot.slane %v1767, %v1774
      %v1777 = vunpack.c.l.s4 1934713408
      %v1778 = vunpack.c.0.s8 %v1777
      %v1779 = vlaneseq
      %v1780 = vshrl.u32 %v1779, 7
      %v1781 = vsub.s32 %v1778, %v1780
      %v1782 = vrot.slane %v1768, %v1781
      %v1783 = vcombine.high %v1759, 0
      %v1784 = vcombine.high %v1766, 0
      %v1785 = vcombine.high %v1775, 0
      %v1786 = vcombine.high %v1782, 0
      %1788 = vrot.lane.b32.xlu0 %v1759, 16
      %v1789 = vpop.permute.xlu0 %1788
      %1791 = vrot.lane.b32.xlu0 %v1717, 32
      %v1792 = vpop.permute.xlu0 %1791
      %1794 = vrot.lane.b32.xlu0 %v1783, 48
      %v1795 = vpop.permute.xlu0 %1794
      %1797 = vrot.lane.b32.xlu0 %v1700, 64
      %v1798 = vpop.permute.xlu0 %1797
      %1800 = vrot.lane.b32.xlu0 %v1766, 80
      %v1801 = vpop.permute.xlu0 %1800
      %1803 = vrot.lane.b32.xlu0 %v1718, 96
      %v1804 = vpop.permute.xlu0 %1803
      %1806 = vrot.lane.b32.xlu0 %v1784, 112
      %v1807 = vpop.permute.xlu0 %1806
      %1809 = vrot.lane.b32.xlu0 %v1775, 16
      %v1810 = vpop.permute.xlu0 %1809
      %1812 = vrot.lane.b32.xlu0 %v1719, 32
      %v1813 = vpop.permute.xlu0 %1812
      %1815 = vrot.lane.b32.xlu0 %v1785, 48
      %v1816 = vpop.permute.xlu0 %1815
      %1818 = vrot.lane.b32.xlu0 %v1716, 64
      %v1819 = vpop.permute.xlu0 %1818
      %1821 = vrot.lane.b32.xlu0 %v1782, 80
      %v1822 = vpop.permute.xlu0 %1821
      %1824 = vrot.lane.b32.xlu0 %v1720, 96
      %v1825 = vpop.permute.xlu0 %1824
      %1827 = vrot.lane.b32.xlu0 %v1786, 112
      %v1828 = vpop.permute.xlu0 %1827
      %v1831 = vsel %vm1105, %v1693, %v1789
      %v1833 = vsel %vm1109, %v1831, %v1792
      %v1835 = vsel %vm1112, %v1833, %v1795
      %v1837 = vsel %vm1115, %v1835, %v1798
      %v1839 = vsel %vm1118, %v1837, %v1801
      %v1841 = vsel %vm1121, %v1839, %v1804
      %v1843 = vsel %vm1124, %v1841, %v1807
      %v1846 = vsel %vm1105, %v1709, %v1810
      %v1848 = vsel %vm1109, %v1846, %v1813
      %v1850 = vsel %vm1112, %v1848, %v1816
      %v1852 = vsel %vm1115, %v1850, %v1819
      %v1854 = vsel %vm1118, %v1852, %v1822
      %v1856 = vsel %vm1121, %v1854, %v1825
      %v1858 = vsel %vm1124, %v1856, %v1828
      %1859 = vrot.lane.b32.xlu0 %v1611, 127
      %v1860 = vpop.permute.xlu0 %1859
      %1861 = vrot.lane.b32.xlu0 %v1620, 127
      %v1862 = vpop.permute.xlu0 %1861
      %1863 = vrot.lane.b32.xlu0 %v1629, 127
      %v1864 = vpop.permute.xlu0 %1863
      %1865 = vrot.lane.b32.xlu0 %v1638, 127
      %v1866 = vpop.permute.xlu0 %1865
      %v1869 = vpack.i.b16 %v1862, %v1860
      %v1871 = vshrl.u32 %v1860, 16
      %v1872 = vshrl.u32 %v1862, 16
      %v1873 = vpack.i.b16 %v1872, %v1871
      %v1877 = vpack.i.b16 %v1866, %v1864
      %v1879 = vshrl.u32 %v1864, 16
      %v1880 = vshrl.u32 %v1866, 16
      %v1881 = vpack.i.b16 %v1880, %v1879
      %v1883 = vcombine.high %v1869, %v926
      %v1885 = vunpack.c.l.s4 1983009808
      %v1886 = vunpack.c.0.s8 %v1885
      %v1887 = vlaneseq
      %v1888 = vshrl.u32 %v1887, 7
      %v1889 = vsub.s32 %v1886, %v1888
      %v1890 = vrot.slane %v1869, %v1889
      %v1892 = vunpack.c.l.s4 1983009808
      %v1893 = vunpack.c.0.s8 %v1892
      %v1894 = vlaneseq
      %v1895 = vshrl.u32 %v1894, 7
      %v1896 = vsub.s32 %v1893, %v1895
      %v1897 = vrot.slane %v1883, %v1896
      %v1898 = vcombine.high %v1877, %v926
      %v1900 = vunpack.c.l.s4 1983009808
      %v1901 = vunpack.c.0.s8 %v1900
      %v1902 = vlaneseq
      %v1903 = vshrl.u32 %v1902, 7
      %v1904 = vsub.s32 %v1901, %v1903
      %v1905 = vrot.slane %v1877, %v1904
      %v1907 = vunpack.c.l.s4 1983009808
      %v1908 = vunpack.c.0.s8 %v1907
      %v1909 = vlaneseq
      %v1910 = vshrl.u32 %v1909, 7
      %v1911 = vsub.s32 %v1908, %v1910
      %v1912 = vrot.slane %v1898, %v1911
      %v1913 = vcombine.low %v1890, %v1905
      %v1914 = vcombine.high %v1890, %v1905
      %v1916 = vunpack.c.l.s4 1934713408
      %v1917 = vunpack.c.0.s8 %v1916
      %v1918 = vlaneseq
      %v1919 = vshrl.u32 %v1918, 7
      %v1920 = vsub.s32 %v1917, %v1919
      %v1921 = vrot.slane %v1913, %v1920
      %v1923 = vunpack.c.l.s4 1934713408
      %v1924 = vunpack.c.0.s8 %v1923
      %v1925 = vlaneseq
      %v1926 = vshrl.u32 %v1925, 7
      %v1927 = vsub.s32 %v1924, %v1926
      %v1928 = vrot.slane %v1914, %v1927
      %v1929 = vcombine.low %v1897, %v1912
      %v1930 = vcombine.high %v1897, %v1912
      %v1932 = vunpack.c.l.s4 1934713408
      %v1933 = vunpack.c.0.s8 %v1932
      %v1934 = vlaneseq
      %v1935 = vshrl.u32 %v1934, 7
      %v1936 = vsub.s32 %v1933, %v1935
      %v1937 = vrot.slane %v1929, %v1936
      %v1939 = vunpack.c.l.s4 1934713408
      %v1940 = vunpack.c.0.s8 %v1939
      %v1941 = vlaneseq
      %v1942 = vshrl.u32 %v1941, 7
      %v1943 = vsub.s32 %v1940, %v1942
      %v1944 = vrot.slane %v1930, %v1943
      %v1945 = vcombine.high %v1921, 0
      %v1946 = vcombine.high %v1928, 0
      %v1947 = vcombine.high %v1937, 0
      %v1948 = vcombine.high %v1944, 0
      %v1949 = vcombine.high %v1873, %v929
      %v1951 = vunpack.c.l.s4 1983009808
      %v1952 = vunpack.c.0.s8 %v1951
      %v1953 = vlaneseq
      %v1954 = vshrl.u32 %v1953, 7
      %v1955 = vsub.s32 %v1952, %v1954
      %v1956 = vrot.slane %v1873, %v1955
      %v1958 = vunpack.c.l.s4 1983009808
      %v1959 = vunpack.c.0.s8 %v1958
      %v1960 = vlaneseq
      %v1961 = vshrl.u32 %v1960, 7
      %v1962 = vsub.s32 %v1959, %v1961
      %v1963 = vrot.slane %v1949, %v1962
      %v1964 = vcombine.high %v1881, %v929
      %v1966 = vunpack.c.l.s4 1983009808
      %v1967 = vunpack.c.0.s8 %v1966
      %v1968 = vlaneseq
      %v1969 = vshrl.u32 %v1968, 7
      %v1970 = vsub.s32 %v1967, %v1969
      %v1971 = vrot.slane %v1881, %v1970
      %v1973 = vunpack.c.l.s4 1983009808
      %v1974 = vunpack.c.0.s8 %v1973
      %v1975 = vlaneseq
      %v1976 = vshrl.u32 %v1975, 7
      %v1977 = vsub.s32 %v1974, %v1976
      %v1978 = vrot.slane %v1964, %v1977
      %v1979 = vcombine.low %v1956, %v1971
      %v1980 = vcombine.high %v1956, %v1971
      %v1982 = vunpack.c.l.s4 1934713408
      %v1983 = vunpack.c.0.s8 %v1982
      %v1984 = vlaneseq
      %v1985 = vshrl.u32 %v1984, 7
      %v1986 = vsub.s32 %v1983, %v1985
      %v1987 = vrot.slane %v1979, %v1986
      %v1989 = vunpack.c.l.s4 1934713408
      %v1990 = vunpack.c.0.s8 %v1989
      %v1991 = vlaneseq
      %v1992 = vshrl.u32 %v1991, 7
      %v1993 = vsub.s32 %v1990, %v1992
      %v1994 = vrot.slane %v1980, %v1993
      %v1995 = vcombine.low %v1963, %v1978
      %v1996 = vcombine.high %v1963, %v1978
      %v1998 = vunpack.c.l.s4 1934713408
      %v1999 = vunpack.c.0.s8 %v1998
      %v2000 = vlaneseq
      %v2001 = vshrl.u32 %v2000, 7
      %v2002 = vsub.s32 %v1999, %v2001
      %v2003 = vrot.slane %v1995, %v2002
      %v2005 = vunpack.c.l.s4 1934713408
      %v2006 = vunpack.c.0.s8 %v2005
      %v2007 = vlaneseq
      %v2008 = vshrl.u32 %v2007, 7
      %v2009 = vsub.s32 %v2006, %v2008
      %v2010 = vrot.slane %v1996, %v2009
      %v2011 = vcombine.high %v1987, 0
      %v2012 = vcombine.high %v1994, 0
      %v2013 = vcombine.high %v2003, 0
      %v2014 = vcombine.high %v2010, 0
      %2016 = vrot.lane.b32.xlu0 %v1987, 16
      %v2017 = vpop.permute.xlu0 %2016
      %2019 = vrot.lane.b32.xlu0 %v1945, 32
      %v2020 = vpop.permute.xlu0 %2019
      %2022 = vrot.lane.b32.xlu0 %v2011, 48
      %v2023 = vpop.permute.xlu0 %2022
      %2025 = vrot.lane.b32.xlu0 %v1928, 64
      %v2026 = vpop.permute.xlu0 %2025
      %2028 = vrot.lane.b32.xlu0 %v1994, 80
      %v2029 = vpop.permute.xlu0 %2028
      %2031 = vrot.lane.b32.xlu0 %v1946, 96
      %v2032 = vpop.permute.xlu0 %2031
      %2034 = vrot.lane.b32.xlu0 %v2012, 112
      %v2035 = vpop.permute.xlu0 %2034
      %2037 = vrot.lane.b32.xlu0 %v2003, 16
      %v2038 = vpop.permute.xlu0 %2037
      %2040 = vrot.lane.b32.xlu0 %v1947, 32
      %v2041 = vpop.permute.xlu0 %2040
      %2043 = vrot.lane.b32.xlu0 %v2013, 48
      %v2044 = vpop.permute.xlu0 %2043
      %2046 = vrot.lane.b32.xlu0 %v1944, 64
      %v2047 = vpop.permute.xlu0 %2046
      %2049 = vrot.lane.b32.xlu0 %v2010, 80
      %v2050 = vpop.permute.xlu0 %2049
      %2052 = vrot.lane.b32.xlu0 %v1948, 96
      %v2053 = vpop.permute.xlu0 %2052
      %2055 = vrot.lane.b32.xlu0 %v2014, 112
      %v2056 = vpop.permute.xlu0 %2055
      %v2059 = vsel %vm1105, %v1921, %v2017
      %v2061 = vsel %vm1109, %v2059, %v2020
      %v2063 = vsel %vm1112, %v2061, %v2023
      %v2065 = vsel %vm1115, %v2063, %v2026
      %v2067 = vsel %vm1118, %v2065, %v2029
      %v2069 = vsel %vm1121, %v2067, %v2032
      %v2071 = vsel %vm1124, %v2069, %v2035
      %v2074 = vsel %vm1105, %v1937, %v2038
      %v2076 = vsel %vm1109, %v2074, %v2041
      %v2078 = vsel %vm1112, %v2076, %v2044
      %v2080 = vsel %vm1115, %v2078, %v2047
      %v2082 = vsel %vm1118, %v2080, %v2050
      %v2084 = vsel %vm1121, %v2082, %v2053
      %v2086 = vsel %vm1124, %v2084, %v2056
      %2087 = vrot.lane.b32.xlu0 %v1611, 126
      %v2088 = vpop.permute.xlu0 %2087
      %2089 = vrot.lane.b32.xlu0 %v1620, 126
      %v2090 = vpop.permute.xlu0 %2089
      %2091 = vrot.lane.b32.xlu0 %v1629, 126
      %v2092 = vpop.permute.xlu0 %2091
      %2093 = vrot.lane.b32.xlu0 %v1638, 126
      %v2094 = vpop.permute.xlu0 %2093
      %v2097 = vpack.i.b16 %v2090, %v2088
      %v2099 = vshrl.u32 %v2088, 16
      %v2100 = vshrl.u32 %v2090, 16
      %v2101 = vpack.i.b16 %v2100, %v2099
      %v2105 = vpack.i.b16 %v2094, %v2092
      %v2107 = vshrl.u32 %v2092, 16
      %v2108 = vshrl.u32 %v2094, 16
      %v2109 = vpack.i.b16 %v2108, %v2107
      %v2111 = vcombine.high %v2097, %v926
      %v2113 = vunpack.c.l.s4 1983009808
      %v2114 = vunpack.c.0.s8 %v2113
      %v2115 = vlaneseq
      %v2116 = vshrl.u32 %v2115, 7
      %v2117 = vsub.s32 %v2114, %v2116
      %v2118 = vrot.slane %v2097, %v2117
      %v2120 = vunpack.c.l.s4 1983009808
      %v2121 = vunpack.c.0.s8 %v2120
      %v2122 = vlaneseq
      %v2123 = vshrl.u32 %v2122, 7
      %v2124 = vsub.s32 %v2121, %v2123
      %v2125 = vrot.slane %v2111, %v2124
      %v2126 = vcombine.high %v2105, %v926
      %v2128 = vunpack.c.l.s4 1983009808
      %v2129 = vunpack.c.0.s8 %v2128
      %v2130 = vlaneseq
      %v2131 = vshrl.u32 %v2130, 7
      %v2132 = vsub.s32 %v2129, %v2131
      %v2133 = vrot.slane %v2105, %v2132
      %v2135 = vunpack.c.l.s4 1983009808
      %v2136 = vunpack.c.0.s8 %v2135
      %v2137 = vlaneseq
      %v2138 = vshrl.u32 %v2137, 7
      %v2139 = vsub.s32 %v2136, %v2138
      %v2140 = vrot.slane %v2126, %v2139
      %v2141 = vcombine.low %v2118, %v2133
      %v2142 = vcombine.high %v2118, %v2133
      %v2144 = vunpack.c.l.s4 1934713408
      %v2145 = vunpack.c.0.s8 %v2144
      %v2146 = vlaneseq
      %v2147 = vshrl.u32 %v2146, 7
      %v2148 = vsub.s32 %v2145, %v2147
      %v2149 = vrot.slane %v2141, %v2148
      %v2151 = vunpack.c.l.s4 1934713408
      %v2152 = vunpack.c.0.s8 %v2151
      %v2153 = vlaneseq
      %v2154 = vshrl.u32 %v2153, 7
      %v2155 = vsub.s32 %v2152, %v2154
      %v2156 = vrot.slane %v2142, %v2155
      %v2157 = vcombine.low %v2125, %v2140
      %v2158 = vcombine.high %v2125, %v2140
      %v2160 = vunpack.c.l.s4 1934713408
      %v2161 = vunpack.c.0.s8 %v2160
      %v2162 = vlaneseq
      %v2163 = vshrl.u32 %v2162, 7
      %v2164 = vsub.s32 %v2161, %v2163
      %v2165 = vrot.slane %v2157, %v2164
      %v2167 = vunpack.c.l.s4 1934713408
      %v2168 = vunpack.c.0.s8 %v2167
      %v2169 = vlaneseq
      %v2170 = vshrl.u32 %v2169, 7
      %v2171 = vsub.s32 %v2168, %v2170
      %v2172 = vrot.slane %v2158, %v2171
      %v2173 = vcombine.high %v2149, 0
      %v2174 = vcombine.high %v2156, 0
      %v2175 = vcombine.high %v2165, 0
      %v2176 = vcombine.high %v2172, 0
      %v2177 = vcombine.high %v2101, %v929
      %v2179 = vunpack.c.l.s4 1983009808
      %v2180 = vunpack.c.0.s8 %v2179
      %v2181 = vlaneseq
      %v2182 = vshrl.u32 %v2181, 7
      %v2183 = vsub.s32 %v2180, %v2182
      %v2184 = vrot.slane %v2101, %v2183
      %v2186 = vunpack.c.l.s4 1983009808
      %v2187 = vunpack.c.0.s8 %v2186
      %v2188 = vlaneseq
      %v2189 = vshrl.u32 %v2188, 7
      %v2190 = vsub.s32 %v2187, %v2189
      %v2191 = vrot.slane %v2177, %v2190
      %v2192 = vcombine.high %v2109, %v929
      %v2194 = vunpack.c.l.s4 1983009808
      %v2195 = vunpack.c.0.s8 %v2194
      %v2196 = vlaneseq
      %v2197 = vshrl.u32 %v2196, 7
      %v2198 = vsub.s32 %v2195, %v2197
      %v2199 = vrot.slane %v2109, %v2198
      %v2201 = vunpack.c.l.s4 1983009808
      %v2202 = vunpack.c.0.s8 %v2201
      %v2203 = vlaneseq
      %v2204 = vshrl.u32 %v2203, 7
      %v2205 = vsub.s32 %v2202, %v2204
      %v2206 = vrot.slane %v2192, %v2205
      %v2207 = vcombine.low %v2184, %v2199
      %v2208 = vcombine.high %v2184, %v2199
      %v2210 = vunpack.c.l.s4 1934713408
      %v2211 = vunpack.c.0.s8 %v2210
      %v2212 = vlaneseq
      %v2213 = vshrl.u32 %v2212, 7
      %v2214 = vsub.s32 %v2211, %v2213
      %v2215 = vrot.slane %v2207, %v2214
      %v2217 = vunpack.c.l.s4 1934713408
      %v2218 = vunpack.c.0.s8 %v2217
      %v2219 = vlaneseq
      %v2220 = vshrl.u32 %v2219, 7
      %v2221 = vsub.s32 %v2218, %v2220
      %v2222 = vrot.slane %v2208, %v2221
      %v2223 = vcombine.low %v2191, %v2206
      %v2224 = vcombine.high %v2191, %v2206
      %v2226 = vunpack.c.l.s4 1934713408
      %v2227 = vunpack.c.0.s8 %v2226
      %v2228 = vlaneseq
      %v2229 = vshrl.u32 %v2228, 7
      %v2230 = vsub.s32 %v2227, %v2229
      %v2231 = vrot.slane %v2223, %v2230
      %v2233 = vunpack.c.l.s4 1934713408
      %v2234 = vunpack.c.0.s8 %v2233
      %v2235 = vlaneseq
      %v2236 = vshrl.u32 %v2235, 7
      %v2237 = vsub.s32 %v2234, %v2236
      %v2238 = vrot.slane %v2224, %v2237
      %v2239 = vcombine.high %v2215, 0
      %v2240 = vcombine.high %v2222, 0
      %v2241 = vcombine.high %v2231, 0
      %v2242 = vcombine.high %v2238, 0
      %2244 = vrot.lane.b32.xlu0 %v2215, 16
      %v2245 = vpop.permute.xlu0 %2244
      %2247 = vrot.lane.b32.xlu0 %v2173, 32
      %v2248 = vpop.permute.xlu0 %2247
      %2250 = vrot.lane.b32.xlu0 %v2239, 48
      %v2251 = vpop.permute.xlu0 %2250
      %2253 = vrot.lane.b32.xlu0 %v2156, 64
      %v2254 = vpop.permute.xlu0 %2253
      %2256 = vrot.lane.b32.xlu0 %v2222, 80
      %v2257 = vpop.permute.xlu0 %2256
      %2259 = vrot.lane.b32.xlu0 %v2174, 96
      %v2260 = vpop.permute.xlu0 %2259
      %2262 = vrot.lane.b32.xlu0 %v2240, 112
      %v2263 = vpop.permute.xlu0 %2262
      %2265 = vrot.lane.b32.xlu0 %v2231, 16
      %v2266 = vpop.permute.xlu0 %2265
      %2268 = vrot.lane.b32.xlu0 %v2175, 32
      %v2269 = vpop.permute.xlu0 %2268
      %2271 = vrot.lane.b32.xlu0 %v2241, 48
      %v2272 = vpop.permute.xlu0 %2271
      %2274 = vrot.lane.b32.xlu0 %v2172, 64
      %v2275 = vpop.permute.xlu0 %2274
      %2277 = vrot.lane.b32.xlu0 %v2238, 80
      %v2278 = vpop.permute.xlu0 %2277
      %2280 = vrot.lane.b32.xlu0 %v2176, 96
      %v2281 = vpop.permute.xlu0 %2280
      %2283 = vrot.lane.b32.xlu0 %v2242, 112
      %v2284 = vpop.permute.xlu0 %2283
      %v2287 = vsel %vm1105, %v2149, %v2245
      %v2289 = vsel %vm1109, %v2287, %v2248
      %v2291 = vsel %vm1112, %v2289, %v2251
      %v2293 = vsel %vm1115, %v2291, %v2254
      %v2295 = vsel %vm1118, %v2293, %v2257
      %v2297 = vsel %vm1121, %v2295, %v2260
      %v2299 = vsel %vm1124, %v2297, %v2263
      %v2302 = vsel %vm1105, %v2165, %v2266
      %v2304 = vsel %vm1109, %v2302, %v2269
      %v2306 = vsel %vm1112, %v2304, %v2272
      %v2308 = vsel %vm1115, %v2306, %v2275
      %v2310 = vsel %vm1118, %v2308, %v2278
      %v2312 = vsel %vm1121, %v2310, %v2281
      %v2314 = vsel %vm1124, %v2312, %v2284
      %vm2319 = vcmask 1046528
      %v2320 = vrot.slane %v906, 1
      %v2321 = vrot.slane %v907, 1
      %v2322 = vsel %vm2319, %v2320, %v2321
      %v2323 = vrot.slane %v908, 1
      %v2324 = vrot.slane %v909, 1
      %v2325 = vsel %vm2319, %v2323, %v2324
      %v2326 = vrot.slane %v910, 1
      %v2327 = vrot.slane %v911, 1
      %v2328 = vsel %vm2319, %v2326, %v2327
      %v2329 = vrot.slane %v912, 1
      %v2330 = vrot.slane %v913, 1
      %v2331 = vsel %vm2319, %v2329, %v2330
      %v2334 = vpack.i.b16 %v2325, %v2322
      %v2336 = vshrl.u32 %v2322, 16
      %v2337 = vshrl.u32 %v2325, 16
      %v2338 = vpack.i.b16 %v2337, %v2336
      %v2342 = vpack.i.b16 %v2331, %v2328
      %v2344 = vshrl.u32 %v2328, 16
      %v2345 = vshrl.u32 %v2331, 16
      %v2346 = vpack.i.b16 %v2345, %v2344
      %v2348 = vcombine.high %v2334, %v926
      %v2350 = vunpack.c.l.s4 1983009808
      %v2351 = vunpack.c.0.s8 %v2350
      %v2352 = vlaneseq
      %v2353 = vshrl.u32 %v2352, 7
      %v2354 = vsub.s32 %v2351, %v2353
      %v2355 = vrot.slane %v2334, %v2354
      %v2357 = vunpack.c.l.s4 1983009808
      %v2358 = vunpack.c.0.s8 %v2357
      %v2359 = vlaneseq
      %v2360 = vshrl.u32 %v2359, 7
      %v2361 = vsub.s32 %v2358, %v2360
      %v2362 = vrot.slane %v2348, %v2361
      %v2363 = vcombine.high %v2342, %v926
      %v2365 = vunpack.c.l.s4 1983009808
      %v2366 = vunpack.c.0.s8 %v2365
      %v2367 = vlaneseq
      %v2368 = vshrl.u32 %v2367, 7
      %v2369 = vsub.s32 %v2366, %v2368
      %v2370 = vrot.slane %v2342, %v2369
      %v2372 = vunpack.c.l.s4 1983009808
      %v2373 = vunpack.c.0.s8 %v2372
      %v2374 = vlaneseq
      %v2375 = vshrl.u32 %v2374, 7
      %v2376 = vsub.s32 %v2373, %v2375
      %v2377 = vrot.slane %v2363, %v2376
      %v2378 = vcombine.low %v2355, %v2370
      %v2379 = vcombine.high %v2355, %v2370
      %v2381 = vunpack.c.l.s4 1934713408
      %v2382 = vunpack.c.0.s8 %v2381
      %v2383 = vlaneseq
      %v2384 = vshrl.u32 %v2383, 7
      %v2385 = vsub.s32 %v2382, %v2384
      %v2386 = vrot.slane %v2378, %v2385
      %v2388 = vunpack.c.l.s4 1934713408
      %v2389 = vunpack.c.0.s8 %v2388
      %v2390 = vlaneseq
      %v2391 = vshrl.u32 %v2390, 7
      %v2392 = vsub.s32 %v2389, %v2391
      %v2393 = vrot.slane %v2379, %v2392
      %v2394 = vcombine.low %v2362, %v2377
      %v2395 = vcombine.high %v2362, %v2377
      %v2397 = vunpack.c.l.s4 1934713408
      %v2398 = vunpack.c.0.s8 %v2397
      %v2399 = vlaneseq
      %v2400 = vshrl.u32 %v2399, 7
      %v2401 = vsub.s32 %v2398, %v2400
      %v2402 = vrot.slane %v2394, %v2401
      %v2404 = vunpack.c.l.s4 1934713408
      %v2405 = vunpack.c.0.s8 %v2404
      %v2406 = vlaneseq
      %v2407 = vshrl.u32 %v2406, 7
      %v2408 = vsub.s32 %v2405, %v2407
      %v2409 = vrot.slane %v2395, %v2408
      %v2410 = vcombine.high %v2386, 0
      %v2411 = vcombine.high %v2393, 0
      %v2412 = vcombine.high %v2402, 0
      %v2413 = vcombine.high %v2409, 0
      %v2414 = vcombine.high %v2338, %v929
      %v2416 = vunpack.c.l.s4 1983009808
      %v2417 = vunpack.c.0.s8 %v2416
      %v2418 = vlaneseq
      %v2419 = vshrl.u32 %v2418, 7
      %v2420 = vsub.s32 %v2417, %v2419
      %v2421 = vrot.slane %v2338, %v2420
      %v2423 = vunpack.c.l.s4 1983009808
      %v2424 = vunpack.c.0.s8 %v2423
      %v2425 = vlaneseq
      %v2426 = vshrl.u32 %v2425, 7
      %v2427 = vsub.s32 %v2424, %v2426
      %v2428 = vrot.slane %v2414, %v2427
      %v2429 = vcombine.high %v2346, %v929
      %v2431 = vunpack.c.l.s4 1983009808
      %v2432 = vunpack.c.0.s8 %v2431
      %v2433 = vlaneseq
      %v2434 = vshrl.u32 %v2433, 7
      %v2435 = vsub.s32 %v2432, %v2434
      %v2436 = vrot.slane %v2346, %v2435
      %v2438 = vunpack.c.l.s4 1983009808
      %v2439 = vunpack.c.0.s8 %v2438
      %v2440 = vlaneseq
      %v2441 = vshrl.u32 %v2440, 7
      %v2442 = vsub.s32 %v2439, %v2441
      %v2443 = vrot.slane %v2429, %v2442
      %v2444 = vcombine.low %v2421, %v2436
      %v2445 = vcombine.high %v2421, %v2436
      %v2447 = vunpack.c.l.s4 1934713408
      %v2448 = vunpack.c.0.s8 %v2447
      %v2449 = vlaneseq
      %v2450 = vshrl.u32 %v2449, 7
      %v2451 = vsub.s32 %v2448, %v2450
      %v2452 = vrot.slane %v2444, %v2451
      %v2454 = vunpack.c.l.s4 1934713408
      %v2455 = vunpack.c.0.s8 %v2454
      %v2456 = vlaneseq
      %v2457 = vshrl.u32 %v2456, 7
      %v2458 = vsub.s32 %v2455, %v2457
      %v2459 = vrot.slane %v2445, %v2458
      %v2460 = vcombine.low %v2428, %v2443
      %v2461 = vcombine.high %v2428, %v2443
      %v2463 = vunpack.c.l.s4 1934713408
      %v2464 = vunpack.c.0.s8 %v2463
      %v2465 = vlaneseq
      %v2466 = vshrl.u32 %v2465, 7
      %v2467 = vsub.s32 %v2464, %v2466
      %v2468 = vrot.slane %v2460, %v2467
      %v2470 = vunpack.c.l.s4 1934713408
      %v2471 = vunpack.c.0.s8 %v2470
      %v2472 = vlaneseq
      %v2473 = vshrl.u32 %v2472, 7
      %v2474 = vsub.s32 %v2471, %v2473
      %v2475 = vrot.slane %v2461, %v2474
      %v2476 = vcombine.high %v2452, 0
      %v2477 = vcombine.high %v2459, 0
      %v2478 = vcombine.high %v2468, 0
      %v2479 = vcombine.high %v2475, 0
      %2481 = vrot.lane.b32.xlu0 %v2452, 16
      %v2482 = vpop.permute.xlu0 %2481
      %2484 = vrot.lane.b32.xlu0 %v2410, 32
      %v2485 = vpop.permute.xlu0 %2484
      %2487 = vrot.lane.b32.xlu0 %v2476, 48
      %v2488 = vpop.permute.xlu0 %2487
      %2490 = vrot.lane.b32.xlu0 %v2393, 64
      %v2491 = vpop.permute.xlu0 %2490
      %2493 = vrot.lane.b32.xlu0 %v2459, 80
      %v2494 = vpop.permute.xlu0 %2493
      %2496 = vrot.lane.b32.xlu0 %v2411, 96
      %v2497 = vpop.permute.xlu0 %2496
      %2499 = vrot.lane.b32.xlu0 %v2477, 112
      %v2500 = vpop.permute.xlu0 %2499
      %2502 = vrot.lane.b32.xlu0 %v2468, 16
      %v2503 = vpop.permute.xlu0 %2502
      %2505 = vrot.lane.b32.xlu0 %v2412, 32
      %v2506 = vpop.permute.xlu0 %2505
      %2508 = vrot.lane.b32.xlu0 %v2478, 48
      %v2509 = vpop.permute.xlu0 %2508
      %2511 = vrot.lane.b32.xlu0 %v2409, 64
      %v2512 = vpop.permute.xlu0 %2511
      %2514 = vrot.lane.b32.xlu0 %v2475, 80
      %v2515 = vpop.permute.xlu0 %2514
      %2517 = vrot.lane.b32.xlu0 %v2413, 96
      %v2518 = vpop.permute.xlu0 %2517
      %2520 = vrot.lane.b32.xlu0 %v2479, 112
      %v2521 = vpop.permute.xlu0 %2520
      %v2524 = vsel %vm1105, %v2386, %v2482
      %v2526 = vsel %vm1109, %v2524, %v2485
      %v2528 = vsel %vm1112, %v2526, %v2488
      %v2530 = vsel %vm1115, %v2528, %v2491
      %v2532 = vsel %vm1118, %v2530, %v2494
      %v2534 = vsel %vm1121, %v2532, %v2497
      %v2536 = vsel %vm1124, %v2534, %v2500
      %v2539 = vsel %vm1105, %v2402, %v2503
      %v2541 = vsel %vm1109, %v2539, %v2506
      %v2543 = vsel %vm1112, %v2541, %v2509
      %v2545 = vsel %vm1115, %v2543, %v2512
      %v2547 = vsel %vm1118, %v2545, %v2515
      %v2549 = vsel %vm1121, %v2547, %v2518
      %v2551 = vsel %vm1124, %v2549, %v2521
      %2552 = vrot.lane.b32.xlu0 %v2322, 127
      %v2553 = vpop.permute.xlu0 %2552
      %2554 = vrot.lane.b32.xlu0 %v2325, 127
      %v2555 = vpop.permute.xlu0 %2554
      %2556 = vrot.lane.b32.xlu0 %v2328, 127
      %v2557 = vpop.permute.xlu0 %2556
      %2558 = vrot.lane.b32.xlu0 %v2331, 127
      %v2559 = vpop.permute.xlu0 %2558
      %v2562 = vpack.i.b16 %v2555, %v2553
      %v2564 = vshrl.u32 %v2553, 16
      %v2565 = vshrl.u32 %v2555, 16
      %v2566 = vpack.i.b16 %v2565, %v2564
      %v2570 = vpack.i.b16 %v2559, %v2557
      %v2572 = vshrl.u32 %v2557, 16
      %v2573 = vshrl.u32 %v2559, 16
      %v2574 = vpack.i.b16 %v2573, %v2572
      %v2576 = vcombine.high %v2562, %v926
      %v2578 = vunpack.c.l.s4 1983009808
      %v2579 = vunpack.c.0.s8 %v2578
      %v2580 = vlaneseq
      %v2581 = vshrl.u32 %v2580, 7
      %v2582 = vsub.s32 %v2579, %v2581
      %v2583 = vrot.slane %v2562, %v2582
      %v2585 = vunpack.c.l.s4 1983009808
      %v2586 = vunpack.c.0.s8 %v2585
      %v2587 = vlaneseq
      %v2588 = vshrl.u32 %v2587, 7
      %v2589 = vsub.s32 %v2586, %v2588
      %v2590 = vrot.slane %v2576, %v2589
      %v2591 = vcombine.high %v2570, %v926
      %v2593 = vunpack.c.l.s4 1983009808
      %v2594 = vunpack.c.0.s8 %v2593
      %v2595 = vlaneseq
      %v2596 = vshrl.u32 %v2595, 7
      %v2597 = vsub.s32 %v2594, %v2596
      %v2598 = vrot.slane %v2570, %v2597
      %v2600 = vunpack.c.l.s4 1983009808
      %v2601 = vunpack.c.0.s8 %v2600
      %v2602 = vlaneseq
      %v2603 = vshrl.u32 %v2602, 7
      %v2604 = vsub.s32 %v2601, %v2603
      %v2605 = vrot.slane %v2591, %v2604
      %v2606 = vcombine.low %v2583, %v2598
      %v2607 = vcombine.high %v2583, %v2598
      %v2609 = vunpack.c.l.s4 1934713408
      %v2610 = vunpack.c.0.s8 %v2609
      %v2611 = vlaneseq
      %v2612 = vshrl.u32 %v2611, 7
      %v2613 = vsub.s32 %v2610, %v2612
      %v2614 = vrot.slane %v2606, %v2613
      %v2616 = vunpack.c.l.s4 1934713408
      %v2617 = vunpack.c.0.s8 %v2616
      %v2618 = vlaneseq
      %v2619 = vshrl.u32 %v2618, 7
      %v2620 = vsub.s32 %v2617, %v2619
      %v2621 = vrot.slane %v2607, %v2620
      %v2622 = vcombine.low %v2590, %v2605
      %v2623 = vcombine.high %v2590, %v2605
      %v2625 = vunpack.c.l.s4 1934713408
      %v2626 = vunpack.c.0.s8 %v2625
      %v2627 = vlaneseq
      %v2628 = vshrl.u32 %v2627, 7
      %v2629 = vsub.s32 %v2626, %v2628
      %v2630 = vrot.slane %v2622, %v2629
      %v2632 = vunpack.c.l.s4 1934713408
      %v2633 = vunpack.c.0.s8 %v2632
      %v2634 = vlaneseq
      %v2635 = vshrl.u32 %v2634, 7
      %v2636 = vsub.s32 %v2633, %v2635
      %v2637 = vrot.slane %v2623, %v2636
      %v2638 = vcombine.high %v2614, 0
      %v2639 = vcombine.high %v2621, 0
      %v2640 = vcombine.high %v2630, 0
      %v2641 = vcombine.high %v2637, 0
      %v2642 = vcombine.high %v2566, %v929
      %v2644 = vunpack.c.l.s4 1983009808
      %v2645 = vunpack.c.0.s8 %v2644
      %v2646 = vlaneseq
      %v2647 = vshrl.u32 %v2646, 7
      %v2648 = vsub.s32 %v2645, %v2647
      %v2649 = vrot.slane %v2566, %v2648
      %v2651 = vunpack.c.l.s4 1983009808
      %v2652 = vunpack.c.0.s8 %v2651
      %v2653 = vlaneseq
      %v2654 = vshrl.u32 %v2653, 7
      %v2655 = vsub.s32 %v2652, %v2654
      %v2656 = vrot.slane %v2642, %v2655
      %v2657 = vcombine.high %v2574, %v929
      %v2659 = vunpack.c.l.s4 1983009808
      %v2660 = vunpack.c.0.s8 %v2659
      %v2661 = vlaneseq
      %v2662 = vshrl.u32 %v2661, 7
      %v2663 = vsub.s32 %v2660, %v2662
      %v2664 = vrot.slane %v2574, %v2663
      %v2666 = vunpack.c.l.s4 1983009808
      %v2667 = vunpack.c.0.s8 %v2666
      %v2668 = vlaneseq
      %v2669 = vshrl.u32 %v2668, 7
      %v2670 = vsub.s32 %v2667, %v2669
      %v2671 = vrot.slane %v2657, %v2670
      %v2672 = vcombine.low %v2649, %v2664
      %v2673 = vcombine.high %v2649, %v2664
      %v2675 = vunpack.c.l.s4 1934713408
      %v2676 = vunpack.c.0.s8 %v2675
      %v2677 = vlaneseq
      %v2678 = vshrl.u32 %v2677, 7
      %v2679 = vsub.s32 %v2676, %v2678
      %v2680 = vrot.slane %v2672, %v2679
      %v2682 = vunpack.c.l.s4 1934713408
      %v2683 = vunpack.c.0.s8 %v2682
      %v2684 = vlaneseq
      %v2685 = vshrl.u32 %v2684, 7
      %v2686 = vsub.s32 %v2683, %v2685
      %v2687 = vrot.slane %v2673, %v2686
      %v2688 = vcombine.low %v2656, %v2671
      %v2689 = vcombine.high %v2656, %v2671
      %v2691 = vunpack.c.l.s4 1934713408
      %v2692 = vunpack.c.0.s8 %v2691
      %v2693 = vlaneseq
      %v2694 = vshrl.u32 %v2693, 7
      %v2695 = vsub.s32 %v2692, %v2694
      %v2696 = vrot.slane %v2688, %v2695
      %v2698 = vunpack.c.l.s4 1934713408
      %v2699 = vunpack.c.0.s8 %v2698
      %v2700 = vlaneseq
      %v2701 = vshrl.u32 %v2700, 7
      %v2702 = vsub.s32 %v2699, %v2701
      %v2703 = vrot.slane %v2689, %v2702
      %v2704 = vcombine.high %v2680, 0
      %v2705 = vcombine.high %v2687, 0
      %v2706 = vcombine.high %v2696, 0
      %v2707 = vcombine.high %v2703, 0
      %2709 = vrot.lane.b32.xlu0 %v2680, 16
      %v2710 = vpop.permute.xlu0 %2709
      %2712 = vrot.lane.b32.xlu0 %v2638, 32
      %v2713 = vpop.permute.xlu0 %2712
      %2715 = vrot.lane.b32.xlu0 %v2704, 48
      %v2716 = vpop.permute.xlu0 %2715
      %2718 = vrot.lane.b32.xlu0 %v2621, 64
      %v2719 = vpop.permute.xlu0 %2718
      %2721 = vrot.lane.b32.xlu0 %v2687, 80
      %v2722 = vpop.permute.xlu0 %2721
      %2724 = vrot.lane.b32.xlu0 %v2639, 96
      %v2725 = vpop.permute.xlu0 %2724
      %2727 = vrot.lane.b32.xlu0 %v2705, 112
      %v2728 = vpop.permute.xlu0 %2727
      %2730 = vrot.lane.b32.xlu0 %v2696, 16
      %v2731 = vpop.permute.xlu0 %2730
      %2733 = vrot.lane.b32.xlu0 %v2640, 32
      %v2734 = vpop.permute.xlu0 %2733
      %2736 = vrot.lane.b32.xlu0 %v2706, 48
      %v2737 = vpop.permute.xlu0 %2736
      %2739 = vrot.lane.b32.xlu0 %v2637, 64
      %v2740 = vpop.permute.xlu0 %2739
      %2742 = vrot.lane.b32.xlu0 %v2703, 80
      %v2743 = vpop.permute.xlu0 %2742
      %2745 = vrot.lane.b32.xlu0 %v2641, 96
      %v2746 = vpop.permute.xlu0 %2745
      %2748 = vrot.lane.b32.xlu0 %v2707, 112
      %v2749 = vpop.permute.xlu0 %2748
      %v2752 = vsel %vm1105, %v2614, %v2710
      %v2754 = vsel %vm1109, %v2752, %v2713
      %v2756 = vsel %vm1112, %v2754, %v2716
      %v2758 = vsel %vm1115, %v2756, %v2719
      %v2760 = vsel %vm1118, %v2758, %v2722
      %v2762 = vsel %vm1121, %v2760, %v2725
      %v2764 = vsel %vm1124, %v2762, %v2728
      %v2767 = vsel %vm1105, %v2630, %v2731
      %v2769 = vsel %vm1109, %v2767, %v2734
      %v2771 = vsel %vm1112, %v2769, %v2737
      %v2773 = vsel %vm1115, %v2771, %v2740
      %v2775 = vsel %vm1118, %v2773, %v2743
      %v2777 = vsel %vm1121, %v2775, %v2746
      %v2779 = vsel %vm1124, %v2777, %v2749
      %2780 = vrot.lane.b32.xlu0 %v2322, 126
      %v2781 = vpop.permute.xlu0 %2780
      %2782 = vrot.lane.b32.xlu0 %v2325, 126
      %v2783 = vpop.permute.xlu0 %2782
      %2784 = vrot.lane.b32.xlu0 %v2328, 126
      %v2785 = vpop.permute.xlu0 %2784
      %2786 = vrot.lane.b32.xlu0 %v2331, 126
      %v2787 = vpop.permute.xlu0 %2786
      %v2790 = vpack.i.b16 %v2783, %v2781
      %v2792 = vshrl.u32 %v2781, 16
      %v2793 = vshrl.u32 %v2783, 16
      %v2794 = vpack.i.b16 %v2793, %v2792
      %v2798 = vpack.i.b16 %v2787, %v2785
      %v2800 = vshrl.u32 %v2785, 16
      %v2801 = vshrl.u32 %v2787, 16
      %v2802 = vpack.i.b16 %v2801, %v2800
      %v2804 = vcombine.high %v2790, %v926
      %v2806 = vunpack.c.l.s4 1983009808
      %v2807 = vunpack.c.0.s8 %v2806
      %v2808 = vlaneseq
      %v2809 = vshrl.u32 %v2808, 7
      %v2810 = vsub.s32 %v2807, %v2809
      %v2811 = vrot.slane %v2790, %v2810
      %v2813 = vunpack.c.l.s4 1983009808
      %v2814 = vunpack.c.0.s8 %v2813
      %v2815 = vlaneseq
      %v2816 = vshrl.u32 %v2815, 7
      %v2817 = vsub.s32 %v2814, %v2816
      %v2818 = vrot.slane %v2804, %v2817
      %v2819 = vcombine.high %v2798, %v926
      %v2821 = vunpack.c.l.s4 1983009808
      %v2822 = vunpack.c.0.s8 %v2821
      %v2823 = vlaneseq
      %v2824 = vshrl.u32 %v2823, 7
      %v2825 = vsub.s32 %v2822, %v2824
      %v2826 = vrot.slane %v2798, %v2825
      %v2828 = vunpack.c.l.s4 1983009808
      %v2829 = vunpack.c.0.s8 %v2828
      %v2830 = vlaneseq
      %v2831 = vshrl.u32 %v2830, 7
      %v2832 = vsub.s32 %v2829, %v2831
      %v2833 = vrot.slane %v2819, %v2832
      %v2834 = vcombine.low %v2811, %v2826
      %v2835 = vcombine.high %v2811, %v2826
      %v2837 = vunpack.c.l.s4 1934713408
      %v2838 = vunpack.c.0.s8 %v2837
      %v2839 = vlaneseq
      %v2840 = vshrl.u32 %v2839, 7
      %v2841 = vsub.s32 %v2838, %v2840
      %v2842 = vrot.slane %v2834, %v2841
      %v2844 = vunpack.c.l.s4 1934713408
      %v2845 = vunpack.c.0.s8 %v2844
      %v2846 = vlaneseq
      %v2847 = vshrl.u32 %v2846, 7
      %v2848 = vsub.s32 %v2845, %v2847
      %v2849 = vrot.slane %v2835, %v2848
      %v2850 = vcombine.low %v2818, %v2833
      %v2851 = vcombine.high %v2818, %v2833
      %v2853 = vunpack.c.l.s4 1934713408
      %v2854 = vunpack.c.0.s8 %v2853
      %v2855 = vlaneseq
      %v2856 = vshrl.u32 %v2855, 7
      %v2857 = vsub.s32 %v2854, %v2856
      %v2858 = vrot.slane %v2850, %v2857
      %v2860 = vunpack.c.l.s4 1934713408
      %v2861 = vunpack.c.0.s8 %v2860
      %v2862 = vlaneseq
      %v2863 = vshrl.u32 %v2862, 7
      %v2864 = vsub.s32 %v2861, %v2863
      %v2865 = vrot.slane %v2851, %v2864
      %v2866 = vcombine.high %v2842, 0
      %v2867 = vcombine.high %v2849, 0
      %v2868 = vcombine.high %v2858, 0
      %v2869 = vcombine.high %v2865, 0
      %v2870 = vcombine.high %v2794, %v929
      %v2872 = vunpack.c.l.s4 1983009808
      %v2873 = vunpack.c.0.s8 %v2872
      %v2874 = vlaneseq
      %v2875 = vshrl.u32 %v2874, 7
      %v2876 = vsub.s32 %v2873, %v2875
      %v2877 = vrot.slane %v2794, %v2876
      %v2879 = vunpack.c.l.s4 1983009808
      %v2880 = vunpack.c.0.s8 %v2879
      %v2881 = vlaneseq
      %v2882 = vshrl.u32 %v2881, 7
      %v2883 = vsub.s32 %v2880, %v2882
      %v2884 = vrot.slane %v2870, %v2883
      %v2885 = vcombine.high %v2802, %v929
      %v2887 = vunpack.c.l.s4 1983009808
      %v2888 = vunpack.c.0.s8 %v2887
      %v2889 = vlaneseq
      %v2890 = vshrl.u32 %v2889, 7
      %v2891 = vsub.s32 %v2888, %v2890
      %v2892 = vrot.slane %v2802, %v2891
      %v2894 = vunpack.c.l.s4 1983009808
      %v2895 = vunpack.c.0.s8 %v2894
      %v2896 = vlaneseq
      %v2897 = vshrl.u32 %v2896, 7
      %v2898 = vsub.s32 %v2895, %v2897
      %v2899 = vrot.slane %v2885, %v2898
      %v2900 = vcombine.low %v2877, %v2892
      %v2901 = vcombine.high %v2877, %v2892
      %v2903 = vunpack.c.l.s4 1934713408
      %v2904 = vunpack.c.0.s8 %v2903
      %v2905 = vlaneseq
      %v2906 = vshrl.u32 %v2905, 7
      %v2907 = vsub.s32 %v2904, %v2906
      %v2908 = vrot.slane %v2900, %v2907
      %v2910 = vunpack.c.l.s4 1934713408
      %v2911 = vunpack.c.0.s8 %v2910
      %v2912 = vlaneseq
      %v2913 = vshrl.u32 %v2912, 7
      %v2914 = vsub.s32 %v2911, %v2913
      %v2915 = vrot.slane %v2901, %v2914
      %v2916 = vcombine.low %v2884, %v2899
      %v2917 = vcombine.high %v2884, %v2899
      %v2919 = vunpack.c.l.s4 1934713408
      %v2920 = vunpack.c.0.s8 %v2919
      %v2921 = vlaneseq
      %v2922 = vshrl.u32 %v2921, 7
      %v2923 = vsub.s32 %v2920, %v2922
      %v2924 = vrot.slane %v2916, %v2923
      %v2926 = vunpack.c.l.s4 1934713408
      %v2927 = vunpack.c.0.s8 %v2926
      %v2928 = vlaneseq
      %v2929 = vshrl.u32 %v2928, 7
      %v2930 = vsub.s32 %v2927, %v2929
      %v2931 = vrot.slane %v2917, %v2930
      %v2932 = vcombine.high %v2908, 0
      %v2933 = vcombine.high %v2915, 0
      %v2934 = vcombine.high %v2924, 0
      %v2935 = vcombine.high %v2931, 0
      %2937 = vrot.lane.b32.xlu0 %v2908, 16
      %v2938 = vpop.permute.xlu0 %2937
      %2940 = vrot.lane.b32.xlu0 %v2866, 32
      %v2941 = vpop.permute.xlu0 %2940
      %2943 = vrot.lane.b32.xlu0 %v2932, 48
      %v2944 = vpop.permute.xlu0 %2943
      %2946 = vrot.lane.b32.xlu0 %v2849, 64
      %v2947 = vpop.permute.xlu0 %2946
      %2949 = vrot.lane.b32.xlu0 %v2915, 80
      %v2950 = vpop.permute.xlu0 %2949
      %2952 = vrot.lane.b32.xlu0 %v2867, 96
      %v2953 = vpop.permute.xlu0 %2952
      %2955 = vrot.lane.b32.xlu0 %v2933, 112
      %v2956 = vpop.permute.xlu0 %2955
      %2958 = vrot.lane.b32.xlu0 %v2924, 16
      %v2959 = vpop.permute.xlu0 %2958
      %2961 = vrot.lane.b32.xlu0 %v2868, 32
      %v2962 = vpop.permute.xlu0 %2961
      %2964 = vrot.lane.b32.xlu0 %v2934, 48
      %v2965 = vpop.permute.xlu0 %2964
      %2967 = vrot.lane.b32.xlu0 %v2865, 64
      %v2968 = vpop.permute.xlu0 %2967
      %2970 = vrot.lane.b32.xlu0 %v2931, 80
      %v2971 = vpop.permute.xlu0 %2970
      %2973 = vrot.lane.b32.xlu0 %v2869, 96
      %v2974 = vpop.permute.xlu0 %2973
      %2976 = vrot.lane.b32.xlu0 %v2935, 112
      %v2977 = vpop.permute.xlu0 %2976
      %v2980 = vsel %vm1105, %v2842, %v2938
      %v2982 = vsel %vm1109, %v2980, %v2941
      %v2984 = vsel %vm1112, %v2982, %v2944
      %v2986 = vsel %vm1115, %v2984, %v2947
      %v2988 = vsel %vm1118, %v2986, %v2950
      %v2990 = vsel %vm1121, %v2988, %v2953
      %v2992 = vsel %vm1124, %v2990, %v2956
      %v2995 = vsel %vm1105, %v2858, %v2959
      %v2997 = vsel %vm1109, %v2995, %v2962
      %v2999 = vsel %vm1112, %v2997, %v2965
      %v3001 = vsel %vm1115, %v2999, %v2968
      %v3003 = vsel %vm1118, %v3001, %v2971
      %v3005 = vsel %vm1121, %v3003, %v2974
      %v3007 = vsel %vm1124, %v3005, %v2977
      %v3010 = vrot.slane %v1358, 6
      %v3011 = vrot.slane %v1373, 6
      %v3014 = vrot.slane %v1586, 4
      %v3015 = vrot.slane %v1601, 4
      %v3018 = vrot.slane %v1843, 2
      %v3019 = vrot.slane %v1858, 2
      %v3022 = vrot.slane %v2299, 6
      %v3023 = vrot.slane %v2314, 6
      %v3026 = vrot.slane %v2536, 4
      %v3027 = vrot.slane %v2551, 4
      %v3030 = vrot.slane %v2764, 2
      %v3031 = vrot.slane %v2779, 2
      %vm3032 = vcmask 1041408
      %v3034 = vsel %vm3032, %v1126, %v3010
      %v3036 = vsel %vm3032, %v1141, %v3011
      %vm3037 = vcmask 1043456
      %v3039 = vsel %vm3037, %v3034, %v3014
      %v3041 = vsel %vm3037, %v3036, %v3015
      %vm3042 = vcmask 1045504
      %v3044 = vsel %vm3042, %v3039, %v3018
      %v3047 = vsel %vm3042, %v3041, %v3019
      %v3050 = vsel %vm3032, %v2071, %v3022
      %v3052 = vsel %vm3032, %v2086, %v3023
      %v3054 = vsel %vm3037, %v3050, %v3026
      %v3056 = vsel %vm3037, %v3052, %v3027
      %v3058 = vsel %vm3042, %v3054, %v3030
      %v3061 = vsel %vm3042, %v3056, %v3031
      %v3063 = vld [vmem:[%s479] sm:$0xf]
      %v3064 = vld [vmem:[%s487] sm:$0x3]
      %v3065 = vld [vmem:[%s494] sm:$0x3]
      %v3068 = vunpack.c.l.s4 1966171168
      %v3069 = vunpack.c.0.s8 %v3068
      %v3070 = vlaneseq
      %v3071 = vshrl.u32 %v3070, 7
      %v3072 = vsub.s32 %v3069, %v3071
      %v3073 = vrot.slane %v3064, %v3072
      %v3074 = vcombine.high %v3073, %v3073
      %v3075 = vunpack.i.l.s16 %v3073
      %v3076 = vunpack.i.h.s16 %v3073
      %v3077 = vunpack.i.l.s16 %v3074
      %v3078 = vunpack.i.h.s16 %v3074
      %v3080 = vrot.slane %v3063, 2
      %3082 = vrot.lane.b32.xlu0 %v3063, 112
      %v3083 = vpop.permute.xlu0 %3082
      %v3084 = vrot.slane %v3083, 2
      %3086 = vrot.lane.b32.xlu0 %v3063, 96
      %v3087 = vpop.permute.xlu0 %3086
      %v3088 = vrot.slane %v3087, 2
      %3090 = vrot.lane.b32.xlu0 %v3063, 80
      %v3091 = vpop.permute.xlu0 %3090
      %v3092 = vrot.slane %v3091, 2
      %3094 = vrot.lane.b32.xlu0 %v3063, 64
      %v3095 = vpop.permute.xlu0 %3094
      %v3096 = vrot.slane %v3095, 2
      %3098 = vrot.lane.b32.xlu0 %v3063, 48
      %v3099 = vpop.permute.xlu0 %3098
      %v3100 = vrot.slane %v3099, 2
      %3102 = vrot.lane.b32.xlu0 %v3063, 32
      %v3103 = vpop.permute.xlu0 %3102
      %v3104 = vrot.slane %v3103, 2
      %3106 = vrot.lane.b32.xlu0 %v3063, 16
      %v3107 = vpop.permute.xlu0 %3106
      %v3108 = vrot.slane %v3107, 2
      %v3117 = vcombine.low %v3063, %v3087
      %v3119 = vunpack.c.l.s4 1934713408
      %v3120 = vunpack.c.0.s8 %v3119
      %v3121 = vlaneseq
      %v3122 = vshrl.u32 %v3121, 7
      %v3123 = vsub.s32 %v3120, %v3122
      %v3124 = vrot.slane %v3117, %v3123
      %v3125 = vcombine.high %v3124, 0
      %v3126 = vcombine.low %v3083, %v3091
      %v3128 = vunpack.c.l.s4 1934713408
      %v3129 = vunpack.c.0.s8 %v3128
      %v3130 = vlaneseq
      %v3131 = vshrl.u32 %v3130, 7
      %v3132 = vsub.s32 %v3129, %v3131
      %v3133 = vrot.slane %v3126, %v3132
      %v3134 = vcombine.high %v3133, 0
      %v3135 = vcombine.low %v3095, %v3103
      %v3137 = vunpack.c.l.s4 1934713408
      %v3138 = vunpack.c.0.s8 %v3137
      %v3139 = vlaneseq
      %v3140 = vshrl.u32 %v3139, 7
      %v3141 = vsub.s32 %v3138, %v3140
      %v3142 = vrot.slane %v3135, %v3141
      %v3143 = vcombine.high %v3142, 0
      %v3144 = vcombine.low %v3099, %v3107
      %v3146 = vunpack.c.l.s4 1934713408
      %v3147 = vunpack.c.0.s8 %v3146
      %v3148 = vlaneseq
      %v3149 = vshrl.u32 %v3148, 7
      %v3150 = vsub.s32 %v3147, %v3149
      %v3151 = vrot.slane %v3144, %v3150
      %v3152 = vcombine.high %v3151, 0
      %v3153 = vcombine.low %v3080, %v3088
      %v3155 = vunpack.c.l.s4 1934713408
      %v3156 = vunpack.c.0.s8 %v3155
      %v3157 = vlaneseq
      %v3158 = vshrl.u32 %v3157, 7
      %v3159 = vsub.s32 %v3156, %v3158
      %v3160 = vrot.slane %v3153, %v3159
      %v3161 = vcombine.high %v3160, 0
      %v3162 = vcombine.low %v3084, %v3092
      %v3164 = vunpack.c.l.s4 1934713408
      %v3165 = vunpack.c.0.s8 %v3164
      %v3166 = vlaneseq
      %v3167 = vshrl.u32 %v3166, 7
      %v3168 = vsub.s32 %v3165, %v3167
      %v3169 = vrot.slane %v3162, %v3168
      %v3170 = vcombine.high %v3169, 0
      %v3171 = vcombine.low %v3096, %v3104
      %v3173 = vunpack.c.l.s4 1934713408
      %v3174 = vunpack.c.0.s8 %v3173
      %v3175 = vlaneseq
      %v3176 = vshrl.u32 %v3175, 7
      %v3177 = vsub.s32 %v3174, %v3176
      %v3178 = vrot.slane %v3171, %v3177
      %v3179 = vcombine.high %v3178, 0
      %v3180 = vcombine.low %v3100, %v3108
      %v3182 = vunpack.c.l.s4 1934713408
      %v3183 = vunpack.c.0.s8 %v3182
      %v3184 = vlaneseq
      %v3185 = vshrl.u32 %v3184, 7
      %v3186 = vsub.s32 %v3183, %v3185
      %v3187 = vrot.slane %v3180, %v3186
      %v3188 = vcombine.high %v3187, 0
      %v3191 = vpack.i.b16 %v3133, %v3124
      %v3192 = vshrl.u32 %v3124, 16
      %v3193 = vshrl.u32 %v3133, 16
      %v3194 = vpack.i.b16 %v3193, %v3192
      %v3197 = vpack.i.b16 %v3134, %v3125
      %v3198 = vshrl.u32 %v3125, 16
      %v3199 = vshrl.u32 %v3134, 16
      %v3200 = vpack.i.b16 %v3199, %v3198
      %v3203 = vpack.i.b16 %v3151, %v3142
      %v3204 = vshrl.u32 %v3142, 16
      %v3205 = vshrl.u32 %v3151, 16
      %v3206 = vpack.i.b16 %v3205, %v3204
      %v3209 = vpack.i.b16 %v3152, %v3143
      %v3210 = vshrl.u32 %v3143, 16
      %v3211 = vshrl.u32 %v3152, 16
      %v3212 = vpack.i.b16 %v3211, %v3210
      %v3215 = vpack.i.b16 %v3169, %v3160
      %v3216 = vshrl.u32 %v3160, 16
      %v3217 = vshrl.u32 %v3169, 16
      %v3218 = vpack.i.b16 %v3217, %v3216
      %v3221 = vpack.i.b16 %v3170, %v3161
      %v3222 = vshrl.u32 %v3161, 16
      %v3223 = vshrl.u32 %v3170, 16
      %v3224 = vpack.i.b16 %v3223, %v3222
      %v3227 = vpack.i.b16 %v3187, %v3178
      %v3228 = vshrl.u32 %v3178, 16
      %v3229 = vshrl.u32 %v3187, 16
      %v3230 = vpack.i.b16 %v3229, %v3228
      %v3233 = vpack.i.b16 %v3188, %v3179
      %v3234 = vshrl.u32 %v3179, 16
      %v3235 = vshrl.u32 %v3188, 16
      %v3236 = vpack.i.b16 %v3235, %v3234
      %v3239 = vunpack.c.l.s4 1966171168
      %v3240 = vunpack.c.0.s8 %v3239
      %v3241 = vlaneseq
      %v3242 = vshrl.u32 %v3241, 7
      %v3243 = vsub.s32 %v3240, %v3242
      %v3244 = vrot.slane %v3065, %v3243
      %v3245 = vcombine.high %v3244, %v3244
      %v3246 = vunpack.i.l.s16 %v3244
      %v3247 = vunpack.i.h.s16 %v3244
      %v3248 = vunpack.i.l.s16 %v3245
      %v3249 = vunpack.i.h.s16 %v3245
      %v3250 = vpack.i.b16 %v3075, %v3075
      %v3251 = vpack.i.b16 %v3076, %v3076
      %v3252 = vpack.i.b16 %v3077, %v3077
      %v3253 = vpack.i.b16 %v3078, %v3078
      %v3254 = vlaneseq
      %v3255 = vshrl.u32 %v3254, 7
      %v3256 = vsub.s32 0, %v3255
      %v3257 = vrot.slane %v3250, %v3256
      %v3258 = vlaneseq
      %v3259 = vshrl.u32 %v3258, 7
      %v3260 = vsub.s32 0, %v3259
      %v3261 = vrot.slane %v3251, %v3260
      %v3262 = vlaneseq
      %v3263 = vshrl.u32 %v3262, 7
      %v3264 = vsub.s32 0, %v3263
      %v3265 = vrot.slane %v3252, %v3264
      %v3266 = vlaneseq
      %v3267 = vshrl.u32 %v3266, 7
      %v3268 = vsub.s32 0, %v3267
      %v3269 = vrot.slane %v3253, %v3268
      %v3274 = vcombine.low %v3191, %v3203
      %v3275 = vcombine.low %v3215, %v3227
      %v3277 = vunpack.c.l.s4 1983009808
      %v3278 = vunpack.c.0.s8 %v3277
      %v3279 = vlaneseq
      %v3280 = vshrl.u32 %v3279, 7
      %v3281 = vsub.s32 %v3278, %v3280
      %v3282 = vrot.slane %v3274, %v3281
      %v3284 = vunpack.c.l.s4 1983009808
      %v3285 = vunpack.c.0.s8 %v3284
      %v3286 = vlaneseq
      %v3287 = vshrl.u32 %v3286, 7
      %v3288 = vsub.s32 %v3285, %v3287
      %v3289 = vrot.slane %v3275, %v3288
      %v3290 = vcombine.low %v3282, %v3289
      %v3291 = vcombine.low %v3194, %v3206
      %v3292 = vcombine.low %v3218, %v3230
      %v3294 = vunpack.c.l.s4 1983009808
      %v3295 = vunpack.c.0.s8 %v3294
      %v3296 = vlaneseq
      %v3297 = vshrl.u32 %v3296, 7
      %v3298 = vsub.s32 %v3295, %v3297
      %v3299 = vrot.slane %v3291, %v3298
      %v3301 = vunpack.c.l.s4 1983009808
      %v3302 = vunpack.c.0.s8 %v3301
      %v3303 = vlaneseq
      %v3304 = vshrl.u32 %v3303, 7
      %v3305 = vsub.s32 %v3302, %v3304
      %v3306 = vrot.slane %v3292, %v3305
      %v3307 = vcombine.low %v3299, %v3306
      %v3308 = vcombine.low %v3197, %v3209
      %v3309 = vcombine.low %v3221, %v3233
      %v3311 = vunpack.c.l.s4 1983009808
      %v3312 = vunpack.c.0.s8 %v3311
      %v3313 = vlaneseq
      %v3314 = vshrl.u32 %v3313, 7
      %v3315 = vsub.s32 %v3312, %v3314
      %v3316 = vrot.slane %v3308, %v3315
      %v3318 = vunpack.c.l.s4 1983009808
      %v3319 = vunpack.c.0.s8 %v3318
      %v3320 = vlaneseq
      %v3321 = vshrl.u32 %v3320, 7
      %v3322 = vsub.s32 %v3319, %v3321
      %v3323 = vrot.slane %v3309, %v3322
      %v3324 = vcombine.low %v3316, %v3323
      %v3325 = vcombine.low %v3200, %v3212
      %v3326 = vcombine.low %v3224, %v3236
      %v3328 = vunpack.c.l.s4 1983009808
      %v3329 = vunpack.c.0.s8 %v3328
      %v3330 = vlaneseq
      %v3331 = vshrl.u32 %v3330, 7
      %v3332 = vsub.s32 %v3329, %v3331
      %v3333 = vrot.slane %v3325, %v3332
      %v3335 = vunpack.c.l.s4 1983009808
      %v3336 = vunpack.c.0.s8 %v3335
      %v3337 = vlaneseq
      %v3338 = vshrl.u32 %v3337, 7
      %v3339 = vsub.s32 %v3336, %v3338
      %v3340 = vrot.slane %v3326, %v3339
      %v3341 = vcombine.low %v3333, %v3340
      %v3343 = vshrl.u32 %v3290, 16
      %v3345 = vrot.slane %v3343, 7
      %v3346 = vshll.u32 %v3290, 16
      %v3348 = vor.u32 %v3345, %v3346
      %v3350 = vshrl.u32 %v3307, 16
      %v3352 = vrot.slane %v3350, 7
      %v3353 = vshll.u32 %v3307, 16
      %v3355 = vor.u32 %v3352, %v3353
      %v3357 = vshrl.u32 %v3324, 16
      %v3359 = vrot.slane %v3357, 7
      %v3360 = vshll.u32 %v3324, 16
      %v3362 = vor.u32 %v3359, %v3360
      %v3364 = vshrl.u32 %v3341, 16
      %v3366 = vrot.slane %v3364, 7
      %v3367 = vshll.u32 %v3341, 16
      %v3369 = vor.u32 %v3366, %v3367
      %v3378 = vpack.i.b16 %v3246, %v3246
      %v3379 = vpack.i.b16 %v3247, %v3247
      %v3380 = vpack.i.b16 %v3248, %v3248
      %v3381 = vpack.i.b16 %v3249, %v3249
      %v3382 = vlaneseq
      %v3383 = vshrl.u32 %v3382, 7
      %v3384 = vsub.s32 0, %v3383
      %v3385 = vrot.slane %v3378, %v3384
      %v3386 = vlaneseq
      %v3387 = vshrl.u32 %v3386, 7
      %v3388 = vsub.s32 0, %v3387
      %v3389 = vrot.slane %v3379, %v3388
      %v3390 = vlaneseq
      %v3391 = vshrl.u32 %v3390, 7
      %v3392 = vsub.s32 0, %v3391
      %v3393 = vrot.slane %v3380, %v3392
      %v3394 = vlaneseq
      %v3395 = vshrl.u32 %v3394, 7
      %v3396 = vsub.s32 0, %v3395
      %v3397 = vrot.slane %v3381, %v3396
      %v3402 = vsel %vm854, %v3257, %v3348
      %v3403 = vsel %vm854, %v3261, %v3355
      %v3404 = vsel %vm854, %v3265, %v3362
      %v3405 = vsel %vm854, %v3269, %v3369
      %v3406 = vsel %vm854, %v3345, %v3385
      %v3407 = vsel %vm854, %v3352, %v3389
      %v3408 = vsel %vm854, %v3359, %v3393
      %v3409 = vsel %vm854, %v3366, %v3397
      %3418 = vrot.lane.b32.xlu0 %v3402, 1
      %v3419 = vpop.permute.xlu0 %3418
      %3420 = vrot.lane.b32.xlu0 %v3406, 1
      %v3421 = vpop.permute.xlu0 %3420
      %3422 = vrot.lane.b32.xlu0 %v3403, 1
      %v3423 = vpop.permute.xlu0 %3422
      %3424 = vrot.lane.b32.xlu0 %v3407, 1
      %v3425 = vpop.permute.xlu0 %3424
      %3426 = vrot.lane.b32.xlu0 %v3404, 1
      %v3427 = vpop.permute.xlu0 %3426
      %3428 = vrot.lane.b32.xlu0 %v3408, 1
      %v3429 = vpop.permute.xlu0 %3428
      %3430 = vrot.lane.b32.xlu0 %v3405, 1
      %v3431 = vpop.permute.xlu0 %3430
      %3432 = vrot.lane.b32.xlu0 %v3409, 1
      %v3433 = vpop.permute.xlu0 %3432
      %v3435 = vsel %vm887, 0, %v3419
      %v3437 = vsel %vm887, 0, %v3421
      %v3439 = vsel %vm887, 0, %v3423
      %v3441 = vsel %vm887, 0, %v3425
      %v3443 = vsel %vm887, 0, %v3427
      %v3445 = vsel %vm887, 0, %v3429
      %v3447 = vsel %vm887, 0, %v3431
      %v3449 = vsel %vm887, 0, %v3433
      %v3450 = vsel %vm905, %v3435, 0
      %v3451 = vsel %vm905, %v3437, 0
      %v3452 = vsel %vm905, %v3439, 0
      %v3453 = vsel %vm905, %v3441, 0
      %v3454 = vsel %vm905, %v3443, 0
      %v3455 = vsel %vm905, %v3445, 0
      %v3456 = vsel %vm905, %v3447, 0
      %v3457 = vsel %vm905, %v3449, 0
      %v3458 = vpack.i.b16 %v3452, %v3450
      %v3460 = vshrl.u32 %v3450, 16
      %v3461 = vshrl.u32 %v3452, 16
      %v3462 = vpack.i.b16 %v3461, %v3460
      %v3464 = vpack.i.b16 %v3456, %v3454
      %v3466 = vshrl.u32 %v3454, 16
      %v3467 = vshrl.u32 %v3456, 16
      %v3468 = vpack.i.b16 %v3467, %v3466
      %v3470 = vcombine.high %v3458, %v926
      %v3472 = vunpack.c.l.s4 1983009808
      %v3473 = vunpack.c.0.s8 %v3472
      %v3474 = vlaneseq
      %v3475 = vshrl.u32 %v3474, 7
      %v3476 = vsub.s32 %v3473, %v3475
      %v3477 = vrot.slane %v3458, %v3476
      %v3479 = vunpack.c.l.s4 1983009808
      %v3480 = vunpack.c.0.s8 %v3479
      %v3481 = vlaneseq
      %v3482 = vshrl.u32 %v3481, 7
      %v3483 = vsub.s32 %v3480, %v3482
      %v3484 = vrot.slane %v3470, %v3483
      %v3485 = vcombine.high %v3464, %v926
      %v3487 = vunpack.c.l.s4 1983009808
      %v3488 = vunpack.c.0.s8 %v3487
      %v3489 = vlaneseq
      %v3490 = vshrl.u32 %v3489, 7
      %v3491 = vsub.s32 %v3488, %v3490
      %v3492 = vrot.slane %v3464, %v3491
      %v3494 = vunpack.c.l.s4 1983009808
      %v3495 = vunpack.c.0.s8 %v3494
      %v3496 = vlaneseq
      %v3497 = vshrl.u32 %v3496, 7
      %v3498 = vsub.s32 %v3495, %v3497
      %v3499 = vrot.slane %v3485, %v3498
      %v3500 = vcombine.low %v3477, %v3492
      %v3501 = vcombine.high %v3477, %v3492
      %v3503 = vunpack.c.l.s4 1934713408
      %v3504 = vunpack.c.0.s8 %v3503
      %v3505 = vlaneseq
      %v3506 = vshrl.u32 %v3505, 7
      %v3507 = vsub.s32 %v3504, %v3506
      %v3508 = vrot.slane %v3500, %v3507
      %v3510 = vunpack.c.l.s4 1934713408
      %v3511 = vunpack.c.0.s8 %v3510
      %v3512 = vlaneseq
      %v3513 = vshrl.u32 %v3512, 7
      %v3514 = vsub.s32 %v3511, %v3513
      %v3515 = vrot.slane %v3501, %v3514
      %v3516 = vcombine.low %v3484, %v3499
      %v3517 = vcombine.high %v3484, %v3499
      %v3519 = vunpack.c.l.s4 1934713408
      %v3520 = vunpack.c.0.s8 %v3519
      %v3521 = vlaneseq
      %v3522 = vshrl.u32 %v3521, 7
      %v3523 = vsub.s32 %v3520, %v3522
      %v3524 = vrot.slane %v3516, %v3523
      %v3526 = vunpack.c.l.s4 1934713408
      %v3527 = vunpack.c.0.s8 %v3526
      %v3528 = vlaneseq
      %v3529 = vshrl.u32 %v3528, 7
      %v3530 = vsub.s32 %v3527, %v3529
      %v3531 = vrot.slane %v3517, %v3530
      %v3532 = vcombine.high %v3508, 0
      %v3533 = vcombine.high %v3515, 0
      %v3534 = vcombine.high %v3524, 0
      %v3535 = vcombine.high %v3531, 0
      %v3536 = vcombine.high %v3462, %v929
      %v3538 = vunpack.c.l.s4 1983009808
      %v3539 = vunpack.c.0.s8 %v3538
      %v3540 = vlaneseq
      %v3541 = vshrl.u32 %v3540, 7
      %v3542 = vsub.s32 %v3539, %v3541
      %v3543 = vrot.slane %v3462, %v3542
      %v3545 = vunpack.c.l.s4 1983009808
      %v3546 = vunpack.c.0.s8 %v3545
      %v3547 = vlaneseq
      %v3548 = vshrl.u32 %v3547, 7
      %v3549 = vsub.s32 %v3546, %v3548
      %v3550 = vrot.slane %v3536, %v3549
      %v3551 = vcombine.high %v3468, %v929
      %v3553 = vunpack.c.l.s4 1983009808
      %v3554 = vunpack.c.0.s8 %v3553
      %v3555 = vlaneseq
      %v3556 = vshrl.u32 %v3555, 7
      %v3557 = vsub.s32 %v3554, %v3556
      %v3558 = vrot.slane %v3468, %v3557
      %v3560 = vunpack.c.l.s4 1983009808
      %v3561 = vunpack.c.0.s8 %v3560
      %v3562 = vlaneseq
      %v3563 = vshrl.u32 %v3562, 7
      %v3564 = vsub.s32 %v3561, %v3563
      %v3565 = vrot.slane %v3551, %v3564
      %v3566 = vcombine.low %v3543, %v3558
      %v3567 = vcombine.high %v3543, %v3558
      %v3569 = vunpack.c.l.s4 1934713408
      %v3570 = vunpack.c.0.s8 %v3569
      %v3571 = vlaneseq
      %v3572 = vshrl.u32 %v3571, 7
      %v3573 = vsub.s32 %v3570, %v3572
      %v3574 = vrot.slane %v3566, %v3573
      %v3576 = vunpack.c.l.s4 1934713408
      %v3577 = vunpack.c.0.s8 %v3576
      %v3578 = vlaneseq
      %v3579 = vshrl.u32 %v3578, 7
      %v3580 = vsub.s32 %v3577, %v3579
      %v3581 = vrot.slane %v3567, %v3580
      %v3582 = vcombine.low %v3550, %v3565
      %v3583 = vcombine.high %v3550, %v3565
      %v3585 = vunpack.c.l.s4 1934713408
      %v3586 = vunpack.c.0.s8 %v3585
      %v3587 = vlaneseq
      %v3588 = vshrl.u32 %v3587, 7
      %v3589 = vsub.s32 %v3586, %v3588
      %v3590 = vrot.slane %v3582, %v3589
      %v3592 = vunpack.c.l.s4 1934713408
      %v3593 = vunpack.c.0.s8 %v3592
      %v3594 = vlaneseq
      %v3595 = vshrl.u32 %v3594, 7
      %v3596 = vsub.s32 %v3593, %v3595
      %v3597 = vrot.slane %v3583, %v3596
      %v3598 = vcombine.high %v3574, 0
      %v3599 = vcombine.high %v3581, 0
      %v3600 = vcombine.high %v3590, 0
      %v3601 = vcombine.high %v3597, 0
      %3603 = vrot.lane.b32.xlu0 %v3574, 16
      %v3604 = vpop.permute.xlu0 %3603
      %3606 = vrot.lane.b32.xlu0 %v3532, 32
      %v3607 = vpop.permute.xlu0 %3606
      %3609 = vrot.lane.b32.xlu0 %v3598, 48
      %v3610 = vpop.permute.xlu0 %3609
      %3612 = vrot.lane.b32.xlu0 %v3515, 64
      %v3613 = vpop.permute.xlu0 %3612
      %3615 = vrot.lane.b32.xlu0 %v3581, 80
      %v3616 = vpop.permute.xlu0 %3615
      %3618 = vrot.lane.b32.xlu0 %v3533, 96
      %v3619 = vpop.permute.xlu0 %3618
      %3621 = vrot.lane.b32.xlu0 %v3599, 112
      %v3622 = vpop.permute.xlu0 %3621
      %3624 = vrot.lane.b32.xlu0 %v3590, 16
      %v3625 = vpop.permute.xlu0 %3624
      %3627 = vrot.lane.b32.xlu0 %v3534, 32
      %v3628 = vpop.permute.xlu0 %3627
      %3630 = vrot.lane.b32.xlu0 %v3600, 48
      %v3631 = vpop.permute.xlu0 %3630
      %3633 = vrot.lane.b32.xlu0 %v3531, 64
      %v3634 = vpop.permute.xlu0 %3633
      %3636 = vrot.lane.b32.xlu0 %v3597, 80
      %v3637 = vpop.permute.xlu0 %3636
      %3639 = vrot.lane.b32.xlu0 %v3535, 96
      %v3640 = vpop.permute.xlu0 %3639
      %3642 = vrot.lane.b32.xlu0 %v3601, 112
      %v3643 = vpop.permute.xlu0 %3642
      %v3646 = vsel %vm1105, %v3508, %v3604
      %v3648 = vsel %vm1109, %v3646, %v3607
      %v3650 = vsel %vm1112, %v3648, %v3610
      %v3652 = vsel %vm1115, %v3650, %v3613
      %v3654 = vsel %vm1118, %v3652, %v3616
      %v3656 = vsel %vm1121, %v3654, %v3619
      %v3658 = vsel %vm1124, %v3656, %v3622
      %v3661 = vsel %vm1105, %v3524, %v3625
      %v3663 = vsel %vm1109, %v3661, %v3628
      %v3665 = vsel %vm1112, %v3663, %v3631
      %v3667 = vsel %vm1115, %v3665, %v3634
      %v3669 = vsel %vm1118, %v3667, %v3637
      %v3671 = vsel %vm1121, %v3669, %v3640
      %v3673 = vsel %vm1124, %v3671, %v3643
      %3678 = vrot.lane.b32.xlu0 %v3450, 127
      %v3679 = vpop.permute.xlu0 %3678
      %3680 = vrot.lane.b32.xlu0 %v3452, 127
      %v3681 = vpop.permute.xlu0 %3680
      %3682 = vrot.lane.b32.xlu0 %v3454, 127
      %v3683 = vpop.permute.xlu0 %3682
      %3684 = vrot.lane.b32.xlu0 %v3456, 127
      %v3685 = vpop.permute.xlu0 %3684
      %v3688 = vpack.i.b16 %v3681, %v3679
      %v3690 = vshrl.u32 %v3679, 16
      %v3691 = vshrl.u32 %v3681, 16
      %v3692 = vpack.i.b16 %v3691, %v3690
      %v3696 = vpack.i.b16 %v3685, %v3683
      %v3698 = vshrl.u32 %v3683, 16
      %v3699 = vshrl.u32 %v3685, 16
      %v3700 = vpack.i.b16 %v3699, %v3698
      %v3702 = vcombine.high %v3688, %v926
      %v3704 = vunpack.c.l.s4 1983009808
      %v3705 = vunpack.c.0.s8 %v3704
      %v3706 = vlaneseq
      %v3707 = vshrl.u32 %v3706, 7
      %v3708 = vsub.s32 %v3705, %v3707
      %v3709 = vrot.slane %v3688, %v3708
      %v3711 = vunpack.c.l.s4 1983009808
      %v3712 = vunpack.c.0.s8 %v3711
      %v3713 = vlaneseq
      %v3714 = vshrl.u32 %v3713, 7
      %v3715 = vsub.s32 %v3712, %v3714
      %v3716 = vrot.slane %v3702, %v3715
      %v3717 = vcombine.high %v3696, %v926
      %v3719 = vunpack.c.l.s4 1983009808
      %v3720 = vunpack.c.0.s8 %v3719
      %v3721 = vlaneseq
      %v3722 = vshrl.u32 %v3721, 7
      %v3723 = vsub.s32 %v3720, %v3722
      %v3724 = vrot.slane %v3696, %v3723
      %v3726 = vunpack.c.l.s4 1983009808
      %v3727 = vunpack.c.0.s8 %v3726
      %v3728 = vlaneseq
      %v3729 = vshrl.u32 %v3728, 7
      %v3730 = vsub.s32 %v3727, %v3729
      %v3731 = vrot.slane %v3717, %v3730
      %v3732 = vcombine.low %v3709, %v3724
      %v3733 = vcombine.high %v3709, %v3724
      %v3735 = vunpack.c.l.s4 1934713408
      %v3736 = vunpack.c.0.s8 %v3735
      %v3737 = vlaneseq
      %v3738 = vshrl.u32 %v3737, 7
      %v3739 = vsub.s32 %v3736, %v3738
      %v3740 = vrot.slane %v3732, %v3739
      %v3742 = vunpack.c.l.s4 1934713408
      %v3743 = vunpack.c.0.s8 %v3742
      %v3744 = vlaneseq
      %v3745 = vshrl.u32 %v3744, 7
      %v3746 = vsub.s32 %v3743, %v3745
      %v3747 = vrot.slane %v3733, %v3746
      %v3748 = vcombine.low %v3716, %v3731
      %v3749 = vcombine.high %v3716, %v3731
      %v3751 = vunpack.c.l.s4 1934713408
      %v3752 = vunpack.c.0.s8 %v3751
      %v3753 = vlaneseq
      %v3754 = vshrl.u32 %v3753, 7
      %v3755 = vsub.s32 %v3752, %v3754
      %v3756 = vrot.slane %v3748, %v3755
      %v3758 = vunpack.c.l.s4 1934713408
      %v3759 = vunpack.c.0.s8 %v3758
      %v3760 = vlaneseq
      %v3761 = vshrl.u32 %v3760, 7
      %v3762 = vsub.s32 %v3759, %v3761
      %v3763 = vrot.slane %v3749, %v3762
      %v3764 = vcombine.high %v3740, 0
      %v3765 = vcombine.high %v3747, 0
      %v3766 = vcombine.high %v3756, 0
      %v3767 = vcombine.high %v3763, 0
      %v3768 = vcombine.high %v3692, %v929
      %v3770 = vunpack.c.l.s4 1983009808
      %v3771 = vunpack.c.0.s8 %v3770
      %v3772 = vlaneseq
      %v3773 = vshrl.u32 %v3772, 7
      %v3774 = vsub.s32 %v3771, %v3773
      %v3775 = vrot.slane %v3692, %v3774
      %v3777 = vunpack.c.l.s4 1983009808
      %v3778 = vunpack.c.0.s8 %v3777
      %v3779 = vlaneseq
      %v3780 = vshrl.u32 %v3779, 7
      %v3781 = vsub.s32 %v3778, %v3780
      %v3782 = vrot.slane %v3768, %v3781
      %v3783 = vcombine.high %v3700, %v929
      %v3785 = vunpack.c.l.s4 1983009808
      %v3786 = vunpack.c.0.s8 %v3785
      %v3787 = vlaneseq
      %v3788 = vshrl.u32 %v3787, 7
      %v3789 = vsub.s32 %v3786, %v3788
      %v3790 = vrot.slane %v3700, %v3789
      %v3792 = vunpack.c.l.s4 1983009808
      %v3793 = vunpack.c.0.s8 %v3792
      %v3794 = vlaneseq
      %v3795 = vshrl.u32 %v3794, 7
      %v3796 = vsub.s32 %v3793, %v3795
      %v3797 = vrot.slane %v3783, %v3796
      %v3798 = vcombine.low %v3775, %v3790
      %v3799 = vcombine.high %v3775, %v3790
      %v3801 = vunpack.c.l.s4 1934713408
      %v3802 = vunpack.c.0.s8 %v3801
      %v3803 = vlaneseq
      %v3804 = vshrl.u32 %v3803, 7
      %v3805 = vsub.s32 %v3802, %v3804
      %v3806 = vrot.slane %v3798, %v3805
      %v3808 = vunpack.c.l.s4 1934713408
      %v3809 = vunpack.c.0.s8 %v3808
      %v3810 = vlaneseq
      %v3811 = vshrl.u32 %v3810, 7
      %v3812 = vsub.s32 %v3809, %v3811
      %v3813 = vrot.slane %v3799, %v3812
      %v3814 = vcombine.low %v3782, %v3797
      %v3815 = vcombine.high %v3782, %v3797
      %v3817 = vunpack.c.l.s4 1934713408
      %v3818 = vunpack.c.0.s8 %v3817
      %v3819 = vlaneseq
      %v3820 = vshrl.u32 %v3819, 7
      %v3821 = vsub.s32 %v3818, %v3820
      %v3822 = vrot.slane %v3814, %v3821
      %v3824 = vunpack.c.l.s4 1934713408
      %v3825 = vunpack.c.0.s8 %v3824
      %v3826 = vlaneseq
      %v3827 = vshrl.u32 %v3826, 7
      %v3828 = vsub.s32 %v3825, %v3827
      %v3829 = vrot.slane %v3815, %v3828
      %v3830 = vcombine.high %v3806, 0
      %v3831 = vcombine.high %v3813, 0
      %v3832 = vcombine.high %v3822, 0
      %v3833 = vcombine.high %v3829, 0
      %3835 = vrot.lane.b32.xlu0 %v3806, 16
      %v3836 = vpop.permute.xlu0 %3835
      %3838 = vrot.lane.b32.xlu0 %v3764, 32
      %v3839 = vpop.permute.xlu0 %3838
      %3841 = vrot.lane.b32.xlu0 %v3830, 48
      %v3842 = vpop.permute.xlu0 %3841
      %3844 = vrot.lane.b32.xlu0 %v3747, 64
      %v3845 = vpop.permute.xlu0 %3844
      %3847 = vrot.lane.b32.xlu0 %v3813, 80
      %v3848 = vpop.permute.xlu0 %3847
      %3850 = vrot.lane.b32.xlu0 %v3765, 96
      %v3851 = vpop.permute.xlu0 %3850
      %3853 = vrot.lane.b32.xlu0 %v3831, 112
      %v3854 = vpop.permute.xlu0 %3853
      %3856 = vrot.lane.b32.xlu0 %v3822, 16
      %v3857 = vpop.permute.xlu0 %3856
      %3859 = vrot.lane.b32.xlu0 %v3766, 32
      %v3860 = vpop.permute.xlu0 %3859
      %3862 = vrot.lane.b32.xlu0 %v3832, 48
      %v3863 = vpop.permute.xlu0 %3862
      %3865 = vrot.lane.b32.xlu0 %v3763, 64
      %v3866 = vpop.permute.xlu0 %3865
      %3868 = vrot.lane.b32.xlu0 %v3829, 80
      %v3869 = vpop.permute.xlu0 %3868
      %3871 = vrot.lane.b32.xlu0 %v3767, 96
      %v3872 = vpop.permute.xlu0 %3871
      %3874 = vrot.lane.b32.xlu0 %v3833, 112
      %v3875 = vpop.permute.xlu0 %3874
      %v3878 = vsel %vm1105, %v3740, %v3836
      %v3880 = vsel %vm1109, %v3878, %v3839
      %v3882 = vsel %vm1112, %v3880, %v3842
      %v3884 = vsel %vm1115, %v3882, %v3845
      %v3886 = vsel %vm1118, %v3884, %v3848
      %v3888 = vsel %vm1121, %v3886, %v3851
      %v3890 = vsel %vm1124, %v3888, %v3854
      %v3893 = vsel %vm1105, %v3756, %v3857
      %v3895 = vsel %vm1109, %v3893, %v3860
      %v3897 = vsel %vm1112, %v3895, %v3863
      %v3899 = vsel %vm1115, %v3897, %v3866
      %v3901 = vsel %vm1118, %v3899, %v3869
      %v3903 = vsel %vm1121, %v3901, %v3872
      %v3905 = vsel %vm1124, %v3903, %v3875
      %3906 = vrot.lane.b32.xlu0 %v3450, 126
      %v3907 = vpop.permute.xlu0 %3906
      %3908 = vrot.lane.b32.xlu0 %v3452, 126
      %v3909 = vpop.permute.xlu0 %3908
      %3910 = vrot.lane.b32.xlu0 %v3454, 126
      %v3911 = vpop.permute.xlu0 %3910
      %3912 = vrot.lane.b32.xlu0 %v3456, 126
      %v3913 = vpop.permute.xlu0 %3912
      %v3916 = vpack.i.b16 %v3909, %v3907
      %v3918 = vshrl.u32 %v3907, 16
      %v3919 = vshrl.u32 %v3909, 16
      %v3920 = vpack.i.b16 %v3919, %v3918
      %v3924 = vpack.i.b16 %v3913, %v3911
      %v3926 = vshrl.u32 %v3911, 16
      %v3927 = vshrl.u32 %v3913, 16
      %v3928 = vpack.i.b16 %v3927, %v3926
      %v3930 = vcombine.high %v3916, %v926
      %v3932 = vunpack.c.l.s4 1983009808
      %v3933 = vunpack.c.0.s8 %v3932
      %v3934 = vlaneseq
      %v3935 = vshrl.u32 %v3934, 7
      %v3936 = vsub.s32 %v3933, %v3935
      %v3937 = vrot.slane %v3916, %v3936
      %v3939 = vunpack.c.l.s4 1983009808
      %v3940 = vunpack.c.0.s8 %v3939
      %v3941 = vlaneseq
      %v3942 = vshrl.u32 %v3941, 7
      %v3943 = vsub.s32 %v3940, %v3942
      %v3944 = vrot.slane %v3930, %v3943
      %v3945 = vcombine.high %v3924, %v926
      %v3947 = vunpack.c.l.s4 1983009808
      %v3948 = vunpack.c.0.s8 %v3947
      %v3949 = vlaneseq
      %v3950 = vshrl.u32 %v3949, 7
      %v3951 = vsub.s32 %v3948, %v3950
      %v3952 = vrot.slane %v3924, %v3951
      %v3954 = vunpack.c.l.s4 1983009808
      %v3955 = vunpack.c.0.s8 %v3954
      %v3956 = vlaneseq
      %v3957 = vshrl.u32 %v3956, 7
      %v3958 = vsub.s32 %v3955, %v3957
      %v3959 = vrot.slane %v3945, %v3958
      %v3960 = vcombine.low %v3937, %v3952
      %v3961 = vcombine.high %v3937, %v3952
      %v3963 = vunpack.c.l.s4 1934713408
      %v3964 = vunpack.c.0.s8 %v3963
      %v3965 = vlaneseq
      %v3966 = vshrl.u32 %v3965, 7
      %v3967 = vsub.s32 %v3964, %v3966
      %v3968 = vrot.slane %v3960, %v3967
      %v3970 = vunpack.c.l.s4 1934713408
      %v3971 = vunpack.c.0.s8 %v3970
      %v3972 = vlaneseq
      %v3973 = vshrl.u32 %v3972, 7
      %v3974 = vsub.s32 %v3971, %v3973
      %v3975 = vrot.slane %v3961, %v3974
      %v3976 = vcombine.low %v3944, %v3959
      %v3977 = vcombine.high %v3944, %v3959
      %v3979 = vunpack.c.l.s4 1934713408
      %v3980 = vunpack.c.0.s8 %v3979
      %v3981 = vlaneseq
      %v3982 = vshrl.u32 %v3981, 7
      %v3983 = vsub.s32 %v3980, %v3982
      %v3984 = vrot.slane %v3976, %v3983
      %v3986 = vunpack.c.l.s4 1934713408
      %v3987 = vunpack.c.0.s8 %v3986
      %v3988 = vlaneseq
      %v3989 = vshrl.u32 %v3988, 7
      %v3990 = vsub.s32 %v3987, %v3989
      %v3991 = vrot.slane %v3977, %v3990
      %v3992 = vcombine.high %v3968, 0
      %v3993 = vcombine.high %v3975, 0
      %v3994 = vcombine.high %v3984, 0
      %v3995 = vcombine.high %v3991, 0
      %v3996 = vcombine.high %v3920, %v929
      %v3998 = vunpack.c.l.s4 1983009808
      %v3999 = vunpack.c.0.s8 %v3998
      %v4000 = vlaneseq
      %v4001 = vshrl.u32 %v4000, 7
      %v4002 = vsub.s32 %v3999, %v4001
      %v4003 = vrot.slane %v3920, %v4002
      %v4005 = vunpack.c.l.s4 1983009808
      %v4006 = vunpack.c.0.s8 %v4005
      %v4007 = vlaneseq
      %v4008 = vshrl.u32 %v4007, 7
      %v4009 = vsub.s32 %v4006, %v4008
      %v4010 = vrot.slane %v3996, %v4009
      %v4011 = vcombine.high %v3928, %v929
      %v4013 = vunpack.c.l.s4 1983009808
      %v4014 = vunpack.c.0.s8 %v4013
      %v4015 = vlaneseq
      %v4016 = vshrl.u32 %v4015, 7
      %v4017 = vsub.s32 %v4014, %v4016
      %v4018 = vrot.slane %v3928, %v4017
      %v4020 = vunpack.c.l.s4 1983009808
      %v4021 = vunpack.c.0.s8 %v4020
      %v4022 = vlaneseq
      %v4023 = vshrl.u32 %v4022, 7
      %v4024 = vsub.s32 %v4021, %v4023
      %v4025 = vrot.slane %v4011, %v4024
      %v4026 = vcombine.low %v4003, %v4018
      %v4027 = vcombine.high %v4003, %v4018
      %v4029 = vunpack.c.l.s4 1934713408
      %v4030 = vunpack.c.0.s8 %v4029
      %v4031 = vlaneseq
      %v4032 = vshrl.u32 %v4031, 7
      %v4033 = vsub.s32 %v4030, %v4032
      %v4034 = vrot.slane %v4026, %v4033
      %v4036 = vunpack.c.l.s4 1934713408
      %v4037 = vunpack.c.0.s8 %v4036
      %v4038 = vlaneseq
      %v4039 = vshrl.u32 %v4038, 7
      %v4040 = vsub.s32 %v4037, %v4039
      %v4041 = vrot.slane %v4027, %v4040
      %v4042 = vcombine.low %v4010, %v4025
      %v4043 = vcombine.high %v4010, %v4025
      %v4045 = vunpack.c.l.s4 1934713408
      %v4046 = vunpack.c.0.s8 %v4045
      %v4047 = vlaneseq
      %v4048 = vshrl.u32 %v4047, 7
      %v4049 = vsub.s32 %v4046, %v4048
      %v4050 = vrot.slane %v4042, %v4049
      %v4052 = vunpack.c.l.s4 1934713408
      %v4053 = vunpack.c.0.s8 %v4052
      %v4054 = vlaneseq
      %v4055 = vshrl.u32 %v4054, 7
      %v4056 = vsub.s32 %v4053, %v4055
      %v4057 = vrot.slane %v4043, %v4056
      %v4058 = vcombine.high %v4034, 0
      %v4059 = vcombine.high %v4041, 0
      %v4060 = vcombine.high %v4050, 0
      %v4061 = vcombine.high %v4057, 0
      %4063 = vrot.lane.b32.xlu0 %v4034, 16
      %v4064 = vpop.permute.xlu0 %4063
      %4066 = vrot.lane.b32.xlu0 %v3992, 32
      %v4067 = vpop.permute.xlu0 %4066
      %4069 = vrot.lane.b32.xlu0 %v4058, 48
      %v4070 = vpop.permute.xlu0 %4069
      %4072 = vrot.lane.b32.xlu0 %v3975, 64
      %v4073 = vpop.permute.xlu0 %4072
      %4075 = vrot.lane.b32.xlu0 %v4041, 80
      %v4076 = vpop.permute.xlu0 %4075
      %4078 = vrot.lane.b32.xlu0 %v3993, 96
      %v4079 = vpop.permute.xlu0 %4078
      %4081 = vrot.lane.b32.xlu0 %v4059, 112
      %v4082 = vpop.permute.xlu0 %4081
      %4084 = vrot.lane.b32.xlu0 %v4050, 16
      %v4085 = vpop.permute.xlu0 %4084
      %4087 = vrot.lane.b32.xlu0 %v3994, 32
      %v4088 = vpop.permute.xlu0 %4087
      %4090 = vrot.lane.b32.xlu0 %v4060, 48
      %v4091 = vpop.permute.xlu0 %4090
      %4093 = vrot.lane.b32.xlu0 %v3991, 64
      %v4094 = vpop.permute.xlu0 %4093
      %4096 = vrot.lane.b32.xlu0 %v4057, 80
      %v4097 = vpop.permute.xlu0 %4096
      %4099 = vrot.lane.b32.xlu0 %v3995, 96
      %v4100 = vpop.permute.xlu0 %4099
      %4102 = vrot.lane.b32.xlu0 %v4061, 112
      %v4103 = vpop.permute.xlu0 %4102
      %v4106 = vsel %vm1105, %v3968, %v4064
      %v4108 = vsel %vm1109, %v4106, %v4067
      %v4110 = vsel %vm1112, %v4108, %v4070
      %v4112 = vsel %vm1115, %v4110, %v4073
      %v4114 = vsel %vm1118, %v4112, %v4076
      %v4116 = vsel %vm1121, %v4114, %v4079
      %v4118 = vsel %vm1124, %v4116, %v4082
      %v4121 = vsel %vm1105, %v3984, %v4085
      %v4123 = vsel %vm1109, %v4121, %v4088
      %v4125 = vsel %vm1112, %v4123, %v4091
      %v4127 = vsel %vm1115, %v4125, %v4094
      %v4129 = vsel %vm1118, %v4127, %v4097
      %v4131 = vsel %vm1121, %v4129, %v4100
      %v4133 = vsel %vm1124, %v4131, %v4103
      %v4135 = vshll.u32 %v3450, 16
      %v4137 = vrot.slane %v4135, 1
      %v4138 = vor.u32 %v3460, %v4137
      %v4139 = vshll.u32 %v3451, 16
      %v4141 = vrot.slane %v4139, 1
      %v4142 = vsel %vm1602, %v4138, %v4141
      %v4144 = vshll.u32 %v3452, 16
      %v4146 = vrot.slane %v4144, 1
      %v4147 = vor.u32 %v3461, %v4146
      %v4148 = vshll.u32 %v3453, 16
      %v4150 = vrot.slane %v4148, 1
      %v4151 = vsel %vm1602, %v4147, %v4150
      %v4153 = vshll.u32 %v3454, 16
      %v4155 = vrot.slane %v4153, 1
      %v4156 = vor.u32 %v3466, %v4155
      %v4157 = vshll.u32 %v3455, 16
      %v4159 = vrot.slane %v4157, 1
      %v4160 = vsel %vm1602, %v4156, %v4159
      %v4162 = vshll.u32 %v3456, 16
      %v4164 = vrot.slane %v4162, 1
      %v4165 = vor.u32 %v3467, %v4164
      %v4166 = vshll.u32 %v3457, 16
      %v4168 = vrot.slane %v4166, 1
      %v4169 = vsel %vm1602, %v4165, %v4168
      %v4172 = vpack.i.b16 %v4151, %v4142
      %v4174 = vshrl.u32 %v4142, 16
      %v4175 = vshrl.u32 %v4151, 16
      %v4176 = vpack.i.b16 %v4175, %v4174
      %v4180 = vpack.i.b16 %v4169, %v4160
      %v4182 = vshrl.u32 %v4160, 16
      %v4183 = vshrl.u32 %v4169, 16
      %v4184 = vpack.i.b16 %v4183, %v4182
      %v4186 = vcombine.high %v4172, %v926
      %v4188 = vunpack.c.l.s4 1983009808
      %v4189 = vunpack.c.0.s8 %v4188
      %v4190 = vlaneseq
      %v4191 = vshrl.u32 %v4190, 7
      %v4192 = vsub.s32 %v4189, %v4191
      %v4193 = vrot.slane %v4172, %v4192
      %v4195 = vunpack.c.l.s4 1983009808
      %v4196 = vunpack.c.0.s8 %v4195
      %v4197 = vlaneseq
      %v4198 = vshrl.u32 %v4197, 7
      %v4199 = vsub.s32 %v4196, %v4198
      %v4200 = vrot.slane %v4186, %v4199
      %v4201 = vcombine.high %v4180, %v926
      %v4203 = vunpack.c.l.s4 1983009808
      %v4204 = vunpack.c.0.s8 %v4203
      %v4205 = vlaneseq
      %v4206 = vshrl.u32 %v4205, 7
      %v4207 = vsub.s32 %v4204, %v4206
      %v4208 = vrot.slane %v4180, %v4207
      %v4210 = vunpack.c.l.s4 1983009808
      %v4211 = vunpack.c.0.s8 %v4210
      %v4212 = vlaneseq
      %v4213 = vshrl.u32 %v4212, 7
      %v4214 = vsub.s32 %v4211, %v4213
      %v4215 = vrot.slane %v4201, %v4214
      %v4216 = vcombine.low %v4193, %v4208
      %v4217 = vcombine.high %v4193, %v4208
      %v4219 = vunpack.c.l.s4 1934713408
      %v4220 = vunpack.c.0.s8 %v4219
      %v4221 = vlaneseq
      %v4222 = vshrl.u32 %v4221, 7
      %v4223 = vsub.s32 %v4220, %v4222
      %v4224 = vrot.slane %v4216, %v4223
      %v4226 = vunpack.c.l.s4 1934713408
      %v4227 = vunpack.c.0.s8 %v4226
      %v4228 = vlaneseq
      %v4229 = vshrl.u32 %v4228, 7
      %v4230 = vsub.s32 %v4227, %v4229
      %v4231 = vrot.slane %v4217, %v4230
      %v4232 = vcombine.low %v4200, %v4215
      %v4233 = vcombine.high %v4200, %v4215
      %v4235 = vunpack.c.l.s4 1934713408
      %v4236 = vunpack.c.0.s8 %v4235
      %v4237 = vlaneseq
      %v4238 = vshrl.u32 %v4237, 7
      %v4239 = vsub.s32 %v4236, %v4238
      %v4240 = vrot.slane %v4232, %v4239
      %v4242 = vunpack.c.l.s4 1934713408
      %v4243 = vunpack.c.0.s8 %v4242
      %v4244 = vlaneseq
      %v4245 = vshrl.u32 %v4244, 7
      %v4246 = vsub.s32 %v4243, %v4245
      %v4247 = vrot.slane %v4233, %v4246
      %v4248 = vcombine.high %v4224, 0
      %v4249 = vcombine.high %v4231, 0
      %v4250 = vcombine.high %v4240, 0
      %v4251 = vcombine.high %v4247, 0
      %v4252 = vcombine.high %v4176, %v929
      %v4254 = vunpack.c.l.s4 1983009808
      %v4255 = vunpack.c.0.s8 %v4254
      %v4256 = vlaneseq
      %v4257 = vshrl.u32 %v4256, 7
      %v4258 = vsub.s32 %v4255, %v4257
      %v4259 = vrot.slane %v4176, %v4258
      %v4261 = vunpack.c.l.s4 1983009808
      %v4262 = vunpack.c.0.s8 %v4261
      %v4263 = vlaneseq
      %v4264 = vshrl.u32 %v4263, 7
      %v4265 = vsub.s32 %v4262, %v4264
      %v4266 = vrot.slane %v4252, %v4265
      %v4267 = vcombine.high %v4184, %v929
      %v4269 = vunpack.c.l.s4 1983009808
      %v4270 = vunpack.c.0.s8 %v4269
      %v4271 = vlaneseq
      %v4272 = vshrl.u32 %v4271, 7
      %v4273 = vsub.s32 %v4270, %v4272
      %v4274 = vrot.slane %v4184, %v4273
      %v4276 = vunpack.c.l.s4 1983009808
      %v4277 = vunpack.c.0.s8 %v4276
      %v4278 = vlaneseq
      %v4279 = vshrl.u32 %v4278, 7
      %v4280 = vsub.s32 %v4277, %v4279
      %v4281 = vrot.slane %v4267, %v4280
      %v4282 = vcombine.low %v4259, %v4274
      %v4283 = vcombine.high %v4259, %v4274
      %v4285 = vunpack.c.l.s4 1934713408
      %v4286 = vunpack.c.0.s8 %v4285
      %v4287 = vlaneseq
      %v4288 = vshrl.u32 %v4287, 7
      %v4289 = vsub.s32 %v4286, %v4288
      %v4290 = vrot.slane %v4282, %v4289
      %v4292 = vunpack.c.l.s4 1934713408
      %v4293 = vunpack.c.0.s8 %v4292
      %v4294 = vlaneseq
      %v4295 = vshrl.u32 %v4294, 7
      %v4296 = vsub.s32 %v4293, %v4295
      %v4297 = vrot.slane %v4283, %v4296
      %v4298 = vcombine.low %v4266, %v4281
      %v4299 = vcombine.high %v4266, %v4281
      %v4301 = vunpack.c.l.s4 1934713408
      %v4302 = vunpack.c.0.s8 %v4301
      %v4303 = vlaneseq
      %v4304 = vshrl.u32 %v4303, 7
      %v4305 = vsub.s32 %v4302, %v4304
      %v4306 = vrot.slane %v4298, %v4305
      %v4308 = vunpack.c.l.s4 1934713408
      %v4309 = vunpack.c.0.s8 %v4308
      %v4310 = vlaneseq
      %v4311 = vshrl.u32 %v4310, 7
      %v4312 = vsub.s32 %v4309, %v4311
      %v4313 = vrot.slane %v4299, %v4312
      %v4314 = vcombine.high %v4290, 0
      %v4315 = vcombine.high %v4297, 0
      %v4316 = vcombine.high %v4306, 0
      %v4317 = vcombine.high %v4313, 0
      %4319 = vrot.lane.b32.xlu0 %v4290, 16
      %v4320 = vpop.permute.xlu0 %4319
      %4322 = vrot.lane.b32.xlu0 %v4248, 32
      %v4323 = vpop.permute.xlu0 %4322
      %4325 = vrot.lane.b32.xlu0 %v4314, 48
      %v4326 = vpop.permute.xlu0 %4325
      %4328 = vrot.lane.b32.xlu0 %v4231, 64
      %v4329 = vpop.permute.xlu0 %4328
      %4331 = vrot.lane.b32.xlu0 %v4297, 80
      %v4332 = vpop.permute.xlu0 %4331
      %4334 = vrot.lane.b32.xlu0 %v4249, 96
      %v4335 = vpop.permute.xlu0 %4334
      %4337 = vrot.lane.b32.xlu0 %v4315, 112
      %v4338 = vpop.permute.xlu0 %4337
      %4340 = vrot.lane.b32.xlu0 %v4306, 16
      %v4341 = vpop.permute.xlu0 %4340
      %4343 = vrot.lane.b32.xlu0 %v4250, 32
      %v4344 = vpop.permute.xlu0 %4343
      %4346 = vrot.lane.b32.xlu0 %v4316, 48
      %v4347 = vpop.permute.xlu0 %4346
      %4349 = vrot.lane.b32.xlu0 %v4247, 64
      %v4350 = vpop.permute.xlu0 %4349
      %4352 = vrot.lane.b32.xlu0 %v4313, 80
      %v4353 = vpop.permute.xlu0 %4352
      %4355 = vrot.lane.b32.xlu0 %v4251, 96
      %v4356 = vpop.permute.xlu0 %4355
      %4358 = vrot.lane.b32.xlu0 %v4317, 112
      %v4359 = vpop.permute.xlu0 %4358
      %v4362 = vsel %vm1105, %v4224, %v4320
      %v4364 = vsel %vm1109, %v4362, %v4323
      %v4366 = vsel %vm1112, %v4364, %v4326
      %v4368 = vsel %vm1115, %v4366, %v4329
      %v4370 = vsel %vm1118, %v4368, %v4332
      %v4372 = vsel %vm1121, %v4370, %v4335
      %v4374 = vsel %vm1124, %v4372, %v4338
      %v4377 = vsel %vm1105, %v4240, %v4341
      %v4379 = vsel %vm1109, %v4377, %v4344
      %v4381 = vsel %vm1112, %v4379, %v4347
      %v4383 = vsel %vm1115, %v4381, %v4350
      %v4385 = vsel %vm1118, %v4383, %v4353
      %v4387 = vsel %vm1121, %v4385, %v4356
      %v4389 = vsel %vm1124, %v4387, %v4359
      %4390 = vrot.lane.b32.xlu0 %v4142, 127
      %v4391 = vpop.permute.xlu0 %4390
      %4392 = vrot.lane.b32.xlu0 %v4151, 127
      %v4393 = vpop.permute.xlu0 %4392
      %4394 = vrot.lane.b32.xlu0 %v4160, 127
      %v4395 = vpop.permute.xlu0 %4394
      %4396 = vrot.lane.b32.xlu0 %v4169, 127
      %v4397 = vpop.permute.xlu0 %4396
      %v4400 = vpack.i.b16 %v4393, %v4391
      %v4402 = vshrl.u32 %v4391, 16
      %v4403 = vshrl.u32 %v4393, 16
      %v4404 = vpack.i.b16 %v4403, %v4402
      %v4408 = vpack.i.b16 %v4397, %v4395
      %v4410 = vshrl.u32 %v4395, 16
      %v4411 = vshrl.u32 %v4397, 16
      %v4412 = vpack.i.b16 %v4411, %v4410
      %v4414 = vcombine.high %v4400, %v926
      %v4416 = vunpack.c.l.s4 1983009808
      %v4417 = vunpack.c.0.s8 %v4416
      %v4418 = vlaneseq
      %v4419 = vshrl.u32 %v4418, 7
      %v4420 = vsub.s32 %v4417, %v4419
      %v4421 = vrot.slane %v4400, %v4420
      %v4423 = vunpack.c.l.s4 1983009808
      %v4424 = vunpack.c.0.s8 %v4423
      %v4425 = vlaneseq
      %v4426 = vshrl.u32 %v4425, 7
      %v4427 = vsub.s32 %v4424, %v4426
      %v4428 = vrot.slane %v4414, %v4427
      %v4429 = vcombine.high %v4408, %v926
      %v4431 = vunpack.c.l.s4 1983009808
      %v4432 = vunpack.c.0.s8 %v4431
      %v4433 = vlaneseq
      %v4434 = vshrl.u32 %v4433, 7
      %v4435 = vsub.s32 %v4432, %v4434
      %v4436 = vrot.slane %v4408, %v4435
      %v4438 = vunpack.c.l.s4 1983009808
      %v4439 = vunpack.c.0.s8 %v4438
      %v4440 = vlaneseq
      %v4441 = vshrl.u32 %v4440, 7
      %v4442 = vsub.s32 %v4439, %v4441
      %v4443 = vrot.slane %v4429, %v4442
      %v4444 = vcombine.low %v4421, %v4436
      %v4445 = vcombine.high %v4421, %v4436
      %v4447 = vunpack.c.l.s4 1934713408
      %v4448 = vunpack.c.0.s8 %v4447
      %v4449 = vlaneseq
      %v4450 = vshrl.u32 %v4449, 7
      %v4451 = vsub.s32 %v4448, %v4450
      %v4452 = vrot.slane %v4444, %v4451
      %v4454 = vunpack.c.l.s4 1934713408
      %v4455 = vunpack.c.0.s8 %v4454
      %v4456 = vlaneseq
      %v4457 = vshrl.u32 %v4456, 7
      %v4458 = vsub.s32 %v4455, %v4457
      %v4459 = vrot.slane %v4445, %v4458
      %v4460 = vcombine.low %v4428, %v4443
      %v4461 = vcombine.high %v4428, %v4443
      %v4463 = vunpack.c.l.s4 1934713408
      %v4464 = vunpack.c.0.s8 %v4463
      %v4465 = vlaneseq
      %v4466 = vshrl.u32 %v4465, 7
      %v4467 = vsub.s32 %v4464, %v4466
      %v4468 = vrot.slane %v4460, %v4467
      %v4470 = vunpack.c.l.s4 1934713408
      %v4471 = vunpack.c.0.s8 %v4470
      %v4472 = vlaneseq
      %v4473 = vshrl.u32 %v4472, 7
      %v4474 = vsub.s32 %v4471, %v4473
      %v4475 = vrot.slane %v4461, %v4474
      %v4476 = vcombine.high %v4452, 0
      %v4477 = vcombine.high %v4459, 0
      %v4478 = vcombine.high %v4468, 0
      %v4479 = vcombine.high %v4475, 0
      %v4480 = vcombine.high %v4404, %v929
      %v4482 = vunpack.c.l.s4 1983009808
      %v4483 = vunpack.c.0.s8 %v4482
      %v4484 = vlaneseq
      %v4485 = vshrl.u32 %v4484, 7
      %v4486 = vsub.s32 %v4483, %v4485
      %v4487 = vrot.slane %v4404, %v4486
      %v4489 = vunpack.c.l.s4 1983009808
      %v4490 = vunpack.c.0.s8 %v4489
      %v4491 = vlaneseq
      %v4492 = vshrl.u32 %v4491, 7
      %v4493 = vsub.s32 %v4490, %v4492
      %v4494 = vrot.slane %v4480, %v4493
      %v4495 = vcombine.high %v4412, %v929
      %v4497 = vunpack.c.l.s4 1983009808
      %v4498 = vunpack.c.0.s8 %v4497
      %v4499 = vlaneseq
      %v4500 = vshrl.u32 %v4499, 7
      %v4501 = vsub.s32 %v4498, %v4500
      %v4502 = vrot.slane %v4412, %v4501
      %v4504 = vunpack.c.l.s4 1983009808
      %v4505 = vunpack.c.0.s8 %v4504
      %v4506 = vlaneseq
      %v4507 = vshrl.u32 %v4506, 7
      %v4508 = vsub.s32 %v4505, %v4507
      %v4509 = vrot.slane %v4495, %v4508
      %v4510 = vcombine.low %v4487, %v4502
      %v4511 = vcombine.high %v4487, %v4502
      %v4513 = vunpack.c.l.s4 1934713408
      %v4514 = vunpack.c.0.s8 %v4513
      %v4515 = vlaneseq
      %v4516 = vshrl.u32 %v4515, 7
      %v4517 = vsub.s32 %v4514, %v4516
      %v4518 = vrot.slane %v4510, %v4517
      %v4520 = vunpack.c.l.s4 1934713408
      %v4521 = vunpack.c.0.s8 %v4520
      %v4522 = vlaneseq
      %v4523 = vshrl.u32 %v4522, 7
      %v4524 = vsub.s32 %v4521, %v4523
      %v4525 = vrot.slane %v4511, %v4524
      %v4526 = vcombine.low %v4494, %v4509
      %v4527 = vcombine.high %v4494, %v4509
      %v4529 = vunpack.c.l.s4 1934713408
      %v4530 = vunpack.c.0.s8 %v4529
      %v4531 = vlaneseq
      %v4532 = vshrl.u32 %v4531, 7
      %v4533 = vsub.s32 %v4530, %v4532
      %v4534 = vrot.slane %v4526, %v4533
      %v4536 = vunpack.c.l.s4 1934713408
      %v4537 = vunpack.c.0.s8 %v4536
      %v4538 = vlaneseq
      %v4539 = vshrl.u32 %v4538, 7
      %v4540 = vsub.s32 %v4537, %v4539
      %v4541 = vrot.slane %v4527, %v4540
      %v4542 = vcombine.high %v4518, 0
      %v4543 = vcombine.high %v4525, 0
      %v4544 = vcombine.high %v4534, 0
      %v4545 = vcombine.high %v4541, 0
      %4547 = vrot.lane.b32.xlu0 %v4518, 16
      %v4548 = vpop.permute.xlu0 %4547
      %4550 = vrot.lane.b32.xlu0 %v4476, 32
      %v4551 = vpop.permute.xlu0 %4550
      %4553 = vrot.lane.b32.xlu0 %v4542, 48
      %v4554 = vpop.permute.xlu0 %4553
      %4556 = vrot.lane.b32.xlu0 %v4459, 64
      %v4557 = vpop.permute.xlu0 %4556
      %4559 = vrot.lane.b32.xlu0 %v4525, 80
      %v4560 = vpop.permute.xlu0 %4559
      %4562 = vrot.lane.b32.xlu0 %v4477, 96
      %v4563 = vpop.permute.xlu0 %4562
      %4565 = vrot.lane.b32.xlu0 %v4543, 112
      %v4566 = vpop.permute.xlu0 %4565
      %4568 = vrot.lane.b32.xlu0 %v4534, 16
      %v4569 = vpop.permute.xlu0 %4568
      %4571 = vrot.lane.b32.xlu0 %v4478, 32
      %v4572 = vpop.permute.xlu0 %4571
      %4574 = vrot.lane.b32.xlu0 %v4544, 48
      %v4575 = vpop.permute.xlu0 %4574
      %4577 = vrot.lane.b32.xlu0 %v4475, 64
      %v4578 = vpop.permute.xlu0 %4577
      %4580 = vrot.lane.b32.xlu0 %v4541, 80
      %v4581 = vpop.permute.xlu0 %4580
      %4583 = vrot.lane.b32.xlu0 %v4479, 96
      %v4584 = vpop.permute.xlu0 %4583
      %4586 = vrot.lane.b32.xlu0 %v4545, 112
      %v4587 = vpop.permute.xlu0 %4586
      %v4590 = vsel %vm1105, %v4452, %v4548
      %v4592 = vsel %vm1109, %v4590, %v4551
      %v4594 = vsel %vm1112, %v4592, %v4554
      %v4596 = vsel %vm1115, %v4594, %v4557
      %v4598 = vsel %vm1118, %v4596, %v4560
      %v4600 = vsel %vm1121, %v4598, %v4563
      %v4602 = vsel %vm1124, %v4600, %v4566
      %v4605 = vsel %vm1105, %v4468, %v4569
      %v4607 = vsel %vm1109, %v4605, %v4572
      %v4609 = vsel %vm1112, %v4607, %v4575
      %v4611 = vsel %vm1115, %v4609, %v4578
      %v4613 = vsel %vm1118, %v4611, %v4581
      %v4615 = vsel %vm1121, %v4613, %v4584
      %v4617 = vsel %vm1124, %v4615, %v4587
      %4618 = vrot.lane.b32.xlu0 %v4142, 126
      %v4619 = vpop.permute.xlu0 %4618
      %4620 = vrot.lane.b32.xlu0 %v4151, 126
      %v4621 = vpop.permute.xlu0 %4620
      %4622 = vrot.lane.b32.xlu0 %v4160, 126
      %v4623 = vpop.permute.xlu0 %4622
      %4624 = vrot.lane.b32.xlu0 %v4169, 126
      %v4625 = vpop.permute.xlu0 %4624
      %v4628 = vpack.i.b16 %v4621, %v4619
      %v4630 = vshrl.u32 %v4619, 16
      %v4631 = vshrl.u32 %v4621, 16
      %v4632 = vpack.i.b16 %v4631, %v4630
      %v4636 = vpack.i.b16 %v4625, %v4623
      %v4638 = vshrl.u32 %v4623, 16
      %v4639 = vshrl.u32 %v4625, 16
      %v4640 = vpack.i.b16 %v4639, %v4638
      %v4642 = vcombine.high %v4628, %v926
      %v4644 = vunpack.c.l.s4 1983009808
      %v4645 = vunpack.c.0.s8 %v4644
      %v4646 = vlaneseq
      %v4647 = vshrl.u32 %v4646, 7
      %v4648 = vsub.s32 %v4645, %v4647
      %v4649 = vrot.slane %v4628, %v4648
      %v4651 = vunpack.c.l.s4 1983009808
      %v4652 = vunpack.c.0.s8 %v4651
      %v4653 = vlaneseq
      %v4654 = vshrl.u32 %v4653, 7
      %v4655 = vsub.s32 %v4652, %v4654
      %v4656 = vrot.slane %v4642, %v4655
      %v4657 = vcombine.high %v4636, %v926
      %v4659 = vunpack.c.l.s4 1983009808
      %v4660 = vunpack.c.0.s8 %v4659
      %v4661 = vlaneseq
      %v4662 = vshrl.u32 %v4661, 7
      %v4663 = vsub.s32 %v4660, %v4662
      %v4664 = vrot.slane %v4636, %v4663
      %v4666 = vunpack.c.l.s4 1983009808
      %v4667 = vunpack.c.0.s8 %v4666
      %v4668 = vlaneseq
      %v4669 = vshrl.u32 %v4668, 7
      %v4670 = vsub.s32 %v4667, %v4669
      %v4671 = vrot.slane %v4657, %v4670
      %v4672 = vcombine.low %v4649, %v4664
      %v4673 = vcombine.high %v4649, %v4664
      %v4675 = vunpack.c.l.s4 1934713408
      %v4676 = vunpack.c.0.s8 %v4675
      %v4677 = vlaneseq
      %v4678 = vshrl.u32 %v4677, 7
      %v4679 = vsub.s32 %v4676, %v4678
      %v4680 = vrot.slane %v4672, %v4679
      %v4682 = vunpack.c.l.s4 1934713408
      %v4683 = vunpack.c.0.s8 %v4682
      %v4684 = vlaneseq
      %v4685 = vshrl.u32 %v4684, 7
      %v4686 = vsub.s32 %v4683, %v4685
      %v4687 = vrot.slane %v4673, %v4686
      %v4688 = vcombine.low %v4656, %v4671
      %v4689 = vcombine.high %v4656, %v4671
      %v4691 = vunpack.c.l.s4 1934713408
      %v4692 = vunpack.c.0.s8 %v4691
      %v4693 = vlaneseq
      %v4694 = vshrl.u32 %v4693, 7
      %v4695 = vsub.s32 %v4692, %v4694
      %v4696 = vrot.slane %v4688, %v4695
      %v4698 = vunpack.c.l.s4 1934713408
      %v4699 = vunpack.c.0.s8 %v4698
      %v4700 = vlaneseq
      %v4701 = vshrl.u32 %v4700, 7
      %v4702 = vsub.s32 %v4699, %v4701
      %v4703 = vrot.slane %v4689, %v4702
      %v4704 = vcombine.high %v4680, 0
      %v4705 = vcombine.high %v4687, 0
      %v4706 = vcombine.high %v4696, 0
      %v4707 = vcombine.high %v4703, 0
      %v4708 = vcombine.high %v4632, %v929
      %v4710 = vunpack.c.l.s4 1983009808
      %v4711 = vunpack.c.0.s8 %v4710
      %v4712 = vlaneseq
      %v4713 = vshrl.u32 %v4712, 7
      %v4714 = vsub.s32 %v4711, %v4713
      %v4715 = vrot.slane %v4632, %v4714
      %v4717 = vunpack.c.l.s4 1983009808
      %v4718 = vunpack.c.0.s8 %v4717
      %v4719 = vlaneseq
      %v4720 = vshrl.u32 %v4719, 7
      %v4721 = vsub.s32 %v4718, %v4720
      %v4722 = vrot.slane %v4708, %v4721
      %v4723 = vcombine.high %v4640, %v929
      %v4725 = vunpack.c.l.s4 1983009808
      %v4726 = vunpack.c.0.s8 %v4725
      %v4727 = vlaneseq
      %v4728 = vshrl.u32 %v4727, 7
      %v4729 = vsub.s32 %v4726, %v4728
      %v4730 = vrot.slane %v4640, %v4729
      %v4732 = vunpack.c.l.s4 1983009808
      %v4733 = vunpack.c.0.s8 %v4732
      %v4734 = vlaneseq
      %v4735 = vshrl.u32 %v4734, 7
      %v4736 = vsub.s32 %v4733, %v4735
      %v4737 = vrot.slane %v4723, %v4736
      %v4738 = vcombine.low %v4715, %v4730
      %v4739 = vcombine.high %v4715, %v4730
      %v4741 = vunpack.c.l.s4 1934713408
      %v4742 = vunpack.c.0.s8 %v4741
      %v4743 = vlaneseq
      %v4744 = vshrl.u32 %v4743, 7
      %v4745 = vsub.s32 %v4742, %v4744
      %v4746 = vrot.slane %v4738, %v4745
      %v4748 = vunpack.c.l.s4 1934713408
      %v4749 = vunpack.c.0.s8 %v4748
      %v4750 = vlaneseq
      %v4751 = vshrl.u32 %v4750, 7
      %v4752 = vsub.s32 %v4749, %v4751
      %v4753 = vrot.slane %v4739, %v4752
      %v4754 = vcombine.low %v4722, %v4737
      %v4755 = vcombine.high %v4722, %v4737
      %v4757 = vunpack.c.l.s4 1934713408
      %v4758 = vunpack.c.0.s8 %v4757
      %v4759 = vlaneseq
      %v4760 = vshrl.u32 %v4759, 7
      %v4761 = vsub.s32 %v4758, %v4760
      %v4762 = vrot.slane %v4754, %v4761
      %v4764 = vunpack.c.l.s4 1934713408
      %v4765 = vunpack.c.0.s8 %v4764
      %v4766 = vlaneseq
      %v4767 = vshrl.u32 %v4766, 7
      %v4768 = vsub.s32 %v4765, %v4767
      %v4769 = vrot.slane %v4755, %v4768
      %v4770 = vcombine.high %v4746, 0
      %v4771 = vcombine.high %v4753, 0
      %v4772 = vcombine.high %v4762, 0
      %v4773 = vcombine.high %v4769, 0
      %4775 = vrot.lane.b32.xlu0 %v4746, 16
      %v4776 = vpop.permute.xlu0 %4775
      %4778 = vrot.lane.b32.xlu0 %v4704, 32
      %v4779 = vpop.permute.xlu0 %4778
      %4781 = vrot.lane.b32.xlu0 %v4770, 48
      %v4782 = vpop.permute.xlu0 %4781
      %4784 = vrot.lane.b32.xlu0 %v4687, 64
      %v4785 = vpop.permute.xlu0 %4784
      %4787 = vrot.lane.b32.xlu0 %v4753, 80
      %v4788 = vpop.permute.xlu0 %4787
      %4790 = vrot.lane.b32.xlu0 %v4705, 96
      %v4791 = vpop.permute.xlu0 %4790
      %4793 = vrot.lane.b32.xlu0 %v4771, 112
      %v4794 = vpop.permute.xlu0 %4793
      %4796 = vrot.lane.b32.xlu0 %v4762, 16
      %v4797 = vpop.permute.xlu0 %4796
      %4799 = vrot.lane.b32.xlu0 %v4706, 32
      %v4800 = vpop.permute.xlu0 %4799
      %4802 = vrot.lane.b32.xlu0 %v4772, 48
      %v4803 = vpop.permute.xlu0 %4802
      %4805 = vrot.lane.b32.xlu0 %v4703, 64
      %v4806 = vpop.permute.xlu0 %4805
      %4808 = vrot.lane.b32.xlu0 %v4769, 80
      %v4809 = vpop.permute.xlu0 %4808
      %4811 = vrot.lane.b32.xlu0 %v4707, 96
      %v4812 = vpop.permute.xlu0 %4811
      %4814 = vrot.lane.b32.xlu0 %v4773, 112
      %v4815 = vpop.permute.xlu0 %4814
      %v4818 = vsel %vm1105, %v4680, %v4776
      %v4820 = vsel %vm1109, %v4818, %v4779
      %v4822 = vsel %vm1112, %v4820, %v4782
      %v4824 = vsel %vm1115, %v4822, %v4785
      %v4826 = vsel %vm1118, %v4824, %v4788
      %v4828 = vsel %vm1121, %v4826, %v4791
      %v4830 = vsel %vm1124, %v4828, %v4794
      %v4833 = vsel %vm1105, %v4696, %v4797
      %v4835 = vsel %vm1109, %v4833, %v4800
      %v4837 = vsel %vm1112, %v4835, %v4803
      %v4839 = vsel %vm1115, %v4837, %v4806
      %v4841 = vsel %vm1118, %v4839, %v4809
      %v4843 = vsel %vm1121, %v4841, %v4812
      %v4845 = vsel %vm1124, %v4843, %v4815
      %v4850 = vrot.slane %v3450, 1
      %v4851 = vrot.slane %v3451, 1
      %v4852 = vsel %vm2319, %v4850, %v4851
      %v4853 = vrot.slane %v3452, 1
      %v4854 = vrot.slane %v3453, 1
      %v4855 = vsel %vm2319, %v4853, %v4854
      %v4856 = vrot.slane %v3454, 1
      %v4857 = vrot.slane %v3455, 1
      %v4858 = vsel %vm2319, %v4856, %v4857
      %v4859 = vrot.slane %v3456, 1
      %v4860 = vrot.slane %v3457, 1
      %v4861 = vsel %vm2319, %v4859, %v4860
      %v4864 = vpack.i.b16 %v4855, %v4852
      %v4866 = vshrl.u32 %v4852, 16
      %v4867 = vshrl.u32 %v4855, 16
      %v4868 = vpack.i.b16 %v4867, %v4866
      %v4872 = vpack.i.b16 %v4861, %v4858
      %v4874 = vshrl.u32 %v4858, 16
      %v4875 = vshrl.u32 %v4861, 16
      %v4876 = vpack.i.b16 %v4875, %v4874
      %v4878 = vcombine.high %v4864, %v926
      %v4880 = vunpack.c.l.s4 1983009808
      %v4881 = vunpack.c.0.s8 %v4880
      %v4882 = vlaneseq
      %v4883 = vshrl.u32 %v4882, 7
      %v4884 = vsub.s32 %v4881, %v4883
      %v4885 = vrot.slane %v4864, %v4884
      %v4887 = vunpack.c.l.s4 1983009808
      %v4888 = vunpack.c.0.s8 %v4887
      %v4889 = vlaneseq
      %v4890 = vshrl.u32 %v4889, 7
      %v4891 = vsub.s32 %v4888, %v4890
      %v4892 = vrot.slane %v4878, %v4891
      %v4893 = vcombine.high %v4872, %v926
      %v4895 = vunpack.c.l.s4 1983009808
      %v4896 = vunpack.c.0.s8 %v4895
      %v4897 = vlaneseq
      %v4898 = vshrl.u32 %v4897, 7
      %v4899 = vsub.s32 %v4896, %v4898
      %v4900 = vrot.slane %v4872, %v4899
      %v4902 = vunpack.c.l.s4 1983009808
      %v4903 = vunpack.c.0.s8 %v4902
      %v4904 = vlaneseq
      %v4905 = vshrl.u32 %v4904, 7
      %v4906 = vsub.s32 %v4903, %v4905
      %v4907 = vrot.slane %v4893, %v4906
      %v4908 = vcombine.low %v4885, %v4900
      %v4909 = vcombine.high %v4885, %v4900
      %v4911 = vunpack.c.l.s4 1934713408
      %v4912 = vunpack.c.0.s8 %v4911
      %v4913 = vlaneseq
      %v4914 = vshrl.u32 %v4913, 7
      %v4915 = vsub.s32 %v4912, %v4914
      %v4916 = vrot.slane %v4908, %v4915
      %v4918 = vunpack.c.l.s4 1934713408
      %v4919 = vunpack.c.0.s8 %v4918
      %v4920 = vlaneseq
      %v4921 = vshrl.u32 %v4920, 7
      %v4922 = vsub.s32 %v4919, %v4921
      %v4923 = vrot.slane %v4909, %v4922
      %v4924 = vcombine.low %v4892, %v4907
      %v4925 = vcombine.high %v4892, %v4907
      %v4927 = vunpack.c.l.s4 1934713408
      %v4928 = vunpack.c.0.s8 %v4927
      %v4929 = vlaneseq
      %v4930 = vshrl.u32 %v4929, 7
      %v4931 = vsub.s32 %v4928, %v4930
      %v4932 = vrot.slane %v4924, %v4931
      %v4934 = vunpack.c.l.s4 1934713408
      %v4935 = vunpack.c.0.s8 %v4934
      %v4936 = vlaneseq
      %v4937 = vshrl.u32 %v4936, 7
      %v4938 = vsub.s32 %v4935, %v4937
      %v4939 = vrot.slane %v4925, %v4938
      %v4940 = vcombine.high %v4916, 0
      %v4941 = vcombine.high %v4923, 0
      %v4942 = vcombine.high %v4932, 0
      %v4943 = vcombine.high %v4939, 0
      %v4944 = vcombine.high %v4868, %v929
      %v4946 = vunpack.c.l.s4 1983009808
      %v4947 = vunpack.c.0.s8 %v4946
      %v4948 = vlaneseq
      %v4949 = vshrl.u32 %v4948, 7
      %v4950 = vsub.s32 %v4947, %v4949
      %v4951 = vrot.slane %v4868, %v4950
      %v4953 = vunpack.c.l.s4 1983009808
      %v4954 = vunpack.c.0.s8 %v4953
      %v4955 = vlaneseq
      %v4956 = vshrl.u32 %v4955, 7
      %v4957 = vsub.s32 %v4954, %v4956
      %v4958 = vrot.slane %v4944, %v4957
      %v4959 = vcombine.high %v4876, %v929
      %v4961 = vunpack.c.l.s4 1983009808
      %v4962 = vunpack.c.0.s8 %v4961
      %v4963 = vlaneseq
      %v4964 = vshrl.u32 %v4963, 7
      %v4965 = vsub.s32 %v4962, %v4964
      %v4966 = vrot.slane %v4876, %v4965
      %v4968 = vunpack.c.l.s4 1983009808
      %v4969 = vunpack.c.0.s8 %v4968
      %v4970 = vlaneseq
      %v4971 = vshrl.u32 %v4970, 7
      %v4972 = vsub.s32 %v4969, %v4971
      %v4973 = vrot.slane %v4959, %v4972
      %v4974 = vcombine.low %v4951, %v4966
      %v4975 = vcombine.high %v4951, %v4966
      %v4977 = vunpack.c.l.s4 1934713408
      %v4978 = vunpack.c.0.s8 %v4977
      %v4979 = vlaneseq
      %v4980 = vshrl.u32 %v4979, 7
      %v4981 = vsub.s32 %v4978, %v4980
      %v4982 = vrot.slane %v4974, %v4981
      %v4984 = vunpack.c.l.s4 1934713408
      %v4985 = vunpack.c.0.s8 %v4984
      %v4986 = vlaneseq
      %v4987 = vshrl.u32 %v4986, 7
      %v4988 = vsub.s32 %v4985, %v4987
      %v4989 = vrot.slane %v4975, %v4988
      %v4990 = vcombine.low %v4958, %v4973
      %v4991 = vcombine.high %v4958, %v4973
      %v4993 = vunpack.c.l.s4 1934713408
      %v4994 = vunpack.c.0.s8 %v4993
      %v4995 = vlaneseq
      %v4996 = vshrl.u32 %v4995, 7
      %v4997 = vsub.s32 %v4994, %v4996
      %v4998 = vrot.slane %v4990, %v4997
      %v5000 = vunpack.c.l.s4 1934713408
      %v5001 = vunpack.c.0.s8 %v5000
      %v5002 = vlaneseq
      %v5003 = vshrl.u32 %v5002, 7
      %v5004 = vsub.s32 %v5001, %v5003
      %v5005 = vrot.slane %v4991, %v5004
      %v5006 = vcombine.high %v4982, 0
      %v5007 = vcombine.high %v4989, 0
      %v5008 = vcombine.high %v4998, 0
      %v5009 = vcombine.high %v5005, 0
      %5011 = vrot.lane.b32.xlu0 %v4982, 16
      %v5012 = vpop.permute.xlu0 %5011
      %5014 = vrot.lane.b32.xlu0 %v4940, 32
      %v5015 = vpop.permute.xlu0 %5014
      %5017 = vrot.lane.b32.xlu0 %v5006, 48
      %v5018 = vpop.permute.xlu0 %5017
      %5020 = vrot.lane.b32.xlu0 %v4923, 64
      %v5021 = vpop.permute.xlu0 %5020
      %5023 = vrot.lane.b32.xlu0 %v4989, 80
      %v5024 = vpop.permute.xlu0 %5023
      %5026 = vrot.lane.b32.xlu0 %v4941, 96
      %v5027 = vpop.permute.xlu0 %5026
      %5029 = vrot.lane.b32.xlu0 %v5007, 112
      %v5030 = vpop.permute.xlu0 %5029
      %5032 = vrot.lane.b32.xlu0 %v4998, 16
      %v5033 = vpop.permute.xlu0 %5032
      %5035 = vrot.lane.b32.xlu0 %v4942, 32
      %v5036 = vpop.permute.xlu0 %5035
      %5038 = vrot.lane.b32.xlu0 %v5008, 48
      %v5039 = vpop.permute.xlu0 %5038
      %5041 = vrot.lane.b32.xlu0 %v4939, 64
      %v5042 = vpop.permute.xlu0 %5041
      %5044 = vrot.lane.b32.xlu0 %v5005, 80
      %v5045 = vpop.permute.xlu0 %5044
      %5047 = vrot.lane.b32.xlu0 %v4943, 96
      %v5048 = vpop.permute.xlu0 %5047
      %5050 = vrot.lane.b32.xlu0 %v5009, 112
      %v5051 = vpop.permute.xlu0 %5050
      %v5054 = vsel %vm1105, %v4916, %v5012
      %v5056 = vsel %vm1109, %v5054, %v5015
      %v5058 = vsel %vm1112, %v5056, %v5018
      %v5060 = vsel %vm1115, %v5058, %v5021
      %v5062 = vsel %vm1118, %v5060, %v5024
      %v5064 = vsel %vm1121, %v5062, %v5027
      %v5066 = vsel %vm1124, %v5064, %v5030
      %v5069 = vsel %vm1105, %v4932, %v5033
      %v5071 = vsel %vm1109, %v5069, %v5036
      %v5073 = vsel %vm1112, %v5071, %v5039
      %v5075 = vsel %vm1115, %v5073, %v5042
      %v5077 = vsel %vm1118, %v5075, %v5045
      %v5079 = vsel %vm1121, %v5077, %v5048
      %v5081 = vsel %vm1124, %v5079, %v5051
      %5082 = vrot.lane.b32.xlu0 %v4852, 127
      %v5083 = vpop.permute.xlu0 %5082
      %5084 = vrot.lane.b32.xlu0 %v4855, 127
      %v5085 = vpop.permute.xlu0 %5084
      %5086 = vrot.lane.b32.xlu0 %v4858, 127
      %v5087 = vpop.permute.xlu0 %5086
      %5088 = vrot.lane.b32.xlu0 %v4861, 127
      %v5089 = vpop.permute.xlu0 %5088
      %v5092 = vpack.i.b16 %v5085, %v5083
      %v5094 = vshrl.u32 %v5083, 16
      %v5095 = vshrl.u32 %v5085, 16
      %v5096 = vpack.i.b16 %v5095, %v5094
      %v5100 = vpack.i.b16 %v5089, %v5087
      %v5102 = vshrl.u32 %v5087, 16
      %v5103 = vshrl.u32 %v5089, 16
      %v5104 = vpack.i.b16 %v5103, %v5102
      %v5106 = vcombine.high %v5092, %v926
      %v5108 = vunpack.c.l.s4 1983009808
      %v5109 = vunpack.c.0.s8 %v5108
      %v5110 = vlaneseq
      %v5111 = vshrl.u32 %v5110, 7
      %v5112 = vsub.s32 %v5109, %v5111
      %v5113 = vrot.slane %v5092, %v5112
      %v5115 = vunpack.c.l.s4 1983009808
      %v5116 = vunpack.c.0.s8 %v5115
      %v5117 = vlaneseq
      %v5118 = vshrl.u32 %v5117, 7
      %v5119 = vsub.s32 %v5116, %v5118
      %v5120 = vrot.slane %v5106, %v5119
      %v5121 = vcombine.high %v5100, %v926
      %v5123 = vunpack.c.l.s4 1983009808
      %v5124 = vunpack.c.0.s8 %v5123
      %v5125 = vlaneseq
      %v5126 = vshrl.u32 %v5125, 7
      %v5127 = vsub.s32 %v5124, %v5126
      %v5128 = vrot.slane %v5100, %v5127
      %v5130 = vunpack.c.l.s4 1983009808
      %v5131 = vunpack.c.0.s8 %v5130
      %v5132 = vlaneseq
      %v5133 = vshrl.u32 %v5132, 7
      %v5134 = vsub.s32 %v5131, %v5133
      %v5135 = vrot.slane %v5121, %v5134
      %v5136 = vcombine.low %v5113, %v5128
      %v5137 = vcombine.high %v5113, %v5128
      %v5139 = vunpack.c.l.s4 1934713408
      %v5140 = vunpack.c.0.s8 %v5139
      %v5141 = vlaneseq
      %v5142 = vshrl.u32 %v5141, 7
      %v5143 = vsub.s32 %v5140, %v5142
      %v5144 = vrot.slane %v5136, %v5143
      %v5146 = vunpack.c.l.s4 1934713408
      %v5147 = vunpack.c.0.s8 %v5146
      %v5148 = vlaneseq
      %v5149 = vshrl.u32 %v5148, 7
      %v5150 = vsub.s32 %v5147, %v5149
      %v5151 = vrot.slane %v5137, %v5150
      %v5152 = vcombine.low %v5120, %v5135
      %v5153 = vcombine.high %v5120, %v5135
      %v5155 = vunpack.c.l.s4 1934713408
      %v5156 = vunpack.c.0.s8 %v5155
      %v5157 = vlaneseq
      %v5158 = vshrl.u32 %v5157, 7
      %v5159 = vsub.s32 %v5156, %v5158
      %v5160 = vrot.slane %v5152, %v5159
      %v5162 = vunpack.c.l.s4 1934713408
      %v5163 = vunpack.c.0.s8 %v5162
      %v5164 = vlaneseq
      %v5165 = vshrl.u32 %v5164, 7
      %v5166 = vsub.s32 %v5163, %v5165
      %v5167 = vrot.slane %v5153, %v5166
      %v5168 = vcombine.high %v5144, 0
      %v5169 = vcombine.high %v5151, 0
      %v5170 = vcombine.high %v5160, 0
      %v5171 = vcombine.high %v5167, 0
      %v5172 = vcombine.high %v5096, %v929
      %v5174 = vunpack.c.l.s4 1983009808
      %v5175 = vunpack.c.0.s8 %v5174
      %v5176 = vlaneseq
      %v5177 = vshrl.u32 %v5176, 7
      %v5178 = vsub.s32 %v5175, %v5177
      %v5179 = vrot.slane %v5096, %v5178
      %v5181 = vunpack.c.l.s4 1983009808
      %v5182 = vunpack.c.0.s8 %v5181
      %v5183 = vlaneseq
      %v5184 = vshrl.u32 %v5183, 7
      %v5185 = vsub.s32 %v5182, %v5184
      %v5186 = vrot.slane %v5172, %v5185
      %v5187 = vcombine.high %v5104, %v929
      %v5189 = vunpack.c.l.s4 1983009808
      %v5190 = vunpack.c.0.s8 %v5189
      %v5191 = vlaneseq
      %v5192 = vshrl.u32 %v5191, 7
      %v5193 = vsub.s32 %v5190, %v5192
      %v5194 = vrot.slane %v5104, %v5193
      %v5196 = vunpack.c.l.s4 1983009808
      %v5197 = vunpack.c.0.s8 %v5196
      %v5198 = vlaneseq
      %v5199 = vshrl.u32 %v5198, 7
      %v5200 = vsub.s32 %v5197, %v5199
      %v5201 = vrot.slane %v5187, %v5200
      %v5202 = vcombine.low %v5179, %v5194
      %v5203 = vcombine.high %v5179, %v5194
      %v5205 = vunpack.c.l.s4 1934713408
      %v5206 = vunpack.c.0.s8 %v5205
      %v5207 = vlaneseq
      %v5208 = vshrl.u32 %v5207, 7
      %v5209 = vsub.s32 %v5206, %v5208
      %v5210 = vrot.slane %v5202, %v5209
      %v5212 = vunpack.c.l.s4 1934713408
      %v5213 = vunpack.c.0.s8 %v5212
      %v5214 = vlaneseq
      %v5215 = vshrl.u32 %v5214, 7
      %v5216 = vsub.s32 %v5213, %v5215
      %v5217 = vrot.slane %v5203, %v5216
      %v5218 = vcombine.low %v5186, %v5201
      %v5219 = vcombine.high %v5186, %v5201
      %v5221 = vunpack.c.l.s4 1934713408
      %v5222 = vunpack.c.0.s8 %v5221
      %v5223 = vlaneseq
      %v5224 = vshrl.u32 %v5223, 7
      %v5225 = vsub.s32 %v5222, %v5224
      %v5226 = vrot.slane %v5218, %v5225
      %v5228 = vunpack.c.l.s4 1934713408
      %v5229 = vunpack.c.0.s8 %v5228
      %v5230 = vlaneseq
      %v5231 = vshrl.u32 %v5230, 7
      %v5232 = vsub.s32 %v5229, %v5231
      %v5233 = vrot.slane %v5219, %v5232
      %v5234 = vcombine.high %v5210, 0
      %v5235 = vcombine.high %v5217, 0
      %v5236 = vcombine.high %v5226, 0
      %v5237 = vcombine.high %v5233, 0
      %5239 = vrot.lane.b32.xlu0 %v5210, 16
      %v5240 = vpop.permute.xlu0 %5239
      %5242 = vrot.lane.b32.xlu0 %v5168, 32
      %v5243 = vpop.permute.xlu0 %5242
      %5245 = vrot.lane.b32.xlu0 %v5234, 48
      %v5246 = vpop.permute.xlu0 %5245
      %5248 = vrot.lane.b32.xlu0 %v5151, 64
      %v5249 = vpop.permute.xlu0 %5248
      %5251 = vrot.lane.b32.xlu0 %v5217, 80
      %v5252 = vpop.permute.xlu0 %5251
      %5254 = vrot.lane.b32.xlu0 %v5169, 96
      %v5255 = vpop.permute.xlu0 %5254
      %5257 = vrot.lane.b32.xlu0 %v5235, 112
      %v5258 = vpop.permute.xlu0 %5257
      %5260 = vrot.lane.b32.xlu0 %v5226, 16
      %v5261 = vpop.permute.xlu0 %5260
      %5263 = vrot.lane.b32.xlu0 %v5170, 32
      %v5264 = vpop.permute.xlu0 %5263
      %5266 = vrot.lane.b32.xlu0 %v5236, 48
      %v5267 = vpop.permute.xlu0 %5266
      %5269 = vrot.lane.b32.xlu0 %v5167, 64
      %v5270 = vpop.permute.xlu0 %5269
      %5272 = vrot.lane.b32.xlu0 %v5233, 80
      %v5273 = vpop.permute.xlu0 %5272
      %5275 = vrot.lane.b32.xlu0 %v5171, 96
      %v5276 = vpop.permute.xlu0 %5275
      %5278 = vrot.lane.b32.xlu0 %v5237, 112
      %v5279 = vpop.permute.xlu0 %5278
      %v5282 = vsel %vm1105, %v5144, %v5240
      %v5284 = vsel %vm1109, %v5282, %v5243
      %v5286 = vsel %vm1112, %v5284, %v5246
      %v5288 = vsel %vm1115, %v5286, %v5249
      %v5290 = vsel %vm1118, %v5288, %v5252
      %v5292 = vsel %vm1121, %v5290, %v5255
      %v5294 = vsel %vm1124, %v5292, %v5258
      %v5297 = vsel %vm1105, %v5160, %v5261
      %v5299 = vsel %vm1109, %v5297, %v5264
      %v5301 = vsel %vm1112, %v5299, %v5267
      %v5303 = vsel %vm1115, %v5301, %v5270
      %v5305 = vsel %vm1118, %v5303, %v5273
      %v5307 = vsel %vm1121, %v5305, %v5276
      %v5309 = vsel %vm1124, %v5307, %v5279
      %5310 = vrot.lane.b32.xlu0 %v4852, 126
      %v5311 = vpop.permute.xlu0 %5310
      %5312 = vrot.lane.b32.xlu0 %v4855, 126
      %v5313 = vpop.permute.xlu0 %5312
      %5314 = vrot.lane.b32.xlu0 %v4858, 126
      %v5315 = vpop.permute.xlu0 %5314
      %5316 = vrot.lane.b32.xlu0 %v4861, 126
      %v5317 = vpop.permute.xlu0 %5316
      %v5320 = vpack.i.b16 %v5313, %v5311
      %v5322 = vshrl.u32 %v5311, 16
      %v5323 = vshrl.u32 %v5313, 16
      %v5324 = vpack.i.b16 %v5323, %v5322
      %v5328 = vpack.i.b16 %v5317, %v5315
      %v5330 = vshrl.u32 %v5315, 16
      %v5331 = vshrl.u32 %v5317, 16
      %v5332 = vpack.i.b16 %v5331, %v5330
      %v5334 = vcombine.high %v5320, %v926
      %v5336 = vunpack.c.l.s4 1983009808
      %v5337 = vunpack.c.0.s8 %v5336
      %v5338 = vlaneseq
      %v5339 = vshrl.u32 %v5338, 7
      %v5340 = vsub.s32 %v5337, %v5339
      %v5341 = vrot.slane %v5320, %v5340
      %v5343 = vunpack.c.l.s4 1983009808
      %v5344 = vunpack.c.0.s8 %v5343
      %v5345 = vlaneseq
      %v5346 = vshrl.u32 %v5345, 7
      %v5347 = vsub.s32 %v5344, %v5346
      %v5348 = vrot.slane %v5334, %v5347
      %v5349 = vcombine.high %v5328, %v926
      %v5351 = vunpack.c.l.s4 1983009808
      %v5352 = vunpack.c.0.s8 %v5351
      %v5353 = vlaneseq
      %v5354 = vshrl.u32 %v5353, 7
      %v5355 = vsub.s32 %v5352, %v5354
      %v5356 = vrot.slane %v5328, %v5355
      %v5358 = vunpack.c.l.s4 1983009808
      %v5359 = vunpack.c.0.s8 %v5358
      %v5360 = vlaneseq
      %v5361 = vshrl.u32 %v5360, 7
      %v5362 = vsub.s32 %v5359, %v5361
      %v5363 = vrot.slane %v5349, %v5362
      %v5364 = vcombine.low %v5341, %v5356
      %v5365 = vcombine.high %v5341, %v5356
      %v5367 = vunpack.c.l.s4 1934713408
      %v5368 = vunpack.c.0.s8 %v5367
      %v5369 = vlaneseq
      %v5370 = vshrl.u32 %v5369, 7
      %v5371 = vsub.s32 %v5368, %v5370
      %v5372 = vrot.slane %v5364, %v5371
      %v5374 = vunpack.c.l.s4 1934713408
      %v5375 = vunpack.c.0.s8 %v5374
      %v5376 = vlaneseq
      %v5377 = vshrl.u32 %v5376, 7
      %v5378 = vsub.s32 %v5375, %v5377
      %v5379 = vrot.slane %v5365, %v5378
      %v5380 = vcombine.low %v5348, %v5363
      %v5381 = vcombine.high %v5348, %v5363
      %v5383 = vunpack.c.l.s4 1934713408
      %v5384 = vunpack.c.0.s8 %v5383
      %v5385 = vlaneseq
      %v5386 = vshrl.u32 %v5385, 7
      %v5387 = vsub.s32 %v5384, %v5386
      %v5388 = vrot.slane %v5380, %v5387
      %v5390 = vunpack.c.l.s4 1934713408
      %v5391 = vunpack.c.0.s8 %v5390
      %v5392 = vlaneseq
      %v5393 = vshrl.u32 %v5392, 7
      %v5394 = vsub.s32 %v5391, %v5393
      %v5395 = vrot.slane %v5381, %v5394
      %v5396 = vcombine.high %v5372, 0
      %v5397 = vcombine.high %v5379, 0
      %v5398 = vcombine.high %v5388, 0
      %v5399 = vcombine.high %v5395, 0
      %v5400 = vcombine.high %v5324, %v929
      %v5402 = vunpack.c.l.s4 1983009808
      %v5403 = vunpack.c.0.s8 %v5402
      %v5404 = vlaneseq
      %v5405 = vshrl.u32 %v5404, 7
      %v5406 = vsub.s32 %v5403, %v5405
      %v5407 = vrot.slane %v5324, %v5406
      %v5409 = vunpack.c.l.s4 1983009808
      %v5410 = vunpack.c.0.s8 %v5409
      %v5411 = vlaneseq
      %v5412 = vshrl.u32 %v5411, 7
      %v5413 = vsub.s32 %v5410, %v5412
      %v5414 = vrot.slane %v5400, %v5413
      %v5415 = vcombine.high %v5332, %v929
      %v5417 = vunpack.c.l.s4 1983009808
      %v5418 = vunpack.c.0.s8 %v5417
      %v5419 = vlaneseq
      %v5420 = vshrl.u32 %v5419, 7
      %v5421 = vsub.s32 %v5418, %v5420
      %v5422 = vrot.slane %v5332, %v5421
      %v5424 = vunpack.c.l.s4 1983009808
      %v5425 = vunpack.c.0.s8 %v5424
      %v5426 = vlaneseq
      %v5427 = vshrl.u32 %v5426, 7
      %v5428 = vsub.s32 %v5425, %v5427
      %v5429 = vrot.slane %v5415, %v5428
      %v5430 = vcombine.low %v5407, %v5422
      %v5431 = vcombine.high %v5407, %v5422
      %v5433 = vunpack.c.l.s4 1934713408
      %v5434 = vunpack.c.0.s8 %v5433
      %v5435 = vlaneseq
      %v5436 = vshrl.u32 %v5435, 7
      %v5437 = vsub.s32 %v5434, %v5436
      %v5438 = vrot.slane %v5430, %v5437
      %v5440 = vunpack.c.l.s4 1934713408
      %v5441 = vunpack.c.0.s8 %v5440
      %v5442 = vlaneseq
      %v5443 = vshrl.u32 %v5442, 7
      %v5444 = vsub.s32 %v5441, %v5443
      %v5445 = vrot.slane %v5431, %v5444
      %v5446 = vcombine.low %v5414, %v5429
      %v5447 = vcombine.high %v5414, %v5429
      %v5449 = vunpack.c.l.s4 1934713408
      %v5450 = vunpack.c.0.s8 %v5449
      %v5451 = vlaneseq
      %v5452 = vshrl.u32 %v5451, 7
      %v5453 = vsub.s32 %v5450, %v5452
      %v5454 = vrot.slane %v5446, %v5453
      %v5456 = vunpack.c.l.s4 1934713408
      %v5457 = vunpack.c.0.s8 %v5456
      %v5458 = vlaneseq
      %v5459 = vshrl.u32 %v5458, 7
      %v5460 = vsub.s32 %v5457, %v5459
      %v5461 = vrot.slane %v5447, %v5460
      %v5462 = vcombine.high %v5438, 0
      %v5463 = vcombine.high %v5445, 0
      %v5464 = vcombine.high %v5454, 0
      %v5465 = vcombine.high %v5461, 0
      %5467 = vrot.lane.b32.xlu0 %v5438, 16
      %v5468 = vpop.permute.xlu0 %5467
      %5470 = vrot.lane.b32.xlu0 %v5396, 32
      %v5471 = vpop.permute.xlu0 %5470
      %5473 = vrot.lane.b32.xlu0 %v5462, 48
      %v5474 = vpop.permute.xlu0 %5473
      %5476 = vrot.lane.b32.xlu0 %v5379, 64
      %v5477 = vpop.permute.xlu0 %5476
      %5479 = vrot.lane.b32.xlu0 %v5445, 80
      %v5480 = vpop.permute.xlu0 %5479
      %5482 = vrot.lane.b32.xlu0 %v5397, 96
      %v5483 = vpop.permute.xlu0 %5482
      %5485 = vrot.lane.b32.xlu0 %v5463, 112
      %v5486 = vpop.permute.xlu0 %5485
      %5488 = vrot.lane.b32.xlu0 %v5454, 16
      %v5489 = vpop.permute.xlu0 %5488
      %5491 = vrot.lane.b32.xlu0 %v5398, 32
      %v5492 = vpop.permute.xlu0 %5491
      %5494 = vrot.lane.b32.xlu0 %v5464, 48
      %v5495 = vpop.permute.xlu0 %5494
      %5497 = vrot.lane.b32.xlu0 %v5395, 64
      %v5498 = vpop.permute.xlu0 %5497
      %5500 = vrot.lane.b32.xlu0 %v5461, 80
      %v5501 = vpop.permute.xlu0 %5500
      %5503 = vrot.lane.b32.xlu0 %v5399, 96
      %v5504 = vpop.permute.xlu0 %5503
      %5506 = vrot.lane.b32.xlu0 %v5465, 112
      %v5507 = vpop.permute.xlu0 %5506
      %v5510 = vsel %vm1105, %v5372, %v5468
      %v5512 = vsel %vm1109, %v5510, %v5471
      %v5514 = vsel %vm1112, %v5512, %v5474
      %v5516 = vsel %vm1115, %v5514, %v5477
      %v5518 = vsel %vm1118, %v5516, %v5480
      %v5520 = vsel %vm1121, %v5518, %v5483
      %v5522 = vsel %vm1124, %v5520, %v5486
      %v5525 = vsel %vm1105, %v5388, %v5489
      %v5527 = vsel %vm1109, %v5525, %v5492
      %v5529 = vsel %vm1112, %v5527, %v5495
      %v5531 = vsel %vm1115, %v5529, %v5498
      %v5533 = vsel %vm1118, %v5531, %v5501
      %v5535 = vsel %vm1121, %v5533, %v5504
      %v5537 = vsel %vm1124, %v5535, %v5507
      %v5540 = vrot.slane %v3890, 6
      %v5541 = vrot.slane %v3905, 6
      %v5544 = vrot.slane %v4118, 4
      %v5545 = vrot.slane %v4133, 4
      %v5548 = vrot.slane %v4374, 2
      %v5549 = vrot.slane %v4389, 2
      %v5552 = vrot.slane %v4830, 6
      %v5553 = vrot.slane %v4845, 6
      %v5556 = vrot.slane %v5066, 4
      %v5557 = vrot.slane %v5081, 4
      %v5560 = vrot.slane %v5294, 2
      %v5561 = vrot.slane %v5309, 2
      %v5563 = vsel %vm3032, %v3658, %v5540
      %v5565 = vsel %vm3032, %v3673, %v5541
      %v5567 = vsel %vm3037, %v5563, %v5544
      %v5569 = vsel %vm3037, %v5565, %v5545
      %v5571 = vsel %vm3042, %v5567, %v5548
      %v5573 = vsel %vm3042, %v5569, %v5549
      %v5575 = vsel %vm3032, %v4602, %v5552
      %v5577 = vsel %vm3032, %v4617, %v5553
      %v5579 = vsel %vm3037, %v5575, %v5556
      %v5581 = vsel %vm3037, %v5577, %v5557
      %v5583 = vsel %vm3042, %v5579, %v5560
      %v5585 = vsel %vm3042, %v5581, %v5561
      %vm5592 = vcmask 1041408
      %v5593 = vrot.slane %v5571, 6
      %v5594 = vrot.slane %v5573, 6
      %v5595 = vrot.slane %v5583, 6
      %v5596 = vsel %vm5592, %v5593, %v5595
      %v5597 = vrot.slane %v5585, 6
      %v5598 = vsel %vm5592, %v5594, %v5597
      %v5599 = vrot.slane %v5522, 6
      %v5600 = vsel %vm5592, %v5595, %v5599
      %v5601 = vrot.slane %v5537, 6
      %v5602 = vsel %vm5592, %v5597, %v5601
      %v5606 = vsel %vm3032, %v2992, %v5593
      %v5609 = vsel %vm3032, %v3007, %v5594
      %v5611 = vld [vmem:[%s6] sm:$0x3]
      %vm5612 = vcmask 588800
      %v5614 = vsel %vm5612, %v5611, 0
      %v5617 = vsel %vm3037, %v5600, 0
      %v5620 = vsel %vm3037, %v5602, 0
      %5622 = vmatprep.subr.bf16.mxu0 %v3047
      %5623 = vmatpush1.bf16.msra.mxu0 %v3044
      %5624 = vmatprep.subr.bf16.mxu0 %v3061
      %5625 = vmatpush1.bf16.msra.mxu0 %v3058
      %5626 = vmatprep.subr.bf16.mxu0 %v5609
      %5627 = vmatpush1.bf16.msra.mxu0 %v5606
      %5628 = vmatprep.subr.bf16.mxu0 %v5598
      %5629 = vmatpush1.bf16.msra.mxu0 %v5596
      %5630 = vmatprep.subr.bf16.mxu0 %v5620
      %5631 = vmatpush1.bf16.msra.mxu0 %v5617
      %5632 = vmatprep.subr.bf16.mxu0 0
      %5633 = vmatpush1.bf16.msra.mxu0 0
      %5634 = vmatprep.subr.bf16.mxu0 0
      %5635 = vmatpush1.bf16.msra.mxu0 0
      %5636 = vmatprep.subr.bf16.mxu0 0
      %5637 = vmatpush1.bf16.msra.mxu0 0
      %5638 = vmatprep.subr.bf16.mxu0 0
      %5639 = vmatpush1.bf16.msra.mxu0 0
      %5640 = vmatprep.subr.bf16.mxu0 0
      %5641 = vmatpush1.bf16.msra.mxu0 0
      %5642 = vmatprep.subr.bf16.mxu0 0
      %5643 = vmatpush1.bf16.msra.mxu0 0
      %5644 = vmatprep.subr.bf16.mxu0 0
      %5645 = vmatpush1.bf16.msra.mxu0 0
      %5646 = vmatprep.subr.bf16.mxu0 0
      %5647 = vmatpush1.bf16.msra.mxu0 0
      %5648 = vmatprep.subr.bf16.mxu0 0
      %5649 = vmatpush1.bf16.msra.mxu0 0
      %5650 = vmatprep.subr.bf16.mxu0 0
      %5651 = vmatpush1.bf16.msra.mxu0 0
      %5652 = vmatprep.subr.bf16.mxu0 0
      %5653 = vmatpush1.bf16.msra.mxu0 0
      %5654 = vmatprep.mubr.bf16.mxu0 0
      %5655 = vmatmul.mubr.bf16.gmra.mrb[0].mxu0 %v5614
      %v5656 = vpop.f32.mrb[0].mxu0
      %v5657 = vadd.f32 0.0, %v5656
      %v5658 = vpop.f32.mrb[0].mxu0
      %v5659 = vadd.f32 0.0, %v5658
      %v5660 = vpop.f32.mrb[0].mxu0
      %v5661 = vpop.f32.mrb[0].mxu0
      %5662 = vdwg.mxu0
      %v5663 = vpack.c.bf16 %v5657, %v5657
      %v5664 = vpack.c.bf16 %v5659, %v5659
      %v5667 = vcombine.low %v5663, %v5664
      %v5669 = vunpack.c.l.s4 1983009808
      %v5670 = vunpack.c.0.s8 %v5669
      %v5671 = vlaneseq
      %v5672 = vshrl.u32 %v5671, 7
      %v5673 = vsub.s32 %v5670, %v5672
      %v5674 = vrot.slane %v5667, %v5673
      %5676 = vst [vmem:[%s503] sm:$0xf] %v5674
      %v5677 = vsel %vm3037, %v5657, 0.0
      %v5678 = vsel %vm3037, %v5659, 0.0
      %v5679 = vadd.f32 %v5677, %v5678
      %5680 = vadd.xlane.f32.xlu0 %v5679
      %v5681 = vpop.xlane.xlu0 %5680
      %v5682 = vmul.f32 %v5657, %v5657
      %v5683 = vmul.f32 %v5659, %v5659
      %v5684 = vsel %vm3037, %v5682, 0.0
      %v5685 = vsel %vm3037, %v5683, 0.0
      %v5686 = vadd.f32 %v5684, %v5685
      %5687 = vadd.xlane.f32.xlu0 %v5686
      %v5688 = vpop.xlane.xlu0 %5687
      %v5689 = vsel %vm887, %v5681, %v5688
      %5690 = vxpose.xlu0.b32.start [1/16] %v5689, 128
      %5691 = vxpose.xlu0.b32.cont [2/16] 0.0, 128
      %5692 = vxpose.xlu0.b32.cont [3/16] 0.0, 128
      %5693 = vxpose.xlu0.b32.cont [4/16] 0.0, 128
      %5694 = vxpose.xlu0.b32.cont [5/16] 0.0, 128
      %5695 = vxpose.xlu0.b32.cont [6/16] 0.0, 128
      %5696 = vxpose.xlu0.b32.cont [7/16] 0.0, 128
      %5697 = vxpose.xlu0.b32.cont [8/16] 0.0, 128
      %5698 = vxpose.xlu0.b32.cont [9/16] 0.0, 128
      %5699 = vxpose.xlu0.b32.cont [10/16] 0.0, 128
      %5700 = vxpose.xlu0.b32.cont [11/16] 0.0, 128
      %5701 = vxpose.xlu0.b32.cont [12/16] 0.0, 128
      %5702 = vxpose.xlu0.b32.cont [13/16] 0.0, 128
      %5703 = vxpose.xlu0.b32.cont [14/16] 0.0, 128
      %5704 = vxpose.xlu0.b32.cont [15/16] 0.0, 128
      %5705 = vxpose.xlu0.b32.end [16/16] 0.0, 128
      %v5706 = vpop.trf.xlu0
      %v5707 = vpop.trf.xlu0
      %v5708 = vpop.trf.xlu0
      %v5709 = vpop.trf.xlu0
      %v5710 = vpop.trf.xlu0
      %v5711 = vpop.trf.xlu0
      %v5712 = vpop.trf.xlu0
      %v5713 = vpop.trf.xlu0
      %v5714 = vpop.trf.xlu0
      %v5715 = vpop.trf.xlu0
      %v5716 = vpop.trf.xlu0
      %v5717 = vpop.trf.xlu0
      %v5718 = vpop.trf.xlu0
      %v5719 = vpop.trf.xlu0
      %v5720 = vpop.trf.xlu0
      %v5721 = vpop.trf.xlu0
      %vm5722 = vcmask 25600
      %5723 = vst.msk [vmem:[%s511] sm:$0x3] %vm5722, %v5706
      %s5724 = smul.u32 2, %s25
      %p5725 = scmp.lt.s32.totalorder %s24, 1
      %s5726 = scalar_select %p5725, %s24, 1
      %p5727 = scmp.lt.s32.totalorder %s5724, 1
      %s5728 = scalar_select %p5727, %s5724, 1
      %s5729 = smul.addr %s5726, 2
      %s5730 = sadd.s32 %s5728, %s5729
      %s5731 = smul.addr %s5730, 2
      %s5732 = scalar_lea.vmem %s7, %s5731
      %p5733 = scmp.lt.s32.totalorder %s24, 1
      %s5734 = scalar_select %p5733, %s24, 1
      %p5735 = scmp.lt.s32.totalorder %s25, 0
      %s5736 = scalar_select %p5735, %s25, 0
      %s5737 = sadd.s32 %s5736, %s5734
      %s5738 = smul.addr %s5737, 2
      %s5739 = scalar_lea.vmem %s8, %s5738
      // Predicated region
      $region49: #{up_forward.3} parent=47 // pred_check
        %p5740 = pneg %p241
      $region50: #{up_forward.3} parent=47 // pred_check_branch
        %5742 = sbr.rel (%p5740) target = $region52
      $region51: #{up_forward.3} parent=47 // pred_region
        %s5743 = smul.u32 2, %s25
      $region52: #{up_forward.3} parent=47 // pred_fallthru
        _
      // Predicated region
      $region53: #{up_forward.3} parent=47 // pred_check
        %p5744 = pneg %p269
      $region54: #{up_forward.3} parent=47 // pred_check_branch
        %5746 = sbr.rel (%p5744) target = $region56
      $region55: #{up_forward.3} parent=47 // pred_region
        _
      $region56: #{up_forward.3} parent=47 // pred_fallthru
        _
    $region48: #{up_forward.3} parent=5 // pred_fallthru
      _
    %p5747 = scmp.le.s32.totalorder 2, %s15
    // Predicated region
    $region57: #{up_forward.3} parent=5 // pred_check
      %p5748 = pneg %p5747
    $region58: #{up_forward.3} parent=5 // pred_check_branch
      %5750 = sbr.rel (%p5748) target = $region60
    $region59: #{up_forward.3} parent=5 // pred_region
      %s5751 = ssub.s32 %s15, 2
      // Predicated region
      $region61: #{up_forward.3} parent=59 // pred_check
        %p5752 = pneg %p247
      $region62: #{up_forward.3} parent=59 // pred_check_branch
        %5754 = sbr.rel (%p5752) target = $region64
      $region63: #{up_forward.3} parent=59 // pred_region
        %s5755 = smul.u32 2, %s27
        %p5756 = scmp.lt.s32.totalorder %s26, 1
        %s5757 = scalar_select %p5756, %s26, 1
        %p5758 = scmp.lt.s32.totalorder %s5755, 1
        %s5759 = scalar_select %p5758, %s5755, 1
        %s5760 = smul.addr %s5757, 2
        %s5761 = sadd.s32 %s5759, %s5760
        %s5762 = smul.addr %s5761, 2
        %s5763 = scalar_lea.vmem %s7, %s5762
      $region64: #{up_forward.3} parent=59 // pred_fallthru
        _
      // Predicated region
      $region65: #{up_forward.3} parent=59 // pred_check
        %p5764 = pneg %p275
      $region66: #{up_forward.3} parent=59 // pred_check_branch
        %5766 = sbr.rel (%p5764) target = $region68
      $region67: #{up_forward.3} parent=59 // pred_region
        %p5767 = scmp.lt.s32.totalorder %s26, 1
        %s5768 = scalar_select %p5767, %s26, 1
        %p5769 = scmp.lt.s32.totalorder %s27, 0
        %s5770 = scalar_select %p5769, %s27, 0
        %s5771 = sadd.s32 %s5770, %s5768
        %s5772 = smul.addr %s5771, 2
        %s5773 = scalar_lea.vmem %s8, %s5772
      $region68: #{up_forward.3} parent=59 // pred_fallthru
        _
    $region60: #{up_forward.3} parent=5 // pred_fallthru
      _
  $region6: #{up_forward.3} parent=0 // loop_footer
    %s19 = sadd.s32 1, %s15
  $region7: #{up_forward.3} parent=0 // loop_footer_branch
    %14 = sbr.rel target = $region3
  $region8: #{up_forward.3} parent=0 // loop_exit
    _

</llo_original>
